<compile_context>
chip_gen: v6e
topology: v6e:2x2x1
jax: 0.10.0
libtpu: 0.0.40
codegen_flags: <defaults>
</compile_context>

<pallas_src>
import functools

import numpy as np
import jax
import jax.numpy as jnp
from jax import lax
from jax.experimental import pallas as pl
from jax.experimental.pallas import tpu as pltpu

NCP = 128  # lane-padded width of the predictor output / weight


# ----------------------- Pyraformer structure helpers ------------------------

def get_mask(input_size, window_size, inner_size):
    all_size = [input_size]
    for w in window_size:
        all_size.append(all_size[-1] // w)
    seq_length = sum(all_size)
    mask = np.zeros((seq_length, seq_length), dtype=np.float32)

    inner_window = inner_size // 2
    for layer_idx in range(len(all_size)):
        start = sum(all_size[:layer_idx])
        for i in range(start, start + all_size[layer_idx]):
            left = max(i - inner_window, start)
            right = min(i + inner_window + 1, start + all_size[layer_idx])
            mask[i, left:right] = 1

    for layer_idx in range(1, len(all_size)):
        start = sum(all_size[:layer_idx])
        for i in range(start, start + all_size[layer_idx]):
            left = (start - all_size[layer_idx - 1]) + (i - start) * window_size[layer_idx - 1]
            if i == start + all_size[layer_idx] - 1:
                right = start
            else:
                right = (start - all_size[layer_idx - 1]) + (i - start + 1) * window_size[layer_idx - 1]
            mask[i, left:right] = 1
            mask[left:right, i] = 1

    return (1.0 - mask), all_size   # 1.0 -> attention NOT allowed (torch bool mask)


def refer_points(all_sizes, window_size):
    input_size = all_sizes[0]
    indexes = np.zeros((input_size, len(all_sizes)), dtype=np.int32)
    for i in range(input_size):
        indexes[i, 0] = i
        former = i
        for j in range(1, len(all_sizes)):
            start = sum(all_sizes[:j])
            inner_idx = former - (start - all_sizes[j - 1])
            former = start + min(inner_idx // window_size[j - 1], all_sizes[j] - 1)
            indexes[i, j] = former
    return indexes  # (seq_len, n_levels)


def build_structure(cfg, batch):
    """Host-side structural constants (mask, conv row-selection matrices, meta)."""
    mask_np, all_size = get_mask(cfg["seq_len"], cfg["window_size"], cfg["inner_size"])
    idx_np = refer_points(all_size, cfg["window_size"])
    last_rows = tuple(int(v) for v in idx_np[-1])      # pyramid nodes of last fine step
    n_real = sum(all_size)
    Lp = ((n_real + 7) // 8) * 8                       # pad pyramid length to sublane multiple

    # additive mask: 0 = allowed, -1e9 = disallowed; padded rows/cols fully masked;
    # block-diagonal across the stacked batch so samples never attend to each other.
    blk = np.full((Lp, Lp), -1e9, dtype=np.float32)
    blk[:n_real, :n_real] = mask_np.astype(np.float32) * np.float32(-1e9)
    big = np.full((batch * Lp, batch * Lp), -1e9, dtype=np.float32)
    for b in range(batch):
        big[b * Lp:(b + 1) * Lp, b * Lp:(b + 1) * Lp] = blk

    # 0/1 row-selection matrices for the strided Conv1d(kernel=stride=w) taps,
    # block-diagonal across the stacked batch.
    sels = []
    for i, w in enumerate(cfg["window_size"]):
        Lin, Lout = all_size[i], all_size[i + 1]
        for j in range(w):
            S = np.zeros((batch * Lout, batch * Lin), dtype=np.float32)
            for b in range(batch):
                for t in range(Lout):
                    S[b * Lout + t, b * Lin + t * w + j] = 1.0
            sels.append(S)

    return dict(mask=big, sels=sels, all_size=tuple(all_size),
                last_rows=last_rows, Lp=Lp)


# ------------------------------ Parameters -----------------------------------

def init_params(key, cfg):
    keys = iter(jax.random.split(key, 64))

    def nk():
        return next(keys)

    def xavier(shape):
        fin, fout = shape[0], shape[-1]
        lim = float(np.sqrt(6.0 / (fin + fout)))
        return jax.random.uniform(nk(), shape, jnp.float32, -lim, lim)

    d_model, d_k, d_v = cfg["d_model"], cfg["d_k"], cfg["d_v"]
    H, d_ff = cfg["n_heads"], cfg["d_inner_hid"]

    p = {}
    # TODO(synk): exact SimpleClassEmbedding definition not given; assumed
    #             Linear(enc_in -> d_model) + learned positional embedding.
    p["emb_w"] = xavier((cfg["enc_in"], d_model))
    p["emb_b"] = jnp.zeros((d_model,), jnp.float32)
    p["pos_emb"] = 0.02 * jax.random.normal(nk(), (cfg["seq_len"], d_model), jnp.float32)

    # Bottleneck_Construct (CSCM)
    p["down_w"] = xavier((d_model, d_k))
    p["down_b"] = jnp.zeros((d_k,), jnp.float32)
    for i, w in enumerate(cfg["window_size"]):
        # flattened Conv1d weight: Wflat[j*C + c, o] == W_torch[o, c, j]
        p[f"conv{i}_w"] = xavier((w * d_k, d_k))
        p[f"conv{i}_b"] = jnp.zeros((d_k,), jnp.float32)
    p["up_w"] = xavier((d_k, d_model))
    p["up_b"] = jnp.zeros((d_model,), jnp.float32)
    p["cscm_ln_g"] = jnp.ones((d_model,), jnp.float32)
    p["cscm_ln_b"] = jnp.zeros((d_model,), jnp.float32)

    layers = []
    for _ in range(cfg["n_layer"]):
        lp = {
            "wq": xavier((d_model, H * d_k)),
            "wk": xavier((d_model, H * d_k)),
            "wv": xavier((d_model, H * d_v)),
            "fc_w": xavier((H * d_v, d_model)),
            "fc_b": jnp.zeros((d_model,), jnp.float32),
            "ln1_g": jnp.ones((d_model,), jnp.float32),
            "ln1_b": jnp.zeros((d_model,), jnp.float32),
            "w1": xavier((d_model, d_ff)),
            "b1": jnp.zeros((d_ff,), jnp.float32),
            "w2": xavier((d_ff, d_model)),
            "b2": jnp.zeros((d_model,), jnp.float32),
            "ln2_g": jnp.ones((d_model,), jnp.float32),
            "ln2_b": jnp.zeros((d_model,), jnp.float32),
        }
        layers.append(lp)
    p["layers"] = layers

    # TODO(synk): Predictor assumed to be Linear(4*d_model, num_class, bias=False).
    p["pred_w"] = xavier((4 * d_model, cfg["num_class"]))
    return p


def pack_params(p, cfg, batch, struct):
    """Re-pack parameters into kernel-friendly, pre-fused arrays."""
    dm, dk, dv = cfg["d_model"], cfg["d_k"], cfg["d_v"]
    H, dff = cfg["n_heads"], cfg["d_inner_hid"]
    ws = cfg["window_size"]
    NC = cfg["num_class"]
    n_lvl = len(ws) + 1
    scale = 1.0 / float(np.sqrt(dk))

    packed = {"mask": jnp.asarray(struct["mask"]),
              "sels": [jnp.asarray(s) for s in struct["sels"]]}

    packed["emb_w"] = p["emb_w"]
    pos = p["pos_emb"] + p["emb_b"][None, :]                     # fold emb bias into pos
    packed["pos_b"] = jnp.tile(pos, (batch, 1))                  # (B*L0, dm)
    packed["down_w"] = p["down_w"]
    packed["down_b"] = p["down_b"].reshape(1, dk)

    conv_w, conv_b = [], []
    for i, w in enumerate(ws):
        Wf = p[f"conv{i}_w"]                                     # (w*dk, dk)
        for j in range(w):
            conv_w.append(Wf[j * dk:(j + 1) * dk, :])
        conv_b.append(p[f"conv{i}_b"].reshape(1, dk))
    packed["conv_w"] = jnp.stack(conv_w)                         # (sum(ws), dk, dk)
    packed["conv_b"] = jnp.stack(conv_b)                         # (len(ws), 1, dk)

    packed["up_w"] = p["up_w"]
    packed["up_b"] = p["up_b"].reshape(1, dm)
    packed["cscm_g"] = p["cscm_ln_g"].reshape(1, dm)
    packed["cscm_b"] = p["cscm_ln_b"].reshape(1, dm)

    attn_w, vec32, w1, b1, w2 = [], [], [], [], []
    for lp in p["layers"]:
        cols = []
        wq = lp["wq"] * scale                                    # fold 1/sqrt(d_k) into Wq
        for h in range(H):
            cols.append(wq[:, h * dk:(h + 1) * dk])
        for h in range(H):
            cols.append(lp["wk"][:, h * dk:(h + 1) * dk])
        for h in range(H):
            # fold the output projection into V:  o_h @ fc_h == p_h @ (seq @ (Wv_h @ fc_h))
            cols.append(lp["wv"][:, h * dv:(h + 1) * dv] @ lp["fc_w"][h * dv:(h + 1) * dv, :])
        attn_w.append(jnp.concatenate(cols, axis=1))             # (dm, 2*H*dk + H*dm) == (32,128)
        for name in ("fc_b", "ln1_g", "ln1_b", "b2", "ln2_g", "ln2_b"):
            vec32.append(lp[name].reshape(1, dm))
        w1.append(lp["w1"])
        b1.append(lp["b1"].reshape(1, dff))
        w2.append(lp["w2"])
    packed["attn_w"] = jnp.stack(attn_w)                         # (n_layer, dm, 128)
    packed["vec32"] = jnp.stack(vec32)                           # (n_layer*6, 1, dm)
    packed["w1"] = jnp.stack(w1)                                 # (n_layer, dm, dff)
    packed["b1"] = jnp.stack(b1)                                 # (n_layer, 1, dff)
    packed["w2"] = jnp.stack(w2)                                 # (n_layer, dff, dm)

    pred = jnp.zeros((n_lvl * dm, NCP), jnp.float32).at[:, :NC].set(p["pred_w"])
    packed["pred_w"] = pred                                      # (4*dm, NCP) = (128,128)
    return packed


# ------------------------------ Fused kernel ----------------------------------

def _make_fused_kernel(cfg, all_size, last_rows, Lp, batch):
    L0 = cfg["seq_len"]
    dm, dk = cfg["d_model"], cfg["d_k"]
    H = cfg["n_heads"]
    ws = list(cfg["window_size"])
    n_layer = cfg["n_layer"]
    n_real = sum(all_size)
    n_sel = sum(ws)
    BL = batch * Lp
    qk_width = 2 * H * dk                                        # lane offset of folded-V block
    f32 = jnp.float32

    offs = [0]
    for s in all_size:
        offs.append(offs[-1] + s)                                # per-sample level row offsets

    def layer_norm(x, g, b, eps):
        mu = jnp.mean(x, axis=-1, keepdims=True)
        xc = x - mu
        var = jnp.mean(xc * xc, axis=-1, keepdims=True)
        return xc * lax.rsqrt(var + eps) * g + b

    def erf_f32(x):
        # TODO(synk): Abramowitz-Stegun 7.1.26 erf (|err|<1.5e-7) built from exp/mul/add.
        a1, a2, a3, a4, a5 = (0.254829592, -0.284496736, 1.421413741,
                              -1.453152027, 1.061405429)
        pp = 0.3275911
        ax = jnp.abs(x)
        t = 1.0 / (1.0 + pp * ax)
        poly = ((((a5 * t + a4) * t + a3) * t + a2) * t + a1) * t
        y = 1.0 - poly * jnp.exp(-ax * ax)
        return jnp.where(x < 0.0, -y, y)

    def gelu_exact(x):
        return 0.5 * x * (1.0 + erf_f32(x * 0.7071067811865476))

    def elu(x):
        return jnp.where(x > 0.0, x, jnp.exp(jnp.minimum(x, 0.0)) - 1.0)

    def kernel(*refs):
        (data_ref, mask_ref, emb_w_ref, pos_ref, down_w_ref, down_b_ref) = refs[:6]
        sel_refs = refs[6:6 + n_sel]
        (conv_w_ref, conv_b_ref, up_w_ref, up_b_ref, cscm_g_ref, cscm_b_ref,
         attn_w_ref, vec32_ref, w1_ref, b1_ref, w2_ref, pred_w_ref,
         out_ref, seq_buf, feat_buf) = refs[6 + n_sel:]

        # ----------------- embedding (Linear + learned positional) -----------
        x = jnp.dot(data_ref[...], emb_w_ref[...],
                    preferred_element_type=f32) + pos_ref[...]            # (B*L0, dm)

        # ----------------- Bottleneck_Construct (CSCM) ------------------------
        cur = jnp.dot(x, down_w_ref[...],
                      preferred_element_type=f32) + down_b_ref[...]       # (B*L0, dk)

        # place fine rows + zero the pad rows (static slices into VMEM scratch)
        for b in range(batch):
            seq_buf[b * Lp:b * Lp + L0, :] = x[b * L0:(b + 1) * L0, :]
            seq_buf[b * Lp + n_real:(b + 1) * Lp, :] = jnp.zeros((Lp - n_real, dm), f32)

        tap = 0
        for i, w in enumerate(ws):
            Lout = all_size[i + 1]                                        # per-sample length
            conv = None
            for j in range(w):
                # strided Conv1d tap j: host-constant 0/1 row selection, then weight matmul
                rows = jnp.dot(sel_refs[tap + j][...], cur, preferred_element_type=f32)
                term = jnp.dot(rows, conv_w_ref[tap + j], preferred_element_type=f32)
                conv = term if conv is None else conv + term
            tap += w
            # BatchNorm1d (eval, default running stats) == identity, then ELU.
            cur = elu(conv + conv_b_ref[i])                               # (B*Lout, dk)
            up = jnp.dot(cur, up_w_ref[...], preferred_element_type=f32) + up_b_ref[...]
            off = offs[i + 1]
            for b in range(batch):
                seq_buf[b * Lp + off:b * Lp + off + Lout, :] = up[b * Lout:(b + 1) * Lout, :]

        seq = layer_norm(seq_buf[...], cscm_g_ref[...], cscm_b_ref[...], 1e-5)   # (BL, dm)

        # ----------------- PAM encoder layers (post-norm) ---------------------
        mask_add = mask_ref[...]                                          # (BL, BL) 0 / -1e9
        for l in range(n_layer):
            # ---- multi-head attention (dropout = identity), fused projection ----
            residual = seq
            qkv = jnp.dot(seq, attn_w_ref[l], preferred_element_type=f32)  # (BL, 128)
            attn = jnp.zeros((BL, dm), f32)
            for h in range(H):
                q = qkv[:, h * dk:(h + 1) * dk]                           # scale pre-folded
                k = qkv[:, (H + h) * dk:(H + h + 1) * dk]
                vfc = qkv[:, qk_width + h * dm:qk_width + (h + 1) * dm]   # V with fc folded in
                s = lax.dot_general(q, k, (((1,), (1,)), ((), ())),
                                    preferred_element_type=f32) + mask_add
                m = jnp.max(s, axis=-1, keepdims=True)
                e = jnp.exp(s - m)
                inv = pl.reciprocal(jnp.sum(e, axis=-1, keepdims=True), approx=True)
                attn = attn + jnp.dot(e * inv, vfc, preferred_element_type=f32)
            seq = attn + vec32_ref[6 * l + 0] + residual                  # + fc bias
            seq = layer_norm(seq, vec32_ref[6 * l + 1], vec32_ref[6 * l + 2], 1e-6)

            # ---- position-wise FFN ----
            residual = seq
            h1 = gelu_exact(jnp.dot(seq, w1_ref[l], preferred_element_type=f32) + b1_ref[l])
            h2 = jnp.dot(h1, w2_ref[l], preferred_element_type=f32) + vec32_ref[6 * l + 3]
            seq = layer_norm(h2 + residual, vec32_ref[6 * l + 4],
                             vec32_ref[6 * l + 5], 1e-6)

        # ------ gather pyramid nodes of the LAST fine step + predictor --------
        seq_buf[...] = seq
        for b in range(batch):
            for lvl, row in enumerate(last_rows):
                r = b * Lp + row
                feat_buf[b:b + 1, lvl * dm:(lvl + 1) * dm] = seq_buf[r:r + 1, :]
        out_ref[...] = jnp.dot(feat_buf[...], pred_w_ref[...],
                               preferred_element_type=f32)                # (B, NCP)

    return kernel


def pyraformer_forward(packed, data, *, cfg, all_size, last_rows, Lp):
    B, L0, enc_in = data.shape
    dm = cfg["d_model"]
    kernel = _make_fused_kernel(cfg, all_size, last_rows, Lp, B)

    data2d = data.reshape(B * L0, enc_in)                       # layout plumbing only

    weights = ([packed["mask"], packed["emb_w"], packed["pos_b"],
                packed["down_w"], packed["down_b"]]
               + list(packed["sels"])
               + [packed["conv_w"], packed["conv_b"], packed["up_w"], packed["up_b"],
                  packed["cscm_g"], packed["cscm_b"], packed["attn_w"], packed["vec32"],
                  packed["w1"], packed["b1"], packed["w2"], packed["pred_w"]])

    def const_spec(a):
        nd = a.ndim
        return pl.BlockSpec(a.shape, lambda i, nd=nd: (0,) * nd)   # VMEM resident

    in_specs = ([pl.BlockSpec(data2d.shape, lambda i: (0, 0))]
                + [const_spec(a) for a in weights])

    out = pl.pallas_call(
        kernel,
        out_shape=jax.ShapeDtypeStruct((B, NCP), jnp.float32),
        grid=(1,),                                               # single step: batch stacked
        in_specs=in_specs,
        out_specs=pl.BlockSpec((B, NCP), lambda i: (0, 0)),
        scratch_shapes=[pltpu.VMEM((B * Lp, dm), jnp.float32),   # pyramid assembly buffer
                        pltpu.VMEM((B, NCP), jnp.float32)],      # lane-dense predictor input
        compiler_params=pltpu.CompilerParams(
            dimension_semantics=("arbitrary",)),
    )(data2d, *weights)
    return out[:, :cfg["num_class"]]


def model_forward(packed, data, *, cfg, all_size, last_rows, Lp):
    logits = pyraformer_forward(packed, data, cfg=cfg, all_size=all_size,
                                last_rows=last_rows, Lp=Lp)
    return jnp.squeeze(logits)      # mirrors `.squeeze()` in the reference


# ----------------------------------- main -------------------------------------

if __name__ == "__main__":
    cfg = dict(
        seq_len=16, enc_in=8, d_model=32, d_inner_hid=64,
        n_heads=2, d_k=16, d_v=16,
        window_size=[2, 2, 2], inner_size=3,
        n_layer=2, num_class=4,
        # dataset='eeg' (not 'de*'), task_name='classification' -> no rearrange,
        # no domain classifier branch.
    )
    B = 2

    struct = build_structure(cfg, B)

    key = jax.random.PRNGKey(0)
    pkey, dkey = jax.random.split(key)
    params = init_params(pkey, cfg)
    data = jax.random.normal(dkey, (B, cfg["seq_len"], cfg["enc_in"]), jnp.float32)

    packed = pack_params(params, cfg, B, struct)

    fwd = jax.jit(functools.partial(
        model_forward, cfg=cfg, all_size=struct["all_size"],
        last_rows=struct["last_rows"], Lp=struct["Lp"]))
    out = fwd(packed, data)
    jax.block_until_ready(out)

    assert out.shape == (B, cfg["num_class"]), out.shape
    assert bool(jnp.all(jnp.isfinite(out)))
    print("KERNEL_OK")
</pallas_src>

<mosaic_0001>
module attributes {stable_mosaic.version = 11 : i64} {
  func.func @kernel(%arg0: i32, %arg1: memref<32x8xf32, #tpu.memory_space<vmem>>, %arg2: memref<64x64xf32, #tpu.memory_space<vmem>>, %arg3: memref<8x32xf32, #tpu.memory_space<vmem>>, %arg4: memref<32x32xf32, #tpu.memory_space<vmem>>, %arg5: memref<32x16xf32, #tpu.memory_space<vmem>>, %arg6: memref<1x16xf32, #tpu.memory_space<vmem>>, %arg7: memref<16x32xf32, #tpu.memory_space<vmem>>, %arg8: memref<16x32xf32, #tpu.memory_space<vmem>>, %arg9: memref<8x16xf32, #tpu.memory_space<vmem>>, %arg10: memref<8x16xf32, #tpu.memory_space<vmem>>, %arg11: memref<4x8xf32, #tpu.memory_space<vmem>>, %arg12: memref<4x8xf32, #tpu.memory_space<vmem>>, %arg13: memref<6x16x16xf32, #tpu.memory_space<vmem>>, %arg14: memref<3x1x16xf32, #tpu.memory_space<vmem>>, %arg15: memref<16x32xf32, #tpu.memory_space<vmem>>, %arg16: memref<1x32xf32, #tpu.memory_space<vmem>>, %arg17: memref<1x32xf32, #tpu.memory_space<vmem>>, %arg18: memref<1x32xf32, #tpu.memory_space<vmem>>, %arg19: memref<2x32x128xf32, #tpu.memory_space<vmem>>, %arg20: memref<12x1x32xf32, #tpu.memory_space<vmem>>, %arg21: memref<2x32x64xf32, #tpu.memory_space<vmem>>, %arg22: memref<2x1x64xf32, #tpu.memory_space<vmem>>, %arg23: memref<2x64x32xf32, #tpu.memory_space<vmem>>, %arg24: memref<128x128xf32, #tpu.memory_space<vmem>>, %arg25: memref<2x128xf32, #tpu.memory_space<vmem>>, %arg26: memref<64x32xf32, #tpu.memory_space<vmem>>, %arg27: memref<2x128xf32, #tpu.memory_space<vmem>>) attributes {dimension_semantics = [#tpu.dimension_semantics<arbitrary>], iteration_bounds = array<i64: 1>, scalar_prefetch = 0 : i64, scratch_operands = 2 : i64, tpu.core_type = #tpu.core_type<tc>, window_params = [{pipeline_mode = #tpu.pipeline_mode<synchronous>, transform_indices = @transform_0, window_bounds = array<i64: 32, 8>}, {pipeline_mode = #tpu.pipeline_mode<synchronous>, transform_indices = @transform_1, window_bounds = array<i64: 64, 64>}, {pipeline_mode = #tpu.pipeline_mode<synchronous>, transform_indices = @transform_2, window_bounds = array<i64: 8, 32>}, {pipeline_mode = #tpu.pipeline_mode<synchronous>, transform_indices = @transform_3, window_bounds = array<i64: 32, 32>}, {pipeline_mode = #tpu.pipeline_mode<synchronous>, transform_indices = @transform_4, window_bounds = array<i64: 32, 16>}, {pipeline_mode = #tpu.pipeline_mode<synchronous>, transform_indices = @transform_5, window_bounds = array<i64: 1, 16>}, {pipeline_mode = #tpu.pipeline_mode<synchronous>, transform_indices = @transform_6, window_bounds = array<i64: 16, 32>}, {pipeline_mode = #tpu.pipeline_mode<synchronous>, transform_indices = @transform_7, window_bounds = array<i64: 16, 32>}, {pipeline_mode = #tpu.pipeline_mode<synchronous>, transform_indices = @transform_8, window_bounds = array<i64: 8, 16>}, {pipeline_mode = #tpu.pipeline_mode<synchronous>, transform_indices = @transform_9, window_bounds = array<i64: 8, 16>}, {pipeline_mode = #tpu.pipeline_mode<synchronous>, transform_indices = @transform_10, window_bounds = array<i64: 4, 8>}, {pipeline_mode = #tpu.pipeline_mode<synchronous>, transform_indices = @transform_11, window_bounds = array<i64: 4, 8>}, {pipeline_mode = #tpu.pipeline_mode<synchronous>, transform_indices = @transform_12, window_bounds = array<i64: 6, 16, 16>}, {pipeline_mode = #tpu.pipeline_mode<synchronous>, transform_indices = @transform_13, window_bounds = array<i64: 3, 1, 16>}, {pipeline_mode = #tpu.pipeline_mode<synchronous>, transform_indices = @transform_14, window_bounds = array<i64: 16, 32>}, {pipeline_mode = #tpu.pipeline_mode<synchronous>, transform_indices = @transform_15, window_bounds = array<i64: 1, 32>}, {pipeline_mode = #tpu.pipeline_mode<synchronous>, transform_indices = @transform_16, window_bounds = array<i64: 1, 32>}, {pipeline_mode = #tpu.pipeline_mode<synchronous>, transform_indices = @transform_17, window_bounds = array<i64: 1, 32>}, {pipeline_mode = #tpu.pipeline_mode<synchronous>, transform_indices = @transform_18, window_bounds = array<i64: 2, 32, 128>}, {pipeline_mode = #tpu.pipeline_mode<synchronous>, transform_indices = @transform_19, window_bounds = array<i64: 12, 1, 32>}, {pipeline_mode = #tpu.pipeline_mode<synchronous>, transform_indices = @transform_20, window_bounds = array<i64: 2, 32, 64>}, {pipeline_mode = #tpu.pipeline_mode<synchronous>, transform_indices = @transform_21, window_bounds = array<i64: 2, 1, 64>}, {pipeline_mode = #tpu.pipeline_mode<synchronous>, transform_indices = @transform_22, window_bounds = array<i64: 2, 64, 32>}, {pipeline_mode = #tpu.pipeline_mode<synchronous>, transform_indices = @transform_23, window_bounds = array<i64: 128, 128>}, {pipeline_mode = #tpu.pipeline_mode<synchronous>, transform_indices = @transform_24, window_bounds = array<i64: 2, 128>}]} {
    %c0 = arith.constant 0 : index
    %c0_0 = arith.constant 0 : index
    %0 = vector.load %arg1[%c0, %c0_0] : memref<32x8xf32, #tpu.memory_space<vmem>>, vector<32x8xf32>
    %c0_1 = arith.constant 0 : index
    %c0_2 = arith.constant 0 : index
    %1 = vector.load %arg3[%c0_1, %c0_2] : memref<8x32xf32, #tpu.memory_space<vmem>>, vector<8x32xf32>
    %cst = arith.constant dense<0.000000e+00> : vector<32x32xf32>
    %2 = tpu.matmul %0, %1, %cst {dimension_numbers = #tpu.dot_dimension_numbers<[1], [0], [0], [1], [0, 0, 1, 1], [], []>} : vector<32x8xf32>, vector<8x32xf32>, vector<32x32xf32> -> vector<32x32xf32>
    %c0_3 = arith.constant 0 : index
    %c0_4 = arith.constant 0 : index
    %3 = vector.load %arg4[%c0_3, %c0_4] : memref<32x32xf32, #tpu.memory_space<vmem>>, vector<32x32xf32>
    %4 = arith.addf %2, %3 : vector<32x32xf32>
    %c0_5 = arith.constant 0 : index
    %c0_6 = arith.constant 0 : index
    %5 = vector.load %arg5[%c0_5, %c0_6] : memref<32x16xf32, #tpu.memory_space<vmem>>, vector<32x16xf32>
    %cst_7 = arith.constant dense<0.000000e+00> : vector<32x16xf32>
    %6 = tpu.matmul %4, %5, %cst_7 {dimension_numbers = #tpu.dot_dimension_numbers<[1], [0], [0], [1], [0, 0, 1, 1], [], []>} : vector<32x32xf32>, vector<32x16xf32>, vector<32x16xf32> -> vector<32x16xf32>
    %c0_8 = arith.constant 0 : index
    %c0_9 = arith.constant 0 : index
    %7 = vector.load %arg6[%c0_8, %c0_9] : memref<1x16xf32, #tpu.memory_space<vmem>>, vector<1x16xf32>
    %8 = vector.broadcast %7 : vector<1x16xf32> to vector<32x16xf32>
    %9 = arith.addf %6, %8 : vector<32x16xf32>
    %10 = vector.extract_strided_slice %4 {offsets = [0, 0], sizes = [16, 32], strides = [1, 1]} : vector<32x32xf32> to vector<16x32xf32>
    %c0_10 = arith.constant 0 : index
    %c0_11 = arith.constant 0 : index
    %11 = vector.load %arg26[%c0_10, %c0_11] : memref<64x32xf32, #tpu.memory_space<vmem>>, vector<16x32xf32>
    tpu.vector_store %arg26[%c0_10, %c0_11], %10 {strides = array<i32>} : memref<64x32xf32, #tpu.memory_space<vmem>>, vector<16x32xf32>,
    %cst_12 = arith.constant 0.000000e+00 : f32
    %12 = vector.broadcast %cst_12 : f32 to vector<2x32xf32>
    %c30 = arith.constant 30 : index
    %c0_13 = arith.constant 0 : index
    %13 = vector.load %arg26[%c30, %c0_13] : memref<64x32xf32, #tpu.memory_space<vmem>>, vector<2x32xf32>
    tpu.vector_store %arg26[%c30, %c0_13], %12 {strides = array<i32>} : memref<64x32xf32, #tpu.memory_space<vmem>>, vector<2x32xf32>,
    %14 = vector.extract_strided_slice %4 {offsets = [16, 0], sizes = [16, 32], strides = [1, 1]} : vector<32x32xf32> to vector<16x32xf32>
    %c32 = arith.constant 32 : index
    %c0_14 = arith.constant 0 : index
    %15 = vector.load %arg26[%c32, %c0_14] : memref<64x32xf32, #tpu.memory_space<vmem>>, vector<16x32xf32>
    tpu.vector_store %arg26[%c32, %c0_14], %14 {strides = array<i32>} : memref<64x32xf32, #tpu.memory_space<vmem>>, vector<16x32xf32>,
    %cst_15 = arith.constant 0.000000e+00 : f32
    %16 = vector.broadcast %cst_15 : f32 to vector<2x32xf32>
    %c62 = arith.constant 62 : index
    %c0_16 = arith.constant 0 : index
    %17 = vector.load %arg26[%c62, %c0_16] : memref<64x32xf32, #tpu.memory_space<vmem>>, vector<2x32xf32>
    tpu.vector_store %arg26[%c62, %c0_16], %16 {strides = array<i32>} : memref<64x32xf32, #tpu.memory_space<vmem>>, vector<2x32xf32>,
    %c0_17 = arith.constant 0 : index
    %c0_18 = arith.constant 0 : index
    %18 = vector.load %arg7[%c0_17, %c0_18] : memref<16x32xf32, #tpu.memory_space<vmem>>, vector<16x32xf32>
    %cst_19 = arith.constant dense<0.000000e+00> : vector<16x16xf32>
    %19 = tpu.matmul %18, %9, %cst_19 {dimension_numbers = #tpu.dot_dimension_numbers<[1], [0], [0], [1], [0, 0, 1, 1], [], []>} : vector<16x32xf32>, vector<32x16xf32>, vector<16x16xf32> -> vector<16x16xf32>
    %c0_20 = arith.constant 0 : index
    %c0_21 = arith.constant 0 : index
    %c0_22 = arith.constant 0 : index
    %20 = vector.load %arg13[%c0_20, %c0_21, %c0_22] : memref<6x16x16xf32, #tpu.memory_space<vmem>>, vector<1x16x16xf32>
    %21 = vector.shape_cast %20 : vector<1x16x16xf32> to vector<16x16xf32>
    %cst_23 = arith.constant dense<0.000000e+00> : vector<16x16xf32>
    %22 = tpu.matmul %19, %21, %cst_23 {dimension_numbers = #tpu.dot_dimension_numbers<[1], [0], [0], [1], [0, 0, 1, 1], [], []>} : vector<16x16xf32>, vector<16x16xf32>, vector<16x16xf32> -> vector<16x16xf32>
    %c0_24 = arith.constant 0 : index
    %c0_25 = arith.constant 0 : index
    %23 = vector.load %arg8[%c0_24, %c0_25] : memref<16x32xf32, #tpu.memory_space<vmem>>, vector<16x32xf32>
    %cst_26 = arith.constant dense<0.000000e+00> : vector<16x16xf32>
    %24 = tpu.matmul %23, %9, %cst_26 {dimension_numbers = #tpu.dot_dimension_numbers<[1], [0], [0], [1], [0, 0, 1, 1], [], []>} : vector<16x32xf32>, vector<32x16xf32>, vector<16x16xf32> -> vector<16x16xf32>
    %c1 = arith.constant 1 : index
    %c0_27 = arith.constant 0 : index
    %c0_28 = arith.constant 0 : index
    %25 = vector.load %arg13[%c1, %c0_27, %c0_28] : memref<6x16x16xf32, #tpu.memory_space<vmem>>, vector<1x16x16xf32>
    %26 = vector.shape_cast %25 : vector<1x16x16xf32> to vector<16x16xf32>
    %cst_29 = arith.constant dense<0.000000e+00> : vector<16x16xf32>
    %27 = tpu.matmul %24, %26, %cst_29 {dimension_numbers = #tpu.dot_dimension_numbers<[1], [0], [0], [1], [0, 0, 1, 1], [], []>} : vector<16x16xf32>, vector<16x16xf32>, vector<16x16xf32> -> vector<16x16xf32>
    %28 = arith.addf %22, %27 : vector<16x16xf32>
    %c0_30 = arith.constant 0 : index
    %c0_31 = arith.constant 0 : index
    %c0_32 = arith.constant 0 : index
    %29 = vector.load %arg14[%c0_30, %c0_31, %c0_32] : memref<3x1x16xf32, #tpu.memory_space<vmem>>, vector<1x1x16xf32>
    %30 = vector.shape_cast %29 : vector<1x1x16xf32> to vector<1x16xf32>
    %31 = vector.broadcast %30 : vector<1x16xf32> to vector<16x16xf32>
    %32 = arith.addf %28, %31 : vector<16x16xf32>
    %cst_33 = arith.constant 0.000000e+00 : f32
    %33 = vector.broadcast %cst_33 : f32 to vector<16x16xf32>
    %34 = arith.cmpf ogt, %32, %33 : vector<16x16xf32>
    %cst_34 = arith.constant 0.000000e+00 : f32
    %35 = vector.broadcast %cst_34 : f32 to vector<16x16xf32>
    %36 = arith.minimumf %32, %35 : vector<16x16xf32>
    %37 = math.exp %36 : vector<16x16xf32>
    %cst_35 = arith.constant 1.000000e+00 : f32
    %38 = vector.broadcast %cst_35 : f32 to vector<16x16xf32>
    %39 = arith.subf %37, %38 : vector<16x16xf32>
    %40 = arith.select %34, %32, %39 : vector<16x16xi1>, vector<16x16xf32>
    %c0_36 = arith.constant 0 : index
    %c0_37 = arith.constant 0 : index
    %41 = vector.load %arg15[%c0_36, %c0_37] : memref<16x32xf32, #tpu.memory_space<vmem>>, vector<16x32xf32>
    %cst_38 = arith.constant dense<0.000000e+00> : vector<16x32xf32>
    %42 = tpu.matmul %40, %41, %cst_38 {dimension_numbers = #tpu.dot_dimension_numbers<[1], [0], [0], [1], [0, 0, 1, 1], [], []>} : vector<16x16xf32>, vector<16x32xf32>, vector<16x32xf32> -> vector<16x32xf32>
    %c0_39 = arith.constant 0 : index
    %c0_40 = arith.constant 0 : index
    %43 = vector.load %arg16[%c0_39, %c0_40] : memref<1x32xf32, #tpu.memory_space<vmem>>, vector<1x32xf32>
    %44 = vector.broadcast %43 : vector<1x32xf32> to vector<16x32xf32>
    %45 = arith.addf %42, %44 : vector<16x32xf32>
    %46 = vector.extract_strided_slice %45 {offsets = [0, 0], sizes = [8, 32], strides = [1, 1]} : vector<16x32xf32> to vector<8x32xf32>
    %c16 = arith.constant 16 : index
    %c0_41 = arith.constant 0 : index
    %47 = vector.load %arg26[%c16, %c0_41] : memref<64x32xf32, #tpu.memory_space<vmem>>, vector<8x32xf32>
    tpu.vector_store %arg26[%c16, %c0_41], %46 {strides = array<i32>} : memref<64x32xf32, #tpu.memory_space<vmem>>, vector<8x32xf32>,
    %48 = vector.extract_strided_slice %45 {offsets = [8, 0], sizes = [8, 32], strides = [1, 1]} : vector<16x32xf32> to vector<8x32xf32>
    %c48 = arith.constant 48 : index
    %c0_42 = arith.constant 0 : index
    %49 = vector.load %arg26[%c48, %c0_42] : memref<64x32xf32, #tpu.memory_space<vmem>>, vector<8x32xf32>
    tpu.vector_store %arg26[%c48, %c0_42], %48 {strides = array<i32>} : memref<64x32xf32, #tpu.memory_space<vmem>>, vector<8x32xf32>,
    %c0_43 = arith.constant 0 : index
    %c0_44 = arith.constant 0 : index
    %50 = vector.load %arg9[%c0_43, %c0_44] : memref<8x16xf32, #tpu.memory_space<vmem>>, vector<8x16xf32>
    %cst_45 = arith.constant dense<0.000000e+00> : vector<8x16xf32>
    %51 = tpu.matmul %50, %40, %cst_45 {dimension_numbers = #tpu.dot_dimension_numbers<[1], [0], [0], [1], [0, 0, 1, 1], [], []>} : vector<8x16xf32>, vector<16x16xf32>, vector<8x16xf32> -> vector<8x16xf32>
    %c2 = arith.constant 2 : index
    %c0_46 = arith.constant 0 : index
    %c0_47 = arith.constant 0 : index
    %52 = vector.load %arg13[%c2, %c0_46, %c0_47] : memref<6x16x16xf32, #tpu.memory_space<vmem>>, vector<1x16x16xf32>
    %53 = vector.shape_cast %52 : vector<1x16x16xf32> to vector<16x16xf32>
    %cst_48 = arith.constant dense<0.000000e+00> : vector<8x16xf32>
    %54 = tpu.matmul %51, %53, %cst_48 {dimension_numbers = #tpu.dot_dimension_numbers<[1], [0], [0], [1], [0, 0, 1, 1], [], []>} : vector<8x16xf32>, vector<16x16xf32>, vector<8x16xf32> -> vector<8x16xf32>
    %c0_49 = arith.constant 0 : index
    %c0_50 = arith.constant 0 : index
    %55 = vector.load %arg10[%c0_49, %c0_50] : memref<8x16xf32, #tpu.memory_space<vmem>>, vector<8x16xf32>
    %cst_51 = arith.constant dense<0.000000e+00> : vector<8x16xf32>
    %56 = tpu.matmul %55, %40, %cst_51 {dimension_numbers = #tpu.dot_dimension_numbers<[1], [0], [0], [1], [0, 0, 1, 1], [], []>} : vector<8x16xf32>, vector<16x16xf32>, vector<8x16xf32> -> vector<8x16xf32>
    %c3 = arith.constant 3 : index
    %c0_52 = arith.constant 0 : index
    %c0_53 = arith.constant 0 : index
    %57 = vector.load %arg13[%c3, %c0_52, %c0_53] : memref<6x16x16xf32, #tpu.memory_space<vmem>>, vector<1x16x16xf32>
    %58 = vector.shape_cast %57 : vector<1x16x16xf32> to vector<16x16xf32>
    %cst_54 = arith.constant dense<0.000000e+00> : vector<8x16xf32>
    %59 = tpu.matmul %56, %58, %cst_54 {dimension_numbers = #tpu.dot_dimension_numbers<[1], [0], [0], [1], [0, 0, 1, 1], [], []>} : vector<8x16xf32>, vector<16x16xf32>, vector<8x16xf32> -> vector<8x16xf32>
    %60 = arith.addf %54, %59 : vector<8x16xf32>
    %c1_55 = arith.constant 1 : index
    %c0_56 = arith.constant 0 : index
    %c0_57 = arith.constant 0 : index
    %61 = vector.load %arg14[%c1_55, %c0_56, %c0_57] : memref<3x1x16xf32, #tpu.memory_space<vmem>>, vector<1x1x16xf32>
    %62 = vector.shape_cast %61 : vector<1x1x16xf32> to vector<1x16xf32>
    %63 = vector.broadcast %62 : vector<1x16xf32> to vector<8x16xf32>
    %64 = arith.addf %60, %63 : vector<8x16xf32>
    %cst_58 = arith.constant 0.000000e+00 : f32
    %65 = vector.broadcast %cst_58 : f32 to vector<8x16xf32>
    %66 = arith.cmpf ogt, %64, %65 : vector<8x16xf32>
    %cst_59 = arith.constant 0.000000e+00 : f32
    %67 = vector.broadcast %cst_59 : f32 to vector<8x16xf32>
    %68 = arith.minimumf %64, %67 : vector<8x16xf32>
    %69 = math.exp %68 : vector<8x16xf32>
    %cst_60 = arith.constant 1.000000e+00 : f32
    %70 = vector.broadcast %cst_60 : f32 to vector<8x16xf32>
    %71 = arith.subf %69, %70 : vector<8x16xf32>
    %72 = arith.select %66, %64, %71 : vector<8x16xi1>, vector<8x16xf32>
    %c0_61 = arith.constant 0 : index
    %c0_62 = arith.constant 0 : index
    %73 = vector.load %arg15[%c0_61, %c0_62] : memref<16x32xf32, #tpu.memory_space<vmem>>, vector<16x32xf32>
    %cst_63 = arith.constant dense<0.000000e+00> : vector<8x32xf32>
    %74 = tpu.matmul %72, %73, %cst_63 {dimension_numbers = #tpu.dot_dimension_numbers<[1], [0], [0], [1], [0, 0, 1, 1], [], []>} : vector<8x16xf32>, vector<16x32xf32>, vector<8x32xf32> -> vector<8x32xf32>
    %c0_64 = arith.constant 0 : index
    %c0_65 = arith.constant 0 : index
    %75 = vector.load %arg16[%c0_64, %c0_65] : memref<1x32xf32, #tpu.memory_space<vmem>>, vector<1x32xf32>
    %76 = vector.broadcast %75 : vector<1x32xf32> to vector<8x32xf32>
    %77 = arith.addf %74, %76 : vector<8x32xf32>
    %78 = vector.extract_strided_slice %77 {offsets = [0, 0], sizes = [4, 32], strides = [1, 1]} : vector<8x32xf32> to vector<4x32xf32>
    %c24 = arith.constant 24 : index
    %c0_66 = arith.constant 0 : index
    %79 = vector.load %arg26[%c24, %c0_66] : memref<64x32xf32, #tpu.memory_space<vmem>>, vector<4x32xf32>
    tpu.vector_store %arg26[%c24, %c0_66], %78 {strides = array<i32>} : memref<64x32xf32, #tpu.memory_space<vmem>>, vector<4x32xf32>,
    %80 = vector.extract_strided_slice %77 {offsets = [4, 0], sizes = [4, 32], strides = [1, 1]} : vector<8x32xf32> to vector<4x32xf32>
    %c56 = arith.constant 56 : index
    %c0_67 = arith.constant 0 : index
    %81 = vector.load %arg26[%c56, %c0_67] : memref<64x32xf32, #tpu.memory_space<vmem>>, vector<4x32xf32>
    tpu.vector_store %arg26[%c56, %c0_67], %80 {strides = array<i32>} : memref<64x32xf32, #tpu.memory_space<vmem>>, vector<4x32xf32>,
    %c0_68 = arith.constant 0 : index
    %c0_69 = arith.constant 0 : index
    %82 = vector.load %arg11[%c0_68, %c0_69] : memref<4x8xf32, #tpu.memory_space<vmem>>, vector<4x8xf32>
    %cst_70 = arith.constant dense<0.000000e+00> : vector<4x16xf32>
    %83 = tpu.matmul %82, %72, %cst_70 {dimension_numbers = #tpu.dot_dimension_numbers<[1], [0], [0], [1], [0, 0, 1, 1], [], []>} : vector<4x8xf32>, vector<8x16xf32>, vector<4x16xf32> -> vector<4x16xf32>
    %c4 = arith.constant 4 : index
    %c0_71 = arith.constant 0 : index
    %c0_72 = arith.constant 0 : index
    %84 = vector.load %arg13[%c4, %c0_71, %c0_72] : memref<6x16x16xf32, #tpu.memory_space<vmem>>, vector<1x16x16xf32>
    %85 = vector.shape_cast %84 : vector<1x16x16xf32> to vector<16x16xf32>
    %cst_73 = arith.constant dense<0.000000e+00> : vector<4x16xf32>
    %86 = tpu.matmul %83, %85, %cst_73 {dimension_numbers = #tpu.dot_dimension_numbers<[1], [0], [0], [1], [0, 0, 1, 1], [], []>} : vector<4x16xf32>, vector<16x16xf32>, vector<4x16xf32> -> vector<4x16xf32>
    %c0_74 = arith.constant 0 : index
    %c0_75 = arith.constant 0 : index
    %87 = vector.load %arg12[%c0_74, %c0_75] : memref<4x8xf32, #tpu.memory_space<vmem>>, vector<4x8xf32>
    %cst_76 = arith.constant dense<0.000000e+00> : vector<4x16xf32>
    %88 = tpu.matmul %87, %72, %cst_76 {dimension_numbers = #tpu.dot_dimension_numbers<[1], [0], [0], [1], [0, 0, 1, 1], [], []>} : vector<4x8xf32>, vector<8x16xf32>, vector<4x16xf32> -> vector<4x16xf32>
    %c5 = arith.constant 5 : index
    %c0_77 = arith.constant 0 : index
    %c0_78 = arith.constant 0 : index
    %89 = vector.load %arg13[%c5, %c0_77, %c0_78] : memref<6x16x16xf32, #tpu.memory_space<vmem>>, vector<1x16x16xf32>
    %90 = vector.shape_cast %89 : vector<1x16x16xf32> to vector<16x16xf32>
    %cst_79 = arith.constant dense<0.000000e+00> : vector<4x16xf32>
    %91 = tpu.matmul %88, %90, %cst_79 {dimension_numbers = #tpu.dot_dimension_numbers<[1], [0], [0], [1], [0, 0, 1, 1], [], []>} : vector<4x16xf32>, vector<16x16xf32>, vector<4x16xf32> -> vector<4x16xf32>
    %92 = arith.addf %86, %91 : vector<4x16xf32>
    %c2_80 = arith.constant 2 : index
    %c0_81 = arith.constant 0 : index
    %c0_82 = arith.constant 0 : index
    %93 = vector.load %arg14[%c2_80, %c0_81, %c0_82] : memref<3x1x16xf32, #tpu.memory_space<vmem>>, vector<1x1x16xf32>
    %94 = vector.shape_cast %93 : vector<1x1x16xf32> to vector<1x16xf32>
    %95 = vector.broadcast %94 : vector<1x16xf32> to vector<4x16xf32>
    %96 = arith.addf %92, %95 : vector<4x16xf32>
    %cst_83 = arith.constant 0.000000e+00 : f32
    %97 = vector.broadcast %cst_83 : f32 to vector<4x16xf32>
    %98 = arith.cmpf ogt, %96, %97 : vector<4x16xf32>
    %cst_84 = arith.constant 0.000000e+00 : f32
    %99 = vector.broadcast %cst_84 : f32 to vector<4x16xf32>
    %100 = arith.minimumf %96, %99 : vector<4x16xf32>
    %101 = math.exp %100 : vector<4x16xf32>
    %cst_85 = arith.constant 1.000000e+00 : f32
    %102 = vector.broadcast %cst_85 : f32 to vector<4x16xf32>
    %103 = arith.subf %101, %102 : vector<4x16xf32>
    %104 = arith.select %98, %96, %103 : vector<4x16xi1>, vector<4x16xf32>
    %c0_86 = arith.constant 0 : index
    %c0_87 = arith.constant 0 : index
    %105 = vector.load %arg15[%c0_86, %c0_87] : memref<16x32xf32, #tpu.memory_space<vmem>>, vector<16x32xf32>
    %cst_88 = arith.constant dense<0.000000e+00> : vector<4x32xf32>
    %106 = tpu.matmul %104, %105, %cst_88 {dimension_numbers = #tpu.dot_dimension_numbers<[1], [0], [0], [1], [0, 0, 1, 1], [], []>} : vector<4x16xf32>, vector<16x32xf32>, vector<4x32xf32> -> vector<4x32xf32>
    %c0_89 = arith.constant 0 : index
    %c0_90 = arith.constant 0 : index
    %107 = vector.load %arg16[%c0_89, %c0_90] : memref<1x32xf32, #tpu.memory_space<vmem>>, vector<1x32xf32>
    %108 = vector.broadcast %107 : vector<1x32xf32> to vector<4x32xf32>
    %109 = arith.addf %106, %108 : vector<4x32xf32>
    %110 = vector.extract_strided_slice %109 {offsets = [0, 0], sizes = [2, 32], strides = [1, 1]} : vector<4x32xf32> to vector<2x32xf32>
    %c28 = arith.constant 28 : index
    %c0_91 = arith.constant 0 : index
    %111 = vector.load %arg26[%c28, %c0_91] : memref<64x32xf32, #tpu.memory_space<vmem>>, vector<2x32xf32>
    tpu.vector_store %arg26[%c28, %c0_91], %110 {strides = array<i32>} : memref<64x32xf32, #tpu.memory_space<vmem>>, vector<2x32xf32>,
    %112 = vector.extract_strided_slice %109 {offsets = [2, 0], sizes = [2, 32], strides = [1, 1]} : vector<4x32xf32> to vector<2x32xf32>
    %c60 = arith.constant 60 : index
    %c0_92 = arith.constant 0 : index
    %113 = vector.load %arg26[%c60, %c0_92] : memref<64x32xf32, #tpu.memory_space<vmem>>, vector<2x32xf32>
    tpu.vector_store %arg26[%c60, %c0_92], %112 {strides = array<i32>} : memref<64x32xf32, #tpu.memory_space<vmem>>, vector<2x32xf32>,
    %c0_93 = arith.constant 0 : index
    %c0_94 = arith.constant 0 : index
    %114 = vector.load %arg26[%c0_93, %c0_94] : memref<64x32xf32, #tpu.memory_space<vmem>>, vector<64x32xf32>
    %c0_95 = arith.constant 0 : index
    %c0_96 = arith.constant 0 : index
    %115 = vector.load %arg17[%c0_95, %c0_96] : memref<1x32xf32, #tpu.memory_space<vmem>>, vector<1x32xf32>
    %c0_97 = arith.constant 0 : index
    %c0_98 = arith.constant 0 : index
    %116 = vector.load %arg18[%c0_97, %c0_98] : memref<1x32xf32, #tpu.memory_space<vmem>>, vector<1x32xf32>
    %cst_99 = arith.constant dense<0.000000e+00> : vector<64xf32>
    %117 = vector.multi_reduction <add>, %114, %cst_99 [1] : vector<64x32xf32> to vector<64xf32>
    %118 = vector.shape_cast %117 : vector<64xf32> to vector<64x1xf32>
    %cst_100 = arith.constant 3.200000e+01 : f32
    %119 = vector.broadcast %cst_100 : f32 to vector<64x1xf32>
    %120 = arith.divf %118, %119 : vector<64x1xf32>
    %121 = vector.broadcast %120 : vector<64x1xf32> to vector<64x32xf32>
    %122 = arith.subf %114, %121 : vector<64x32xf32>
    %123 = arith.mulf %122, %122 : vector<64x32xf32>
    %cst_101 = arith.constant dense<0.000000e+00> : vector<64xf32>
    %124 = vector.multi_reduction <add>, %123, %cst_101 [1] : vector<64x32xf32> to vector<64xf32>
    %125 = vector.shape_cast %124 : vector<64xf32> to vector<64x1xf32>
    %cst_102 = arith.constant 3.200000e+01 : f32
    %126 = vector.broadcast %cst_102 : f32 to vector<64x1xf32>
    %127 = arith.divf %125, %126 : vector<64x1xf32>
    %cst_103 = arith.constant 9.99999974E-6 : f32
    %128 = vector.broadcast %cst_103 : f32 to vector<64x1xf32>
    %129 = arith.addf %127, %128 : vector<64x1xf32>
    %130 = math.rsqrt %129 : vector<64x1xf32>
    %131 = vector.broadcast %130 : vector<64x1xf32> to vector<64x32xf32>
    %132 = arith.mulf %122, %131 : vector<64x32xf32>
    %133 = vector.broadcast %115 : vector<1x32xf32> to vector<64x32xf32>
    %134 = arith.mulf %132, %133 : vector<64x32xf32>
    %135 = vector.broadcast %116 : vector<1x32xf32> to vector<64x32xf32>
    %136 = arith.addf %134, %135 : vector<64x32xf32>
    %c0_104 = arith.constant 0 : index
    %c0_105 = arith.constant 0 : index
    %137 = vector.load %arg2[%c0_104, %c0_105] : memref<64x64xf32, #tpu.memory_space<vmem>>, vector<64x64xf32>
    %c0_106 = arith.constant 0 : index
    %c0_107 = arith.constant 0 : index
    %c0_108 = arith.constant 0 : index
    %138 = vector.load %arg19[%c0_106, %c0_107, %c0_108] : memref<2x32x128xf32, #tpu.memory_space<vmem>>, vector<1x32x128xf32>
    %139 = vector.shape_cast %138 : vector<1x32x128xf32> to vector<32x128xf32>
    %cst_109 = arith.constant dense<0.000000e+00> : vector<64x128xf32>
    %140 = tpu.matmul %136, %139, %cst_109 {dimension_numbers = #tpu.dot_dimension_numbers<[1], [0], [0], [1], [0, 0, 1, 1], [], []>} : vector<64x32xf32>, vector<32x128xf32>, vector<64x128xf32> -> vector<64x128xf32>
    %cst_110 = arith.constant 0.000000e+00 : f32
    %141 = vector.broadcast %cst_110 : f32 to vector<64x32xf32>
    %142 = vector.extract_strided_slice %140 {offsets = [0, 0], sizes = [64, 16], strides = [1, 1]} : vector<64x128xf32> to vector<64x16xf32>
    %143 = vector.extract_strided_slice %140 {offsets = [0, 32], sizes = [64, 16], strides = [1, 1]} : vector<64x128xf32> to vector<64x16xf32>
    %144 = vector.extract_strided_slice %140 {offsets = [0, 64], sizes = [64, 32], strides = [1, 1]} : vector<64x128xf32> to vector<64x32xf32>
    %cst_111 = arith.constant dense<0.000000e+00> : vector<64x64xf32>
    %145 = tpu.matmul %142, %143, %cst_111 {dimension_numbers = #tpu.dot_dimension_numbers<[1], [1], [0], [0], [0, 0, 1, 0], [], []>} : vector<64x16xf32>, vector<64x16xf32>, vector<64x64xf32> -> vector<64x64xf32>
    %146 = arith.addf %145, %137 : vector<64x64xf32>
    %cst_112 = arith.constant dense<0xFF800000> : vector<64xf32>
    %147 = vector.multi_reduction <maximumf>, %146, %cst_112 [1] : vector<64x64xf32> to vector<64xf32>
    %148 = vector.shape_cast %147 : vector<64xf32> to vector<64x1xf32>
    %149 = vector.broadcast %148 : vector<64x1xf32> to vector<64x64xf32>
    %150 = arith.subf %146, %149 : vector<64x64xf32>
    %151 = math.exp %150 : vector<64x64xf32>
    %cst_113 = arith.constant dense<0.000000e+00> : vector<64xf32>
    %152 = vector.multi_reduction <add>, %151, %cst_113 [1] : vector<64x64xf32> to vector<64xf32>
    %153 = vector.shape_cast %152 : vector<64xf32> to vector<64x1xf32>
    %154 = tpu.reciprocal %153 {approx = true} : vector<64x1xf32> -> vector<64x1xf32>
    %155 = vector.broadcast %154 : vector<64x1xf32> to vector<64x64xf32>
    %156 = arith.mulf %151, %155 : vector<64x64xf32>
    %cst_114 = arith.constant dense<0.000000e+00> : vector<64x32xf32>
    %157 = tpu.matmul %156, %144, %cst_114 {dimension_numbers = #tpu.dot_dimension_numbers<[1], [0], [0], [1], [0, 0, 1, 1], [], []>} : vector<64x64xf32>, vector<64x32xf32>, vector<64x32xf32> -> vector<64x32xf32>
    %158 = arith.addf %141, %157 : vector<64x32xf32>
    %159 = vector.extract_strided_slice %140 {offsets = [0, 16], sizes = [64, 16], strides = [1, 1]} : vector<64x128xf32> to vector<64x16xf32>
    %160 = vector.extract_strided_slice %140 {offsets = [0, 48], sizes = [64, 16], strides = [1, 1]} : vector<64x128xf32> to vector<64x16xf32>
    %161 = vector.extract_strided_slice %140 {offsets = [0, 96], sizes = [64, 32], strides = [1, 1]} : vector<64x128xf32> to vector<64x32xf32>
    %cst_115 = arith.constant dense<0.000000e+00> : vector<64x64xf32>
    %162 = tpu.matmul %159, %160, %cst_115 {dimension_numbers = #tpu.dot_dimension_numbers<[1], [1], [0], [0], [0, 0, 1, 0], [], []>} : vector<64x16xf32>, vector<64x16xf32>, vector<64x64xf32> -> vector<64x64xf32>
    %163 = arith.addf %162, %137 : vector<64x64xf32>
    %cst_116 = arith.constant dense<0xFF800000> : vector<64xf32>
    %164 = vector.multi_reduction <maximumf>, %163, %cst_116 [1] : vector<64x64xf32> to vector<64xf32>
    %165 = vector.shape_cast %164 : vector<64xf32> to vector<64x1xf32>
    %166 = vector.broadcast %165 : vector<64x1xf32> to vector<64x64xf32>
    %167 = arith.subf %163, %166 : vector<64x64xf32>
    %168 = math.exp %167 : vector<64x64xf32>
    %cst_117 = arith.constant dense<0.000000e+00> : vector<64xf32>
    %169 = vector.multi_reduction <add>, %168, %cst_117 [1] : vector<64x64xf32> to vector<64xf32>
    %170 = vector.shape_cast %169 : vector<64xf32> to vector<64x1xf32>
    %171 = tpu.reciprocal %170 {approx = true} : vector<64x1xf32> -> vector<64x1xf32>
    %172 = vector.broadcast %171 : vector<64x1xf32> to vector<64x64xf32>
    %173 = arith.mulf %168, %172 : vector<64x64xf32>
    %cst_118 = arith.constant dense<0.000000e+00> : vector<64x32xf32>
    %174 = tpu.matmul %173, %161, %cst_118 {dimension_numbers = #tpu.dot_dimension_numbers<[1], [0], [0], [1], [0, 0, 1, 1], [], []>} : vector<64x64xf32>, vector<64x32xf32>, vector<64x32xf32> -> vector<64x32xf32>
    %175 = arith.addf %158, %174 : vector<64x32xf32>
    %c0_119 = arith.constant 0 : index
    %c0_120 = arith.constant 0 : index
    %c0_121 = arith.constant 0 : index
    %176 = vector.load %arg20[%c0_119, %c0_120, %c0_121] : memref<12x1x32xf32, #tpu.memory_space<vmem>>, vector<1x1x32xf32>
    %177 = vector.shape_cast %176 : vector<1x1x32xf32> to vector<1x32xf32>
    %178 = vector.broadcast %177 : vector<1x32xf32> to vector<64x32xf32>
    %179 = arith.addf %175, %178 : vector<64x32xf32>
    %180 = arith.addf %179, %136 : vector<64x32xf32>
    %c1_122 = arith.constant 1 : index
    %c0_123 = arith.constant 0 : index
    %c0_124 = arith.constant 0 : index
    %181 = vector.load %arg20[%c1_122, %c0_123, %c0_124] : memref<12x1x32xf32, #tpu.memory_space<vmem>>, vector<1x1x32xf32>
    %182 = vector.shape_cast %181 : vector<1x1x32xf32> to vector<1x32xf32>
    %c2_125 = arith.constant 2 : index
    %c0_126 = arith.constant 0 : index
    %c0_127 = arith.constant 0 : index
    %183 = vector.load %arg20[%c2_125, %c0_126, %c0_127] : memref<12x1x32xf32, #tpu.memory_space<vmem>>, vector<1x1x32xf32>
    %184 = vector.shape_cast %183 : vector<1x1x32xf32> to vector<1x32xf32>
    %cst_128 = arith.constant dense<0.000000e+00> : vector<64xf32>
    %185 = vector.multi_reduction <add>, %180, %cst_128 [1] : vector<64x32xf32> to vector<64xf32>
    %186 = vector.shape_cast %185 : vector<64xf32> to vector<64x1xf32>
    %cst_129 = arith.constant 3.200000e+01 : f32
    %187 = vector.broadcast %cst_129 : f32 to vector<64x1xf32>
    %188 = arith.divf %186, %187 : vector<64x1xf32>
    %189 = vector.broadcast %188 : vector<64x1xf32> to vector<64x32xf32>
    %190 = arith.subf %180, %189 : vector<64x32xf32>
    %191 = arith.mulf %190, %190 : vector<64x32xf32>
    %cst_130 = arith.constant dense<0.000000e+00> : vector<64xf32>
    %192 = vector.multi_reduction <add>, %191, %cst_130 [1] : vector<64x32xf32> to vector<64xf32>
    %193 = vector.shape_cast %192 : vector<64xf32> to vector<64x1xf32>
    %cst_131 = arith.constant 3.200000e+01 : f32
    %194 = vector.broadcast %cst_131 : f32 to vector<64x1xf32>
    %195 = arith.divf %193, %194 : vector<64x1xf32>
    %cst_132 = arith.constant 9.99999997E-7 : f32
    %196 = vector.broadcast %cst_132 : f32 to vector<64x1xf32>
    %197 = arith.addf %195, %196 : vector<64x1xf32>
    %198 = math.rsqrt %197 : vector<64x1xf32>
    %199 = vector.broadcast %198 : vector<64x1xf32> to vector<64x32xf32>
    %200 = arith.mulf %190, %199 : vector<64x32xf32>
    %201 = vector.broadcast %182 : vector<1x32xf32> to vector<64x32xf32>
    %202 = arith.mulf %200, %201 : vector<64x32xf32>
    %203 = vector.broadcast %184 : vector<1x32xf32> to vector<64x32xf32>
    %204 = arith.addf %202, %203 : vector<64x32xf32>
    %c0_133 = arith.constant 0 : index
    %c0_134 = arith.constant 0 : index
    %c0_135 = arith.constant 0 : index
    %205 = vector.load %arg21[%c0_133, %c0_134, %c0_135] : memref<2x32x64xf32, #tpu.memory_space<vmem>>, vector<1x32x64xf32>
    %206 = vector.shape_cast %205 : vector<1x32x64xf32> to vector<32x64xf32>
    %cst_136 = arith.constant dense<0.000000e+00> : vector<64x64xf32>
    %207 = tpu.matmul %204, %206, %cst_136 {dimension_numbers = #tpu.dot_dimension_numbers<[1], [0], [0], [1], [0, 0, 1, 1], [], []>} : vector<64x32xf32>, vector<32x64xf32>, vector<64x64xf32> -> vector<64x64xf32>
    %c0_137 = arith.constant 0 : index
    %c0_138 = arith.constant 0 : index
    %c0_139 = arith.constant 0 : index
    %208 = vector.load %arg22[%c0_137, %c0_138, %c0_139] : memref<2x1x64xf32, #tpu.memory_space<vmem>>, vector<1x1x64xf32>
    %209 = vector.shape_cast %208 : vector<1x1x64xf32> to vector<1x64xf32>
    %210 = vector.broadcast %209 : vector<1x64xf32> to vector<64x64xf32>
    %211 = arith.addf %207, %210 : vector<64x64xf32>
    %cst_140 = arith.constant 5.000000e-01 : f32
    %212 = vector.broadcast %cst_140 : f32 to vector<64x64xf32>
    %213 = arith.mulf %212, %211 : vector<64x64xf32>
    %cst_141 = arith.constant 0.707106769 : f32
    %214 = vector.broadcast %cst_141 : f32 to vector<64x64xf32>
    %215 = arith.mulf %211, %214 : vector<64x64xf32>
    %216 = math.absf %215 : vector<64x64xf32>
    %cst_142 = arith.constant 0.327591091 : f32
    %217 = vector.broadcast %cst_142 : f32 to vector<64x64xf32>
    %218 = arith.mulf %217, %216 : vector<64x64xf32>
    %cst_143 = arith.constant 1.000000e+00 : f32
    %219 = vector.broadcast %cst_143 : f32 to vector<64x64xf32>
    %220 = arith.addf %219, %218 : vector<64x64xf32>
    %cst_144 = arith.constant 1.000000e+00 : f32
    %221 = vector.broadcast %cst_144 : f32 to vector<64x64xf32>
    %222 = arith.divf %221, %220 : vector<64x64xf32>
    %cst_145 = arith.constant 1.06140542 : f32
    %223 = vector.broadcast %cst_145 : f32 to vector<64x64xf32>
    %224 = arith.mulf %223, %222 : vector<64x64xf32>
    %cst_146 = arith.constant -1.45315206 : f32
    %225 = vector.broadcast %cst_146 : f32 to vector<64x64xf32>
    %226 = arith.addf %224, %225 : vector<64x64xf32>
    %227 = arith.mulf %226, %222 : vector<64x64xf32>
    %cst_147 = arith.constant 1.42141378 : f32
    %228 = vector.broadcast %cst_147 : f32 to vector<64x64xf32>
    %229 = arith.addf %227, %228 : vector<64x64xf32>
    %230 = arith.mulf %229, %222 : vector<64x64xf32>
    %cst_148 = arith.constant -0.284496725 : f32
    %231 = vector.broadcast %cst_148 : f32 to vector<64x64xf32>
    %232 = arith.addf %230, %231 : vector<64x64xf32>
    %233 = arith.mulf %232, %222 : vector<64x64xf32>
    %cst_149 = arith.constant 0.254829586 : f32
    %234 = vector.broadcast %cst_149 : f32 to vector<64x64xf32>
    %235 = arith.addf %233, %234 : vector<64x64xf32>
    %236 = arith.mulf %235, %222 : vector<64x64xf32>
    %cst_150 = arith.constant 0.000000e+00 : f32
    %237 = vector.broadcast %cst_150 : f32 to vector<64x64xf32>
    %238 = arith.subf %237, %216 : vector<64x64xf32>
    %239 = arith.mulf %238, %216 : vector<64x64xf32>
    %240 = math.exp %239 : vector<64x64xf32>
    %241 = arith.mulf %236, %240 : vector<64x64xf32>
    %cst_151 = arith.constant 1.000000e+00 : f32
    %242 = vector.broadcast %cst_151 : f32 to vector<64x64xf32>
    %243 = arith.subf %242, %241 : vector<64x64xf32>
    %cst_152 = arith.constant 0.000000e+00 : f32
    %244 = vector.broadcast %cst_152 : f32 to vector<64x64xf32>
    %245 = arith.cmpf olt, %215, %244 : vector<64x64xf32>
    %cst_153 = arith.constant 0.000000e+00 : f32
    %246 = vector.broadcast %cst_153 : f32 to vector<64x64xf32>
    %247 = arith.subf %246, %243 : vector<64x64xf32>
    %248 = arith.select %245, %247, %243 : vector<64x64xi1>, vector<64x64xf32>
    %cst_154 = arith.constant 1.000000e+00 : f32
    %249 = vector.broadcast %cst_154 : f32 to vector<64x64xf32>
    %250 = arith.addf %249, %248 : vector<64x64xf32>
    %251 = arith.mulf %213, %250 : vector<64x64xf32>
    %c0_155 = arith.constant 0 : index
    %c0_156 = arith.constant 0 : index
    %c0_157 = arith.constant 0 : index
    %252 = vector.load %arg23[%c0_155, %c0_156, %c0_157] : memref<2x64x32xf32, #tpu.memory_space<vmem>>, vector<1x64x32xf32>
    %253 = vector.shape_cast %252 : vector<1x64x32xf32> to vector<64x32xf32>
    %cst_158 = arith.constant dense<0.000000e+00> : vector<64x32xf32>
    %254 = tpu.matmul %251, %253, %cst_158 {dimension_numbers = #tpu.dot_dimension_numbers<[1], [0], [0], [1], [0, 0, 1, 1], [], []>} : vector<64x64xf32>, vector<64x32xf32>, vector<64x32xf32> -> vector<64x32xf32>
    %c3_159 = arith.constant 3 : index
    %c0_160 = arith.constant 0 : index
    %c0_161 = arith.constant 0 : index
    %255 = vector.load %arg20[%c3_159, %c0_160, %c0_161] : memref<12x1x32xf32, #tpu.memory_space<vmem>>, vector<1x1x32xf32>
    %256 = vector.shape_cast %255 : vector<1x1x32xf32> to vector<1x32xf32>
    %257 = vector.broadcast %256 : vector<1x32xf32> to vector<64x32xf32>
    %258 = arith.addf %254, %257 : vector<64x32xf32>
    %259 = arith.addf %258, %204 : vector<64x32xf32>
    %c4_162 = arith.constant 4 : index
    %c0_163 = arith.constant 0 : index
    %c0_164 = arith.constant 0 : index
    %260 = vector.load %arg20[%c4_162, %c0_163, %c0_164] : memref<12x1x32xf32, #tpu.memory_space<vmem>>, vector<1x1x32xf32>
    %261 = vector.shape_cast %260 : vector<1x1x32xf32> to vector<1x32xf32>
    %c5_165 = arith.constant 5 : index
    %c0_166 = arith.constant 0 : index
    %c0_167 = arith.constant 0 : index
    %262 = vector.load %arg20[%c5_165, %c0_166, %c0_167] : memref<12x1x32xf32, #tpu.memory_space<vmem>>, vector<1x1x32xf32>
    %263 = vector.shape_cast %262 : vector<1x1x32xf32> to vector<1x32xf32>
    %cst_168 = arith.constant dense<0.000000e+00> : vector<64xf32>
    %264 = vector.multi_reduction <add>, %259, %cst_168 [1] : vector<64x32xf32> to vector<64xf32>
    %265 = vector.shape_cast %264 : vector<64xf32> to vector<64x1xf32>
    %cst_169 = arith.constant 3.200000e+01 : f32
    %266 = vector.broadcast %cst_169 : f32 to vector<64x1xf32>
    %267 = arith.divf %265, %266 : vector<64x1xf32>
    %268 = vector.broadcast %267 : vector<64x1xf32> to vector<64x32xf32>
    %269 = arith.subf %259, %268 : vector<64x32xf32>
    %270 = arith.mulf %269, %269 : vector<64x32xf32>
    %cst_170 = arith.constant dense<0.000000e+00> : vector<64xf32>
    %271 = vector.multi_reduction <add>, %270, %cst_170 [1] : vector<64x32xf32> to vector<64xf32>
    %272 = vector.shape_cast %271 : vector<64xf32> to vector<64x1xf32>
    %cst_171 = arith.constant 3.200000e+01 : f32
    %273 = vector.broadcast %cst_171 : f32 to vector<64x1xf32>
    %274 = arith.divf %272, %273 : vector<64x1xf32>
    %cst_172 = arith.constant 9.99999997E-7 : f32
    %275 = vector.broadcast %cst_172 : f32 to vector<64x1xf32>
    %276 = arith.addf %274, %275 : vector<64x1xf32>
    %277 = math.rsqrt %276 : vector<64x1xf32>
    %278 = vector.broadcast %277 : vector<64x1xf32> to vector<64x32xf32>
    %279 = arith.mulf %269, %278 : vector<64x32xf32>
    %280 = vector.broadcast %261 : vector<1x32xf32> to vector<64x32xf32>
    %281 = arith.mulf %279, %280 : vector<64x32xf32>
    %282 = vector.broadcast %263 : vector<1x32xf32> to vector<64x32xf32>
    %283 = arith.addf %281, %282 : vector<64x32xf32>
    %c1_173 = arith.constant 1 : index
    %c0_174 = arith.constant 0 : index
    %c0_175 = arith.constant 0 : index
    %284 = vector.load %arg19[%c1_173, %c0_174, %c0_175] : memref<2x32x128xf32, #tpu.memory_space<vmem>>, vector<1x32x128xf32>
    %285 = vector.shape_cast %284 : vector<1x32x128xf32> to vector<32x128xf32>
    %cst_176 = arith.constant dense<0.000000e+00> : vector<64x128xf32>
    %286 = tpu.matmul %283, %285, %cst_176 {dimension_numbers = #tpu.dot_dimension_numbers<[1], [0], [0], [1], [0, 0, 1, 1], [], []>} : vector<64x32xf32>, vector<32x128xf32>, vector<64x128xf32> -> vector<64x128xf32>
    %cst_177 = arith.constant 0.000000e+00 : f32
    %287 = vector.broadcast %cst_177 : f32 to vector<64x32xf32>
    %288 = vector.extract_strided_slice %286 {offsets = [0, 0], sizes = [64, 16], strides = [1, 1]} : vector<64x128xf32> to vector<64x16xf32>
    %289 = vector.extract_strided_slice %286 {offsets = [0, 32], sizes = [64, 16], strides = [1, 1]} : vector<64x128xf32> to vector<64x16xf32>
    %290 = vector.extract_strided_slice %286 {offsets = [0, 64], sizes = [64, 32], strides = [1, 1]} : vector<64x128xf32> to vector<64x32xf32>
    %cst_178 = arith.constant dense<0.000000e+00> : vector<64x64xf32>
    %291 = tpu.matmul %288, %289, %cst_178 {dimension_numbers = #tpu.dot_dimension_numbers<[1], [1], [0], [0], [0, 0, 1, 0], [], []>} : vector<64x16xf32>, vector<64x16xf32>, vector<64x64xf32> -> vector<64x64xf32>
    %292 = arith.addf %291, %137 : vector<64x64xf32>
    %cst_179 = arith.constant dense<0xFF800000> : vector<64xf32>
    %293 = vector.multi_reduction <maximumf>, %292, %cst_179 [1] : vector<64x64xf32> to vector<64xf32>
    %294 = vector.shape_cast %293 : vector<64xf32> to vector<64x1xf32>
    %295 = vector.broadcast %294 : vector<64x1xf32> to vector<64x64xf32>
    %296 = arith.subf %292, %295 : vector<64x64xf32>
    %297 = math.exp %296 : vector<64x64xf32>
    %cst_180 = arith.constant dense<0.000000e+00> : vector<64xf32>
    %298 = vector.multi_reduction <add>, %297, %cst_180 [1] : vector<64x64xf32> to vector<64xf32>
    %299 = vector.shape_cast %298 : vector<64xf32> to vector<64x1xf32>
    %300 = tpu.reciprocal %299 {approx = true} : vector<64x1xf32> -> vector<64x1xf32>
    %301 = vector.broadcast %300 : vector<64x1xf32> to vector<64x64xf32>
    %302 = arith.mulf %297, %301 : vector<64x64xf32>
    %cst_181 = arith.constant dense<0.000000e+00> : vector<64x32xf32>
    %303 = tpu.matmul %302, %290, %cst_181 {dimension_numbers = #tpu.dot_dimension_numbers<[1], [0], [0], [1], [0, 0, 1, 1], [], []>} : vector<64x64xf32>, vector<64x32xf32>, vector<64x32xf32> -> vector<64x32xf32>
    %304 = arith.addf %287, %303 : vector<64x32xf32>
    %305 = vector.extract_strided_slice %286 {offsets = [0, 16], sizes = [64, 16], strides = [1, 1]} : vector<64x128xf32> to vector<64x16xf32>
    %306 = vector.extract_strided_slice %286 {offsets = [0, 48], sizes = [64, 16], strides = [1, 1]} : vector<64x128xf32> to vector<64x16xf32>
    %307 = vector.extract_strided_slice %286 {offsets = [0, 96], sizes = [64, 32], strides = [1, 1]} : vector<64x128xf32> to vector<64x32xf32>
    %cst_182 = arith.constant dense<0.000000e+00> : vector<64x64xf32>
    %308 = tpu.matmul %305, %306, %cst_182 {dimension_numbers = #tpu.dot_dimension_numbers<[1], [1], [0], [0], [0, 0, 1, 0], [], []>} : vector<64x16xf32>, vector<64x16xf32>, vector<64x64xf32> -> vector<64x64xf32>
    %309 = arith.addf %308, %137 : vector<64x64xf32>
    %cst_183 = arith.constant dense<0xFF800000> : vector<64xf32>
    %310 = vector.multi_reduction <maximumf>, %309, %cst_183 [1] : vector<64x64xf32> to vector<64xf32>
    %311 = vector.shape_cast %310 : vector<64xf32> to vector<64x1xf32>
    %312 = vector.broadcast %311 : vector<64x1xf32> to vector<64x64xf32>
    %313 = arith.subf %309, %312 : vector<64x64xf32>
    %314 = math.exp %313 : vector<64x64xf32>
    %cst_184 = arith.constant dense<0.000000e+00> : vector<64xf32>
    %315 = vector.multi_reduction <add>, %314, %cst_184 [1] : vector<64x64xf32> to vector<64xf32>
    %316 = vector.shape_cast %315 : vector<64xf32> to vector<64x1xf32>
    %317 = tpu.reciprocal %316 {approx = true} : vector<64x1xf32> -> vector<64x1xf32>
    %318 = vector.broadcast %317 : vector<64x1xf32> to vector<64x64xf32>
    %319 = arith.mulf %314, %318 : vector<64x64xf32>
    %cst_185 = arith.constant dense<0.000000e+00> : vector<64x32xf32>
    %320 = tpu.matmul %319, %307, %cst_185 {dimension_numbers = #tpu.dot_dimension_numbers<[1], [0], [0], [1], [0, 0, 1, 1], [], []>} : vector<64x64xf32>, vector<64x32xf32>, vector<64x32xf32> -> vector<64x32xf32>
    %321 = arith.addf %304, %320 : vector<64x32xf32>
    %c6 = arith.constant 6 : index
    %c0_186 = arith.constant 0 : index
    %c0_187 = arith.constant 0 : index
    %322 = vector.load %arg20[%c6, %c0_186, %c0_187] : memref<12x1x32xf32, #tpu.memory_space<vmem>>, vector<1x1x32xf32>
    %323 = vector.shape_cast %322 : vector<1x1x32xf32> to vector<1x32xf32>
    %324 = vector.broadcast %323 : vector<1x32xf32> to vector<64x32xf32>
    %325 = arith.addf %321, %324 : vector<64x32xf32>
    %326 = arith.addf %325, %283 : vector<64x32xf32>
    %c7 = arith.constant 7 : index
    %c0_188 = arith.constant 0 : index
    %c0_189 = arith.constant 0 : index
    %327 = vector.load %arg20[%c7, %c0_188, %c0_189] : memref<12x1x32xf32, #tpu.memory_space<vmem>>, vector<1x1x32xf32>
    %328 = vector.shape_cast %327 : vector<1x1x32xf32> to vector<1x32xf32>
    %c8 = arith.constant 8 : index
    %c0_190 = arith.constant 0 : index
    %c0_191 = arith.constant 0 : index
    %329 = vector.load %arg20[%c8, %c0_190, %c0_191] : memref<12x1x32xf32, #tpu.memory_space<vmem>>, vector<1x1x32xf32>
    %330 = vector.shape_cast %329 : vector<1x1x32xf32> to vector<1x32xf32>
    %cst_192 = arith.constant dense<0.000000e+00> : vector<64xf32>
    %331 = vector.multi_reduction <add>, %326, %cst_192 [1] : vector<64x32xf32> to vector<64xf32>
    %332 = vector.shape_cast %331 : vector<64xf32> to vector<64x1xf32>
    %cst_193 = arith.constant 3.200000e+01 : f32
    %333 = vector.broadcast %cst_193 : f32 to vector<64x1xf32>
    %334 = arith.divf %332, %333 : vector<64x1xf32>
    %335 = vector.broadcast %334 : vector<64x1xf32> to vector<64x32xf32>
    %336 = arith.subf %326, %335 : vector<64x32xf32>
    %337 = arith.mulf %336, %336 : vector<64x32xf32>
    %cst_194 = arith.constant dense<0.000000e+00> : vector<64xf32>
    %338 = vector.multi_reduction <add>, %337, %cst_194 [1] : vector<64x32xf32> to vector<64xf32>
    %339 = vector.shape_cast %338 : vector<64xf32> to vector<64x1xf32>
    %cst_195 = arith.constant 3.200000e+01 : f32
    %340 = vector.broadcast %cst_195 : f32 to vector<64x1xf32>
    %341 = arith.divf %339, %340 : vector<64x1xf32>
    %cst_196 = arith.constant 9.99999997E-7 : f32
    %342 = vector.broadcast %cst_196 : f32 to vector<64x1xf32>
    %343 = arith.addf %341, %342 : vector<64x1xf32>
    %344 = math.rsqrt %343 : vector<64x1xf32>
    %345 = vector.broadcast %344 : vector<64x1xf32> to vector<64x32xf32>
    %346 = arith.mulf %336, %345 : vector<64x32xf32>
    %347 = vector.broadcast %328 : vector<1x32xf32> to vector<64x32xf32>
    %348 = arith.mulf %346, %347 : vector<64x32xf32>
    %349 = vector.broadcast %330 : vector<1x32xf32> to vector<64x32xf32>
    %350 = arith.addf %348, %349 : vector<64x32xf32>
    %c1_197 = arith.constant 1 : index
    %c0_198 = arith.constant 0 : index
    %c0_199 = arith.constant 0 : index
    %351 = vector.load %arg21[%c1_197, %c0_198, %c0_199] : memref<2x32x64xf32, #tpu.memory_space<vmem>>, vector<1x32x64xf32>
    %352 = vector.shape_cast %351 : vector<1x32x64xf32> to vector<32x64xf32>
    %cst_200 = arith.constant dense<0.000000e+00> : vector<64x64xf32>
    %353 = tpu.matmul %350, %352, %cst_200 {dimension_numbers = #tpu.dot_dimension_numbers<[1], [0], [0], [1], [0, 0, 1, 1], [], []>} : vector<64x32xf32>, vector<32x64xf32>, vector<64x64xf32> -> vector<64x64xf32>
    %c1_201 = arith.constant 1 : index
    %c0_202 = arith.constant 0 : index
    %c0_203 = arith.constant 0 : index
    %354 = vector.load %arg22[%c1_201, %c0_202, %c0_203] : memref<2x1x64xf32, #tpu.memory_space<vmem>>, vector<1x1x64xf32>
    %355 = vector.shape_cast %354 : vector<1x1x64xf32> to vector<1x64xf32>
    %356 = vector.broadcast %355 : vector<1x64xf32> to vector<64x64xf32>
    %357 = arith.addf %353, %356 : vector<64x64xf32>
    %cst_204 = arith.constant 5.000000e-01 : f32
    %358 = vector.broadcast %cst_204 : f32 to vector<64x64xf32>
    %359 = arith.mulf %358, %357 : vector<64x64xf32>
    %cst_205 = arith.constant 0.707106769 : f32
    %360 = vector.broadcast %cst_205 : f32 to vector<64x64xf32>
    %361 = arith.mulf %357, %360 : vector<64x64xf32>
    %362 = math.absf %361 : vector<64x64xf32>
    %cst_206 = arith.constant 0.327591091 : f32
    %363 = vector.broadcast %cst_206 : f32 to vector<64x64xf32>
    %364 = arith.mulf %363, %362 : vector<64x64xf32>
    %cst_207 = arith.constant 1.000000e+00 : f32
    %365 = vector.broadcast %cst_207 : f32 to vector<64x64xf32>
    %366 = arith.addf %365, %364 : vector<64x64xf32>
    %cst_208 = arith.constant 1.000000e+00 : f32
    %367 = vector.broadcast %cst_208 : f32 to vector<64x64xf32>
    %368 = arith.divf %367, %366 : vector<64x64xf32>
    %cst_209 = arith.constant 1.06140542 : f32
    %369 = vector.broadcast %cst_209 : f32 to vector<64x64xf32>
    %370 = arith.mulf %369, %368 : vector<64x64xf32>
    %cst_210 = arith.constant -1.45315206 : f32
    %371 = vector.broadcast %cst_210 : f32 to vector<64x64xf32>
    %372 = arith.addf %370, %371 : vector<64x64xf32>
    %373 = arith.mulf %372, %368 : vector<64x64xf32>
    %cst_211 = arith.constant 1.42141378 : f32
    %374 = vector.broadcast %cst_211 : f32 to vector<64x64xf32>
    %375 = arith.addf %373, %374 : vector<64x64xf32>
    %376 = arith.mulf %375, %368 : vector<64x64xf32>
    %cst_212 = arith.constant -0.284496725 : f32
    %377 = vector.broadcast %cst_212 : f32 to vector<64x64xf32>
    %378 = arith.addf %376, %377 : vector<64x64xf32>
    %379 = arith.mulf %378, %368 : vector<64x64xf32>
    %cst_213 = arith.constant 0.254829586 : f32
    %380 = vector.broadcast %cst_213 : f32 to vector<64x64xf32>
    %381 = arith.addf %379, %380 : vector<64x64xf32>
    %382 = arith.mulf %381, %368 : vector<64x64xf32>
    %cst_214 = arith.constant 0.000000e+00 : f32
    %383 = vector.broadcast %cst_214 : f32 to vector<64x64xf32>
    %384 = arith.subf %383, %362 : vector<64x64xf32>
    %385 = arith.mulf %384, %362 : vector<64x64xf32>
    %386 = math.exp %385 : vector<64x64xf32>
    %387 = arith.mulf %382, %386 : vector<64x64xf32>
    %cst_215 = arith.constant 1.000000e+00 : f32
    %388 = vector.broadcast %cst_215 : f32 to vector<64x64xf32>
    %389 = arith.subf %388, %387 : vector<64x64xf32>
    %cst_216 = arith.constant 0.000000e+00 : f32
    %390 = vector.broadcast %cst_216 : f32 to vector<64x64xf32>
    %391 = arith.cmpf olt, %361, %390 : vector<64x64xf32>
    %cst_217 = arith.constant 0.000000e+00 : f32
    %392 = vector.broadcast %cst_217 : f32 to vector<64x64xf32>
    %393 = arith.subf %392, %389 : vector<64x64xf32>
    %394 = arith.select %391, %393, %389 : vector<64x64xi1>, vector<64x64xf32>
    %cst_218 = arith.constant 1.000000e+00 : f32
    %395 = vector.broadcast %cst_218 : f32 to vector<64x64xf32>
    %396 = arith.addf %395, %394 : vector<64x64xf32>
    %397 = arith.mulf %359, %396 : vector<64x64xf32>
    %c1_219 = arith.constant 1 : index
    %c0_220 = arith.constant 0 : index
    %c0_221 = arith.constant 0 : index
    %398 = vector.load %arg23[%c1_219, %c0_220, %c0_221] : memref<2x64x32xf32, #tpu.memory_space<vmem>>, vector<1x64x32xf32>
    %399 = vector.shape_cast %398 : vector<1x64x32xf32> to vector<64x32xf32>
    %cst_222 = arith.constant dense<0.000000e+00> : vector<64x32xf32>
    %400 = tpu.matmul %397, %399, %cst_222 {dimension_numbers = #tpu.dot_dimension_numbers<[1], [0], [0], [1], [0, 0, 1, 1], [], []>} : vector<64x64xf32>, vector<64x32xf32>, vector<64x32xf32> -> vector<64x32xf32>
    %c9 = arith.constant 9 : index
    %c0_223 = arith.constant 0 : index
    %c0_224 = arith.constant 0 : index
    %401 = vector.load %arg20[%c9, %c0_223, %c0_224] : memref<12x1x32xf32, #tpu.memory_space<vmem>>, vector<1x1x32xf32>
    %402 = vector.shape_cast %401 : vector<1x1x32xf32> to vector<1x32xf32>
    %403 = vector.broadcast %402 : vector<1x32xf32> to vector<64x32xf32>
    %404 = arith.addf %400, %403 : vector<64x32xf32>
    %405 = arith.addf %404, %350 : vector<64x32xf32>
    %c10 = arith.constant 10 : index
    %c0_225 = arith.constant 0 : index
    %c0_226 = arith.constant 0 : index
    %406 = vector.load %arg20[%c10, %c0_225, %c0_226] : memref<12x1x32xf32, #tpu.memory_space<vmem>>, vector<1x1x32xf32>
    %407 = vector.shape_cast %406 : vector<1x1x32xf32> to vector<1x32xf32>
    %c11 = arith.constant 11 : index
    %c0_227 = arith.constant 0 : index
    %c0_228 = arith.constant 0 : index
    %408 = vector.load %arg20[%c11, %c0_227, %c0_228] : memref<12x1x32xf32, #tpu.memory_space<vmem>>, vector<1x1x32xf32>
    %409 = vector.shape_cast %408 : vector<1x1x32xf32> to vector<1x32xf32>
    %cst_229 = arith.constant dense<0.000000e+00> : vector<64xf32>
    %410 = vector.multi_reduction <add>, %405, %cst_229 [1] : vector<64x32xf32> to vector<64xf32>
    %411 = vector.shape_cast %410 : vector<64xf32> to vector<64x1xf32>
    %cst_230 = arith.constant 3.200000e+01 : f32
    %412 = vector.broadcast %cst_230 : f32 to vector<64x1xf32>
    %413 = arith.divf %411, %412 : vector<64x1xf32>
    %414 = vector.broadcast %413 : vector<64x1xf32> to vector<64x32xf32>
    %415 = arith.subf %405, %414 : vector<64x32xf32>
    %416 = arith.mulf %415, %415 : vector<64x32xf32>
    %cst_231 = arith.constant dense<0.000000e+00> : vector<64xf32>
    %417 = vector.multi_reduction <add>, %416, %cst_231 [1] : vector<64x32xf32> to vector<64xf32>
    %418 = vector.shape_cast %417 : vector<64xf32> to vector<64x1xf32>
    %cst_232 = arith.constant 3.200000e+01 : f32
    %419 = vector.broadcast %cst_232 : f32 to vector<64x1xf32>
    %420 = arith.divf %418, %419 : vector<64x1xf32>
    %cst_233 = arith.constant 9.99999997E-7 : f32
    %421 = vector.broadcast %cst_233 : f32 to vector<64x1xf32>
    %422 = arith.addf %420, %421 : vector<64x1xf32>
    %423 = math.rsqrt %422 : vector<64x1xf32>
    %424 = vector.broadcast %423 : vector<64x1xf32> to vector<64x32xf32>
    %425 = arith.mulf %415, %424 : vector<64x32xf32>
    %426 = vector.broadcast %407 : vector<1x32xf32> to vector<64x32xf32>
    %427 = arith.mulf %425, %426 : vector<64x32xf32>
    %428 = vector.broadcast %409 : vector<1x32xf32> to vector<64x32xf32>
    %429 = arith.addf %427, %428 : vector<64x32xf32>
    %c0_234 = arith.constant 0 : index
    %c0_235 = arith.constant 0 : index
    %430 = vector.load %arg26[%c0_234, %c0_235] : memref<64x32xf32, #tpu.memory_space<vmem>>, vector<64x32xf32>
    tpu.vector_store %arg26[%c0_234, %c0_235], %429 {strides = array<i32>} : memref<64x32xf32, #tpu.memory_space<vmem>>, vector<64x32xf32>,
    %c15 = arith.constant 15 : index
    %c0_236 = arith.constant 0 : index
    %431 = vector.load %arg26[%c15, %c0_236] : memref<64x32xf32, #tpu.memory_space<vmem>>, vector<1x32xf32>
    %c0_237 = arith.constant 0 : index
    %c0_238 = arith.constant 0 : index
    %432 = vector.load %arg27[%c0_237, %c0_238] : memref<2x128xf32, #tpu.memory_space<vmem>>, vector<1x32xf32>
    tpu.vector_store %arg27[%c0_237, %c0_238], %431 {strides = array<i32>} : memref<2x128xf32, #tpu.memory_space<vmem>>, vector<1x32xf32>,
    %c23 = arith.constant 23 : index
    %c0_239 = arith.constant 0 : index
    %433 = vector.load %arg26[%c23, %c0_239] : memref<64x32xf32, #tpu.memory_space<vmem>>, vector<1x32xf32>
    %c0_240 = arith.constant 0 : index
    %c32_241 = arith.constant 32 : index
    %434 = vector.load %arg27[%c0_240, %c32_241] : memref<2x128xf32, #tpu.memory_space<vmem>>, vector<1x32xf32>
    tpu.vector_store %arg27[%c0_240, %c32_241], %433 {strides = array<i32>} : memref<2x128xf32, #tpu.memory_space<vmem>>, vector<1x32xf32>,
    %c27 = arith.constant 27 : index
    %c0_242 = arith.constant 0 : index
    %435 = vector.load %arg26[%c27, %c0_242] : memref<64x32xf32, #tpu.memory_space<vmem>>, vector<1x32xf32>
    %c0_243 = arith.constant 0 : index
    %c64 = arith.constant 64 : index
    %436 = vector.load %arg27[%c0_243, %c64] : memref<2x128xf32, #tpu.memory_space<vmem>>, vector<1x32xf32>
    tpu.vector_store %arg27[%c0_243, %c64], %435 {strides = array<i32>} : memref<2x128xf32, #tpu.memory_space<vmem>>, vector<1x32xf32>,
    %c29 = arith.constant 29 : index
    %c0_244 = arith.constant 0 : index
    %437 = vector.load %arg26[%c29, %c0_244] : memref<64x32xf32, #tpu.memory_space<vmem>>, vector<1x32xf32>
    %c0_245 = arith.constant 0 : index
    %c96 = arith.constant 96 : index
    %438 = vector.load %arg27[%c0_245, %c96] : memref<2x128xf32, #tpu.memory_space<vmem>>, vector<1x32xf32>
    tpu.vector_store %arg27[%c0_245, %c96], %437 {strides = array<i32>} : memref<2x128xf32, #tpu.memory_space<vmem>>, vector<1x32xf32>,
    %c47 = arith.constant 47 : index
    %c0_246 = arith.constant 0 : index
    %439 = vector.load %arg26[%c47, %c0_246] : memref<64x32xf32, #tpu.memory_space<vmem>>, vector<1x32xf32>
    %c1_247 = arith.constant 1 : index
    %c0_248 = arith.constant 0 : index
    %440 = vector.load %arg27[%c1_247, %c0_248] : memref<2x128xf32, #tpu.memory_space<vmem>>, vector<1x32xf32>
    tpu.vector_store %arg27[%c1_247, %c0_248], %439 {strides = array<i32>} : memref<2x128xf32, #tpu.memory_space<vmem>>, vector<1x32xf32>,
    %c55 = arith.constant 55 : index
    %c0_249 = arith.constant 0 : index
    %441 = vector.load %arg26[%c55, %c0_249] : memref<64x32xf32, #tpu.memory_space<vmem>>, vector<1x32xf32>
    %c1_250 = arith.constant 1 : index
    %c32_251 = arith.constant 32 : index
    %442 = vector.load %arg27[%c1_250, %c32_251] : memref<2x128xf32, #tpu.memory_space<vmem>>, vector<1x32xf32>
    tpu.vector_store %arg27[%c1_250, %c32_251], %441 {strides = array<i32>} : memref<2x128xf32, #tpu.memory_space<vmem>>, vector<1x32xf32>,
    %c59 = arith.constant 59 : index
    %c0_252 = arith.constant 0 : index
    %443 = vector.load %arg26[%c59, %c0_252] : memref<64x32xf32, #tpu.memory_space<vmem>>, vector<1x32xf32>
    %c1_253 = arith.constant 1 : index
    %c64_254 = arith.constant 64 : index
    %444 = vector.load %arg27[%c1_253, %c64_254] : memref<2x128xf32, #tpu.memory_space<vmem>>, vector<1x32xf32>
    tpu.vector_store %arg27[%c1_253, %c64_254], %443 {strides = array<i32>} : memref<2x128xf32, #tpu.memory_space<vmem>>, vector<1x32xf32>,
    %c61 = arith.constant 61 : index
    %c0_255 = arith.constant 0 : index
    %445 = vector.load %arg26[%c61, %c0_255] : memref<64x32xf32, #tpu.memory_space<vmem>>, vector<1x32xf32>
    %c1_256 = arith.constant 1 : index
    %c96_257 = arith.constant 96 : index
    %446 = vector.load %arg27[%c1_256, %c96_257] : memref<2x128xf32, #tpu.memory_space<vmem>>, vector<1x32xf32>
    tpu.vector_store %arg27[%c1_256, %c96_257], %445 {strides = array<i32>} : memref<2x128xf32, #tpu.memory_space<vmem>>, vector<1x32xf32>,
    %c0_258 = arith.constant 0 : index
    %c0_259 = arith.constant 0 : index
    %447 = vector.load %arg27[%c0_258, %c0_259] : memref<2x128xf32, #tpu.memory_space<vmem>>, vector<2x128xf32>
    %c0_260 = arith.constant 0 : index
    %c0_261 = arith.constant 0 : index
    %448 = vector.load %arg24[%c0_260, %c0_261] : memref<128x128xf32, #tpu.memory_space<vmem>>, vector<128x128xf32>
    %cst_262 = arith.constant dense<0.000000e+00> : vector<2x128xf32>
    %449 = tpu.matmul %447, %448, %cst_262 {dimension_numbers = #tpu.dot_dimension_numbers<[1], [0], [0], [1], [0, 0, 1, 1], [], []>} : vector<2x128xf32>, vector<128x128xf32>, vector<2x128xf32> -> vector<2x128xf32>
    %c0_263 = arith.constant 0 : index
    %c0_264 = arith.constant 0 : index
    %450 = vector.load %arg25[%c0_263, %c0_264] : memref<2x128xf32, #tpu.memory_space<vmem>>, vector<2x128xf32>
    tpu.vector_store %arg25[%c0_263, %c0_264], %449 {strides = array<i32>} : memref<2x128xf32, #tpu.memory_space<vmem>>, vector<2x128xf32>,
    return
  }
  func.func @transform_0(%arg0: i32) -> (i32, i32) {
    %c0_i32 = arith.constant 0 : i32
    %c0_i32_0 = arith.constant 0 : i32
    %c0_i32_1 = arith.constant 0 : i32
    return %c0_i32, %c0_i32_0 : i32, i32
  }
  func.func @transform_1(%arg0: i32) -> (i32, i32) {
    %c0_i32 = arith.constant 0 : i32
    %c0_i32_0 = arith.constant 0 : i32
    %c0_i32_1 = arith.constant 0 : i32
    return %c0_i32, %c0_i32_0 : i32, i32
  }
  func.func @transform_2(%arg0: i32) -> (i32, i32) {
    %c0_i32 = arith.constant 0 : i32
    %c0_i32_0 = arith.constant 0 : i32
    %c0_i32_1 = arith.constant 0 : i32
    return %c0_i32, %c0_i32_0 : i32, i32
  }
  func.func @transform_3(%arg0: i32) -> (i32, i32) {
    %c0_i32 = arith.constant 0 : i32
    %c0_i32_0 = arith.constant 0 : i32
    %c0_i32_1 = arith.constant 0 : i32
    return %c0_i32, %c0_i32_0 : i32, i32
  }
  func.func @transform_4(%arg0: i32) -> (i32, i32) {
    %c0_i32 = arith.constant 0 : i32
    %c0_i32_0 = arith.constant 0 : i32
    %c0_i32_1 = arith.constant 0 : i32
    return %c0_i32, %c0_i32_0 : i32, i32
  }
  func.func @transform_5(%arg0: i32) -> (i32, i32) {
    %c0_i32 = arith.constant 0 : i32
    %c0_i32_0 = arith.constant 0 : i32
    %c0_i32_1 = arith.constant 0 : i32
    return %c0_i32, %c0_i32_0 : i32, i32
  }
  func.func @transform_6(%arg0: i32) -> (i32, i32) {
    %c0_i32 = arith.constant 0 : i32
    %c0_i32_0 = arith.constant 0 : i32
    %c0_i32_1 = arith.constant 0 : i32
    return %c0_i32, %c0_i32_0 : i32, i32
  }
  func.func @transform_7(%arg0: i32) -> (i32, i32) {
    %c0_i32 = arith.constant 0 : i32
    %c0_i32_0 = arith.constant 0 : i32
    %c0_i32_1 = arith.constant 0 : i32
    return %c0_i32, %c0_i32_0 : i32, i32
  }
  func.func @transform_8(%arg0: i32) -> (i32, i32) {
    %c0_i32 = arith.constant 0 : i32
    %c0_i32_0 = arith.constant 0 : i32
    %c0_i32_1 = arith.constant 0 : i32
    return %c0_i32, %c0_i32_0 : i32, i32
  }
  func.func @transform_9(%arg0: i32) -> (i32, i32) {
    %c0_i32 = arith.constant 0 : i32
    %c0_i32_0 = arith.constant 0 : i32
    %c0_i32_1 = arith.constant 0 : i32
    return %c0_i32, %c0_i32_0 : i32, i32
  }
  func.func @transform_10(%arg0: i32) -> (i32, i32) {
    %c0_i32 = arith.constant 0 : i32
    %c0_i32_0 = arith.constant 0 : i32
    %c0_i32_1 = arith.constant 0 : i32
    return %c0_i32, %c0_i32_0 : i32, i32
  }
  func.func @transform_11(%arg0: i32) -> (i32, i32) {
    %c0_i32 = arith.constant 0 : i32
    %c0_i32_0 = arith.constant 0 : i32
    %c0_i32_1 = arith.constant 0 : i32
    return %c0_i32, %c0_i32_0 : i32, i32
  }
  func.func @transform_12(%arg0: i32) -> (i32, i32, i32) {
    %c0_i32 = arith.constant 0 : i32
    %c0_i32_0 = arith.constant 0 : i32
    %c0_i32_1 = arith.constant 0 : i32
    %c0_i32_2 = arith.constant 0 : i32
    return %c0_i32, %c0_i32_0, %c0_i32_1 : i32, i32, i32
  }
  func.func @transform_13(%arg0: i32) -> (i32, i32, i32) {
    %c0_i32 = arith.constant 0 : i32
    %c0_i32_0 = arith.constant 0 : i32
    %c0_i32_1 = arith.constant 0 : i32
    %c0_i32_2 = arith.constant 0 : i32
    return %c0_i32, %c0_i32_0, %c0_i32_1 : i32, i32, i32
  }
  func.func @transform_14(%arg0: i32) -> (i32, i32) {
    %c0_i32 = arith.constant 0 : i32
    %c0_i32_0 = arith.constant 0 : i32
    %c0_i32_1 = arith.constant 0 : i32
    return %c0_i32, %c0_i32_0 : i32, i32
  }
  func.func @transform_15(%arg0: i32) -> (i32, i32) {
    %c0_i32 = arith.constant 0 : i32
    %c0_i32_0 = arith.constant 0 : i32
    %c0_i32_1 = arith.constant 0 : i32
    return %c0_i32, %c0_i32_0 : i32, i32
  }
  func.func @transform_16(%arg0: i32) -> (i32, i32) {
    %c0_i32 = arith.constant 0 : i32
    %c0_i32_0 = arith.constant 0 : i32
    %c0_i32_1 = arith.constant 0 : i32
    return %c0_i32, %c0_i32_0 : i32, i32
  }
  func.func @transform_17(%arg0: i32) -> (i32, i32) {
    %c0_i32 = arith.constant 0 : i32
    %c0_i32_0 = arith.constant 0 : i32
    %c0_i32_1 = arith.constant 0 : i32
    return %c0_i32, %c0_i32_0 : i32, i32
  }
  func.func @transform_18(%arg0: i32) -> (i32, i32, i32) {
    %c0_i32 = arith.constant 0 : i32
    %c0_i32_0 = arith.constant 0 : i32
    %c0_i32_1 = arith.constant 0 : i32
    %c0_i32_2 = arith.constant 0 : i32
    return %c0_i32, %c0_i32_0, %c0_i32_1 : i32, i32, i32
  }
  func.func @transform_19(%arg0: i32) -> (i32, i32, i32) {
    %c0_i32 = arith.constant 0 : i32
    %c0_i32_0 = arith.constant 0 : i32
    %c0_i32_1 = arith.constant 0 : i32
    %c0_i32_2 = arith.constant 0 : i32
    return %c0_i32, %c0_i32_0, %c0_i32_1 : i32, i32, i32
  }
  func.func @transform_20(%arg0: i32) -> (i32, i32, i32) {
    %c0_i32 = arith.constant 0 : i32
    %c0_i32_0 = arith.constant 0 : i32
    %c0_i32_1 = arith.constant 0 : i32
    %c0_i32_2 = arith.constant 0 : i32
    return %c0_i32, %c0_i32_0, %c0_i32_1 : i32, i32, i32
  }
  func.func @transform_21(%arg0: i32) -> (i32, i32, i32) {
    %c0_i32 = arith.constant 0 : i32
    %c0_i32_0 = arith.constant 0 : i32
    %c0_i32_1 = arith.constant 0 : i32
    %c0_i32_2 = arith.constant 0 : i32
    return %c0_i32, %c0_i32_0, %c0_i32_1 : i32, i32, i32
  }
  func.func @transform_22(%arg0: i32) -> (i32, i32, i32) {
    %c0_i32 = arith.constant 0 : i32
    %c0_i32_0 = arith.constant 0 : i32
    %c0_i32_1 = arith.constant 0 : i32
    %c0_i32_2 = arith.constant 0 : i32
    return %c0_i32, %c0_i32_0, %c0_i32_1 : i32, i32, i32
  }
  func.func @transform_23(%arg0: i32) -> (i32, i32) {
    %c0_i32 = arith.constant 0 : i32
    %c0_i32_0 = arith.constant 0 : i32
    %c0_i32_1 = arith.constant 0 : i32
    return %c0_i32, %c0_i32_0 : i32, i32
  }
  func.func @transform_24(%arg0: i32) -> (i32, i32) {
    %c0_i32 = arith.constant 0 : i32
    %c0_i32_0 = arith.constant 0 : i32
    %c0_i32_1 = arith.constant 0 : i32
    return %c0_i32, %c0_i32_0 : i32, i32
  }
}

</mosaic_0001>

<llo_original>
// kernel: model_forward.1
$region0: #{model_forward.1}
  #allocation0 [shape = 'u32[]', space=smem, size = 0x4, offset = 0x4, fixed_abs, tag = 'smem constant byte address 0x4 - core index']
  #allocation1 [shape = 'u32[144,128]{1,0:T(1,128)}', space=vmem, size = 0x12000, scoped, tag = 'internal scratch']
  #allocation2 [shape = 'f32[64,32]{1,0:T(8,128)}', space=vmem, size = 0x8000, scoped, tag = 'scratch operand']
  #allocation3 [shape = 'f32[2,128]{1,0:T(2,128)}', space=vmem, size = 0x400, scoped, tag = 'scratch operand']
  %s0 = inlined_call_operand.vmem [shape: f32[32,8], index: 0, kind: input, shape index: {}]
  %s1 = inlined_call_operand.vmem [shape: f32[64,64], index: 1, kind: input, shape index: {}]
  %s2 = inlined_call_operand.hbm [shape: f32[8,32], index: 2, kind: input, shape index: {}]
  %s3 = inlined_call_operand.hbm [shape: f32[32,32], index: 3, kind: input, shape index: {}]
  %s4 = inlined_call_operand.vmem [shape: f32[32,16], index: 4, kind: input, shape index: {}]
  %s5 = inlined_call_operand.hbm [shape: f32[1,16], index: 5, kind: input, shape index: {}]
  %s6 = inlined_call_operand.hbm [shape: f32[16,32], index: 6, kind: input, shape index: {}]
  %s7 = inlined_call_operand.hbm [shape: f32[16,32], index: 7, kind: input, shape index: {}]
  %s8 = inlined_call_operand.hbm [shape: f32[8,16], index: 8, kind: input, shape index: {}]
  %s9 = inlined_call_operand.hbm [shape: f32[8,16], index: 9, kind: input, shape index: {}]
  %s10 = inlined_call_operand.hbm [shape: f32[4,8], index: 10, kind: input, shape index: {}]
  %s11 = inlined_call_operand.hbm [shape: f32[4,8], index: 11, kind: input, shape index: {}]
  %s12 = inlined_call_operand.vmem [shape: f32[6,16,16], index: 12, kind: input, shape index: {}]
  %s13 = inlined_call_operand.hbm [shape: f32[3,1,16], index: 13, kind: input, shape index: {}]
  %s14 = inlined_call_operand.vmem [shape: f32[16,32], index: 14, kind: input, shape index: {}]
  %s15 = inlined_call_operand.vmem [shape: f32[1,32], index: 15, kind: input, shape index: {}]
  %s16 = inlined_call_operand.hbm [shape: f32[1,32], index: 16, kind: input, shape index: {}]
  %s17 = inlined_call_operand.hbm [shape: f32[1,32], index: 17, kind: input, shape index: {}]
  %s18 = inlined_call_operand.hbm [shape: f32[2,32,128], index: 18, kind: input, shape index: {}]
  %s19 = inlined_call_operand.hbm [shape: f32[12,1,32], index: 19, kind: input, shape index: {}]
  %s20 = inlined_call_operand.hbm [shape: f32[2,32,64], index: 20, kind: input, shape index: {}]
  %s21 = inlined_call_operand.hbm [shape: f32[2,1,64], index: 21, kind: input, shape index: {}]
  %s22 = inlined_call_operand.vmem [shape: f32[2,64,32], index: 22, kind: input, shape index: {}]
  %s23 = inlined_call_operand.vmem [shape: f32[128,128], index: 23, kind: input, shape index: {}]
  %s24 = inlined_call_operand.hbm [shape: f32[2,128], index: 24, kind: output, shape index: {}]
  %s25 = sld [smem:[#allocation0]]
  $region170: #{model_forward.1} parent=0
    _
  %s27 = ssub.s32 1, %s25
  %s28 = scalar_select 0, %s27, %s25
  $region1: #{model_forward.1} parent=0
    #allocation4 [shape = 'u8[4096]{0}', space=vmem, size = 0x1000, scoped, tag = 'input window, operand 2, single buffered']
    #allocation5 [shape = 's32[1]{0}', space=sflag, size = 0x4, scoped, tag = 'scoped memory for model_forward.1']
    #allocation6 [shape = 's32[1]{0}', space=sflag, size = 0x4, scoped, tag = 'scoped memory for model_forward.1']
    #allocation7 [shape = 'u8[16384]{0}', space=vmem, size = 0x4000, scoped, tag = 'input window, operand 3, single buffered']
    #allocation8 [shape = 's32[1]{0}', space=sflag, size = 0x4, scoped, tag = 'scoped memory for model_forward.1']
    #allocation9 [shape = 'u8[512]{0}', space=vmem, size = 0x400, scoped, tag = 'input window, operand 5, single buffered']
    #allocation10 [shape = 'u8[8192]{0}', space=vmem, size = 0x2000, scoped, tag = 'input window, operand 6, single buffered']
    #allocation11 [shape = 's32[1]{0}', space=sflag, size = 0x4, scoped, tag = 'scoped memory for model_forward.1']
    #allocation12 [shape = 'u8[8192]{0}', space=vmem, size = 0x2000, scoped, tag = 'input window, operand 7, single buffered']
    #allocation13 [shape = 'u8[4096]{0}', space=vmem, size = 0x1000, scoped, tag = 'input window, operand 8, single buffered']
    #allocation14 [shape = 's32[1]{0}', space=sflag, size = 0x4, scoped, tag = 'scoped memory for model_forward.1']
    #allocation15 [shape = 'u8[4096]{0}', space=vmem, size = 0x1000, scoped, tag = 'input window, operand 9, single buffered']
    #allocation16 [shape = 'u8[2048]{0}', space=vmem, size = 0x800, scoped, tag = 'input window, operand 10, single buffered']
    #allocation17 [shape = 's32[1]{0}', space=sflag, size = 0x4, scoped, tag = 'scoped memory for model_forward.1']
    #allocation18 [shape = 'u8[2048]{0}', space=vmem, size = 0x800, scoped, tag = 'input window, operand 11, single buffered']
    #allocation19 [shape = 'u8[1536]{0}', space=vmem, size = 0x800, scoped, tag = 'input window, operand 13, single buffered']
    #allocation20 [shape = 's32[1]{0}', space=sflag, size = 0x4, scoped, tag = 'scoped memory for model_forward.1']
    #allocation21 [shape = 'u8[512]{0}', space=vmem, size = 0x400, scoped, tag = 'input window, operand 16, single buffered']
    #allocation22 [shape = 'u8[512]{0}', space=vmem, size = 0x400, scoped, tag = 'input window, operand 17, single buffered']
    #allocation23 [shape = 's32[1]{0}', space=sflag, size = 0x4, scoped, tag = 'scoped memory for model_forward.1']
    #allocation24 [shape = 'u8[32768]{0}', space=vmem, size = 0x8000, scoped, tag = 'input window, operand 18, single buffered']
    #allocation25 [shape = 'u8[6144]{0}', space=vmem, size = 0x1800, scoped, tag = 'input window, operand 19, single buffered']
    #allocation26 [shape = 's32[1]{0}', space=sflag, size = 0x4, scoped, tag = 'scoped memory for model_forward.1']
    #allocation27 [shape = 'u8[32768]{0}', space=vmem, size = 0x8000, scoped, tag = 'input window, operand 20, single buffered']
    #allocation28 [shape = 'u8[1024]{0}', space=vmem, size = 0x400, scoped, tag = 'input window, operand 21, single buffered']
    #allocation29 [shape = 's32[1]{0}', space=sflag, size = 0x4, scoped, tag = 'scoped memory for model_forward.1']
    #allocation30 [shape = 'u8[1024]{0}', space=vmem, size = 0x400, scoped, tag = 'output window, operand 0, single buffered']
    %29 = vsyncpa [#allocation5], 0
    %30 = vsyncpa [#allocation8], 0
    %31 = vsyncpa [#allocation11], 0
    %32 = vsyncpa [#allocation14], 0
    %33 = vsyncpa [#allocation17], 0
    %34 = vsyncpa [#allocation20], 0
    %35 = vsyncpa [#allocation23], 0
    %36 = vsyncpa [#allocation26], 0
    %37 = vsyncpa [#allocation29], 0
    %38 = vsyncpa [#allocation6], 0
    // Predicated region
    $region2: #{model_forward.1} parent=1 // pred_check
      _
    $region3: #{model_forward.1} parent=1 // pred_check_branch
      %40 = sbr.rel (0) target = $region5
    $region4: #{model_forward.1} parent=1 // pred_region
      _
    $region5: #{model_forward.1} parent=1 // pred_fallthru
      _
    // Predicated region
    $region6: #{model_forward.1} parent=1 // pred_check
      _
    $region7: #{model_forward.1} parent=1 // pred_check_branch
      %42 = sbr.rel (0) target = $region9
    $region8: #{model_forward.1} parent=1 // pred_region
      _
    $region9: #{model_forward.1} parent=1 // pred_fallthru
      _
    // Predicated region
    $region10: #{model_forward.1} parent=1 // pred_check
      _
    $region11: #{model_forward.1} parent=1 // pred_check_branch
      %44 = sbr.rel (0) target = $region13
    $region12: #{model_forward.1} parent=1 // pred_region
      %s46 = ssub.s32 128, 128
      %47 = vsyncadd [#allocation5], %s46
      %s49 = sshll.u32 [#allocation4], 4
      %s50 = int_to_ptr.vmem [resolvable:$true] %s49
      %52 = dma.hbm_to_vmem [thread:$0]  %s2, 128, %s50, [#allocation5]
    $region13: #{model_forward.1} parent=1 // pred_fallthru
      _
    // Predicated region
    $region14: #{model_forward.1} parent=1 // pred_check
      _
    $region15: #{model_forward.1} parent=1 // pred_check_branch
      %54 = sbr.rel (0) target = $region17
    $region16: #{model_forward.1} parent=1 // pred_region
      %s56 = ssub.s32 512, 512
      %57 = vsyncadd [#allocation8], %s56
      %s58 = sshll.u32 [#allocation7], 4
      %s59 = int_to_ptr.vmem [resolvable:$true] %s58
      %64 = dma.hbm_to_vmem [thread:$0]  %s3, 512, %s59, [#allocation8], 128, 128, 8
    $region17: #{model_forward.1} parent=1 // pred_fallthru
      _
    // Predicated region
    $region18: #{model_forward.1} parent=1 // pred_check
      _
    $region19: #{model_forward.1} parent=1 // pred_check_branch
      %66 = sbr.rel (0) target = $region21
    $region20: #{model_forward.1} parent=1 // pred_region
      _
    $region21: #{model_forward.1} parent=1 // pred_fallthru
      _
    // Predicated region
    $region22: #{model_forward.1} parent=1 // pred_check
      _
    $region23: #{model_forward.1} parent=1 // pred_check_branch
      %68 = sbr.rel (0) target = $region25
    $region24: #{model_forward.1} parent=1 // pred_region
      %s70 = ssub.s32 16, 16
      %71 = vsyncadd [#allocation8], %s70
      %s73 = sshll.u32 [#allocation9], 4
      %s74 = int_to_ptr.vmem [resolvable:$true] %s73
      %76 = dma.hbm_to_vmem [thread:$0]  %s5, 16, %s74, [#allocation8]
    $region25: #{model_forward.1} parent=1 // pred_fallthru
      _
    // Predicated region
    $region26: #{model_forward.1} parent=1 // pred_check
      _
    $region27: #{model_forward.1} parent=1 // pred_check_branch
      %78 = sbr.rel (0) target = $region29
    $region28: #{model_forward.1} parent=1 // pred_region
      %s80 = ssub.s32 256, 256
      %81 = vsyncadd [#allocation11], %s80
      %s82 = sshll.u32 [#allocation10], 4
      %s83 = int_to_ptr.vmem [resolvable:$true] %s82
      %88 = dma.hbm_to_vmem [thread:$0]  %s6, 256, %s83, [#allocation11], 128, 128, 8
    $region29: #{model_forward.1} parent=1 // pred_fallthru
      _
    // Predicated region
    $region30: #{model_forward.1} parent=1 // pred_check
      _
    $region31: #{model_forward.1} parent=1 // pred_check_branch
      %90 = sbr.rel (0) target = $region33
    $region32: #{model_forward.1} parent=1 // pred_region
      %s92 = ssub.s32 256, 256
      %93 = vsyncadd [#allocation11], %s92
      %s94 = sshll.u32 [#allocation12], 4
      %s95 = int_to_ptr.vmem [resolvable:$true] %s94
      %100 = dma.hbm_to_vmem [thread:$0]  %s7, 256, %s95, [#allocation11], 128, 128, 8
    $region33: #{model_forward.1} parent=1 // pred_fallthru
      _
    // Predicated region
    $region34: #{model_forward.1} parent=1 // pred_check
      _
    $region35: #{model_forward.1} parent=1 // pred_check_branch
      %102 = sbr.rel (0) target = $region37
    $region36: #{model_forward.1} parent=1 // pred_region
      %s104 = ssub.s32 128, 128
      %105 = vsyncadd [#allocation14], %s104
      %s107 = sshll.u32 [#allocation13], 4
      %s108 = int_to_ptr.vmem [resolvable:$true] %s107
      %110 = dma.hbm_to_vmem [thread:$0]  %s8, 128, %s108, [#allocation14]
    $region37: #{model_forward.1} parent=1 // pred_fallthru
      _
    // Predicated region
    $region38: #{model_forward.1} parent=1 // pred_check
      _
    $region39: #{model_forward.1} parent=1 // pred_check_branch
      %112 = sbr.rel (0) target = $region41
    $region40: #{model_forward.1} parent=1 // pred_region
      %s114 = ssub.s32 128, 128
      %115 = vsyncadd [#allocation14], %s114
      %s117 = sshll.u32 [#allocation15], 4
      %s118 = int_to_ptr.vmem [resolvable:$true] %s117
      %120 = dma.hbm_to_vmem [thread:$0]  %s9, 128, %s118, [#allocation14]
    $region41: #{model_forward.1} parent=1 // pred_fallthru
      _
    // Predicated region
    $region42: #{model_forward.1} parent=1 // pred_check
      _
    $region43: #{model_forward.1} parent=1 // pred_check_branch
      %122 = sbr.rel (0) target = $region45
    $region44: #{model_forward.1} parent=1 // pred_region
      %s124 = ssub.s32 64, 64
      %125 = vsyncadd [#allocation17], %s124
      %s127 = sshll.u32 [#allocation16], 4
      %s128 = int_to_ptr.vmem [resolvable:$true] %s127
      %130 = dma.hbm_to_vmem [thread:$0]  %s10, 64, %s128, [#allocation17]
    $region45: #{model_forward.1} parent=1 // pred_fallthru
      _
    // Predicated region
    $region46: #{model_forward.1} parent=1 // pred_check
      _
    $region47: #{model_forward.1} parent=1 // pred_check_branch
      %132 = sbr.rel (0) target = $region49
    $region48: #{model_forward.1} parent=1 // pred_region
      %s134 = ssub.s32 64, 64
      %135 = vsyncadd [#allocation17], %s134
      %s137 = sshll.u32 [#allocation18], 4
      %s138 = int_to_ptr.vmem [resolvable:$true] %s137
      %140 = dma.hbm_to_vmem [thread:$0]  %s11, 64, %s138, [#allocation17]
    $region49: #{model_forward.1} parent=1 // pred_fallthru
      _
    // Predicated region
    $region50: #{model_forward.1} parent=1 // pred_check
      _
    $region51: #{model_forward.1} parent=1 // pred_check_branch
      %142 = sbr.rel (0) target = $region53
    $region52: #{model_forward.1} parent=1 // pred_region
      _
    $region53: #{model_forward.1} parent=1 // pred_fallthru
      _
    // Predicated region
    $region54: #{model_forward.1} parent=1 // pred_check
      _
    $region55: #{model_forward.1} parent=1 // pred_check_branch
      %144 = sbr.rel (0) target = $region57
    $region56: #{model_forward.1} parent=1 // pred_region
      %s146 = ssub.s32 48, 48
      %147 = vsyncadd [#allocation20], %s146
      %s148 = sshll.u32 [#allocation19], 4
      %s149 = int_to_ptr.vmem [resolvable:$true] %s148
      %154 = dma.hbm_to_vmem [thread:$0]  %s13, 48, %s149, [#allocation20], 16, 16, 1
    $region57: #{model_forward.1} parent=1 // pred_fallthru
      _
    // Predicated region
    $region58: #{model_forward.1} parent=1 // pred_check
      _
    $region59: #{model_forward.1} parent=1 // pred_check_branch
      %156 = sbr.rel (0) target = $region61
    $region60: #{model_forward.1} parent=1 // pred_region
      _
    $region61: #{model_forward.1} parent=1 // pred_fallthru
      _
    // Predicated region
    $region62: #{model_forward.1} parent=1 // pred_check
      _
    $region63: #{model_forward.1} parent=1 // pred_check_branch
      %158 = sbr.rel (0) target = $region65
    $region64: #{model_forward.1} parent=1 // pred_region
      _
    $region65: #{model_forward.1} parent=1 // pred_fallthru
      _
    // Predicated region
    $region66: #{model_forward.1} parent=1 // pred_check
      _
    $region67: #{model_forward.1} parent=1 // pred_check_branch
      %160 = sbr.rel (0) target = $region69
    $region68: #{model_forward.1} parent=1 // pred_region
      %s162 = ssub.s32 16, 16
      %163 = vsyncadd [#allocation20], %s162
      %s165 = sshll.u32 [#allocation21], 4
      %s166 = int_to_ptr.vmem [resolvable:$true] %s165
      %168 = dma.hbm_to_vmem [thread:$0]  %s16, 16, %s166, [#allocation20]
    $region69: #{model_forward.1} parent=1 // pred_fallthru
      _
    // Predicated region
    $region70: #{model_forward.1} parent=1 // pred_check
      _
    $region71: #{model_forward.1} parent=1 // pred_check_branch
      %170 = sbr.rel (0) target = $region73
    $region72: #{model_forward.1} parent=1 // pred_region
      %s172 = ssub.s32 16, 16
      %173 = vsyncadd [#allocation23], %s172
      %s175 = sshll.u32 [#allocation22], 4
      %s176 = int_to_ptr.vmem [resolvable:$true] %s175
      %178 = dma.hbm_to_vmem [thread:$0]  %s17, 16, %s176, [#allocation23]
    $region73: #{model_forward.1} parent=1 // pred_fallthru
      _
    // Predicated region
    $region74: #{model_forward.1} parent=1 // pred_check
      _
    $region75: #{model_forward.1} parent=1 // pred_check_branch
      %180 = sbr.rel (0) target = $region77
    $region76: #{model_forward.1} parent=1 // pred_region
      %s182 = ssub.s32 1024, 1024
      %183 = vsyncadd [#allocation23], %s182
      %s184 = sshll.u32 [#allocation24], 4
      %s185 = int_to_ptr.vmem [resolvable:$true] %s184
      %190 = dma.hbm_to_vmem [thread:$0]  %s18, 1024, %s185, [#allocation23], 128, 128, 8
    $region77: #{model_forward.1} parent=1 // pred_fallthru
      _
    // Predicated region
    $region78: #{model_forward.1} parent=1 // pred_check
      _
    $region79: #{model_forward.1} parent=1 // pred_check_branch
      %192 = sbr.rel (0) target = $region81
    $region80: #{model_forward.1} parent=1 // pred_region
      %s194 = ssub.s32 192, 192
      %195 = vsyncadd [#allocation26], %s194
      %s196 = sshll.u32 [#allocation25], 4
      %s197 = int_to_ptr.vmem [resolvable:$true] %s196
      %202 = dma.hbm_to_vmem [thread:$0]  %s19, 192, %s197, [#allocation26], 16, 16, 1
    $region81: #{model_forward.1} parent=1 // pred_fallthru
      _
    // Predicated region
    $region82: #{model_forward.1} parent=1 // pred_check
      _
    $region83: #{model_forward.1} parent=1 // pred_check_branch
      %204 = sbr.rel (0) target = $region85
    $region84: #{model_forward.1} parent=1 // pred_region
      %s206 = ssub.s32 1024, 1024
      %207 = vsyncadd [#allocation26], %s206
      %s208 = sshll.u32 [#allocation27], 4
      %s209 = int_to_ptr.vmem [resolvable:$true] %s208
      %214 = dma.hbm_to_vmem [thread:$0]  %s20, 1024, %s209, [#allocation26], 128, 128, 8
    $region85: #{model_forward.1} parent=1 // pred_fallthru
      _
    // Predicated region
    $region86: #{model_forward.1} parent=1 // pred_check
      _
    $region87: #{model_forward.1} parent=1 // pred_check_branch
      %216 = sbr.rel (0) target = $region89
    $region88: #{model_forward.1} parent=1 // pred_region
      %s218 = ssub.s32 32, 32
      %219 = vsyncadd [#allocation29], %s218
      %s220 = sshll.u32 [#allocation28], 4
      %s221 = int_to_ptr.vmem [resolvable:$true] %s220
      %226 = dma.hbm_to_vmem [thread:$0]  %s21, 32, %s221, [#allocation29], 16, 16, 1
    $region89: #{model_forward.1} parent=1 // pred_fallthru
      _
    // Predicated region
    $region90: #{model_forward.1} parent=1 // pred_check
      _
    $region91: #{model_forward.1} parent=1 // pred_check_branch
      %228 = sbr.rel (0) target = $region93
    $region92: #{model_forward.1} parent=1 // pred_region
      _
    $region93: #{model_forward.1} parent=1 // pred_fallthru
      _
    // Predicated region
    $region94: #{model_forward.1} parent=1 // pred_check
      _
    $region95: #{model_forward.1} parent=1 // pred_check_branch
      %230 = sbr.rel (0) target = $region97
    $region96: #{model_forward.1} parent=1 // pred_region
      _
    $region97: #{model_forward.1} parent=1 // pred_fallthru
      _
    // Predicated region
    $region98: #{model_forward.1} parent=1 // pred_check
      _
    $region99: #{model_forward.1} parent=1 // pred_check_branch
      %232 = sbr.rel (0) target = $region101
    $region100: #{model_forward.1} parent=1 // pred_region
      %233 = dma.done [#allocation5], 128
    $region101: #{model_forward.1} parent=1 // pred_fallthru
      _
    // Predicated region
    $region102: #{model_forward.1} parent=1 // pred_check
      _
    $region103: #{model_forward.1} parent=1 // pred_check_branch
      %235 = sbr.rel (0) target = $region105
    $region104: #{model_forward.1} parent=1 // pred_region
      %236 = dma.done [#allocation8], 512
    $region105: #{model_forward.1} parent=1 // pred_fallthru
      _
    // Predicated region
    $region106: #{model_forward.1} parent=1 // pred_check
      _
    $region107: #{model_forward.1} parent=1 // pred_check_branch
      %238 = sbr.rel (0) target = $region109
    $region108: #{model_forward.1} parent=1 // pred_region
      %239 = dma.done [#allocation8], 16
    $region109: #{model_forward.1} parent=1 // pred_fallthru
      _
    // Predicated region
    $region110: #{model_forward.1} parent=1 // pred_check
      _
    $region111: #{model_forward.1} parent=1 // pred_check_branch
      %241 = sbr.rel (0) target = $region113
    $region112: #{model_forward.1} parent=1 // pred_region
      %242 = dma.done [#allocation11], 256
    $region113: #{model_forward.1} parent=1 // pred_fallthru
      _
    // Predicated region
    $region114: #{model_forward.1} parent=1 // pred_check
      _
    $region115: #{model_forward.1} parent=1 // pred_check_branch
      %244 = sbr.rel (0) target = $region117
    $region116: #{model_forward.1} parent=1 // pred_region
      %245 = dma.done [#allocation11], 256
    $region117: #{model_forward.1} parent=1 // pred_fallthru
      _
    // Predicated region
    $region118: #{model_forward.1} parent=1 // pred_check
      _
    $region119: #{model_forward.1} parent=1 // pred_check_branch
      %247 = sbr.rel (0) target = $region121
    $region120: #{model_forward.1} parent=1 // pred_region
      %248 = dma.done [#allocation14], 128
    $region121: #{model_forward.1} parent=1 // pred_fallthru
      _
    // Predicated region
    $region122: #{model_forward.1} parent=1 // pred_check
      _
    $region123: #{model_forward.1} parent=1 // pred_check_branch
      %250 = sbr.rel (0) target = $region125
    $region124: #{model_forward.1} parent=1 // pred_region
      %251 = dma.done [#allocation14], 128
    $region125: #{model_forward.1} parent=1 // pred_fallthru
      _
    // Predicated region
    $region126: #{model_forward.1} parent=1 // pred_check
      _
    $region127: #{model_forward.1} parent=1 // pred_check_branch
      %253 = sbr.rel (0) target = $region129
    $region128: #{model_forward.1} parent=1 // pred_region
      %254 = dma.done [#allocation17], 64
    $region129: #{model_forward.1} parent=1 // pred_fallthru
      _
    // Predicated region
    $region130: #{model_forward.1} parent=1 // pred_check
      _
    $region131: #{model_forward.1} parent=1 // pred_check_branch
      %256 = sbr.rel (0) target = $region133
    $region132: #{model_forward.1} parent=1 // pred_region
      %257 = dma.done [#allocation17], 64
    $region133: #{model_forward.1} parent=1 // pred_fallthru
      _
    // Predicated region
    $region134: #{model_forward.1} parent=1 // pred_check
      _
    $region135: #{model_forward.1} parent=1 // pred_check_branch
      %259 = sbr.rel (0) target = $region137
    $region136: #{model_forward.1} parent=1 // pred_region
      %260 = dma.done [#allocation20], 48
    $region137: #{model_forward.1} parent=1 // pred_fallthru
      _
    // Predicated region
    $region138: #{model_forward.1} parent=1 // pred_check
      _
    $region139: #{model_forward.1} parent=1 // pred_check_branch
      %262 = sbr.rel (0) target = $region141
    $region140: #{model_forward.1} parent=1 // pred_region
      %263 = dma.done [#allocation20], 16
    $region141: #{model_forward.1} parent=1 // pred_fallthru
      _
    // Predicated region
    $region142: #{model_forward.1} parent=1 // pred_check
      _
    $region143: #{model_forward.1} parent=1 // pred_check_branch
      %265 = sbr.rel (0) target = $region145
    $region144: #{model_forward.1} parent=1 // pred_region
      %266 = dma.done [#allocation23], 16
    $region145: #{model_forward.1} parent=1 // pred_fallthru
      _
    // Predicated region
    $region146: #{model_forward.1} parent=1 // pred_check
      _
    $region147: #{model_forward.1} parent=1 // pred_check_branch
      %268 = sbr.rel (0) target = $region149
    $region148: #{model_forward.1} parent=1 // pred_region
      %269 = dma.done [#allocation23], 1024
    $region149: #{model_forward.1} parent=1 // pred_fallthru
      _
    // Predicated region
    $region150: #{model_forward.1} parent=1 // pred_check
      _
    $region151: #{model_forward.1} parent=1 // pred_check_branch
      %271 = sbr.rel (0) target = $region153
    $region152: #{model_forward.1} parent=1 // pred_region
      %272 = dma.done [#allocation26], 192
    $region153: #{model_forward.1} parent=1 // pred_fallthru
      _
    // Predicated region
    $region154: #{model_forward.1} parent=1 // pred_check
      _
    $region155: #{model_forward.1} parent=1 // pred_check_branch
      %274 = sbr.rel (0) target = $region157
    $region156: #{model_forward.1} parent=1 // pred_region
      %275 = dma.done [#allocation26], 1024
    $region157: #{model_forward.1} parent=1 // pred_fallthru
      _
    // Predicated region
    $region158: #{model_forward.1} parent=1 // pred_check
      _
    $region159: #{model_forward.1} parent=1 // pred_check_branch
      %277 = sbr.rel (0) target = $region161
    $region160: #{model_forward.1} parent=1 // pred_region
      %278 = dma.done [#allocation29], 32
    $region161: #{model_forward.1} parent=1 // pred_fallthru
      _
    %v279 = vld [vmem:[%s0] sm:$0xff]
    %v280 = vld [vmem:[%s0 + $0x8] sm:$0xff]
    %v281 = vld [vmem:[%s0 + $0x10] sm:$0xff]
    %v282 = vld [vmem:[%s0 + $0x18] sm:$0xff]
    %v283 = vld [vmem:[#allocation4] sm:$0xff]
    %v284 = vld [vmem:[#allocation7] sm:$0xff]
    %v285 = vld [vmem:[#allocation7 + $0x8] sm:$0xff]
    %v286 = vld [vmem:[#allocation7 + $0x10] sm:$0xff]
    %v287 = vld [vmem:[#allocation7 + $0x18] sm:$0xff]
    %vm288 = vcmask 64512
    %v290 = vsel %vm288, %v279, 0
    %v293 = vsel %vm288, %v280, 0
    %v296 = vsel %vm288, %v281, 0
    %v299 = vsel %vm288, %v282, 0
    %301 = vmatprep.subr.mxu0 0.0
    %302 = vmatpush1.msra.mxu0 0.0
    %303 = vmatprep.subr.mxu0 0.0
    %304 = vmatpush1.msra.mxu0 0.0
    %305 = vmatprep.subr.mxu0 0.0
    %306 = vmatpush1.msra.mxu0 0.0
    %307 = vmatprep.subr.mxu0 0.0
    %308 = vmatpush1.msra.mxu0 0.0
    %309 = vmatprep.subr.mxu0 0.0
    %310 = vmatpush1.msra.mxu0 0.0
    %311 = vmatprep.subr.mxu0 0.0
    %312 = vmatpush1.msra.mxu0 0.0
    %313 = vmatprep.subr.mxu0 0.0
    %314 = vmatpush1.msra.mxu0 0.0
    %315 = vmatprep.subr.mxu0 0.0
    %316 = vmatpush1.msra.mxu0 0.0
    %317 = vmatprep.subr.mxu0 0.0
    %318 = vmatpush1.msra.mxu0 0.0
    %319 = vmatprep.subr.mxu0 0.0
    %320 = vmatpush1.msra.mxu0 0.0
    %321 = vmatprep.subr.mxu0 0.0
    %322 = vmatpush1.msra.mxu0 0.0
    %323 = vmatprep.subr.mxu0 0.0
    %324 = vmatpush1.msra.mxu0 0.0
    %325 = vmatprep.subr.mxu0 0.0
    %326 = vmatpush1.msra.mxu0 0.0
    %327 = vmatprep.subr.mxu0 0.0
    %328 = vmatpush1.msra.mxu0 0.0
    %329 = vmatprep.subr.mxu0 0.0
    %330 = vmatpush1.msra.mxu0 0.0
    %331 = vmatprep.subr.mxu0 0.0
    %332 = vmatpush1.msra.mxu0 %v283
    %333 = vmatprep.subr.mxu0 0.0
    %334 = vmatpush2.msra.mxu0 0.0
    %335 = vmatprep.subr.mxu0 0.0
    %336 = vmatpush2.msra.mxu0 0.0
    %337 = vmatprep.subr.mxu0 0.0
    %338 = vmatpush2.msra.mxu0 0.0
    %339 = vmatprep.subr.mxu0 0.0
    %340 = vmatpush2.msra.mxu0 0.0
    %341 = vmatprep.subr.mxu0 0.0
    %342 = vmatpush2.msra.mxu0 0.0
    %343 = vmatprep.subr.mxu0 0.0
    %344 = vmatpush2.msra.mxu0 0.0
    %345 = vmatprep.subr.mxu0 0.0
    %346 = vmatpush2.msra.mxu0 0.0
    %347 = vmatprep.subr.mxu0 0.0
    %348 = vmatpush2.msra.mxu0 0.0
    %349 = vmatprep.subr.mxu0 0.0
    %350 = vmatpush2.msra.mxu0 0.0
    %351 = vmatprep.subr.mxu0 0.0
    %352 = vmatpush2.msra.mxu0 0.0
    %353 = vmatprep.subr.mxu0 0.0
    %354 = vmatpush2.msra.mxu0 0.0
    %355 = vmatprep.subr.mxu0 0.0
    %356 = vmatpush2.msra.mxu0 0.0
    %357 = vmatprep.subr.mxu0 0.0
    %358 = vmatpush2.msra.mxu0 0.0
    %359 = vmatprep.subr.mxu0 0.0
    %360 = vmatpush2.msra.mxu0 0.0
    %361 = vmatprep.subr.mxu0 0.0
    %362 = vmatpush2.msra.mxu0 0.0
    %363 = vmatprep.subr.mxu0 0.0
    %364 = vmatpush2.msra.mxu0 0.0
    %365 = vmatprep.mubr.f32.mxu0 0.0
    %366 = vmatmul.mubr.f32.gmra.mxu0 %v290
    %v367 = vpop.f32.mrf.mxu0
    %v368 = vadd.f32 %v284, %v367
    %v369 = vpop.f32.mrf.mxu0
    %370 = vmatprep.mubr.f32.mxu0 0.0
    %371 = vmatmul.mubr.f32.gmra.mxu0 %v293
    %v372 = vpop.f32.mrf.mxu0
    %v373 = vadd.f32 %v285, %v372
    %v374 = vpop.f32.mrf.mxu0
    %375 = vmatprep.mubr.f32.mxu0 0.0
    %376 = vmatmul.mubr.f32.gmra.mxu0 %v296
    %v377 = vpop.f32.mrf.mxu0
    %v378 = vadd.f32 %v286, %v377
    %v379 = vpop.f32.mrf.mxu0
    %380 = vmatprep.mubr.f32.mxu0 0.0
    %381 = vmatmul.mubr.f32.gmra.mxu0 %v299
    %v382 = vpop.f32.mrf.mxu0
    %v383 = vadd.f32 %v287, %v382
    %v384 = vpop.f32.mrf.mxu0
    %385 = vdwg.mxu0
    %v386 = vld [vmem:[%s4] sm:$0xff]
    %v387 = vld [vmem:[%s4 + $0x8] sm:$0xff]
    %v388 = vld [vmem:[%s4 + $0x10] sm:$0xff]
    %v389 = vld [vmem:[%s4 + $0x18] sm:$0xff]
    %v390 = vld [vmem:[#allocation9] sm:$0x1]
    %v392 = vlaneseq
    %v393 = vshrl.u32 %v392, 7
    %v394 = vsub.s32 0, %v393
    %v395 = vrot.slane %v390, %v394
    %vm397 = vcmask 261120
    %v399 = vsel %vm397, %v368, 0
    %v402 = vsel %vm397, %v373, 0
    %v405 = vsel %vm397, %v378, 0
    %v408 = vsel %vm397, %v383, 0
    %410 = vmatprep.subr.mxu0 0.0
    %411 = vmatpush1.msra.mxu0 0.0
    %412 = vmatprep.subr.mxu0 0.0
    %413 = vmatpush1.msra.mxu0 0.0
    %414 = vmatprep.subr.mxu0 0.0
    %415 = vmatpush1.msra.mxu0 0.0
    %416 = vmatprep.subr.mxu0 0.0
    %417 = vmatpush1.msra.mxu0 0.0
    %418 = vmatprep.subr.mxu0 0.0
    %419 = vmatpush1.msra.mxu0 0.0
    %420 = vmatprep.subr.mxu0 0.0
    %421 = vmatpush1.msra.mxu0 0.0
    %422 = vmatprep.subr.mxu0 0.0
    %423 = vmatpush1.msra.mxu0 0.0
    %424 = vmatprep.subr.mxu0 0.0
    %425 = vmatpush1.msra.mxu0 0.0
    %426 = vmatprep.subr.mxu0 0.0
    %427 = vmatpush1.msra.mxu0 0.0
    %428 = vmatprep.subr.mxu0 0.0
    %429 = vmatpush1.msra.mxu0 0.0
    %430 = vmatprep.subr.mxu0 0.0
    %431 = vmatpush1.msra.mxu0 0.0
    %432 = vmatprep.subr.mxu0 0.0
    %433 = vmatpush1.msra.mxu0 0.0
    %434 = vmatprep.subr.mxu0 0.0
    %435 = vmatpush1.msra.mxu0 %v389
    %436 = vmatprep.subr.mxu0 0.0
    %437 = vmatpush1.msra.mxu0 %v388
    %438 = vmatprep.subr.mxu0 0.0
    %439 = vmatpush1.msra.mxu0 %v387
    %440 = vmatprep.subr.mxu0 0.0
    %441 = vmatpush1.msra.mxu0 %v386
    %442 = vmatprep.subr.mxu0 0.0
    %443 = vmatpush2.msra.mxu0 0.0
    %444 = vmatprep.subr.mxu0 0.0
    %445 = vmatpush2.msra.mxu0 0.0
    %446 = vmatprep.subr.mxu0 0.0
    %447 = vmatpush2.msra.mxu0 0.0
    %448 = vmatprep.subr.mxu0 0.0
    %449 = vmatpush2.msra.mxu0 0.0
    %450 = vmatprep.subr.mxu0 0.0
    %451 = vmatpush2.msra.mxu0 0.0
    %452 = vmatprep.subr.mxu0 0.0
    %453 = vmatpush2.msra.mxu0 0.0
    %454 = vmatprep.subr.mxu0 0.0
    %455 = vmatpush2.msra.mxu0 0.0
    %456 = vmatprep.subr.mxu0 0.0
    %457 = vmatpush2.msra.mxu0 0.0
    %458 = vmatprep.subr.mxu0 0.0
    %459 = vmatpush2.msra.mxu0 0.0
    %460 = vmatprep.subr.mxu0 0.0
    %461 = vmatpush2.msra.mxu0 0.0
    %462 = vmatprep.subr.mxu0 0.0
    %463 = vmatpush2.msra.mxu0 0.0
    %464 = vmatprep.subr.mxu0 0.0
    %465 = vmatpush2.msra.mxu0 0.0
    %466 = vmatprep.subr.mxu0 0.0
    %467 = vmatpush2.msra.mxu0 0.0
    %468 = vmatprep.subr.mxu0 0.0
    %469 = vmatpush2.msra.mxu0 0.0
    %470 = vmatprep.subr.mxu0 0.0
    %471 = vmatpush2.msra.mxu0 0.0
    %472 = vmatprep.subr.mxu0 0.0
    %473 = vmatpush2.msra.mxu0 0.0
    %474 = vmatprep.mubr.f32.mxu0 0.0
    %475 = vmatmul.mubr.f32.gmra.mxu0 %v399
    %v476 = vpop.f32.mrf.mxu0
    %v477 = vadd.f32 %v395, %v476
    %v478 = vpop.f32.mrf.mxu0
    %479 = vmatprep.mubr.f32.mxu0 0.0
    %480 = vmatmul.mubr.f32.gmra.mxu0 %v402
    %v481 = vpop.f32.mrf.mxu0
    %v482 = vadd.f32 %v395, %v481
    %v483 = vpop.f32.mrf.mxu0
    %484 = vmatprep.mubr.f32.mxu0 0.0
    %485 = vmatmul.mubr.f32.gmra.mxu0 %v405
    %v486 = vpop.f32.mrf.mxu0
    %v487 = vadd.f32 %v395, %v486
    %v488 = vpop.f32.mrf.mxu0
    %489 = vmatprep.mubr.f32.mxu0 0.0
    %490 = vmatmul.mubr.f32.gmra.mxu0 %v408
    %v491 = vpop.f32.mrf.mxu0
    %v492 = vadd.f32 %v395, %v491
    %v493 = vpop.f32.mrf.mxu0
    %494 = vdwg.mxu0
    %495 = vst.msk [vmem:[#allocation2] sm:$0xff] %vm397, %v368
    %496 = vst.msk [vmem:[#allocation2 + $0x8] sm:$0xff] %vm397, %v373
    %vm497 = vcmask 254976
    %498 = vst.msk [vmem:[#allocation2 + $0x1e] sm:$0x3] %vm497, 0.0
    %499 = vst.msk [vmem:[#allocation2 + $0x20] sm:$0xff] %vm397, %v378
    %500 = vst.msk [vmem:[#allocation2 + $0x28] sm:$0xff] %vm397, %v383
    %501 = vst.msk [vmem:[#allocation2 + $0x3e] sm:$0x3] %vm497, 0.0
    %v502 = vld [vmem:[#allocation10] sm:$0xff]
    %v503 = vld [vmem:[#allocation10 + $0x8] sm:$0xff]
    %v505 = vsel %vm397, %v502, 0
    %v508 = vsel %vm397, %v503, 0
    %510 = vmatprep.subr.mxu0 0.0
    %511 = vmatpush1.msra.mxu0 0.0
    %512 = vmatprep.subr.mxu0 0.0
    %513 = vmatpush1.msra.mxu0 0.0
    %514 = vmatprep.subr.mxu0 0.0
    %515 = vmatpush1.msra.mxu0 0.0
    %516 = vmatprep.subr.mxu0 0.0
    %517 = vmatpush1.msra.mxu0 0.0
    %518 = vmatprep.subr.mxu0 0.0
    %519 = vmatpush1.msra.mxu0 0.0
    %520 = vmatprep.subr.mxu0 0.0
    %521 = vmatpush1.msra.mxu0 0.0
    %522 = vmatprep.subr.mxu0 0.0
    %523 = vmatpush1.msra.mxu0 0.0
    %524 = vmatprep.subr.mxu0 0.0
    %525 = vmatpush1.msra.mxu0 0.0
    %526 = vmatprep.subr.mxu0 0.0
    %527 = vmatpush1.msra.mxu0 0.0
    %528 = vmatprep.subr.mxu0 0.0
    %529 = vmatpush1.msra.mxu0 0.0
    %530 = vmatprep.subr.mxu0 0.0
    %531 = vmatpush1.msra.mxu0 0.0
    %532 = vmatprep.subr.mxu0 0.0
    %533 = vmatpush1.msra.mxu0 0.0
    %534 = vmatprep.subr.mxu0 0.0
    %535 = vmatpush1.msra.mxu0 %v492
    %536 = vmatprep.subr.mxu0 0.0
    %537 = vmatpush1.msra.mxu0 %v487
    %538 = vmatprep.subr.mxu0 0.0
    %539 = vmatpush1.msra.mxu0 %v482
    %540 = vmatprep.subr.mxu0 0.0
    %541 = vmatpush1.msra.mxu0 %v477
    %542 = vmatprep.subr.mxu0 0.0
    %543 = vmatpush2.msra.mxu0 0.0
    %544 = vmatprep.subr.mxu0 0.0
    %545 = vmatpush2.msra.mxu0 0.0
    %546 = vmatprep.subr.mxu0 0.0
    %547 = vmatpush2.msra.mxu0 0.0
    %548 = vmatprep.subr.mxu0 0.0
    %549 = vmatpush2.msra.mxu0 0.0
    %550 = vmatprep.subr.mxu0 0.0
    %551 = vmatpush2.msra.mxu0 0.0
    %552 = vmatprep.subr.mxu0 0.0
    %553 = vmatpush2.msra.mxu0 0.0
    %554 = vmatprep.subr.mxu0 0.0
    %555 = vmatpush2.msra.mxu0 0.0
    %556 = vmatprep.subr.mxu0 0.0
    %557 = vmatpush2.msra.mxu0 0.0
    %558 = vmatprep.subr.mxu0 0.0
    %559 = vmatpush2.msra.mxu0 0.0
    %560 = vmatprep.subr.mxu0 0.0
    %561 = vmatpush2.msra.mxu0 0.0
    %562 = vmatprep.subr.mxu0 0.0
    %563 = vmatpush2.msra.mxu0 0.0
    %564 = vmatprep.subr.mxu0 0.0
    %565 = vmatpush2.msra.mxu0 0.0
    %566 = vmatprep.subr.mxu0 0.0
    %567 = vmatpush2.msra.mxu0 0.0
    %568 = vmatprep.subr.mxu0 0.0
    %569 = vmatpush2.msra.mxu0 0.0
    %570 = vmatprep.subr.mxu0 0.0
    %571 = vmatpush2.msra.mxu0 0.0
    %572 = vmatprep.subr.mxu0 0.0
    %573 = vmatpush2.msra.mxu0 0.0
    %574 = vmatprep.mubr.f32.mxu0 0.0
    %575 = vmatmul.mubr.f32.gmra.mxu0 %v505
    %v576 = vpop.f32.mrf.mxu0
    %v577 = vadd.f32 0.0, %v576
    %v578 = vpop.f32.mrf.mxu0
    %579 = vmatprep.mubr.f32.mxu0 0.0
    %580 = vmatmul.mubr.f32.gmra.mxu0 %v508
    %v581 = vpop.f32.mrf.mxu0
    %v582 = vadd.f32 0.0, %v581
    %v583 = vpop.f32.mrf.mxu0
    %584 = vdwg.mxu0
    %v585 = vld [vmem:[%s12] sm:$0xff]
    %v586 = vld [vmem:[%s12 + $0x8] sm:$0xff]
    %v587 = vld [vmem:[#allocation12] sm:$0xff]
    %v588 = vld [vmem:[#allocation12 + $0x8] sm:$0xff]
    %v590 = vsel %vm397, %v587, 0
    %v593 = vsel %vm397, %v588, 0
    %595 = vmatprep.subr.mxu0 0.0
    %596 = vmatpush1.msra.mxu0 0.0
    %597 = vmatprep.subr.mxu0 0.0
    %598 = vmatpush1.msra.mxu0 0.0
    %599 = vmatprep.subr.mxu0 0.0
    %600 = vmatpush1.msra.mxu0 0.0
    %601 = vmatprep.subr.mxu0 0.0
    %602 = vmatpush1.msra.mxu0 0.0
    %603 = vmatprep.subr.mxu0 0.0
    %604 = vmatpush1.msra.mxu0 0.0
    %605 = vmatprep.subr.mxu0 0.0
    %606 = vmatpush1.msra.mxu0 0.0
    %607 = vmatprep.subr.mxu0 0.0
    %608 = vmatpush1.msra.mxu0 0.0
    %609 = vmatprep.subr.mxu0 0.0
    %610 = vmatpush1.msra.mxu0 0.0
    %611 = vmatprep.subr.mxu0 0.0
    %612 = vmatpush1.msra.mxu0 0.0
    %613 = vmatprep.subr.mxu0 0.0
    %614 = vmatpush1.msra.mxu0 0.0
    %615 = vmatprep.subr.mxu0 0.0
    %616 = vmatpush1.msra.mxu0 0.0
    %617 = vmatprep.subr.mxu0 0.0
    %618 = vmatpush1.msra.mxu0 0.0
    %619 = vmatprep.subr.mxu0 0.0
    %620 = vmatpush1.msra.mxu0 %v492
    %621 = vmatprep.subr.mxu0 0.0
    %622 = vmatpush1.msra.mxu0 %v487
    %623 = vmatprep.subr.mxu0 0.0
    %624 = vmatpush1.msra.mxu0 %v482
    %625 = vmatprep.subr.mxu0 0.0
    %626 = vmatpush1.msra.mxu0 %v477
    %627 = vmatprep.subr.mxu0 0.0
    %628 = vmatpush2.msra.mxu0 0.0
    %629 = vmatprep.subr.mxu0 0.0
    %630 = vmatpush2.msra.mxu0 0.0
    %631 = vmatprep.subr.mxu0 0.0
    %632 = vmatpush2.msra.mxu0 0.0
    %633 = vmatprep.subr.mxu0 0.0
    %634 = vmatpush2.msra.mxu0 0.0
    %635 = vmatprep.subr.mxu0 0.0
    %636 = vmatpush2.msra.mxu0 0.0
    %637 = vmatprep.subr.mxu0 0.0
    %638 = vmatpush2.msra.mxu0 0.0
    %639 = vmatprep.subr.mxu0 0.0
    %640 = vmatpush2.msra.mxu0 0.0
    %641 = vmatprep.subr.mxu0 0.0
    %642 = vmatpush2.msra.mxu0 0.0
    %643 = vmatprep.subr.mxu0 0.0
    %644 = vmatpush2.msra.mxu0 0.0
    %645 = vmatprep.subr.mxu0 0.0
    %646 = vmatpush2.msra.mxu0 0.0
    %647 = vmatprep.subr.mxu0 0.0
    %648 = vmatpush2.msra.mxu0 0.0
    %649 = vmatprep.subr.mxu0 0.0
    %650 = vmatpush2.msra.mxu0 0.0
    %651 = vmatprep.subr.mxu0 0.0
    %652 = vmatpush2.msra.mxu0 0.0
    %653 = vmatprep.subr.mxu0 0.0
    %654 = vmatpush2.msra.mxu0 0.0
    %655 = vmatprep.subr.mxu0 0.0
    %656 = vmatpush2.msra.mxu0 0.0
    %657 = vmatprep.subr.mxu0 0.0
    %658 = vmatpush2.msra.mxu0 0.0
    %659 = vmatprep.mubr.f32.mxu0 0.0
    %660 = vmatmul.mubr.f32.gmra.mxu0 %v590
    %v661 = vpop.f32.mrf.mxu0
    %v662 = vadd.f32 0.0, %v661
    %v663 = vpop.f32.mrf.mxu0
    %664 = vmatprep.mubr.f32.mxu0 0.0
    %665 = vmatmul.mubr.f32.gmra.mxu0 %v593
    %v666 = vpop.f32.mrf.mxu0
    %v667 = vadd.f32 0.0, %v666
    %v668 = vpop.f32.mrf.mxu0
    %669 = vdwg.mxu0
    %s670 = scalar_lea.vmem %s12, 16
    %v671 = vld [vmem:[%s670] sm:$0xff]
    %v672 = vld [vmem:[%s670 + $0x8] sm:$0xff]
    %vm673 = vcmask 130048
    %v675 = vsel %vm673, %v662, 0
    %v678 = vsel %vm673, %v667, 0
    %680 = vmatprep.subr.mxu0 0.0
    %681 = vmatpush1.msra.mxu0 0.0
    %682 = vmatprep.subr.mxu0 0.0
    %683 = vmatpush1.msra.mxu0 0.0
    %684 = vmatprep.subr.mxu0 0.0
    %685 = vmatpush1.msra.mxu0 0.0
    %686 = vmatprep.subr.mxu0 0.0
    %687 = vmatpush1.msra.mxu0 0.0
    %688 = vmatprep.subr.mxu0 0.0
    %689 = vmatpush1.msra.mxu0 0.0
    %690 = vmatprep.subr.mxu0 0.0
    %691 = vmatpush1.msra.mxu0 0.0
    %692 = vmatprep.subr.mxu0 0.0
    %693 = vmatpush1.msra.mxu0 0.0
    %694 = vmatprep.subr.mxu0 0.0
    %695 = vmatpush1.msra.mxu0 0.0
    %696 = vmatprep.subr.mxu0 0.0
    %697 = vmatpush1.msra.mxu0 0.0
    %698 = vmatprep.subr.mxu0 0.0
    %699 = vmatpush1.msra.mxu0 0.0
    %700 = vmatprep.subr.mxu0 0.0
    %701 = vmatpush1.msra.mxu0 0.0
    %702 = vmatprep.subr.mxu0 0.0
    %703 = vmatpush1.msra.mxu0 0.0
    %704 = vmatprep.subr.mxu0 0.0
    %705 = vmatpush1.msra.mxu0 0.0
    %706 = vmatprep.subr.mxu0 0.0
    %707 = vmatpush1.msra.mxu0 0.0
    %708 = vmatprep.subr.mxu0 0.0
    %709 = vmatpush1.msra.mxu0 %v672
    %710 = vmatprep.subr.mxu0 0.0
    %711 = vmatpush1.msra.mxu0 %v671
    %712 = vmatprep.subr.mxu0 0.0
    %713 = vmatpush2.msra.mxu0 0.0
    %714 = vmatprep.subr.mxu0 0.0
    %715 = vmatpush2.msra.mxu0 0.0
    %716 = vmatprep.subr.mxu0 0.0
    %717 = vmatpush2.msra.mxu0 0.0
    %718 = vmatprep.subr.mxu0 0.0
    %719 = vmatpush2.msra.mxu0 0.0
    %720 = vmatprep.subr.mxu0 0.0
    %721 = vmatpush2.msra.mxu0 0.0
    %722 = vmatprep.subr.mxu0 0.0
    %723 = vmatpush2.msra.mxu0 0.0
    %724 = vmatprep.subr.mxu0 0.0
    %725 = vmatpush2.msra.mxu0 0.0
    %726 = vmatprep.subr.mxu0 0.0
    %727 = vmatpush2.msra.mxu0 0.0
    %728 = vmatprep.subr.mxu0 0.0
    %729 = vmatpush2.msra.mxu0 0.0
    %730 = vmatprep.subr.mxu0 0.0
    %731 = vmatpush2.msra.mxu0 0.0
    %732 = vmatprep.subr.mxu0 0.0
    %733 = vmatpush2.msra.mxu0 0.0
    %734 = vmatprep.subr.mxu0 0.0
    %735 = vmatpush2.msra.mxu0 0.0
    %736 = vmatprep.subr.mxu0 0.0
    %737 = vmatpush2.msra.mxu0 0.0
    %738 = vmatprep.subr.mxu0 0.0
    %739 = vmatpush2.msra.mxu0 0.0
    %740 = vmatprep.subr.mxu0 0.0
    %741 = vmatpush2.msra.mxu0 0.0
    %742 = vmatprep.subr.mxu0 0.0
    %743 = vmatpush2.msra.mxu0 0.0
    %744 = vmatprep.mubr.f32.mxu0 0.0
    %745 = vmatmul.mubr.f32.gmra.mxu0 %v675
    %v746 = vpop.f32.mrf.mxu0
    %v747 = vadd.f32 0.0, %v746
    %v748 = vpop.f32.mrf.mxu0
    %749 = vmatprep.mubr.f32.mxu0 0.0
    %750 = vmatmul.mubr.f32.gmra.mxu0 %v678
    %v751 = vpop.f32.mrf.mxu0
    %v752 = vadd.f32 0.0, %v751
    %v753 = vpop.f32.mrf.mxu0
    %754 = vdwg.mxu0
    %v756 = vsel %vm673, %v577, 0
    %v759 = vsel %vm673, %v582, 0
    %761 = vmatprep.subr.mxu0 0.0
    %762 = vmatpush1.msra.mxu0 0.0
    %763 = vmatprep.subr.mxu0 0.0
    %764 = vmatpush1.msra.mxu0 0.0
    %765 = vmatprep.subr.mxu0 0.0
    %766 = vmatpush1.msra.mxu0 0.0
    %767 = vmatprep.subr.mxu0 0.0
    %768 = vmatpush1.msra.mxu0 0.0
    %769 = vmatprep.subr.mxu0 0.0
    %770 = vmatpush1.msra.mxu0 0.0
    %771 = vmatprep.subr.mxu0 0.0
    %772 = vmatpush1.msra.mxu0 0.0
    %773 = vmatprep.subr.mxu0 0.0
    %774 = vmatpush1.msra.mxu0 0.0
    %775 = vmatprep.subr.mxu0 0.0
    %776 = vmatpush1.msra.mxu0 0.0
    %777 = vmatprep.subr.mxu0 0.0
    %778 = vmatpush1.msra.mxu0 0.0
    %779 = vmatprep.subr.mxu0 0.0
    %780 = vmatpush1.msra.mxu0 0.0
    %781 = vmatprep.subr.mxu0 0.0
    %782 = vmatpush1.msra.mxu0 0.0
    %783 = vmatprep.subr.mxu0 0.0
    %784 = vmatpush1.msra.mxu0 0.0
    %785 = vmatprep.subr.mxu0 0.0
    %786 = vmatpush1.msra.mxu0 0.0
    %787 = vmatprep.subr.mxu0 0.0
    %788 = vmatpush1.msra.mxu0 0.0
    %789 = vmatprep.subr.mxu0 0.0
    %790 = vmatpush1.msra.mxu0 %v586
    %791 = vmatprep.subr.mxu0 0.0
    %792 = vmatpush1.msra.mxu0 %v585
    %793 = vmatprep.subr.mxu0 0.0
    %794 = vmatpush2.msra.mxu0 0.0
    %795 = vmatprep.subr.mxu0 0.0
    %796 = vmatpush2.msra.mxu0 0.0
    %797 = vmatprep.subr.mxu0 0.0
    %798 = vmatpush2.msra.mxu0 0.0
    %799 = vmatprep.subr.mxu0 0.0
    %800 = vmatpush2.msra.mxu0 0.0
    %801 = vmatprep.subr.mxu0 0.0
    %802 = vmatpush2.msra.mxu0 0.0
    %803 = vmatprep.subr.mxu0 0.0
    %804 = vmatpush2.msra.mxu0 0.0
    %805 = vmatprep.subr.mxu0 0.0
    %806 = vmatpush2.msra.mxu0 0.0
    %807 = vmatprep.subr.mxu0 0.0
    %808 = vmatpush2.msra.mxu0 0.0
    %809 = vmatprep.subr.mxu0 0.0
    %810 = vmatpush2.msra.mxu0 0.0
    %811 = vmatprep.subr.mxu0 0.0
    %812 = vmatpush2.msra.mxu0 0.0
    %813 = vmatprep.subr.mxu0 0.0
    %814 = vmatpush2.msra.mxu0 0.0
    %815 = vmatprep.subr.mxu0 0.0
    %816 = vmatpush2.msra.mxu0 0.0
    %817 = vmatprep.subr.mxu0 0.0
    %818 = vmatpush2.msra.mxu0 0.0
    %819 = vmatprep.subr.mxu0 0.0
    %820 = vmatpush2.msra.mxu0 0.0
    %821 = vmatprep.subr.mxu0 0.0
    %822 = vmatpush2.msra.mxu0 0.0
    %823 = vmatprep.subr.mxu0 0.0
    %824 = vmatpush2.msra.mxu0 0.0
    %825 = vmatprep.mubr.f32.mxu0 0.0
    %826 = vmatmul.mubr.f32.gmra.mxu0 %v756
    %v827 = vpop.f32.mrf.mxu0
    %v828 = vadd.f32 %v747, %v827
    %v829 = vpop.f32.mrf.mxu0
    %830 = vmatprep.mubr.f32.mxu0 0.0
    %831 = vmatmul.mubr.f32.gmra.mxu0 %v759
    %v832 = vpop.f32.mrf.mxu0
    %v833 = vadd.f32 %v752, %v832
    %v834 = vpop.f32.mrf.mxu0
    %835 = vdwg.mxu0
    %v836 = vld [vmem:[#allocation19] sm:$0x1]
    %v838 = vlaneseq
    %v839 = vshrl.u32 %v838, 7
    %v840 = vsub.s32 0, %v839
    %v841 = vrot.slane %v836, %v840
    %v843 = vadd.f32 %v828, %v841
    %v844 = vadd.f32 %v833, %v841
    %vm845 = vcmp.gt.f32.partialorder %v843, 0.0
    %vm846 = vcmp.gt.f32.partialorder %v844, 0.0
    %v847 = vmin.f32 %v843, 0.0
    %v848 = vmin.f32 %v844, 0.0
    %v849 = vmul.f32 %v847, 1.442695
    %v850 = vpow.pop %v849
    %v851 = vmul.f32 %v848, 1.442695
    %v852 = vpow.pop %v851
    %v853 = vsub.f32 %v850, 1.0
    %v854 = vsub.f32 %v852, 1.0
    %v855 = vsel %vm845, %v843, %v853
    %v856 = vsel %vm846, %v844, %v854
    %v857 = vld [vmem:[%s14] sm:$0xff]
    %v858 = vld [vmem:[%s14 + $0x8] sm:$0xff]
    %v859 = vld [vmem:[%s15] sm:$0x1]
    %v861 = vlaneseq
    %v862 = vshrl.u32 %v861, 7
    %v863 = vsub.s32 0, %v862
    %v864 = vrot.slane %v859, %v863
    %v867 = vsel %vm673, %v855, 0
    %v870 = vsel %vm673, %v856, 0
    %872 = vmatprep.subr.mxu0 0.0
    %873 = vmatpush1.msra.mxu0 0.0
    %874 = vmatprep.subr.mxu0 0.0
    %875 = vmatpush1.msra.mxu0 0.0
    %876 = vmatprep.subr.mxu0 0.0
    %877 = vmatpush1.msra.mxu0 0.0
    %878 = vmatprep.subr.mxu0 0.0
    %879 = vmatpush1.msra.mxu0 0.0
    %880 = vmatprep.subr.mxu0 0.0
    %881 = vmatpush1.msra.mxu0 0.0
    %882 = vmatprep.subr.mxu0 0.0
    %883 = vmatpush1.msra.mxu0 0.0
    %884 = vmatprep.subr.mxu0 0.0
    %885 = vmatpush1.msra.mxu0 0.0
    %886 = vmatprep.subr.mxu0 0.0
    %887 = vmatpush1.msra.mxu0 0.0
    %888 = vmatprep.subr.mxu0 0.0
    %889 = vmatpush1.msra.mxu0 0.0
    %890 = vmatprep.subr.mxu0 0.0
    %891 = vmatpush1.msra.mxu0 0.0
    %892 = vmatprep.subr.mxu0 0.0
    %893 = vmatpush1.msra.mxu0 0.0
    %894 = vmatprep.subr.mxu0 0.0
    %895 = vmatpush1.msra.mxu0 0.0
    %896 = vmatprep.subr.mxu0 0.0
    %897 = vmatpush1.msra.mxu0 0.0
    %898 = vmatprep.subr.mxu0 0.0
    %899 = vmatpush1.msra.mxu0 0.0
    %900 = vmatprep.subr.mxu0 0.0
    %901 = vmatpush1.msra.mxu0 %v858
    %902 = vmatprep.subr.mxu0 0.0
    %903 = vmatpush1.msra.mxu0 %v857
    %904 = vmatprep.subr.mxu0 0.0
    %905 = vmatpush2.msra.mxu0 0.0
    %906 = vmatprep.subr.mxu0 0.0
    %907 = vmatpush2.msra.mxu0 0.0
    %908 = vmatprep.subr.mxu0 0.0
    %909 = vmatpush2.msra.mxu0 0.0
    %910 = vmatprep.subr.mxu0 0.0
    %911 = vmatpush2.msra.mxu0 0.0
    %912 = vmatprep.subr.mxu0 0.0
    %913 = vmatpush2.msra.mxu0 0.0
    %914 = vmatprep.subr.mxu0 0.0
    %915 = vmatpush2.msra.mxu0 0.0
    %916 = vmatprep.subr.mxu0 0.0
    %917 = vmatpush2.msra.mxu0 0.0
    %918 = vmatprep.subr.mxu0 0.0
    %919 = vmatpush2.msra.mxu0 0.0
    %920 = vmatprep.subr.mxu0 0.0
    %921 = vmatpush2.msra.mxu0 0.0
    %922 = vmatprep.subr.mxu0 0.0
    %923 = vmatpush2.msra.mxu0 0.0
    %924 = vmatprep.subr.mxu0 0.0
    %925 = vmatpush2.msra.mxu0 0.0
    %926 = vmatprep.subr.mxu0 0.0
    %927 = vmatpush2.msra.mxu0 0.0
    %928 = vmatprep.subr.mxu0 0.0
    %929 = vmatpush2.msra.mxu0 0.0
    %930 = vmatprep.subr.mxu0 0.0
    %931 = vmatpush2.msra.mxu0 0.0
    %932 = vmatprep.subr.mxu0 0.0
    %933 = vmatpush2.msra.mxu0 0.0
    %934 = vmatprep.subr.mxu0 0.0
    %935 = vmatpush2.msra.mxu0 0.0
    %936 = vmatprep.mubr.f32.mxu0 0.0
    %937 = vmatmul.mubr.f32.gmra.mxu0 %v867
    %v938 = vpop.f32.mrf.mxu0
    %v939 = vadd.f32 %v864, %v938
    %v940 = vpop.f32.mrf.mxu0
    %941 = vmatprep.mubr.f32.mxu0 0.0
    %942 = vmatmul.mubr.f32.gmra.mxu0 %v870
    %v943 = vpop.f32.mrf.mxu0
    %v944 = vadd.f32 %v864, %v943
    %v945 = vpop.f32.mrf.mxu0
    %946 = vdwg.mxu0
    %947 = vst.msk [vmem:[#allocation2 + $0x10] sm:$0xff] %vm397, %v939
    %948 = vst.msk [vmem:[#allocation2 + $0x30] sm:$0xff] %vm397, %v944
    %v949 = vld [vmem:[#allocation13] sm:$0xff]
    %v951 = vsel %vm673, %v949, 0
    %953 = vmatprep.subr.mxu0 0.0
    %954 = vmatpush1.msra.mxu0 0.0
    %955 = vmatprep.subr.mxu0 0.0
    %956 = vmatpush1.msra.mxu0 0.0
    %957 = vmatprep.subr.mxu0 0.0
    %958 = vmatpush1.msra.mxu0 0.0
    %959 = vmatprep.subr.mxu0 0.0
    %960 = vmatpush1.msra.mxu0 0.0
    %961 = vmatprep.subr.mxu0 0.0
    %962 = vmatpush1.msra.mxu0 0.0
    %963 = vmatprep.subr.mxu0 0.0
    %964 = vmatpush1.msra.mxu0 0.0
    %965 = vmatprep.subr.mxu0 0.0
    %966 = vmatpush1.msra.mxu0 0.0
    %967 = vmatprep.subr.mxu0 0.0
    %968 = vmatpush1.msra.mxu0 0.0
    %969 = vmatprep.subr.mxu0 0.0
    %970 = vmatpush1.msra.mxu0 0.0
    %971 = vmatprep.subr.mxu0 0.0
    %972 = vmatpush1.msra.mxu0 0.0
    %973 = vmatprep.subr.mxu0 0.0
    %974 = vmatpush1.msra.mxu0 0.0
    %975 = vmatprep.subr.mxu0 0.0
    %976 = vmatpush1.msra.mxu0 0.0
    %977 = vmatprep.subr.mxu0 0.0
    %978 = vmatpush1.msra.mxu0 0.0
    %979 = vmatprep.subr.mxu0 0.0
    %980 = vmatpush1.msra.mxu0 0.0
    %981 = vmatprep.subr.mxu0 0.0
    %982 = vmatpush1.msra.mxu0 %v856
    %983 = vmatprep.subr.mxu0 0.0
    %984 = vmatpush1.msra.mxu0 %v855
    %985 = vmatprep.subr.mxu0 0.0
    %986 = vmatpush2.msra.mxu0 0.0
    %987 = vmatprep.subr.mxu0 0.0
    %988 = vmatpush2.msra.mxu0 0.0
    %989 = vmatprep.subr.mxu0 0.0
    %990 = vmatpush2.msra.mxu0 0.0
    %991 = vmatprep.subr.mxu0 0.0
    %992 = vmatpush2.msra.mxu0 0.0
    %993 = vmatprep.subr.mxu0 0.0
    %994 = vmatpush2.msra.mxu0 0.0
    %995 = vmatprep.subr.mxu0 0.0
    %996 = vmatpush2.msra.mxu0 0.0
    %997 = vmatprep.subr.mxu0 0.0
    %998 = vmatpush2.msra.mxu0 0.0
    %999 = vmatprep.subr.mxu0 0.0
    %1000 = vmatpush2.msra.mxu0 0.0
    %1001 = vmatprep.subr.mxu0 0.0
    %1002 = vmatpush2.msra.mxu0 0.0
    %1003 = vmatprep.subr.mxu0 0.0
    %1004 = vmatpush2.msra.mxu0 0.0
    %1005 = vmatprep.subr.mxu0 0.0
    %1006 = vmatpush2.msra.mxu0 0.0
    %1007 = vmatprep.subr.mxu0 0.0
    %1008 = vmatpush2.msra.mxu0 0.0
    %1009 = vmatprep.subr.mxu0 0.0
    %1010 = vmatpush2.msra.mxu0 0.0
    %1011 = vmatprep.subr.mxu0 0.0
    %1012 = vmatpush2.msra.mxu0 0.0
    %1013 = vmatprep.subr.mxu0 0.0
    %1014 = vmatpush2.msra.mxu0 0.0
    %1015 = vmatprep.subr.mxu0 0.0
    %1016 = vmatpush2.msra.mxu0 0.0
    %1017 = vmatprep.mubr.f32.mxu0 0.0
    %1018 = vmatmul.mubr.f32.gmra.mxu0 %v951
    %v1019 = vpop.f32.mrf.mxu0
    %v1020 = vadd.f32 0.0, %v1019
    %v1021 = vpop.f32.mrf.mxu0
    %1022 = vdwg.mxu0
    %s1023 = scalar_lea.vmem %s12, 32
    %v1024 = vld [vmem:[%s1023] sm:$0xff]
    %v1025 = vld [vmem:[%s1023 + $0x8] sm:$0xff]
    %v1026 = vld [vmem:[#allocation15] sm:$0xff]
    %v1028 = vsel %vm673, %v1026, 0
    %1030 = vmatprep.subr.mxu0 0.0
    %1031 = vmatpush1.msra.mxu0 0.0
    %1032 = vmatprep.subr.mxu0 0.0
    %1033 = vmatpush1.msra.mxu0 0.0
    %1034 = vmatprep.subr.mxu0 0.0
    %1035 = vmatpush1.msra.mxu0 0.0
    %1036 = vmatprep.subr.mxu0 0.0
    %1037 = vmatpush1.msra.mxu0 0.0
    %1038 = vmatprep.subr.mxu0 0.0
    %1039 = vmatpush1.msra.mxu0 0.0
    %1040 = vmatprep.subr.mxu0 0.0
    %1041 = vmatpush1.msra.mxu0 0.0
    %1042 = vmatprep.subr.mxu0 0.0
    %1043 = vmatpush1.msra.mxu0 0.0
    %1044 = vmatprep.subr.mxu0 0.0
    %1045 = vmatpush1.msra.mxu0 0.0
    %1046 = vmatprep.subr.mxu0 0.0
    %1047 = vmatpush1.msra.mxu0 0.0
    %1048 = vmatprep.subr.mxu0 0.0
    %1049 = vmatpush1.msra.mxu0 0.0
    %1050 = vmatprep.subr.mxu0 0.0
    %1051 = vmatpush1.msra.mxu0 0.0
    %1052 = vmatprep.subr.mxu0 0.0
    %1053 = vmatpush1.msra.mxu0 0.0
    %1054 = vmatprep.subr.mxu0 0.0
    %1055 = vmatpush1.msra.mxu0 0.0
    %1056 = vmatprep.subr.mxu0 0.0
    %1057 = vmatpush1.msra.mxu0 0.0
    %1058 = vmatprep.subr.mxu0 0.0
    %1059 = vmatpush1.msra.mxu0 %v856
    %1060 = vmatprep.subr.mxu0 0.0
    %1061 = vmatpush1.msra.mxu0 %v855
    %1062 = vmatprep.subr.mxu0 0.0
    %1063 = vmatpush2.msra.mxu0 0.0
    %1064 = vmatprep.subr.mxu0 0.0
    %1065 = vmatpush2.msra.mxu0 0.0
    %1066 = vmatprep.subr.mxu0 0.0
    %1067 = vmatpush2.msra.mxu0 0.0
    %1068 = vmatprep.subr.mxu0 0.0
    %1069 = vmatpush2.msra.mxu0 0.0
    %1070 = vmatprep.subr.mxu0 0.0
    %1071 = vmatpush2.msra.mxu0 0.0
    %1072 = vmatprep.subr.mxu0 0.0
    %1073 = vmatpush2.msra.mxu0 0.0
    %1074 = vmatprep.subr.mxu0 0.0
    %1075 = vmatpush2.msra.mxu0 0.0
    %1076 = vmatprep.subr.mxu0 0.0
    %1077 = vmatpush2.msra.mxu0 0.0
    %1078 = vmatprep.subr.mxu0 0.0
    %1079 = vmatpush2.msra.mxu0 0.0
    %1080 = vmatprep.subr.mxu0 0.0
    %1081 = vmatpush2.msra.mxu0 0.0
    %1082 = vmatprep.subr.mxu0 0.0
    %1083 = vmatpush2.msra.mxu0 0.0
    %1084 = vmatprep.subr.mxu0 0.0
    %1085 = vmatpush2.msra.mxu0 0.0
    %1086 = vmatprep.subr.mxu0 0.0
    %1087 = vmatpush2.msra.mxu0 0.0
    %1088 = vmatprep.subr.mxu0 0.0
    %1089 = vmatpush2.msra.mxu0 0.0
    %1090 = vmatprep.subr.mxu0 0.0
    %1091 = vmatpush2.msra.mxu0 0.0
    %1092 = vmatprep.subr.mxu0 0.0
    %1093 = vmatpush2.msra.mxu0 0.0
    %1094 = vmatprep.mubr.f32.mxu0 0.0
    %1095 = vmatmul.mubr.f32.gmra.mxu0 %v1028
    %v1096 = vpop.f32.mrf.mxu0
    %v1097 = vadd.f32 0.0, %v1096
    %v1098 = vpop.f32.mrf.mxu0
    %1099 = vdwg.mxu0
    %s1100 = scalar_lea.vmem %s12, 48
    %v1101 = vld [vmem:[%s1100] sm:$0xff]
    %v1102 = vld [vmem:[%s1100 + $0x8] sm:$0xff]
    %v1104 = vsel %vm673, %v1097, 0
    %1106 = vmatprep.subr.mxu0 0.0
    %1107 = vmatpush1.msra.mxu0 0.0
    %1108 = vmatprep.subr.mxu0 0.0
    %1109 = vmatpush1.msra.mxu0 0.0
    %1110 = vmatprep.subr.mxu0 0.0
    %1111 = vmatpush1.msra.mxu0 0.0
    %1112 = vmatprep.subr.mxu0 0.0
    %1113 = vmatpush1.msra.mxu0 0.0
    %1114 = vmatprep.subr.mxu0 0.0
    %1115 = vmatpush1.msra.mxu0 0.0
    %1116 = vmatprep.subr.mxu0 0.0
    %1117 = vmatpush1.msra.mxu0 0.0
    %1118 = vmatprep.subr.mxu0 0.0
    %1119 = vmatpush1.msra.mxu0 0.0
    %1120 = vmatprep.subr.mxu0 0.0
    %1121 = vmatpush1.msra.mxu0 0.0
    %1122 = vmatprep.subr.mxu0 0.0
    %1123 = vmatpush1.msra.mxu0 0.0
    %1124 = vmatprep.subr.mxu0 0.0
    %1125 = vmatpush1.msra.mxu0 0.0
    %1126 = vmatprep.subr.mxu0 0.0
    %1127 = vmatpush1.msra.mxu0 0.0
    %1128 = vmatprep.subr.mxu0 0.0
    %1129 = vmatpush1.msra.mxu0 0.0
    %1130 = vmatprep.subr.mxu0 0.0
    %1131 = vmatpush1.msra.mxu0 0.0
    %1132 = vmatprep.subr.mxu0 0.0
    %1133 = vmatpush1.msra.mxu0 0.0
    %1134 = vmatprep.subr.mxu0 0.0
    %1135 = vmatpush1.msra.mxu0 %v1102
    %1136 = vmatprep.subr.mxu0 0.0
    %1137 = vmatpush1.msra.mxu0 %v1101
    %1138 = vmatprep.subr.mxu0 0.0
    %1139 = vmatpush2.msra.mxu0 0.0
    %1140 = vmatprep.subr.mxu0 0.0
    %1141 = vmatpush2.msra.mxu0 0.0
    %1142 = vmatprep.subr.mxu0 0.0
    %1143 = vmatpush2.msra.mxu0 0.0
    %1144 = vmatprep.subr.mxu0 0.0
    %1145 = vmatpush2.msra.mxu0 0.0
    %1146 = vmatprep.subr.mxu0 0.0
    %1147 = vmatpush2.msra.mxu0 0.0
    %1148 = vmatprep.subr.mxu0 0.0
    %1149 = vmatpush2.msra.mxu0 0.0
    %1150 = vmatprep.subr.mxu0 0.0
    %1151 = vmatpush2.msra.mxu0 0.0
    %1152 = vmatprep.subr.mxu0 0.0
    %1153 = vmatpush2.msra.mxu0 0.0
    %1154 = vmatprep.subr.mxu0 0.0
    %1155 = vmatpush2.msra.mxu0 0.0
    %1156 = vmatprep.subr.mxu0 0.0
    %1157 = vmatpush2.msra.mxu0 0.0
    %1158 = vmatprep.subr.mxu0 0.0
    %1159 = vmatpush2.msra.mxu0 0.0
    %1160 = vmatprep.subr.mxu0 0.0
    %1161 = vmatpush2.msra.mxu0 0.0
    %1162 = vmatprep.subr.mxu0 0.0
    %1163 = vmatpush2.msra.mxu0 0.0
    %1164 = vmatprep.subr.mxu0 0.0
    %1165 = vmatpush2.msra.mxu0 0.0
    %1166 = vmatprep.subr.mxu0 0.0
    %1167 = vmatpush2.msra.mxu0 0.0
    %1168 = vmatprep.subr.mxu0 0.0
    %1169 = vmatpush2.msra.mxu0 0.0
    %1170 = vmatprep.mubr.f32.mxu0 0.0
    %1171 = vmatmul.mubr.f32.gmra.mxu0 %v1104
    %v1172 = vpop.f32.mrf.mxu0
    %v1173 = vadd.f32 0.0, %v1172
    %v1174 = vpop.f32.mrf.mxu0
    %1175 = vdwg.mxu0
    %v1177 = vsel %vm673, %v1020, 0
    %1179 = vmatprep.subr.mxu0 0.0
    %1180 = vmatpush1.msra.mxu0 0.0
    %1181 = vmatprep.subr.mxu0 0.0
    %1182 = vmatpush1.msra.mxu0 0.0
    %1183 = vmatprep.subr.mxu0 0.0
    %1184 = vmatpush1.msra.mxu0 0.0
    %1185 = vmatprep.subr.mxu0 0.0
    %1186 = vmatpush1.msra.mxu0 0.0
    %1187 = vmatprep.subr.mxu0 0.0
    %1188 = vmatpush1.msra.mxu0 0.0
    %1189 = vmatprep.subr.mxu0 0.0
    %1190 = vmatpush1.msra.mxu0 0.0
    %1191 = vmatprep.subr.mxu0 0.0
    %1192 = vmatpush1.msra.mxu0 0.0
    %1193 = vmatprep.subr.mxu0 0.0
    %1194 = vmatpush1.msra.mxu0 0.0
    %1195 = vmatprep.subr.mxu0 0.0
    %1196 = vmatpush1.msra.mxu0 0.0
    %1197 = vmatprep.subr.mxu0 0.0
    %1198 = vmatpush1.msra.mxu0 0.0
    %1199 = vmatprep.subr.mxu0 0.0
    %1200 = vmatpush1.msra.mxu0 0.0
    %1201 = vmatprep.subr.mxu0 0.0
    %1202 = vmatpush1.msra.mxu0 0.0
    %1203 = vmatprep.subr.mxu0 0.0
    %1204 = vmatpush1.msra.mxu0 0.0
    %1205 = vmatprep.subr.mxu0 0.0
    %1206 = vmatpush1.msra.mxu0 0.0
    %1207 = vmatprep.subr.mxu0 0.0
    %1208 = vmatpush1.msra.mxu0 %v1025
    %1209 = vmatprep.subr.mxu0 0.0
    %1210 = vmatpush1.msra.mxu0 %v1024
    %1211 = vmatprep.subr.mxu0 0.0
    %1212 = vmatpush2.msra.mxu0 0.0
    %1213 = vmatprep.subr.mxu0 0.0
    %1214 = vmatpush2.msra.mxu0 0.0
    %1215 = vmatprep.subr.mxu0 0.0
    %1216 = vmatpush2.msra.mxu0 0.0
    %1217 = vmatprep.subr.mxu0 0.0
    %1218 = vmatpush2.msra.mxu0 0.0
    %1219 = vmatprep.subr.mxu0 0.0
    %1220 = vmatpush2.msra.mxu0 0.0
    %1221 = vmatprep.subr.mxu0 0.0
    %1222 = vmatpush2.msra.mxu0 0.0
    %1223 = vmatprep.subr.mxu0 0.0
    %1224 = vmatpush2.msra.mxu0 0.0
    %1225 = vmatprep.subr.mxu0 0.0
    %1226 = vmatpush2.msra.mxu0 0.0
    %1227 = vmatprep.subr.mxu0 0.0
    %1228 = vmatpush2.msra.mxu0 0.0
    %1229 = vmatprep.subr.mxu0 0.0
    %1230 = vmatpush2.msra.mxu0 0.0
    %1231 = vmatprep.subr.mxu0 0.0
    %1232 = vmatpush2.msra.mxu0 0.0
    %1233 = vmatprep.subr.mxu0 0.0
    %1234 = vmatpush2.msra.mxu0 0.0
    %1235 = vmatprep.subr.mxu0 0.0
    %1236 = vmatpush2.msra.mxu0 0.0
    %1237 = vmatprep.subr.mxu0 0.0
    %1238 = vmatpush2.msra.mxu0 0.0
    %1239 = vmatprep.subr.mxu0 0.0
    %1240 = vmatpush2.msra.mxu0 0.0
    %1241 = vmatprep.subr.mxu0 0.0
    %1242 = vmatpush2.msra.mxu0 0.0
    %1243 = vmatprep.mubr.f32.mxu0 0.0
    %1244 = vmatmul.mubr.f32.gmra.mxu0 %v1177
    %v1245 = vpop.f32.mrf.mxu0
    %v1246 = vadd.f32 %v1173, %v1245
    %v1247 = vpop.f32.mrf.mxu0
    %1248 = vdwg.mxu0
    %s1249 = scalar_lea.vmem [#allocation19], 1
    %v1250 = vld [vmem:[%s1249] sm:$0x1]
    %v1252 = vlaneseq
    %v1253 = vshrl.u32 %v1252, 7
    %v1254 = vsub.s32 0, %v1253
    %v1255 = vrot.slane %v1250, %v1254
    %v1257 = vadd.f32 %v1246, %v1255
    %vm1258 = vcmp.gt.f32.partialorder %v1257, 0.0
    %v1259 = vmin.f32 %v1257, 0.0
    %v1260 = vmul.f32 %v1259, 1.442695
    %v1261 = vpow.pop %v1260
    %v1262 = vsub.f32 %v1261, 1.0
    %v1263 = vsel %vm1258, %v1257, %v1262
    %v1264 = vld [vmem:[%s14] sm:$0xff]
    %v1265 = vld [vmem:[%s14 + $0x8] sm:$0xff]
    %v1266 = vld [vmem:[%s15] sm:$0x1]
    %v1268 = vlaneseq
    %v1269 = vshrl.u32 %v1268, 7
    %v1270 = vsub.s32 0, %v1269
    %v1271 = vrot.slane %v1266, %v1270
    %v1274 = vsel %vm673, %v1263, 0
    %1276 = vmatprep.subr.mxu0 0.0
    %1277 = vmatpush1.msra.mxu0 0.0
    %1278 = vmatprep.subr.mxu0 0.0
    %1279 = vmatpush1.msra.mxu0 0.0
    %1280 = vmatprep.subr.mxu0 0.0
    %1281 = vmatpush1.msra.mxu0 0.0
    %1282 = vmatprep.subr.mxu0 0.0
    %1283 = vmatpush1.msra.mxu0 0.0
    %1284 = vmatprep.subr.mxu0 0.0
    %1285 = vmatpush1.msra.mxu0 0.0
    %1286 = vmatprep.subr.mxu0 0.0
    %1287 = vmatpush1.msra.mxu0 0.0
    %1288 = vmatprep.subr.mxu0 0.0
    %1289 = vmatpush1.msra.mxu0 0.0
    %1290 = vmatprep.subr.mxu0 0.0
    %1291 = vmatpush1.msra.mxu0 0.0
    %1292 = vmatprep.subr.mxu0 0.0
    %1293 = vmatpush1.msra.mxu0 0.0
    %1294 = vmatprep.subr.mxu0 0.0
    %1295 = vmatpush1.msra.mxu0 0.0
    %1296 = vmatprep.subr.mxu0 0.0
    %1297 = vmatpush1.msra.mxu0 0.0
    %1298 = vmatprep.subr.mxu0 0.0
    %1299 = vmatpush1.msra.mxu0 0.0
    %1300 = vmatprep.subr.mxu0 0.0
    %1301 = vmatpush1.msra.mxu0 0.0
    %1302 = vmatprep.subr.mxu0 0.0
    %1303 = vmatpush1.msra.mxu0 0.0
    %1304 = vmatprep.subr.mxu0 0.0
    %1305 = vmatpush1.msra.mxu0 %v1265
    %1306 = vmatprep.subr.mxu0 0.0
    %1307 = vmatpush1.msra.mxu0 %v1264
    %1308 = vmatprep.subr.mxu0 0.0
    %1309 = vmatpush2.msra.mxu0 0.0
    %1310 = vmatprep.subr.mxu0 0.0
    %1311 = vmatpush2.msra.mxu0 0.0
    %1312 = vmatprep.subr.mxu0 0.0
    %1313 = vmatpush2.msra.mxu0 0.0
    %1314 = vmatprep.subr.mxu0 0.0
    %1315 = vmatpush2.msra.mxu0 0.0
    %1316 = vmatprep.subr.mxu0 0.0
    %1317 = vmatpush2.msra.mxu0 0.0
    %1318 = vmatprep.subr.mxu0 0.0
    %1319 = vmatpush2.msra.mxu0 0.0
    %1320 = vmatprep.subr.mxu0 0.0
    %1321 = vmatpush2.msra.mxu0 0.0
    %1322 = vmatprep.subr.mxu0 0.0
    %1323 = vmatpush2.msra.mxu0 0.0
    %1324 = vmatprep.subr.mxu0 0.0
    %1325 = vmatpush2.msra.mxu0 0.0
    %1326 = vmatprep.subr.mxu0 0.0
    %1327 = vmatpush2.msra.mxu0 0.0
    %1328 = vmatprep.subr.mxu0 0.0
    %1329 = vmatpush2.msra.mxu0 0.0
    %1330 = vmatprep.subr.mxu0 0.0
    %1331 = vmatpush2.msra.mxu0 0.0
    %1332 = vmatprep.subr.mxu0 0.0
    %1333 = vmatpush2.msra.mxu0 0.0
    %1334 = vmatprep.subr.mxu0 0.0
    %1335 = vmatpush2.msra.mxu0 0.0
    %1336 = vmatprep.subr.mxu0 0.0
    %1337 = vmatpush2.msra.mxu0 0.0
    %1338 = vmatprep.subr.mxu0 0.0
    %1339 = vmatpush2.msra.mxu0 0.0
    %1340 = vmatprep.mubr.f32.mxu0 0.0
    %1341 = vmatmul.mubr.f32.gmra.mxu0 %v1274
    %v1342 = vpop.f32.mrf.mxu0
    %v1343 = vadd.f32 %v1271, %v1342
    %v1344 = vpop.f32.mrf.mxu0
    %1345 = vdwg.mxu0
    %vm1346 = vcmask 257024
    %1347 = vst.msk [vmem:[#allocation2 + $0x18] sm:$0xf] %vm1346, %v1343
    %vm1348 = vcmask 261124
    %1349 = vst.msk [vmem:[#allocation2 + $0x34] sm:$0xf0] %vm1348, %v1343
    %v1350 = vld [vmem:[#allocation16] sm:$0xf]
    %v1352 = vsel %vm288, %v1350, 0
    %1354 = vmatprep.subr.mxu0 0.0
    %1355 = vmatpush1.msra.mxu0 0.0
    %1356 = vmatprep.subr.mxu0 0.0
    %1357 = vmatpush1.msra.mxu0 0.0
    %1358 = vmatprep.subr.mxu0 0.0
    %1359 = vmatpush1.msra.mxu0 0.0
    %1360 = vmatprep.subr.mxu0 0.0
    %1361 = vmatpush1.msra.mxu0 0.0
    %1362 = vmatprep.subr.mxu0 0.0
    %1363 = vmatpush1.msra.mxu0 0.0
    %1364 = vmatprep.subr.mxu0 0.0
    %1365 = vmatpush1.msra.mxu0 0.0
    %1366 = vmatprep.subr.mxu0 0.0
    %1367 = vmatpush1.msra.mxu0 0.0
    %1368 = vmatprep.subr.mxu0 0.0
    %1369 = vmatpush1.msra.mxu0 0.0
    %1370 = vmatprep.subr.mxu0 0.0
    %1371 = vmatpush1.msra.mxu0 0.0
    %1372 = vmatprep.subr.mxu0 0.0
    %1373 = vmatpush1.msra.mxu0 0.0
    %1374 = vmatprep.subr.mxu0 0.0
    %1375 = vmatpush1.msra.mxu0 0.0
    %1376 = vmatprep.subr.mxu0 0.0
    %1377 = vmatpush1.msra.mxu0 0.0
    %1378 = vmatprep.subr.mxu0 0.0
    %1379 = vmatpush1.msra.mxu0 0.0
    %1380 = vmatprep.subr.mxu0 0.0
    %1381 = vmatpush1.msra.mxu0 0.0
    %1382 = vmatprep.subr.mxu0 0.0
    %1383 = vmatpush1.msra.mxu0 0.0
    %1384 = vmatprep.subr.mxu0 0.0
    %1385 = vmatpush1.msra.mxu0 %v1263
    %1386 = vmatprep.subr.mxu0 0.0
    %1387 = vmatpush2.msra.mxu0 0.0
    %1388 = vmatprep.subr.mxu0 0.0
    %1389 = vmatpush2.msra.mxu0 0.0
    %1390 = vmatprep.subr.mxu0 0.0
    %1391 = vmatpush2.msra.mxu0 0.0
    %1392 = vmatprep.subr.mxu0 0.0
    %1393 = vmatpush2.msra.mxu0 0.0
    %1394 = vmatprep.subr.mxu0 0.0
    %1395 = vmatpush2.msra.mxu0 0.0
    %1396 = vmatprep.subr.mxu0 0.0
    %1397 = vmatpush2.msra.mxu0 0.0
    %1398 = vmatprep.subr.mxu0 0.0
    %1399 = vmatpush2.msra.mxu0 0.0
    %1400 = vmatprep.subr.mxu0 0.0
    %1401 = vmatpush2.msra.mxu0 0.0
    %1402 = vmatprep.subr.mxu0 0.0
    %1403 = vmatpush2.msra.mxu0 0.0
    %1404 = vmatprep.subr.mxu0 0.0
    %1405 = vmatpush2.msra.mxu0 0.0
    %1406 = vmatprep.subr.mxu0 0.0
    %1407 = vmatpush2.msra.mxu0 0.0
    %1408 = vmatprep.subr.mxu0 0.0
    %1409 = vmatpush2.msra.mxu0 0.0
    %1410 = vmatprep.subr.mxu0 0.0
    %1411 = vmatpush2.msra.mxu0 0.0
    %1412 = vmatprep.subr.mxu0 0.0
    %1413 = vmatpush2.msra.mxu0 0.0
    %1414 = vmatprep.subr.mxu0 0.0
    %1415 = vmatpush2.msra.mxu0 0.0
    %1416 = vmatprep.subr.mxu0 0.0
    %1417 = vmatpush2.msra.mxu0 0.0
    %1418 = vmatprep.mubr.f32.mxu0 0.0
    %1419 = vmatmul.mubr.f32.gmra.mxu0 %v1352
    %v1420 = vpop.f32.mrf.mxu0
    %v1421 = vadd.f32 0.0, %v1420
    %v1422 = vpop.f32.mrf.mxu0
    %1423 = vdwg.mxu0
    %s1424 = scalar_lea.vmem %s12, 64
    %v1425 = vld [vmem:[%s1424] sm:$0xff]
    %v1426 = vld [vmem:[%s1424 + $0x8] sm:$0xff]
    %v1427 = vld [vmem:[#allocation18] sm:$0xf]
    %v1429 = vsel %vm288, %v1427, 0
    %1431 = vmatprep.subr.mxu0 0.0
    %1432 = vmatpush1.msra.mxu0 0.0
    %1433 = vmatprep.subr.mxu0 0.0
    %1434 = vmatpush1.msra.mxu0 0.0
    %1435 = vmatprep.subr.mxu0 0.0
    %1436 = vmatpush1.msra.mxu0 0.0
    %1437 = vmatprep.subr.mxu0 0.0
    %1438 = vmatpush1.msra.mxu0 0.0
    %1439 = vmatprep.subr.mxu0 0.0
    %1440 = vmatpush1.msra.mxu0 0.0
    %1441 = vmatprep.subr.mxu0 0.0
    %1442 = vmatpush1.msra.mxu0 0.0
    %1443 = vmatprep.subr.mxu0 0.0
    %1444 = vmatpush1.msra.mxu0 0.0
    %1445 = vmatprep.subr.mxu0 0.0
    %1446 = vmatpush1.msra.mxu0 0.0
    %1447 = vmatprep.subr.mxu0 0.0
    %1448 = vmatpush1.msra.mxu0 0.0
    %1449 = vmatprep.subr.mxu0 0.0
    %1450 = vmatpush1.msra.mxu0 0.0
    %1451 = vmatprep.subr.mxu0 0.0
    %1452 = vmatpush1.msra.mxu0 0.0
    %1453 = vmatprep.subr.mxu0 0.0
    %1454 = vmatpush1.msra.mxu0 0.0
    %1455 = vmatprep.subr.mxu0 0.0
    %1456 = vmatpush1.msra.mxu0 0.0
    %1457 = vmatprep.subr.mxu0 0.0
    %1458 = vmatpush1.msra.mxu0 0.0
    %1459 = vmatprep.subr.mxu0 0.0
    %1460 = vmatpush1.msra.mxu0 0.0
    %1461 = vmatprep.subr.mxu0 0.0
    %1462 = vmatpush1.msra.mxu0 %v1263
    %1463 = vmatprep.subr.mxu0 0.0
    %1464 = vmatpush2.msra.mxu0 0.0
    %1465 = vmatprep.subr.mxu0 0.0
    %1466 = vmatpush2.msra.mxu0 0.0
    %1467 = vmatprep.subr.mxu0 0.0
    %1468 = vmatpush2.msra.mxu0 0.0
    %1469 = vmatprep.subr.mxu0 0.0
    %1470 = vmatpush2.msra.mxu0 0.0
    %1471 = vmatprep.subr.mxu0 0.0
    %1472 = vmatpush2.msra.mxu0 0.0
    %1473 = vmatprep.subr.mxu0 0.0
    %1474 = vmatpush2.msra.mxu0 0.0
    %1475 = vmatprep.subr.mxu0 0.0
    %1476 = vmatpush2.msra.mxu0 0.0
    %1477 = vmatprep.subr.mxu0 0.0
    %1478 = vmatpush2.msra.mxu0 0.0
    %1479 = vmatprep.subr.mxu0 0.0
    %1480 = vmatpush2.msra.mxu0 0.0
    %1481 = vmatprep.subr.mxu0 0.0
    %1482 = vmatpush2.msra.mxu0 0.0
    %1483 = vmatprep.subr.mxu0 0.0
    %1484 = vmatpush2.msra.mxu0 0.0
    %1485 = vmatprep.subr.mxu0 0.0
    %1486 = vmatpush2.msra.mxu0 0.0
    %1487 = vmatprep.subr.mxu0 0.0
    %1488 = vmatpush2.msra.mxu0 0.0
    %1489 = vmatprep.subr.mxu0 0.0
    %1490 = vmatpush2.msra.mxu0 0.0
    %1491 = vmatprep.subr.mxu0 0.0
    %1492 = vmatpush2.msra.mxu0 0.0
    %1493 = vmatprep.subr.mxu0 0.0
    %1494 = vmatpush2.msra.mxu0 0.0
    %1495 = vmatprep.mubr.f32.mxu0 0.0
    %1496 = vmatmul.mubr.f32.gmra.mxu0 %v1429
    %v1497 = vpop.f32.mrf.mxu0
    %v1498 = vadd.f32 0.0, %v1497
    %v1499 = vpop.f32.mrf.mxu0
    %1500 = vdwg.mxu0
    %s1501 = scalar_lea.vmem %s12, 80
    %v1502 = vld [vmem:[%s1501] sm:$0xff]
    %v1503 = vld [vmem:[%s1501 + $0x8] sm:$0xff]
    %v1505 = vsel %vm673, %v1498, 0
    %1507 = vmatprep.subr.mxu0 0.0
    %1508 = vmatpush1.msra.mxu0 0.0
    %1509 = vmatprep.subr.mxu0 0.0
    %1510 = vmatpush1.msra.mxu0 0.0
    %1511 = vmatprep.subr.mxu0 0.0
    %1512 = vmatpush1.msra.mxu0 0.0
    %1513 = vmatprep.subr.mxu0 0.0
    %1514 = vmatpush1.msra.mxu0 0.0
    %1515 = vmatprep.subr.mxu0 0.0
    %1516 = vmatpush1.msra.mxu0 0.0
    %1517 = vmatprep.subr.mxu0 0.0
    %1518 = vmatpush1.msra.mxu0 0.0
    %1519 = vmatprep.subr.mxu0 0.0
    %1520 = vmatpush1.msra.mxu0 0.0
    %1521 = vmatprep.subr.mxu0 0.0
    %1522 = vmatpush1.msra.mxu0 0.0
    %1523 = vmatprep.subr.mxu0 0.0
    %1524 = vmatpush1.msra.mxu0 0.0
    %1525 = vmatprep.subr.mxu0 0.0
    %1526 = vmatpush1.msra.mxu0 0.0
    %1527 = vmatprep.subr.mxu0 0.0
    %1528 = vmatpush1.msra.mxu0 0.0
    %1529 = vmatprep.subr.mxu0 0.0
    %1530 = vmatpush1.msra.mxu0 0.0
    %1531 = vmatprep.subr.mxu0 0.0
    %1532 = vmatpush1.msra.mxu0 0.0
    %1533 = vmatprep.subr.mxu0 0.0
    %1534 = vmatpush1.msra.mxu0 0.0
    %1535 = vmatprep.subr.mxu0 0.0
    %1536 = vmatpush1.msra.mxu0 %v1503
    %1537 = vmatprep.subr.mxu0 0.0
    %1538 = vmatpush1.msra.mxu0 %v1502
    %1539 = vmatprep.subr.mxu0 0.0
    %1540 = vmatpush2.msra.mxu0 0.0
    %1541 = vmatprep.subr.mxu0 0.0
    %1542 = vmatpush2.msra.mxu0 0.0
    %1543 = vmatprep.subr.mxu0 0.0
    %1544 = vmatpush2.msra.mxu0 0.0
    %1545 = vmatprep.subr.mxu0 0.0
    %1546 = vmatpush2.msra.mxu0 0.0
    %1547 = vmatprep.subr.mxu0 0.0
    %1548 = vmatpush2.msra.mxu0 0.0
    %1549 = vmatprep.subr.mxu0 0.0
    %1550 = vmatpush2.msra.mxu0 0.0
    %1551 = vmatprep.subr.mxu0 0.0
    %1552 = vmatpush2.msra.mxu0 0.0
    %1553 = vmatprep.subr.mxu0 0.0
    %1554 = vmatpush2.msra.mxu0 0.0
    %1555 = vmatprep.subr.mxu0 0.0
    %1556 = vmatpush2.msra.mxu0 0.0
    %1557 = vmatprep.subr.mxu0 0.0
    %1558 = vmatpush2.msra.mxu0 0.0
    %1559 = vmatprep.subr.mxu0 0.0
    %1560 = vmatpush2.msra.mxu0 0.0
    %1561 = vmatprep.subr.mxu0 0.0
    %1562 = vmatpush2.msra.mxu0 0.0
    %1563 = vmatprep.subr.mxu0 0.0
    %1564 = vmatpush2.msra.mxu0 0.0
    %1565 = vmatprep.subr.mxu0 0.0
    %1566 = vmatpush2.msra.mxu0 0.0
    %1567 = vmatprep.subr.mxu0 0.0
    %1568 = vmatpush2.msra.mxu0 0.0
    %1569 = vmatprep.subr.mxu0 0.0
    %1570 = vmatpush2.msra.mxu0 0.0
    %1571 = vmatprep.mubr.f32.mxu0 0.0
    %1572 = vmatmul.mubr.f32.gmra.mxu0 %v1505
    %v1573 = vpop.f32.mrf.mxu0
    %v1574 = vadd.f32 0.0, %v1573
    %v1575 = vpop.f32.mrf.mxu0
    %1576 = vdwg.mxu0
    %v1578 = vsel %vm673, %v1421, 0
    %1580 = vmatprep.subr.mxu0 0.0
    %1581 = vmatpush1.msra.mxu0 0.0
    %1582 = vmatprep.subr.mxu0 0.0
    %1583 = vmatpush1.msra.mxu0 0.0
    %1584 = vmatprep.subr.mxu0 0.0
    %1585 = vmatpush1.msra.mxu0 0.0
    %1586 = vmatprep.subr.mxu0 0.0
    %1587 = vmatpush1.msra.mxu0 0.0
    %1588 = vmatprep.subr.mxu0 0.0
    %1589 = vmatpush1.msra.mxu0 0.0
    %1590 = vmatprep.subr.mxu0 0.0
    %1591 = vmatpush1.msra.mxu0 0.0
    %1592 = vmatprep.subr.mxu0 0.0
    %1593 = vmatpush1.msra.mxu0 0.0
    %1594 = vmatprep.subr.mxu0 0.0
    %1595 = vmatpush1.msra.mxu0 0.0
    %1596 = vmatprep.subr.mxu0 0.0
    %1597 = vmatpush1.msra.mxu0 0.0
    %1598 = vmatprep.subr.mxu0 0.0
    %1599 = vmatpush1.msra.mxu0 0.0
    %1600 = vmatprep.subr.mxu0 0.0
    %1601 = vmatpush1.msra.mxu0 0.0
    %1602 = vmatprep.subr.mxu0 0.0
    %1603 = vmatpush1.msra.mxu0 0.0
    %1604 = vmatprep.subr.mxu0 0.0
    %1605 = vmatpush1.msra.mxu0 0.0
    %1606 = vmatprep.subr.mxu0 0.0
    %1607 = vmatpush1.msra.mxu0 0.0
    %1608 = vmatprep.subr.mxu0 0.0
    %1609 = vmatpush1.msra.mxu0 %v1426
    %1610 = vmatprep.subr.mxu0 0.0
    %1611 = vmatpush1.msra.mxu0 %v1425
    %1612 = vmatprep.subr.mxu0 0.0
    %1613 = vmatpush2.msra.mxu0 0.0
    %1614 = vmatprep.subr.mxu0 0.0
    %1615 = vmatpush2.msra.mxu0 0.0
    %1616 = vmatprep.subr.mxu0 0.0
    %1617 = vmatpush2.msra.mxu0 0.0
    %1618 = vmatprep.subr.mxu0 0.0
    %1619 = vmatpush2.msra.mxu0 0.0
    %1620 = vmatprep.subr.mxu0 0.0
    %1621 = vmatpush2.msra.mxu0 0.0
    %1622 = vmatprep.subr.mxu0 0.0
    %1623 = vmatpush2.msra.mxu0 0.0
    %1624 = vmatprep.subr.mxu0 0.0
    %1625 = vmatpush2.msra.mxu0 0.0
    %1626 = vmatprep.subr.mxu0 0.0
    %1627 = vmatpush2.msra.mxu0 0.0
    %1628 = vmatprep.subr.mxu0 0.0
    %1629 = vmatpush2.msra.mxu0 0.0
    %1630 = vmatprep.subr.mxu0 0.0
    %1631 = vmatpush2.msra.mxu0 0.0
    %1632 = vmatprep.subr.mxu0 0.0
    %1633 = vmatpush2.msra.mxu0 0.0
    %1634 = vmatprep.subr.mxu0 0.0
    %1635 = vmatpush2.msra.mxu0 0.0
    %1636 = vmatprep.subr.mxu0 0.0
    %1637 = vmatpush2.msra.mxu0 0.0
    %1638 = vmatprep.subr.mxu0 0.0
    %1639 = vmatpush2.msra.mxu0 0.0
    %1640 = vmatprep.subr.mxu0 0.0
    %1641 = vmatpush2.msra.mxu0 0.0
    %1642 = vmatprep.subr.mxu0 0.0
    %1643 = vmatpush2.msra.mxu0 0.0
    %1644 = vmatprep.mubr.f32.mxu0 0.0
    %1645 = vmatmul.mubr.f32.gmra.mxu0 %v1578
    %v1646 = vpop.f32.mrf.mxu0
    %v1647 = vadd.f32 %v1574, %v1646
    %v1648 = vpop.f32.mrf.mxu0
    %1649 = vdwg.mxu0
    %s1650 = scalar_lea.vmem [#allocation19], 2
    %v1651 = vld [vmem:[%s1650] sm:$0x1]
    %v1653 = vlaneseq
    %v1654 = vshrl.u32 %v1653, 7
    %v1655 = vsub.s32 0, %v1654
    %v1656 = vrot.slane %v1651, %v1655
    %v1658 = vadd.f32 %v1647, %v1656
    %vm1659 = vcmp.gt.f32.partialorder %v1658, 0.0
    %v1660 = vmin.f32 %v1658, 0.0
    %v1661 = vmul.f32 %v1660, 1.442695
    %v1662 = vpow.pop %v1661
    %v1663 = vsub.f32 %v1662, 1.0
    %v1664 = vsel %vm1659, %v1658, %v1663
    %v1665 = vld [vmem:[%s14] sm:$0xff]
    %v1666 = vld [vmem:[%s14 + $0x8] sm:$0xff]
    %v1667 = vld [vmem:[%s15] sm:$0x1]
    %v1669 = vlaneseq
    %v1670 = vshrl.u32 %v1669, 7
    %v1671 = vsub.s32 0, %v1670
    %v1672 = vrot.slane %v1667, %v1671
    %v1675 = vsel %vm673, %v1664, 0
    %1677 = vmatprep.subr.mxu0 0.0
    %1678 = vmatpush1.msra.mxu0 0.0
    %1679 = vmatprep.subr.mxu0 0.0
    %1680 = vmatpush1.msra.mxu0 0.0
    %1681 = vmatprep.subr.mxu0 0.0
    %1682 = vmatpush1.msra.mxu0 0.0
    %1683 = vmatprep.subr.mxu0 0.0
    %1684 = vmatpush1.msra.mxu0 0.0
    %1685 = vmatprep.subr.mxu0 0.0
    %1686 = vmatpush1.msra.mxu0 0.0
    %1687 = vmatprep.subr.mxu0 0.0
    %1688 = vmatpush1.msra.mxu0 0.0
    %1689 = vmatprep.subr.mxu0 0.0
    %1690 = vmatpush1.msra.mxu0 0.0
    %1691 = vmatprep.subr.mxu0 0.0
    %1692 = vmatpush1.msra.mxu0 0.0
    %1693 = vmatprep.subr.mxu0 0.0
    %1694 = vmatpush1.msra.mxu0 0.0
    %1695 = vmatprep.subr.mxu0 0.0
    %1696 = vmatpush1.msra.mxu0 0.0
    %1697 = vmatprep.subr.mxu0 0.0
    %1698 = vmatpush1.msra.mxu0 0.0
    %1699 = vmatprep.subr.mxu0 0.0
    %1700 = vmatpush1.msra.mxu0 0.0
    %1701 = vmatprep.subr.mxu0 0.0
    %1702 = vmatpush1.msra.mxu0 0.0
    %1703 = vmatprep.subr.mxu0 0.0
    %1704 = vmatpush1.msra.mxu0 0.0
    %1705 = vmatprep.subr.mxu0 0.0
    %1706 = vmatpush1.msra.mxu0 %v1666
    %1707 = vmatprep.subr.mxu0 0.0
    %1708 = vmatpush1.msra.mxu0 %v1665
    %1709 = vmatprep.subr.mxu0 0.0
    %1710 = vmatpush2.msra.mxu0 0.0
    %1711 = vmatprep.subr.mxu0 0.0
    %1712 = vmatpush2.msra.mxu0 0.0
    %1713 = vmatprep.subr.mxu0 0.0
    %1714 = vmatpush2.msra.mxu0 0.0
    %1715 = vmatprep.subr.mxu0 0.0
    %1716 = vmatpush2.msra.mxu0 0.0
    %1717 = vmatprep.subr.mxu0 0.0
    %1718 = vmatpush2.msra.mxu0 0.0
    %1719 = vmatprep.subr.mxu0 0.0
    %1720 = vmatpush2.msra.mxu0 0.0
    %1721 = vmatprep.subr.mxu0 0.0
    %1722 = vmatpush2.msra.mxu0 0.0
    %1723 = vmatprep.subr.mxu0 0.0
    %1724 = vmatpush2.msra.mxu0 0.0
    %1725 = vmatprep.subr.mxu0 0.0
    %1726 = vmatpush2.msra.mxu0 0.0
    %1727 = vmatprep.subr.mxu0 0.0
    %1728 = vmatpush2.msra.mxu0 0.0
    %1729 = vmatprep.subr.mxu0 0.0
    %1730 = vmatpush2.msra.mxu0 0.0
    %1731 = vmatprep.subr.mxu0 0.0
    %1732 = vmatpush2.msra.mxu0 0.0
    %1733 = vmatprep.subr.mxu0 0.0
    %1734 = vmatpush2.msra.mxu0 0.0
    %1735 = vmatprep.subr.mxu0 0.0
    %1736 = vmatpush2.msra.mxu0 0.0
    %1737 = vmatprep.subr.mxu0 0.0
    %1738 = vmatpush2.msra.mxu0 0.0
    %1739 = vmatprep.subr.mxu0 0.0
    %1740 = vmatpush2.msra.mxu0 0.0
    %1741 = vmatprep.mubr.f32.mxu0 0.0
    %1742 = vmatmul.mubr.f32.gmra.mxu0 %v1675
    %v1743 = vpop.f32.mrf.mxu0
    %v1744 = vadd.f32 %v1672, %v1743
    %v1745 = vpop.f32.mrf.mxu0
    %1746 = vdwg.mxu0
    %1747 = vst.msk [vmem:[#allocation2 + $0x1c] sm:$0x3] %vm497, %v1744
    %vm1748 = vcmask 257026
    %1749 = vst.msk [vmem:[#allocation2 + $0x3a] sm:$0xc] %vm1748, %v1744
    %v1750 = vld [vmem:[#allocation2] sm:$0xff]
    %v1751 = vld [vmem:[#allocation2 + $0x8] sm:$0xff]
    %v1752 = vld [vmem:[#allocation2 + $0x10] sm:$0xff]
    %v1753 = vld [vmem:[#allocation2 + $0x18] sm:$0xff]
    %v1754 = vld [vmem:[#allocation2 + $0x20] sm:$0xff]
    %v1755 = vld [vmem:[#allocation2 + $0x28] sm:$0xff]
    %v1756 = vld [vmem:[#allocation2 + $0x30] sm:$0xff]
    %v1757 = vld [vmem:[#allocation2 + $0x38] sm:$0xff]
    %v1758 = vld [vmem:[#allocation21] sm:$0x1]
    %v1759 = vld [vmem:[#allocation22] sm:$0x1]
    %v1760 = vsel %vm397, %v1750, 0.0
    %1761 = vadd.xlane.f32.xlu0 %v1760
    %v1762 = vpop.xlane.xlu0 %1761
    %v1763 = vsel %vm397, %v1751, 0.0
    %1764 = vadd.xlane.f32.xlu0 %v1763
    %v1765 = vpop.xlane.xlu0 %1764
    %v1766 = vsel %vm397, %v1752, 0.0
    %1767 = vadd.xlane.f32.xlu0 %v1766
    %v1768 = vpop.xlane.xlu0 %1767
    %v1769 = vsel %vm397, %v1753, 0.0
    %1770 = vadd.xlane.f32.xlu0 %v1769
    %v1771 = vpop.xlane.xlu0 %1770
    %v1772 = vsel %vm397, %v1754, 0.0
    %1773 = vadd.xlane.f32.xlu0 %v1772
    %v1774 = vpop.xlane.xlu0 %1773
    %v1775 = vsel %vm397, %v1755, 0.0
    %1776 = vadd.xlane.f32.xlu0 %v1775
    %v1777 = vpop.xlane.xlu0 %1776
    %v1778 = vsel %vm397, %v1756, 0.0
    %1779 = vadd.xlane.f32.xlu0 %v1778
    %v1780 = vpop.xlane.xlu0 %1779
    %v1781 = vsel %vm397, %v1757, 0.0
    %1782 = vadd.xlane.f32.xlu0 %v1781
    %v1783 = vpop.xlane.xlu0 %1782
    %v1784 = vrcp.pop 32.0
    %v1785 = vmul.f32 %v1762, %v1784
    %v1786 = vmul.f32 %v1765, %v1784
    %v1787 = vmul.f32 %v1768, %v1784
    %v1788 = vmul.f32 %v1771, %v1784
    %v1789 = vmul.f32 %v1774, %v1784
    %v1790 = vmul.f32 %v1777, %v1784
    %v1791 = vmul.f32 %v1780, %v1784
    %v1792 = vmul.f32 %v1783, %v1784
    %v1793 = vsub.f32 %v1750, %v1785
    %v1794 = vsub.f32 %v1751, %v1786
    %v1795 = vsub.f32 %v1752, %v1787
    %v1796 = vsub.f32 %v1753, %v1788
    %v1797 = vsub.f32 %v1754, %v1789
    %v1798 = vsub.f32 %v1755, %v1790
    %v1799 = vsub.f32 %v1756, %v1791
    %v1800 = vsub.f32 %v1757, %v1792
    %v1801 = vmul.f32 %v1793, %v1793
    %v1802 = vmul.f32 %v1794, %v1794
    %v1803 = vmul.f32 %v1795, %v1795
    %v1804 = vmul.f32 %v1796, %v1796
    %v1805 = vmul.f32 %v1797, %v1797
    %v1806 = vmul.f32 %v1798, %v1798
    %v1807 = vmul.f32 %v1799, %v1799
    %v1808 = vmul.f32 %v1800, %v1800
    %v1809 = vsel %vm397, %v1801, 0.0
    %1810 = vadd.xlane.f32.xlu0 %v1809
    %v1811 = vpop.xlane.xlu0 %1810
    %v1812 = vsel %vm397, %v1802, 0.0
    %1813 = vadd.xlane.f32.xlu0 %v1812
    %v1814 = vpop.xlane.xlu0 %1813
    %v1815 = vsel %vm397, %v1803, 0.0
    %1816 = vadd.xlane.f32.xlu0 %v1815
    %v1817 = vpop.xlane.xlu0 %1816
    %v1818 = vsel %vm397, %v1804, 0.0
    %1819 = vadd.xlane.f32.xlu0 %v1818
    %v1820 = vpop.xlane.xlu0 %1819
    %v1821 = vsel %vm397, %v1805, 0.0
    %1822 = vadd.xlane.f32.xlu0 %v1821
    %v1823 = vpop.xlane.xlu0 %1822
    %v1824 = vsel %vm397, %v1806, 0.0
    %1825 = vadd.xlane.f32.xlu0 %v1824
    %v1826 = vpop.xlane.xlu0 %1825
    %v1827 = vsel %vm397, %v1807, 0.0
    %1828 = vadd.xlane.f32.xlu0 %v1827
    %v1829 = vpop.xlane.xlu0 %1828
    %v1830 = vsel %vm397, %v1808, 0.0
    %1831 = vadd.xlane.f32.xlu0 %v1830
    %v1832 = vpop.xlane.xlu0 %1831
    %v1833 = vmul.f32 %v1811, %v1784
    %v1834 = vmul.f32 %v1814, %v1784
    %v1835 = vmul.f32 %v1817, %v1784
    %v1836 = vmul.f32 %v1820, %v1784
    %v1837 = vmul.f32 %v1823, %v1784
    %v1838 = vmul.f32 %v1826, %v1784
    %v1839 = vmul.f32 %v1829, %v1784
    %v1840 = vmul.f32 %v1832, %v1784
    %v1841 = vadd.f32 %v1833, 1e-05
    %v1842 = vadd.f32 %v1834, 1e-05
    %v1843 = vadd.f32 %v1835, 1e-05
    %v1844 = vadd.f32 %v1836, 1e-05
    %v1845 = vadd.f32 %v1837, 1e-05
    %v1846 = vadd.f32 %v1838, 1e-05
    %v1847 = vadd.f32 %v1839, 1e-05
    %v1848 = vadd.f32 %v1840, 1e-05
    %v1849 = vrsqrt.pop %v1841
    %v1850 = vrsqrt.pop %v1842
    %v1851 = vrsqrt.pop %v1843
    %v1852 = vrsqrt.pop %v1844
    %v1853 = vrsqrt.pop %v1845
    %v1854 = vrsqrt.pop %v1846
    %v1855 = vrsqrt.pop %v1847
    %v1856 = vrsqrt.pop %v1848
    %v1857 = vmul.f32 %v1793, %v1849
    %v1858 = vmul.f32 %v1794, %v1850
    %v1859 = vmul.f32 %v1795, %v1851
    %v1860 = vmul.f32 %v1796, %v1852
    %v1861 = vmul.f32 %v1797, %v1853
    %v1862 = vmul.f32 %v1798, %v1854
    %v1863 = vmul.f32 %v1799, %v1855
    %v1864 = vmul.f32 %v1800, %v1856
    %v1866 = vlaneseq
    %v1867 = vshrl.u32 %v1866, 7
    %v1868 = vsub.s32 0, %v1867
    %v1869 = vrot.slane %v1758, %v1868
    %v1871 = vmul.f32 %v1857, %v1869
    %v1872 = vmul.f32 %v1858, %v1869
    %v1873 = vmul.f32 %v1859, %v1869
    %v1874 = vmul.f32 %v1860, %v1869
    %v1875 = vmul.f32 %v1861, %v1869
    %v1876 = vmul.f32 %v1862, %v1869
    %v1877 = vmul.f32 %v1863, %v1869
    %v1878 = vmul.f32 %v1864, %v1869
    %v1880 = vlaneseq
    %v1881 = vshrl.u32 %v1880, 7
    %v1882 = vsub.s32 0, %v1881
    %v1883 = vrot.slane %v1759, %v1882
    %v1885 = vadd.f32 %v1871, %v1883
    %v1886 = vadd.f32 %v1872, %v1883
    %v1887 = vadd.f32 %v1873, %v1883
    %v1888 = vadd.f32 %v1874, %v1883
    %v1889 = vadd.f32 %v1875, %v1883
    %v1890 = vadd.f32 %v1876, %v1883
    %v1891 = vadd.f32 %v1877, %v1883
    %v1892 = vadd.f32 %v1878, %v1883
    %v1893 = vld [vmem:[%s1] sm:$0xff]
    %v1894 = vld [vmem:[%s1 + $0x8] sm:$0xff]
    %v1895 = vld [vmem:[%s1 + $0x10] sm:$0xff]
    %v1896 = vld [vmem:[%s1 + $0x18] sm:$0xff]
    %v1897 = vld [vmem:[%s1 + $0x20] sm:$0xff]
    %v1898 = vld [vmem:[%s1 + $0x28] sm:$0xff]
    %v1899 = vld [vmem:[%s1 + $0x30] sm:$0xff]
    %v1900 = vld [vmem:[%s1 + $0x38] sm:$0xff]
    %v1901 = vld [vmem:[#allocation24] sm:$0xff]
    %v1902 = vld [vmem:[#allocation24 + $0x8] sm:$0xff]
    %v1903 = vld [vmem:[#allocation24 + $0x10] sm:$0xff]
    %v1904 = vld [vmem:[#allocation24 + $0x18] sm:$0xff]
    %v1906 = vsel %vm397, %v1885, 0
    %v1909 = vsel %vm397, %v1886, 0
    %v1912 = vsel %vm397, %v1887, 0
    %v1915 = vsel %vm397, %v1888, 0
    %v1918 = vsel %vm397, %v1889, 0
    %v1921 = vsel %vm397, %v1890, 0
    %v1924 = vsel %vm397, %v1891, 0
    %v1927 = vsel %vm397, %v1892, 0
    %1929 = vmatprep.subr.mxu0 0.0
    %1930 = vmatpush1.msra.mxu0 0.0
    %1931 = vmatprep.subr.mxu0 0.0
    %1932 = vmatpush1.msra.mxu0 0.0
    %1933 = vmatprep.subr.mxu0 0.0
    %1934 = vmatpush1.msra.mxu0 0.0
    %1935 = vmatprep.subr.mxu0 0.0
    %1936 = vmatpush1.msra.mxu0 0.0
    %1937 = vmatprep.subr.mxu0 0.0
    %1938 = vmatpush1.msra.mxu0 0.0
    %1939 = vmatprep.subr.mxu0 0.0
    %1940 = vmatpush1.msra.mxu0 0.0
    %1941 = vmatprep.subr.mxu0 0.0
    %1942 = vmatpush1.msra.mxu0 0.0
    %1943 = vmatprep.subr.mxu0 0.0
    %1944 = vmatpush1.msra.mxu0 0.0
    %1945 = vmatprep.subr.mxu0 0.0
    %1946 = vmatpush1.msra.mxu0 0.0
    %1947 = vmatprep.subr.mxu0 0.0
    %1948 = vmatpush1.msra.mxu0 0.0
    %1949 = vmatprep.subr.mxu0 0.0
    %1950 = vmatpush1.msra.mxu0 0.0
    %1951 = vmatprep.subr.mxu0 0.0
    %1952 = vmatpush1.msra.mxu0 0.0
    %1953 = vmatprep.subr.mxu0 0.0
    %1954 = vmatpush1.msra.mxu0 %v1904
    %1955 = vmatprep.subr.mxu0 0.0
    %1956 = vmatpush1.msra.mxu0 %v1903
    %1957 = vmatprep.subr.mxu0 0.0
    %1958 = vmatpush1.msra.mxu0 %v1902
    %1959 = vmatprep.subr.mxu0 0.0
    %1960 = vmatpush1.msra.mxu0 %v1901
    %1961 = vmatprep.subr.mxu0 0.0
    %1962 = vmatpush2.msra.mxu0 0.0
    %1963 = vmatprep.subr.mxu0 0.0
    %1964 = vmatpush2.msra.mxu0 0.0
    %1965 = vmatprep.subr.mxu0 0.0
    %1966 = vmatpush2.msra.mxu0 0.0
    %1967 = vmatprep.subr.mxu0 0.0
    %1968 = vmatpush2.msra.mxu0 0.0
    %1969 = vmatprep.subr.mxu0 0.0
    %1970 = vmatpush2.msra.mxu0 0.0
    %1971 = vmatprep.subr.mxu0 0.0
    %1972 = vmatpush2.msra.mxu0 0.0
    %1973 = vmatprep.subr.mxu0 0.0
    %1974 = vmatpush2.msra.mxu0 0.0
    %1975 = vmatprep.subr.mxu0 0.0
    %1976 = vmatpush2.msra.mxu0 0.0
    %1977 = vmatprep.subr.mxu0 0.0
    %1978 = vmatpush2.msra.mxu0 0.0
    %1979 = vmatprep.subr.mxu0 0.0
    %1980 = vmatpush2.msra.mxu0 0.0
    %1981 = vmatprep.subr.mxu0 0.0
    %1982 = vmatpush2.msra.mxu0 0.0
    %1983 = vmatprep.subr.mxu0 0.0
    %1984 = vmatpush2.msra.mxu0 0.0
    %1985 = vmatprep.subr.mxu0 0.0
    %1986 = vmatpush2.msra.mxu0 0.0
    %1987 = vmatprep.subr.mxu0 0.0
    %1988 = vmatpush2.msra.mxu0 0.0
    %1989 = vmatprep.subr.mxu0 0.0
    %1990 = vmatpush2.msra.mxu0 0.0
    %1991 = vmatprep.subr.mxu0 0.0
    %1992 = vmatpush2.msra.mxu0 0.0
    %1993 = vmatprep.mubr.f32.mxu0 0.0
    %1994 = vmatmul.mubr.f32.gmra.mxu0 %v1906
    %v1995 = vpop.f32.mrf.mxu0
    %v1996 = vadd.f32 0.0, %v1995
    %v1997 = vpop.f32.mrf.mxu0
    %1998 = vmatprep.mubr.f32.mxu0 0.0
    %1999 = vmatmul.mubr.f32.gmra.mxu0 %v1909
    %v2000 = vpop.f32.mrf.mxu0
    %v2001 = vadd.f32 0.0, %v2000
    %v2002 = vpop.f32.mrf.mxu0
    %2003 = vmatprep.mubr.f32.mxu0 0.0
    %2004 = vmatmul.mubr.f32.gmra.mxu0 %v1912
    %v2005 = vpop.f32.mrf.mxu0
    %v2006 = vadd.f32 0.0, %v2005
    %v2007 = vpop.f32.mrf.mxu0
    %2008 = vmatprep.mubr.f32.mxu0 0.0
    %2009 = vmatmul.mubr.f32.gmra.mxu0 %v1915
    %v2010 = vpop.f32.mrf.mxu0
    %v2011 = vadd.f32 0.0, %v2010
    %v2012 = vpop.f32.mrf.mxu0
    %2013 = vmatprep.mubr.f32.mxu0 0.0
    %2014 = vmatmul.mubr.f32.gmra.mxu0 %v1918
    %v2015 = vpop.f32.mrf.mxu0
    %v2016 = vadd.f32 0.0, %v2015
    %v2017 = vpop.f32.mrf.mxu0
    %2018 = vmatprep.mubr.f32.mxu0 0.0
    %2019 = vmatmul.mubr.f32.gmra.mxu0 %v1921
    %v2020 = vpop.f32.mrf.mxu0
    %v2021 = vadd.f32 0.0, %v2020
    %v2022 = vpop.f32.mrf.mxu0
    %2023 = vmatprep.mubr.f32.mxu0 0.0
    %2024 = vmatmul.mubr.f32.gmra.mxu0 %v1924
    %v2025 = vpop.f32.mrf.mxu0
    %v2026 = vadd.f32 0.0, %v2025
    %v2027 = vpop.f32.mrf.mxu0
    %2028 = vmatprep.mubr.f32.mxu0 0.0
    %2029 = vmatmul.mubr.f32.gmra.mxu0 %v1927
    %v2030 = vpop.f32.mrf.mxu0
    %v2031 = vadd.f32 0.0, %v2030
    %v2032 = vpop.f32.mrf.mxu0
    %2033 = vdwg.mxu0
    %2042 = vrot.lane.b32.xlu0 %v1996, 96
    %v2043 = vpop.permute.xlu0 %2042
    %2044 = vrot.lane.b32.xlu0 %v2001, 96
    %v2045 = vpop.permute.xlu0 %2044
    %2046 = vrot.lane.b32.xlu0 %v2006, 96
    %v2047 = vpop.permute.xlu0 %2046
    %2048 = vrot.lane.b32.xlu0 %v2011, 96
    %v2049 = vpop.permute.xlu0 %2048
    %2050 = vrot.lane.b32.xlu0 %v2016, 96
    %v2051 = vpop.permute.xlu0 %2050
    %2052 = vrot.lane.b32.xlu0 %v2021, 96
    %v2053 = vpop.permute.xlu0 %2052
    %2054 = vrot.lane.b32.xlu0 %v2026, 96
    %v2055 = vpop.permute.xlu0 %2054
    %2056 = vrot.lane.b32.xlu0 %v2031, 96
    %v2057 = vpop.permute.xlu0 %2056
    %v2058 = vsel %vm673, %v1996, 0
    %v2060 = vsel %vm673, %v2001, 0
    %v2062 = vsel %vm673, %v2006, 0
    %v2064 = vsel %vm673, %v2011, 0
    %v2066 = vsel %vm673, %v2016, 0
    %v2068 = vsel %vm673, %v2021, 0
    %v2070 = vsel %vm673, %v2026, 0
    %v2072 = vsel %vm673, %v2031, 0
    %v2074 = vsel %vm673, %v2043, 0
    %v2076 = vsel %vm673, %v2045, 0
    %v2078 = vsel %vm673, %v2047, 0
    %v2080 = vsel %vm673, %v2049, 0
    %v2082 = vsel %vm673, %v2051, 0
    %v2084 = vsel %vm673, %v2053, 0
    %v2086 = vsel %vm673, %v2055, 0
    %v2088 = vsel %vm673, %v2057, 0
    %2090 = vmatprep.subr.mxu0 0.0
    %2091 = vmatpush1.xpose.msra.mxu0 0.0
    %2092 = vmatprep.subr.mxu0 0.0
    %2093 = vmatpush1.xpose.msra.mxu0 0.0
    %2094 = vmatprep.subr.mxu0 0.0
    %2095 = vmatpush1.xpose.msra.mxu0 0.0
    %2096 = vmatprep.subr.mxu0 0.0
    %2097 = vmatpush1.xpose.msra.mxu0 0.0
    %2098 = vmatprep.subr.mxu0 0.0
    %2099 = vmatpush1.xpose.msra.mxu0 0.0
    %2100 = vmatprep.subr.mxu0 0.0
    %2101 = vmatpush1.xpose.msra.mxu0 0.0
    %2102 = vmatprep.subr.mxu0 0.0
    %2103 = vmatpush1.xpose.msra.mxu0 0.0
    %2104 = vmatprep.subr.mxu0 0.0
    %2105 = vmatpush1.xpose.msra.mxu0 0.0
    %2106 = vmatprep.subr.mxu0 0.0
    %2107 = vmatpush1.xpose.msra.mxu0 %v2088
    %2108 = vmatprep.subr.mxu0 0.0
    %2109 = vmatpush1.xpose.msra.mxu0 %v2086
    %2110 = vmatprep.subr.mxu0 0.0
    %2111 = vmatpush1.xpose.msra.mxu0 %v2084
    %2112 = vmatprep.subr.mxu0 0.0
    %2113 = vmatpush1.xpose.msra.mxu0 %v2082
    %2114 = vmatprep.subr.mxu0 0.0
    %2115 = vmatpush1.xpose.msra.mxu0 %v2080
    %2116 = vmatprep.subr.mxu0 0.0
    %2117 = vmatpush1.xpose.msra.mxu0 %v2078
    %2118 = vmatprep.subr.mxu0 0.0
    %2119 = vmatpush1.xpose.msra.mxu0 %v2076
    %2120 = vmatprep.subr.mxu0 0.0
    %2121 = vmatpush1.xpose.msra.mxu0 %v2074
    %2122 = vmatprep.subr.mxu0 0.0
    %2123 = vmatpush2.xpose.msra.mxu0 0.0
    %2124 = vmatprep.subr.mxu0 0.0
    %2125 = vmatpush2.xpose.msra.mxu0 0.0
    %2126 = vmatprep.subr.mxu0 0.0
    %2127 = vmatpush2.xpose.msra.mxu0 0.0
    %2128 = vmatprep.subr.mxu0 0.0
    %2129 = vmatpush2.xpose.msra.mxu0 0.0
    %2130 = vmatprep.subr.mxu0 0.0
    %2131 = vmatpush2.xpose.msra.mxu0 0.0
    %2132 = vmatprep.subr.mxu0 0.0
    %2133 = vmatpush2.xpose.msra.mxu0 0.0
    %2134 = vmatprep.subr.mxu0 0.0
    %2135 = vmatpush2.xpose.msra.mxu0 0.0
    %2136 = vmatprep.subr.mxu0 0.0
    %2137 = vmatpush2.xpose.msra.mxu0 0.0
    %2138 = vmatprep.subr.mxu0 0.0
    %2139 = vmatpush2.xpose.msra.mxu0 0.0
    %2140 = vmatprep.subr.mxu0 0.0
    %2141 = vmatpush2.xpose.msra.mxu0 0.0
    %2142 = vmatprep.subr.mxu0 0.0
    %2143 = vmatpush2.xpose.msra.mxu0 0.0
    %2144 = vmatprep.subr.mxu0 0.0
    %2145 = vmatpush2.xpose.msra.mxu0 0.0
    %2146 = vmatprep.subr.mxu0 0.0
    %2147 = vmatpush2.xpose.msra.mxu0 0.0
    %2148 = vmatprep.subr.mxu0 0.0
    %2149 = vmatpush2.xpose.msra.mxu0 0.0
    %2150 = vmatprep.subr.mxu0 0.0
    %2151 = vmatpush2.xpose.msra.mxu0 0.0
    %2152 = vmatprep.subr.mxu0 0.0
    %2153 = vmatpush2.xpose.msra.mxu0 0.0
    %2154 = vmatprep.mubr.f32.mxu0 0.0
    %2155 = vmatmul.mubr.f32.gmra.mxu0 %v2058
    %v2156 = vpop.f32.mrf.mxu0
    %v2157 = vadd.f32 %v1893, %v2156
    %v2158 = vpop.f32.mrf.mxu0
    %2159 = vmatprep.mubr.f32.mxu0 0.0
    %2160 = vmatmul.mubr.f32.gmra.mxu0 %v2060
    %v2161 = vpop.f32.mrf.mxu0
    %v2162 = vadd.f32 %v1894, %v2161
    %v2163 = vpop.f32.mrf.mxu0
    %2164 = vmatprep.mubr.f32.mxu0 0.0
    %2165 = vmatmul.mubr.f32.gmra.mxu0 %v2062
    %v2166 = vpop.f32.mrf.mxu0
    %v2167 = vadd.f32 %v1895, %v2166
    %v2168 = vpop.f32.mrf.mxu0
    %2169 = vmatprep.mubr.f32.mxu0 0.0
    %2170 = vmatmul.mubr.f32.gmra.mxu0 %v2064
    %v2171 = vpop.f32.mrf.mxu0
    %v2172 = vadd.f32 %v1896, %v2171
    %v2173 = vpop.f32.mrf.mxu0
    %2174 = vmatprep.mubr.f32.mxu0 0.0
    %2175 = vmatmul.mubr.f32.gmra.mxu0 %v2066
    %v2176 = vpop.f32.mrf.mxu0
    %v2177 = vadd.f32 %v1897, %v2176
    %v2178 = vpop.f32.mrf.mxu0
    %2179 = vmatprep.mubr.f32.mxu0 0.0
    %2180 = vmatmul.mubr.f32.gmra.mxu0 %v2068
    %v2181 = vpop.f32.mrf.mxu0
    %v2182 = vadd.f32 %v1898, %v2181
    %v2183 = vpop.f32.mrf.mxu0
    %2184 = vmatprep.mubr.f32.mxu0 0.0
    %2185 = vmatmul.mubr.f32.gmra.mxu0 %v2070
    %v2186 = vpop.f32.mrf.mxu0
    %v2187 = vadd.f32 %v1899, %v2186
    %v2188 = vpop.f32.mrf.mxu0
    %2189 = vmatprep.mubr.f32.mxu0 0.0
    %2190 = vmatmul.mubr.f32.gmra.mxu0 %v2072
    %v2191 = vpop.f32.mrf.mxu0
    %v2192 = vadd.f32 %v1900, %v2191
    %v2193 = vpop.f32.mrf.mxu0
    %2194 = vdwg.mxu0
    %vm2195 = vcmask 523264
    %v2196 = vsel %vm2195, %v2157, -inf
    %2197 = vmax.xlane.f32.xlu0 %v2196
    %v2198 = vpop.xlane.xlu0 %2197
    %v2199 = vsel %vm2195, %v2162, -inf
    %2200 = vmax.xlane.f32.xlu0 %v2199
    %v2201 = vpop.xlane.xlu0 %2200
    %v2202 = vsel %vm2195, %v2167, -inf
    %2203 = vmax.xlane.f32.xlu0 %v2202
    %v2204 = vpop.xlane.xlu0 %2203
    %v2205 = vsel %vm2195, %v2172, -inf
    %2206 = vmax.xlane.f32.xlu0 %v2205
    %v2207 = vpop.xlane.xlu0 %2206
    %v2208 = vsel %vm2195, %v2177, -inf
    %2209 = vmax.xlane.f32.xlu0 %v2208
    %v2210 = vpop.xlane.xlu0 %2209
    %v2211 = vsel %vm2195, %v2182, -inf
    %2212 = vmax.xlane.f32.xlu0 %v2211
    %v2213 = vpop.xlane.xlu0 %2212
    %v2214 = vsel %vm2195, %v2187, -inf
    %2215 = vmax.xlane.f32.xlu0 %v2214
    %v2216 = vpop.xlane.xlu0 %2215
    %v2217 = vsel %vm2195, %v2192, -inf
    %2218 = vmax.xlane.f32.xlu0 %v2217
    %v2219 = vpop.xlane.xlu0 %2218
    %v2220 = vsub.f32 %v2157, %v2198
    %v2221 = vsub.f32 %v2162, %v2201
    %v2222 = vsub.f32 %v2167, %v2204
    %v2223 = vsub.f32 %v2172, %v2207
    %v2224 = vsub.f32 %v2177, %v2210
    %v2225 = vsub.f32 %v2182, %v2213
    %v2226 = vsub.f32 %v2187, %v2216
    %v2227 = vsub.f32 %v2192, %v2219
    %v2228 = vmul.f32 %v2220, 1.442695
    %v2229 = vpow.pop %v2228
    %v2230 = vmul.f32 %v2221, 1.442695
    %v2231 = vpow.pop %v2230
    %v2232 = vmul.f32 %v2222, 1.442695
    %v2233 = vpow.pop %v2232
    %v2234 = vmul.f32 %v2223, 1.442695
    %v2235 = vpow.pop %v2234
    %v2236 = vmul.f32 %v2224, 1.442695
    %v2237 = vpow.pop %v2236
    %v2238 = vmul.f32 %v2225, 1.442695
    %v2239 = vpow.pop %v2238
    %v2240 = vmul.f32 %v2226, 1.442695
    %v2241 = vpow.pop %v2240
    %v2242 = vmul.f32 %v2227, 1.442695
    %v2243 = vpow.pop %v2242
    %v2244 = vsel %vm2195, %v2229, 0.0
    %2245 = vadd.xlane.f32.xlu0 %v2244
    %v2246 = vpop.xlane.xlu0 %2245
    %v2247 = vsel %vm2195, %v2231, 0.0
    %2248 = vadd.xlane.f32.xlu0 %v2247
    %v2249 = vpop.xlane.xlu0 %2248
    %v2250 = vsel %vm2195, %v2233, 0.0
    %2251 = vadd.xlane.f32.xlu0 %v2250
    %v2252 = vpop.xlane.xlu0 %2251
    %v2253 = vsel %vm2195, %v2235, 0.0
    %2254 = vadd.xlane.f32.xlu0 %v2253
    %v2255 = vpop.xlane.xlu0 %2254
    %v2256 = vsel %vm2195, %v2237, 0.0
    %2257 = vadd.xlane.f32.xlu0 %v2256
    %v2258 = vpop.xlane.xlu0 %2257
    %v2259 = vsel %vm2195, %v2239, 0.0
    %2260 = vadd.xlane.f32.xlu0 %v2259
    %v2261 = vpop.xlane.xlu0 %2260
    %v2262 = vsel %vm2195, %v2241, 0.0
    %2263 = vadd.xlane.f32.xlu0 %v2262
    %v2264 = vpop.xlane.xlu0 %2263
    %v2265 = vsel %vm2195, %v2243, 0.0
    %2266 = vadd.xlane.f32.xlu0 %v2265
    %v2267 = vpop.xlane.xlu0 %2266
    %v2268 = vrcp.pop %v2246
    %v2269 = vrcp.pop %v2249
    %v2270 = vrcp.pop %v2252
    %v2271 = vrcp.pop %v2255
    %v2272 = vrcp.pop %v2258
    %v2273 = vrcp.pop %v2261
    %v2274 = vrcp.pop %v2264
    %v2275 = vrcp.pop %v2267
    %v2276 = vmul.f32 %v2229, %v2268
    %v2277 = vmul.f32 %v2231, %v2269
    %v2278 = vmul.f32 %v2233, %v2270
    %v2279 = vmul.f32 %v2235, %v2271
    %v2280 = vmul.f32 %v2237, %v2272
    %v2281 = vmul.f32 %v2239, %v2273
    %v2282 = vmul.f32 %v2241, %v2274
    %v2283 = vmul.f32 %v2243, %v2275
    %2284 = vrot.lane.b32.xlu0 %v1996, 112
    %v2285 = vpop.permute.xlu0 %2284
    %2286 = vrot.lane.b32.xlu0 %v2001, 112
    %v2287 = vpop.permute.xlu0 %2286
    %2288 = vrot.lane.b32.xlu0 %v2006, 112
    %v2289 = vpop.permute.xlu0 %2288
    %2290 = vrot.lane.b32.xlu0 %v2011, 112
    %v2291 = vpop.permute.xlu0 %2290
    %2292 = vrot.lane.b32.xlu0 %v2016, 112
    %v2293 = vpop.permute.xlu0 %2292
    %2294 = vrot.lane.b32.xlu0 %v2021, 112
    %v2295 = vpop.permute.xlu0 %2294
    %2296 = vrot.lane.b32.xlu0 %v2026, 112
    %v2297 = vpop.permute.xlu0 %2296
    %2298 = vrot.lane.b32.xlu0 %v2031, 112
    %v2299 = vpop.permute.xlu0 %2298
    %2300 = vrot.lane.b32.xlu0 %v1996, 80
    %v2301 = vpop.permute.xlu0 %2300
    %2302 = vrot.lane.b32.xlu0 %v2001, 80
    %v2303 = vpop.permute.xlu0 %2302
    %2304 = vrot.lane.b32.xlu0 %v2006, 80
    %v2305 = vpop.permute.xlu0 %2304
    %2306 = vrot.lane.b32.xlu0 %v2011, 80
    %v2307 = vpop.permute.xlu0 %2306
    %2308 = vrot.lane.b32.xlu0 %v2016, 80
    %v2309 = vpop.permute.xlu0 %2308
    %2310 = vrot.lane.b32.xlu0 %v2021, 80
    %v2311 = vpop.permute.xlu0 %2310
    %2312 = vrot.lane.b32.xlu0 %v2026, 80
    %v2313 = vpop.permute.xlu0 %2312
    %2314 = vrot.lane.b32.xlu0 %v2031, 80
    %v2315 = vpop.permute.xlu0 %2314
    %v2316 = vsel %vm673, %v2285, 0
    %v2318 = vsel %vm673, %v2287, 0
    %v2320 = vsel %vm673, %v2289, 0
    %v2322 = vsel %vm673, %v2291, 0
    %v2324 = vsel %vm673, %v2293, 0
    %v2326 = vsel %vm673, %v2295, 0
    %v2328 = vsel %vm673, %v2297, 0
    %v2330 = vsel %vm673, %v2299, 0
    %v2332 = vsel %vm673, %v2301, 0
    %v2334 = vsel %vm673, %v2303, 0
    %v2336 = vsel %vm673, %v2305, 0
    %v2338 = vsel %vm673, %v2307, 0
    %v2340 = vsel %vm673, %v2309, 0
    %v2342 = vsel %vm673, %v2311, 0
    %v2344 = vsel %vm673, %v2313, 0
    %v2346 = vsel %vm673, %v2315, 0
    %2348 = vmatprep.subr.mxu0 0.0
    %2349 = vmatpush1.xpose.msra.mxu0 0.0
    %2350 = vmatprep.subr.mxu0 0.0
    %2351 = vmatpush1.xpose.msra.mxu0 0.0
    %2352 = vmatprep.subr.mxu0 0.0
    %2353 = vmatpush1.xpose.msra.mxu0 0.0
    %2354 = vmatprep.subr.mxu0 0.0
    %2355 = vmatpush1.xpose.msra.mxu0 0.0
    %2356 = vmatprep.subr.mxu0 0.0
    %2357 = vmatpush1.xpose.msra.mxu0 0.0
    %2358 = vmatprep.subr.mxu0 0.0
    %2359 = vmatpush1.xpose.msra.mxu0 0.0
    %2360 = vmatprep.subr.mxu0 0.0
    %2361 = vmatpush1.xpose.msra.mxu0 0.0
    %2362 = vmatprep.subr.mxu0 0.0
    %2363 = vmatpush1.xpose.msra.mxu0 0.0
    %2364 = vmatprep.subr.mxu0 0.0
    %2365 = vmatpush1.xpose.msra.mxu0 %v2346
    %2366 = vmatprep.subr.mxu0 0.0
    %2367 = vmatpush1.xpose.msra.mxu0 %v2344
    %2368 = vmatprep.subr.mxu0 0.0
    %2369 = vmatpush1.xpose.msra.mxu0 %v2342
    %2370 = vmatprep.subr.mxu0 0.0
    %2371 = vmatpush1.xpose.msra.mxu0 %v2340
    %2372 = vmatprep.subr.mxu0 0.0
    %2373 = vmatpush1.xpose.msra.mxu0 %v2338
    %2374 = vmatprep.subr.mxu0 0.0
    %2375 = vmatpush1.xpose.msra.mxu0 %v2336
    %2376 = vmatprep.subr.mxu0 0.0
    %2377 = vmatpush1.xpose.msra.mxu0 %v2334
    %2378 = vmatprep.subr.mxu0 0.0
    %2379 = vmatpush1.xpose.msra.mxu0 %v2332
    %2380 = vmatprep.subr.mxu0 0.0
    %2381 = vmatpush2.xpose.msra.mxu0 0.0
    %2382 = vmatprep.subr.mxu0 0.0
    %2383 = vmatpush2.xpose.msra.mxu0 0.0
    %2384 = vmatprep.subr.mxu0 0.0
    %2385 = vmatpush2.xpose.msra.mxu0 0.0
    %2386 = vmatprep.subr.mxu0 0.0
    %2387 = vmatpush2.xpose.msra.mxu0 0.0
    %2388 = vmatprep.subr.mxu0 0.0
    %2389 = vmatpush2.xpose.msra.mxu0 0.0
    %2390 = vmatprep.subr.mxu0 0.0
    %2391 = vmatpush2.xpose.msra.mxu0 0.0
    %2392 = vmatprep.subr.mxu0 0.0
    %2393 = vmatpush2.xpose.msra.mxu0 0.0
    %2394 = vmatprep.subr.mxu0 0.0
    %2395 = vmatpush2.xpose.msra.mxu0 0.0
    %2396 = vmatprep.subr.mxu0 0.0
    %2397 = vmatpush2.xpose.msra.mxu0 0.0
    %2398 = vmatprep.subr.mxu0 0.0
    %2399 = vmatpush2.xpose.msra.mxu0 0.0
    %2400 = vmatprep.subr.mxu0 0.0
    %2401 = vmatpush2.xpose.msra.mxu0 0.0
    %2402 = vmatprep.subr.mxu0 0.0
    %2403 = vmatpush2.xpose.msra.mxu0 0.0
    %2404 = vmatprep.subr.mxu0 0.0
    %2405 = vmatpush2.xpose.msra.mxu0 0.0
    %2406 = vmatprep.subr.mxu0 0.0
    %2407 = vmatpush2.xpose.msra.mxu0 0.0
    %2408 = vmatprep.subr.mxu0 0.0
    %2409 = vmatpush2.xpose.msra.mxu0 0.0
    %2410 = vmatprep.subr.mxu0 0.0
    %2411 = vmatpush2.xpose.msra.mxu0 0.0
    %2412 = vmatprep.mubr.f32.mxu0 0.0
    %2413 = vmatmul.mubr.f32.gmra.mxu0 %v2316
    %v2414 = vpop.f32.mrf.mxu0
    %v2415 = vadd.f32 %v1893, %v2414
    %v2416 = vpop.f32.mrf.mxu0
    %2417 = vmatprep.mubr.f32.mxu0 0.0
    %2418 = vmatmul.mubr.f32.gmra.mxu0 %v2318
    %v2419 = vpop.f32.mrf.mxu0
    %v2420 = vadd.f32 %v1894, %v2419
    %v2421 = vpop.f32.mrf.mxu0
    %2422 = vmatprep.mubr.f32.mxu0 0.0
    %2423 = vmatmul.mubr.f32.gmra.mxu0 %v2320
    %v2424 = vpop.f32.mrf.mxu0
    %v2425 = vadd.f32 %v1895, %v2424
    %v2426 = vpop.f32.mrf.mxu0
    %2427 = vmatprep.mubr.f32.mxu0 0.0
    %2428 = vmatmul.mubr.f32.gmra.mxu0 %v2322
    %v2429 = vpop.f32.mrf.mxu0
    %v2430 = vadd.f32 %v1896, %v2429
    %v2431 = vpop.f32.mrf.mxu0
    %2432 = vmatprep.mubr.f32.mxu0 0.0
    %2433 = vmatmul.mubr.f32.gmra.mxu0 %v2324
    %v2434 = vpop.f32.mrf.mxu0
    %v2435 = vadd.f32 %v1897, %v2434
    %v2436 = vpop.f32.mrf.mxu0
    %2437 = vmatprep.mubr.f32.mxu0 0.0
    %2438 = vmatmul.mubr.f32.gmra.mxu0 %v2326
    %v2439 = vpop.f32.mrf.mxu0
    %v2440 = vadd.f32 %v1898, %v2439
    %v2441 = vpop.f32.mrf.mxu0
    %2442 = vmatprep.mubr.f32.mxu0 0.0
    %2443 = vmatmul.mubr.f32.gmra.mxu0 %v2328
    %v2444 = vpop.f32.mrf.mxu0
    %v2445 = vadd.f32 %v1899, %v2444
    %v2446 = vpop.f32.mrf.mxu0
    %2447 = vmatprep.mubr.f32.mxu0 0.0
    %2448 = vmatmul.mubr.f32.gmra.mxu0 %v2330
    %v2449 = vpop.f32.mrf.mxu0
    %v2450 = vadd.f32 %v1900, %v2449
    %v2451 = vpop.f32.mrf.mxu0
    %2452 = vdwg.mxu0
    %v2453 = vsel %vm2195, %v2415, -inf
    %2454 = vmax.xlane.f32.xlu0 %v2453
    %v2455 = vpop.xlane.xlu0 %2454
    %v2456 = vsel %vm2195, %v2420, -inf
    %2457 = vmax.xlane.f32.xlu0 %v2456
    %v2458 = vpop.xlane.xlu0 %2457
    %v2459 = vsel %vm2195, %v2425, -inf
    %2460 = vmax.xlane.f32.xlu0 %v2459
    %v2461 = vpop.xlane.xlu0 %2460
    %v2462 = vsel %vm2195, %v2430, -inf
    %2463 = vmax.xlane.f32.xlu0 %v2462
    %v2464 = vpop.xlane.xlu0 %2463
    %v2465 = vsel %vm2195, %v2435, -inf
    %2466 = vmax.xlane.f32.xlu0 %v2465
    %v2467 = vpop.xlane.xlu0 %2466
    %v2468 = vsel %vm2195, %v2440, -inf
    %2469 = vmax.xlane.f32.xlu0 %v2468
    %v2470 = vpop.xlane.xlu0 %2469
    %v2471 = vsel %vm2195, %v2445, -inf
    %2472 = vmax.xlane.f32.xlu0 %v2471
    %v2473 = vpop.xlane.xlu0 %2472
    %v2474 = vsel %vm2195, %v2450, -inf
    %2475 = vmax.xlane.f32.xlu0 %v2474
    %v2476 = vpop.xlane.xlu0 %2475
    %v2477 = vsub.f32 %v2415, %v2455
    %v2478 = vsub.f32 %v2420, %v2458
    %v2479 = vsub.f32 %v2425, %v2461
    %v2480 = vsub.f32 %v2430, %v2464
    %v2481 = vsub.f32 %v2435, %v2467
    %v2482 = vsub.f32 %v2440, %v2470
    %v2483 = vsub.f32 %v2445, %v2473
    %v2484 = vsub.f32 %v2450, %v2476
    %v2485 = vmul.f32 %v2477, 1.442695
    %v2486 = vpow.pop %v2485
    %v2487 = vmul.f32 %v2478, 1.442695
    %v2488 = vpow.pop %v2487
    %v2489 = vmul.f32 %v2479, 1.442695
    %v2490 = vpow.pop %v2489
    %v2491 = vmul.f32 %v2480, 1.442695
    %v2492 = vpow.pop %v2491
    %v2493 = vmul.f32 %v2481, 1.442695
    %v2494 = vpow.pop %v2493
    %v2495 = vmul.f32 %v2482, 1.442695
    %v2496 = vpow.pop %v2495
    %v2497 = vmul.f32 %v2483, 1.442695
    %v2498 = vpow.pop %v2497
    %v2499 = vmul.f32 %v2484, 1.442695
    %v2500 = vpow.pop %v2499
    %v2501 = vsel %vm2195, %v2486, 0.0
    %2502 = vadd.xlane.f32.xlu0 %v2501
    %v2503 = vpop.xlane.xlu0 %2502
    %v2504 = vsel %vm2195, %v2488, 0.0
    %2505 = vadd.xlane.f32.xlu0 %v2504
    %v2506 = vpop.xlane.xlu0 %2505
    %v2507 = vsel %vm2195, %v2490, 0.0
    %2508 = vadd.xlane.f32.xlu0 %v2507
    %v2509 = vpop.xlane.xlu0 %2508
    %v2510 = vsel %vm2195, %v2492, 0.0
    %2511 = vadd.xlane.f32.xlu0 %v2510
    %v2512 = vpop.xlane.xlu0 %2511
    %v2513 = vsel %vm2195, %v2494, 0.0
    %2514 = vadd.xlane.f32.xlu0 %v2513
    %v2515 = vpop.xlane.xlu0 %2514
    %v2516 = vsel %vm2195, %v2496, 0.0
    %2517 = vadd.xlane.f32.xlu0 %v2516
    %v2518 = vpop.xlane.xlu0 %2517
    %v2519 = vsel %vm2195, %v2498, 0.0
    %2520 = vadd.xlane.f32.xlu0 %v2519
    %v2521 = vpop.xlane.xlu0 %2520
    %v2522 = vsel %vm2195, %v2500, 0.0
    %2523 = vadd.xlane.f32.xlu0 %v2522
    %v2524 = vpop.xlane.xlu0 %2523
    %v2525 = vrcp.pop %v2503
    %v2526 = vrcp.pop %v2506
    %v2527 = vrcp.pop %v2509
    %v2528 = vrcp.pop %v2512
    %v2529 = vrcp.pop %v2515
    %v2530 = vrcp.pop %v2518
    %v2531 = vrcp.pop %v2521
    %v2532 = vrcp.pop %v2524
    %v2533 = vmul.f32 %v2486, %v2525
    %v2534 = vmul.f32 %v2488, %v2526
    %v2535 = vmul.f32 %v2490, %v2527
    %v2536 = vmul.f32 %v2492, %v2528
    %v2537 = vmul.f32 %v2494, %v2529
    %v2538 = vmul.f32 %v2496, %v2530
    %v2539 = vmul.f32 %v2498, %v2531
    %v2540 = vmul.f32 %v2500, %v2532
    %2541 = vrot.lane.b32.xlu0 %v1996, 32
    %v2542 = vpop.permute.xlu0 %2541
    %2543 = vrot.lane.b32.xlu0 %v2001, 32
    %v2544 = vpop.permute.xlu0 %2543
    %2545 = vrot.lane.b32.xlu0 %v2006, 32
    %v2546 = vpop.permute.xlu0 %2545
    %2547 = vrot.lane.b32.xlu0 %v2011, 32
    %v2548 = vpop.permute.xlu0 %2547
    %2549 = vrot.lane.b32.xlu0 %v2016, 32
    %v2550 = vpop.permute.xlu0 %2549
    %2551 = vrot.lane.b32.xlu0 %v2021, 32
    %v2552 = vpop.permute.xlu0 %2551
    %2553 = vrot.lane.b32.xlu0 %v2026, 32
    %v2554 = vpop.permute.xlu0 %2553
    %2555 = vrot.lane.b32.xlu0 %v2031, 32
    %v2556 = vpop.permute.xlu0 %2555
    %v2566 = vsel %vm2195, %v2533, 0
    %v2569 = vsel %vm2195, %v2534, 0
    %v2572 = vsel %vm2195, %v2535, 0
    %v2575 = vsel %vm2195, %v2536, 0
    %v2578 = vsel %vm2195, %v2537, 0
    %v2581 = vsel %vm2195, %v2538, 0
    %v2584 = vsel %vm2195, %v2539, 0
    %v2587 = vsel %vm2195, %v2540, 0
    %2589 = vmatprep.subr.mxu0 0.0
    %2590 = vmatpush1.msra.mxu0 0.0
    %2591 = vmatprep.subr.mxu0 0.0
    %2592 = vmatpush1.msra.mxu0 0.0
    %2593 = vmatprep.subr.mxu0 0.0
    %2594 = vmatpush1.msra.mxu0 0.0
    %2595 = vmatprep.subr.mxu0 0.0
    %2596 = vmatpush1.msra.mxu0 0.0
    %2597 = vmatprep.subr.mxu0 0.0
    %2598 = vmatpush1.msra.mxu0 0.0
    %2599 = vmatprep.subr.mxu0 0.0
    %2600 = vmatpush1.msra.mxu0 0.0
    %2601 = vmatprep.subr.mxu0 0.0
    %2602 = vmatpush1.msra.mxu0 0.0
    %2603 = vmatprep.subr.mxu0 0.0
    %2604 = vmatpush1.msra.mxu0 0.0
    %2605 = vmatprep.subr.mxu0 0.0
    %2606 = vmatpush1.msra.mxu0 %v2556
    %2607 = vmatprep.subr.mxu0 0.0
    %2608 = vmatpush1.msra.mxu0 %v2554
    %2609 = vmatprep.subr.mxu0 0.0
    %2610 = vmatpush1.msra.mxu0 %v2552
    %2611 = vmatprep.subr.mxu0 0.0
    %2612 = vmatpush1.msra.mxu0 %v2550
    %2613 = vmatprep.subr.mxu0 0.0
    %2614 = vmatpush1.msra.mxu0 %v2548
    %2615 = vmatprep.subr.mxu0 0.0
    %2616 = vmatpush1.msra.mxu0 %v2546
    %2617 = vmatprep.subr.mxu0 0.0
    %2618 = vmatpush1.msra.mxu0 %v2544
    %2619 = vmatprep.subr.mxu0 0.0
    %2620 = vmatpush1.msra.mxu0 %v2542
    %2621 = vmatprep.subr.mxu0 0.0
    %2622 = vmatpush2.msra.mxu0 0.0
    %2623 = vmatprep.subr.mxu0 0.0
    %2624 = vmatpush2.msra.mxu0 0.0
    %2625 = vmatprep.subr.mxu0 0.0
    %2626 = vmatpush2.msra.mxu0 0.0
    %2627 = vmatprep.subr.mxu0 0.0
    %2628 = vmatpush2.msra.mxu0 0.0
    %2629 = vmatprep.subr.mxu0 0.0
    %2630 = vmatpush2.msra.mxu0 0.0
    %2631 = vmatprep.subr.mxu0 0.0
    %2632 = vmatpush2.msra.mxu0 0.0
    %2633 = vmatprep.subr.mxu0 0.0
    %2634 = vmatpush2.msra.mxu0 0.0
    %2635 = vmatprep.subr.mxu0 0.0
    %2636 = vmatpush2.msra.mxu0 0.0
    %2637 = vmatprep.subr.mxu0 0.0
    %2638 = vmatpush2.msra.mxu0 0.0
    %2639 = vmatprep.subr.mxu0 0.0
    %2640 = vmatpush2.msra.mxu0 0.0
    %2641 = vmatprep.subr.mxu0 0.0
    %2642 = vmatpush2.msra.mxu0 0.0
    %2643 = vmatprep.subr.mxu0 0.0
    %2644 = vmatpush2.msra.mxu0 0.0
    %2645 = vmatprep.subr.mxu0 0.0
    %2646 = vmatpush2.msra.mxu0 0.0
    %2647 = vmatprep.subr.mxu0 0.0
    %2648 = vmatpush2.msra.mxu0 0.0
    %2649 = vmatprep.subr.mxu0 0.0
    %2650 = vmatpush2.msra.mxu0 0.0
    %2651 = vmatprep.subr.mxu0 0.0
    %2652 = vmatpush2.msra.mxu0 0.0
    %2653 = vmatprep.mubr.f32.mxu0 0.0
    %2654 = vmatmul.mubr.f32.gmra.mxu0 %v2566
    %v2655 = vpop.f32.mrf.mxu0
    %v2656 = vadd.f32 0.0, %v2655
    %v2657 = vpop.f32.mrf.mxu0
    %2658 = vmatprep.mubr.f32.mxu0 0.0
    %2659 = vmatmul.mubr.f32.gmra.mxu0 %v2569
    %v2660 = vpop.f32.mrf.mxu0
    %v2661 = vadd.f32 0.0, %v2660
    %v2662 = vpop.f32.mrf.mxu0
    %2663 = vmatprep.mubr.f32.mxu0 0.0
    %2664 = vmatmul.mubr.f32.gmra.mxu0 %v2572
    %v2665 = vpop.f32.mrf.mxu0
    %v2666 = vadd.f32 0.0, %v2665
    %v2667 = vpop.f32.mrf.mxu0
    %2668 = vmatprep.mubr.f32.mxu0 0.0
    %2669 = vmatmul.mubr.f32.gmra.mxu0 %v2575
    %v2670 = vpop.f32.mrf.mxu0
    %v2671 = vadd.f32 0.0, %v2670
    %v2672 = vpop.f32.mrf.mxu0
    %2673 = vmatprep.mubr.f32.mxu0 0.0
    %2674 = vmatmul.mubr.f32.gmra.mxu0 %v2578
    %v2675 = vpop.f32.mrf.mxu0
    %v2676 = vadd.f32 0.0, %v2675
    %v2677 = vpop.f32.mrf.mxu0
    %2678 = vmatprep.mubr.f32.mxu0 0.0
    %2679 = vmatmul.mubr.f32.gmra.mxu0 %v2581
    %v2680 = vpop.f32.mrf.mxu0
    %v2681 = vadd.f32 0.0, %v2680
    %v2682 = vpop.f32.mrf.mxu0
    %2683 = vmatprep.mubr.f32.mxu0 0.0
    %2684 = vmatmul.mubr.f32.gmra.mxu0 %v2584
    %v2685 = vpop.f32.mrf.mxu0
    %v2686 = vadd.f32 0.0, %v2685
    %v2687 = vpop.f32.mrf.mxu0
    %2688 = vmatprep.mubr.f32.mxu0 0.0
    %2689 = vmatmul.mubr.f32.gmra.mxu0 %v2587
    %v2690 = vpop.f32.mrf.mxu0
    %v2691 = vadd.f32 0.0, %v2690
    %v2692 = vpop.f32.mrf.mxu0
    %2693 = vdwg.mxu0
    %2694 = vrot.lane.b32.xlu0 %v1996, 64
    %v2695 = vpop.permute.xlu0 %2694
    %2696 = vrot.lane.b32.xlu0 %v2001, 64
    %v2697 = vpop.permute.xlu0 %2696
    %2698 = vrot.lane.b32.xlu0 %v2006, 64
    %v2699 = vpop.permute.xlu0 %2698
    %2700 = vrot.lane.b32.xlu0 %v2011, 64
    %v2701 = vpop.permute.xlu0 %2700
    %2702 = vrot.lane.b32.xlu0 %v2016, 64
    %v2703 = vpop.permute.xlu0 %2702
    %2704 = vrot.lane.b32.xlu0 %v2021, 64
    %v2705 = vpop.permute.xlu0 %2704
    %2706 = vrot.lane.b32.xlu0 %v2026, 64
    %v2707 = vpop.permute.xlu0 %2706
    %2708 = vrot.lane.b32.xlu0 %v2031, 64
    %v2709 = vpop.permute.xlu0 %2708
    %v2719 = vsel %vm2195, %v2276, 0
    %v2722 = vsel %vm2195, %v2277, 0
    %v2725 = vsel %vm2195, %v2278, 0
    %v2728 = vsel %vm2195, %v2279, 0
    %v2731 = vsel %vm2195, %v2280, 0
    %v2734 = vsel %vm2195, %v2281, 0
    %v2737 = vsel %vm2195, %v2282, 0
    %v2740 = vsel %vm2195, %v2283, 0
    %2742 = vmatprep.subr.mxu0 0.0
    %2743 = vmatpush1.msra.mxu0 0.0
    %2744 = vmatprep.subr.mxu0 0.0
    %2745 = vmatpush1.msra.mxu0 0.0
    %2746 = vmatprep.subr.mxu0 0.0
    %2747 = vmatpush1.msra.mxu0 0.0
    %2748 = vmatprep.subr.mxu0 0.0
    %2749 = vmatpush1.msra.mxu0 0.0
    %2750 = vmatprep.subr.mxu0 0.0
    %2751 = vmatpush1.msra.mxu0 0.0
    %2752 = vmatprep.subr.mxu0 0.0
    %2753 = vmatpush1.msra.mxu0 0.0
    %2754 = vmatprep.subr.mxu0 0.0
    %2755 = vmatpush1.msra.mxu0 0.0
    %2756 = vmatprep.subr.mxu0 0.0
    %2757 = vmatpush1.msra.mxu0 0.0
    %2758 = vmatprep.subr.mxu0 0.0
    %2759 = vmatpush1.msra.mxu0 %v2709
    %2760 = vmatprep.subr.mxu0 0.0
    %2761 = vmatpush1.msra.mxu0 %v2707
    %2762 = vmatprep.subr.mxu0 0.0
    %2763 = vmatpush1.msra.mxu0 %v2705
    %2764 = vmatprep.subr.mxu0 0.0
    %2765 = vmatpush1.msra.mxu0 %v2703
    %2766 = vmatprep.subr.mxu0 0.0
    %2767 = vmatpush1.msra.mxu0 %v2701
    %2768 = vmatprep.subr.mxu0 0.0
    %2769 = vmatpush1.msra.mxu0 %v2699
    %2770 = vmatprep.subr.mxu0 0.0
    %2771 = vmatpush1.msra.mxu0 %v2697
    %2772 = vmatprep.subr.mxu0 0.0
    %2773 = vmatpush1.msra.mxu0 %v2695
    %2774 = vmatprep.subr.mxu0 0.0
    %2775 = vmatpush2.msra.mxu0 0.0
    %2776 = vmatprep.subr.mxu0 0.0
    %2777 = vmatpush2.msra.mxu0 0.0
    %2778 = vmatprep.subr.mxu0 0.0
    %2779 = vmatpush2.msra.mxu0 0.0
    %2780 = vmatprep.subr.mxu0 0.0
    %2781 = vmatpush2.msra.mxu0 0.0
    %2782 = vmatprep.subr.mxu0 0.0
    %2783 = vmatpush2.msra.mxu0 0.0
    %2784 = vmatprep.subr.mxu0 0.0
    %2785 = vmatpush2.msra.mxu0 0.0
    %2786 = vmatprep.subr.mxu0 0.0
    %2787 = vmatpush2.msra.mxu0 0.0
    %2788 = vmatprep.subr.mxu0 0.0
    %2789 = vmatpush2.msra.mxu0 0.0
    %2790 = vmatprep.subr.mxu0 0.0
    %2791 = vmatpush2.msra.mxu0 0.0
    %2792 = vmatprep.subr.mxu0 0.0
    %2793 = vmatpush2.msra.mxu0 0.0
    %2794 = vmatprep.subr.mxu0 0.0
    %2795 = vmatpush2.msra.mxu0 0.0
    %2796 = vmatprep.subr.mxu0 0.0
    %2797 = vmatpush2.msra.mxu0 0.0
    %2798 = vmatprep.subr.mxu0 0.0
    %2799 = vmatpush2.msra.mxu0 0.0
    %2800 = vmatprep.subr.mxu0 0.0
    %2801 = vmatpush2.msra.mxu0 0.0
    %2802 = vmatprep.subr.mxu0 0.0
    %2803 = vmatpush2.msra.mxu0 0.0
    %2804 = vmatprep.subr.mxu0 0.0
    %2805 = vmatpush2.msra.mxu0 0.0
    %2806 = vmatprep.mubr.f32.mxu0 0.0
    %2807 = vmatmul.mubr.f32.gmra.mxu0 %v2719
    %v2808 = vpop.f32.mrf.mxu0
    %v2809 = vadd.f32 %v2656, %v2808
    %v2810 = vpop.f32.mrf.mxu0
    %2811 = vmatprep.mubr.f32.mxu0 0.0
    %2812 = vmatmul.mubr.f32.gmra.mxu0 %v2722
    %v2813 = vpop.f32.mrf.mxu0
    %v2814 = vadd.f32 %v2661, %v2813
    %v2815 = vpop.f32.mrf.mxu0
    %2816 = vmatprep.mubr.f32.mxu0 0.0
    %2817 = vmatmul.mubr.f32.gmra.mxu0 %v2725
    %v2818 = vpop.f32.mrf.mxu0
    %v2819 = vadd.f32 %v2666, %v2818
    %v2820 = vpop.f32.mrf.mxu0
    %2821 = vmatprep.mubr.f32.mxu0 0.0
    %2822 = vmatmul.mubr.f32.gmra.mxu0 %v2728
    %v2823 = vpop.f32.mrf.mxu0
    %v2824 = vadd.f32 %v2671, %v2823
    %v2825 = vpop.f32.mrf.mxu0
    %2826 = vmatprep.mubr.f32.mxu0 0.0
    %2827 = vmatmul.mubr.f32.gmra.mxu0 %v2731
    %v2828 = vpop.f32.mrf.mxu0
    %v2829 = vadd.f32 %v2676, %v2828
    %v2830 = vpop.f32.mrf.mxu0
    %2831 = vmatprep.mubr.f32.mxu0 0.0
    %2832 = vmatmul.mubr.f32.gmra.mxu0 %v2734
    %v2833 = vpop.f32.mrf.mxu0
    %v2834 = vadd.f32 %v2681, %v2833
    %v2835 = vpop.f32.mrf.mxu0
    %2836 = vmatprep.mubr.f32.mxu0 0.0
    %2837 = vmatmul.mubr.f32.gmra.mxu0 %v2737
    %v2838 = vpop.f32.mrf.mxu0
    %v2839 = vadd.f32 %v2686, %v2838
    %v2840 = vpop.f32.mrf.mxu0
    %2841 = vmatprep.mubr.f32.mxu0 0.0
    %2842 = vmatmul.mubr.f32.gmra.mxu0 %v2740
    %v2843 = vpop.f32.mrf.mxu0
    %v2844 = vadd.f32 %v2691, %v2843
    %v2845 = vpop.f32.mrf.mxu0
    %2846 = vdwg.mxu0
    %v2847 = vld [vmem:[#allocation25] sm:$0x1]
    %v2849 = vlaneseq
    %v2850 = vshrl.u32 %v2849, 7
    %v2851 = vsub.s32 0, %v2850
    %v2852 = vrot.slane %v2847, %v2851
    %v2854 = vadd.f32 %v2809, %v2852
    %v2855 = vadd.f32 %v2814, %v2852
    %v2856 = vadd.f32 %v2819, %v2852
    %v2857 = vadd.f32 %v2824, %v2852
    %v2858 = vadd.f32 %v2829, %v2852
    %v2859 = vadd.f32 %v2834, %v2852
    %v2860 = vadd.f32 %v2839, %v2852
    %v2861 = vadd.f32 %v2844, %v2852
    %v2862 = vadd.f32 %v2854, %v1885
    %v2863 = vadd.f32 %v2855, %v1886
    %v2864 = vadd.f32 %v2856, %v1887
    %v2865 = vadd.f32 %v2857, %v1888
    %v2866 = vadd.f32 %v2858, %v1889
    %v2867 = vadd.f32 %v2859, %v1890
    %v2868 = vadd.f32 %v2860, %v1891
    %v2869 = vadd.f32 %v2861, %v1892
    %s2870 = scalar_lea.vmem [#allocation25], 1
    %v2871 = vld [vmem:[%s2870] sm:$0x1]
    %s2872 = scalar_lea.vmem [#allocation25], 2
    %v2873 = vld [vmem:[%s2872] sm:$0x1]
    %v2874 = vsel %vm397, %v2862, 0.0
    %2875 = vadd.xlane.f32.xlu0 %v2874
    %v2876 = vpop.xlane.xlu0 %2875
    %v2877 = vsel %vm397, %v2863, 0.0
    %2878 = vadd.xlane.f32.xlu0 %v2877
    %v2879 = vpop.xlane.xlu0 %2878
    %v2880 = vsel %vm397, %v2864, 0.0
    %2881 = vadd.xlane.f32.xlu0 %v2880
    %v2882 = vpop.xlane.xlu0 %2881
    %v2883 = vsel %vm397, %v2865, 0.0
    %2884 = vadd.xlane.f32.xlu0 %v2883
    %v2885 = vpop.xlane.xlu0 %2884
    %v2886 = vsel %vm397, %v2866, 0.0
    %2887 = vadd.xlane.f32.xlu0 %v2886
    %v2888 = vpop.xlane.xlu0 %2887
    %v2889 = vsel %vm397, %v2867, 0.0
    %2890 = vadd.xlane.f32.xlu0 %v2889
    %v2891 = vpop.xlane.xlu0 %2890
    %v2892 = vsel %vm397, %v2868, 0.0
    %2893 = vadd.xlane.f32.xlu0 %v2892
    %v2894 = vpop.xlane.xlu0 %2893
    %v2895 = vsel %vm397, %v2869, 0.0
    %2896 = vadd.xlane.f32.xlu0 %v2895
    %v2897 = vpop.xlane.xlu0 %2896
    %v2898 = vmul.f32 %v2876, %v1784
    %v2899 = vmul.f32 %v2879, %v1784
    %v2900 = vmul.f32 %v2882, %v1784
    %v2901 = vmul.f32 %v2885, %v1784
    %v2902 = vmul.f32 %v2888, %v1784
    %v2903 = vmul.f32 %v2891, %v1784
    %v2904 = vmul.f32 %v2894, %v1784
    %v2905 = vmul.f32 %v2897, %v1784
    %v2906 = vsub.f32 %v2862, %v2898
    %v2907 = vsub.f32 %v2863, %v2899
    %v2908 = vsub.f32 %v2864, %v2900
    %v2909 = vsub.f32 %v2865, %v2901
    %v2910 = vsub.f32 %v2866, %v2902
    %v2911 = vsub.f32 %v2867, %v2903
    %v2912 = vsub.f32 %v2868, %v2904
    %v2913 = vsub.f32 %v2869, %v2905
    %v2914 = vmul.f32 %v2906, %v2906
    %v2915 = vmul.f32 %v2907, %v2907
    %v2916 = vmul.f32 %v2908, %v2908
    %v2917 = vmul.f32 %v2909, %v2909
    %v2918 = vmul.f32 %v2910, %v2910
    %v2919 = vmul.f32 %v2911, %v2911
    %v2920 = vmul.f32 %v2912, %v2912
    %v2921 = vmul.f32 %v2913, %v2913
    %v2922 = vsel %vm397, %v2914, 0.0
    %2923 = vadd.xlane.f32.xlu0 %v2922
    %v2924 = vpop.xlane.xlu0 %2923
    %v2925 = vsel %vm397, %v2915, 0.0
    %2926 = vadd.xlane.f32.xlu0 %v2925
    %v2927 = vpop.xlane.xlu0 %2926
    %v2928 = vsel %vm397, %v2916, 0.0
    %2929 = vadd.xlane.f32.xlu0 %v2928
    %v2930 = vpop.xlane.xlu0 %2929
    %v2931 = vsel %vm397, %v2917, 0.0
    %2932 = vadd.xlane.f32.xlu0 %v2931
    %v2933 = vpop.xlane.xlu0 %2932
    %v2934 = vsel %vm397, %v2918, 0.0
    %2935 = vadd.xlane.f32.xlu0 %v2934
    %v2936 = vpop.xlane.xlu0 %2935
    %v2937 = vsel %vm397, %v2919, 0.0
    %2938 = vadd.xlane.f32.xlu0 %v2937
    %v2939 = vpop.xlane.xlu0 %2938
    %v2940 = vsel %vm397, %v2920, 0.0
    %2941 = vadd.xlane.f32.xlu0 %v2940
    %v2942 = vpop.xlane.xlu0 %2941
    %v2943 = vsel %vm397, %v2921, 0.0
    %2944 = vadd.xlane.f32.xlu0 %v2943
    %v2945 = vpop.xlane.xlu0 %2944
    %v2946 = vmul.f32 %v2924, %v1784
    %v2947 = vmul.f32 %v2927, %v1784
    %v2948 = vmul.f32 %v2930, %v1784
    %v2949 = vmul.f32 %v2933, %v1784
    %v2950 = vmul.f32 %v2936, %v1784
    %v2951 = vmul.f32 %v2939, %v1784
    %v2952 = vmul.f32 %v2942, %v1784
    %v2953 = vmul.f32 %v2945, %v1784
    %v2954 = vadd.f32 %v2946, 1e-06
    %v2955 = vadd.f32 %v2947, 1e-06
    %v2956 = vadd.f32 %v2948, 1e-06
    %v2957 = vadd.f32 %v2949, 1e-06
    %v2958 = vadd.f32 %v2950, 1e-06
    %v2959 = vadd.f32 %v2951, 1e-06
    %v2960 = vadd.f32 %v2952, 1e-06
    %v2961 = vadd.f32 %v2953, 1e-06
    %v2962 = vrsqrt.pop %v2954
    %v2963 = vrsqrt.pop %v2955
    %v2964 = vrsqrt.pop %v2956
    %v2965 = vrsqrt.pop %v2957
    %v2966 = vrsqrt.pop %v2958
    %v2967 = vrsqrt.pop %v2959
    %v2968 = vrsqrt.pop %v2960
    %v2969 = vrsqrt.pop %v2961
    %v2970 = vmul.f32 %v2906, %v2962
    %v2971 = vmul.f32 %v2907, %v2963
    %v2972 = vmul.f32 %v2908, %v2964
    %v2973 = vmul.f32 %v2909, %v2965
    %v2974 = vmul.f32 %v2910, %v2966
    %v2975 = vmul.f32 %v2911, %v2967
    %v2976 = vmul.f32 %v2912, %v2968
    %v2977 = vmul.f32 %v2913, %v2969
    %v2979 = vlaneseq
    %v2980 = vshrl.u32 %v2979, 7
    %v2981 = vsub.s32 0, %v2980
    %v2982 = vrot.slane %v2871, %v2981
    %v2984 = vmul.f32 %v2970, %v2982
    %v2985 = vmul.f32 %v2971, %v2982
    %v2986 = vmul.f32 %v2972, %v2982
    %v2987 = vmul.f32 %v2973, %v2982
    %v2988 = vmul.f32 %v2974, %v2982
    %v2989 = vmul.f32 %v2975, %v2982
    %v2990 = vmul.f32 %v2976, %v2982
    %v2991 = vmul.f32 %v2977, %v2982
    %v2993 = vlaneseq
    %v2994 = vshrl.u32 %v2993, 7
    %v2995 = vsub.s32 0, %v2994
    %v2996 = vrot.slane %v2873, %v2995
    %v2998 = vadd.f32 %v2984, %v2996
    %v2999 = vadd.f32 %v2985, %v2996
    %v3000 = vadd.f32 %v2986, %v2996
    %v3001 = vadd.f32 %v2987, %v2996
    %v3002 = vadd.f32 %v2988, %v2996
    %v3003 = vadd.f32 %v2989, %v2996
    %v3004 = vadd.f32 %v2990, %v2996
    %v3005 = vadd.f32 %v2991, %v2996
    %v3006 = vld [vmem:[#allocation27] sm:$0xff]
    %v3007 = vld [vmem:[#allocation27 + $0x8] sm:$0xff]
    %v3008 = vld [vmem:[#allocation27 + $0x10] sm:$0xff]
    %v3009 = vld [vmem:[#allocation27 + $0x18] sm:$0xff]
    %v3010 = vld [vmem:[#allocation28] sm:$0x1]
    %v3012 = vlaneseq
    %v3013 = vshrl.u32 %v3012, 7
    %v3014 = vsub.s32 0, %v3013
    %v3015 = vrot.slane %v3010, %v3014
    %v3018 = vsel %vm397, %v2998, 0
    %v3021 = vsel %vm397, %v2999, 0
    %v3024 = vsel %vm397, %v3000, 0
    %v3027 = vsel %vm397, %v3001, 0
    %v3030 = vsel %vm397, %v3002, 0
    %v3033 = vsel %vm397, %v3003, 0
    %v3036 = vsel %vm397, %v3004, 0
    %v3039 = vsel %vm397, %v3005, 0
    %3041 = vmatprep.subr.mxu0 0.0
    %3042 = vmatpush1.msra.mxu0 0.0
    %3043 = vmatprep.subr.mxu0 0.0
    %3044 = vmatpush1.msra.mxu0 0.0
    %3045 = vmatprep.subr.mxu0 0.0
    %3046 = vmatpush1.msra.mxu0 0.0
    %3047 = vmatprep.subr.mxu0 0.0
    %3048 = vmatpush1.msra.mxu0 0.0
    %3049 = vmatprep.subr.mxu0 0.0
    %3050 = vmatpush1.msra.mxu0 0.0
    %3051 = vmatprep.subr.mxu0 0.0
    %3052 = vmatpush1.msra.mxu0 0.0
    %3053 = vmatprep.subr.mxu0 0.0
    %3054 = vmatpush1.msra.mxu0 0.0
    %3055 = vmatprep.subr.mxu0 0.0
    %3056 = vmatpush1.msra.mxu0 0.0
    %3057 = vmatprep.subr.mxu0 0.0
    %3058 = vmatpush1.msra.mxu0 0.0
    %3059 = vmatprep.subr.mxu0 0.0
    %3060 = vmatpush1.msra.mxu0 0.0
    %3061 = vmatprep.subr.mxu0 0.0
    %3062 = vmatpush1.msra.mxu0 0.0
    %3063 = vmatprep.subr.mxu0 0.0
    %3064 = vmatpush1.msra.mxu0 0.0
    %3065 = vmatprep.subr.mxu0 0.0
    %3066 = vmatpush1.msra.mxu0 %v3009
    %3067 = vmatprep.subr.mxu0 0.0
    %3068 = vmatpush1.msra.mxu0 %v3008
    %3069 = vmatprep.subr.mxu0 0.0
    %3070 = vmatpush1.msra.mxu0 %v3007
    %3071 = vmatprep.subr.mxu0 0.0
    %3072 = vmatpush1.msra.mxu0 %v3006
    %3073 = vmatprep.subr.mxu0 0.0
    %3074 = vmatpush2.msra.mxu0 0.0
    %3075 = vmatprep.subr.mxu0 0.0
    %3076 = vmatpush2.msra.mxu0 0.0
    %3077 = vmatprep.subr.mxu0 0.0
    %3078 = vmatpush2.msra.mxu0 0.0
    %3079 = vmatprep.subr.mxu0 0.0
    %3080 = vmatpush2.msra.mxu0 0.0
    %3081 = vmatprep.subr.mxu0 0.0
    %3082 = vmatpush2.msra.mxu0 0.0
    %3083 = vmatprep.subr.mxu0 0.0
    %3084 = vmatpush2.msra.mxu0 0.0
    %3085 = vmatprep.subr.mxu0 0.0
    %3086 = vmatpush2.msra.mxu0 0.0
    %3087 = vmatprep.subr.mxu0 0.0
    %3088 = vmatpush2.msra.mxu0 0.0
    %3089 = vmatprep.subr.mxu0 0.0
    %3090 = vmatpush2.msra.mxu0 0.0
    %3091 = vmatprep.subr.mxu0 0.0
    %3092 = vmatpush2.msra.mxu0 0.0
    %3093 = vmatprep.subr.mxu0 0.0
    %3094 = vmatpush2.msra.mxu0 0.0
    %3095 = vmatprep.subr.mxu0 0.0
    %3096 = vmatpush2.msra.mxu0 0.0
    %3097 = vmatprep.subr.mxu0 0.0
    %3098 = vmatpush2.msra.mxu0 0.0
    %3099 = vmatprep.subr.mxu0 0.0
    %3100 = vmatpush2.msra.mxu0 0.0
    %3101 = vmatprep.subr.mxu0 0.0
    %3102 = vmatpush2.msra.mxu0 0.0
    %3103 = vmatprep.subr.mxu0 0.0
    %3104 = vmatpush2.msra.mxu0 0.0
    %3105 = vmatprep.mubr.f32.mxu0 0.0
    %3106 = vmatmul.mubr.f32.gmra.mxu0 %v3018
    %v3107 = vpop.f32.mrf.mxu0
    %v3108 = vadd.f32 %v3015, %v3107
    %v3109 = vpop.f32.mrf.mxu0
    %3110 = vmatprep.mubr.f32.mxu0 0.0
    %3111 = vmatmul.mubr.f32.gmra.mxu0 %v3021
    %v3112 = vpop.f32.mrf.mxu0
    %v3113 = vadd.f32 %v3015, %v3112
    %v3114 = vpop.f32.mrf.mxu0
    %3115 = vmatprep.mubr.f32.mxu0 0.0
    %3116 = vmatmul.mubr.f32.gmra.mxu0 %v3024
    %v3117 = vpop.f32.mrf.mxu0
    %v3118 = vadd.f32 %v3015, %v3117
    %v3119 = vpop.f32.mrf.mxu0
    %3120 = vmatprep.mubr.f32.mxu0 0.0
    %3121 = vmatmul.mubr.f32.gmra.mxu0 %v3027
    %v3122 = vpop.f32.mrf.mxu0
    %v3123 = vadd.f32 %v3015, %v3122
    %v3124 = vpop.f32.mrf.mxu0
    %3125 = vmatprep.mubr.f32.mxu0 0.0
    %3126 = vmatmul.mubr.f32.gmra.mxu0 %v3030
    %v3127 = vpop.f32.mrf.mxu0
    %v3128 = vadd.f32 %v3015, %v3127
    %v3129 = vpop.f32.mrf.mxu0
    %3130 = vmatprep.mubr.f32.mxu0 0.0
    %3131 = vmatmul.mubr.f32.gmra.mxu0 %v3033
    %v3132 = vpop.f32.mrf.mxu0
    %v3133 = vadd.f32 %v3015, %v3132
    %v3134 = vpop.f32.mrf.mxu0
    %3135 = vmatprep.mubr.f32.mxu0 0.0
    %3136 = vmatmul.mubr.f32.gmra.mxu0 %v3036
    %v3137 = vpop.f32.mrf.mxu0
    %v3138 = vadd.f32 %v3015, %v3137
    %v3139 = vpop.f32.mrf.mxu0
    %3140 = vmatprep.mubr.f32.mxu0 0.0
    %3141 = vmatmul.mubr.f32.gmra.mxu0 %v3039
    %v3142 = vpop.f32.mrf.mxu0
    %v3143 = vadd.f32 %v3015, %v3142
    %v3144 = vpop.f32.mrf.mxu0
    %3145 = vdwg.mxu0
    %v3146 = vmul.f32 %v3108, 0.5
    %v3147 = vmul.f32 %v3113, 0.5
    %v3148 = vmul.f32 %v3118, 0.5
    %v3149 = vmul.f32 %v3123, 0.5
    %v3150 = vmul.f32 %v3128, 0.5
    %v3151 = vmul.f32 %v3133, 0.5
    %v3152 = vmul.f32 %v3138, 0.5
    %v3153 = vmul.f32 %v3143, 0.5
    %v3154 = vmul.f32 %v3108, 0.70710677
    %v3155 = vmul.f32 %v3113, 0.70710677
    %v3156 = vmul.f32 %v3118, 0.70710677
    %v3157 = vmul.f32 %v3123, 0.70710677
    %v3158 = vmul.f32 %v3128, 0.70710677
    %v3159 = vmul.f32 %v3133, 0.70710677
    %v3160 = vmul.f32 %v3138, 0.70710677
    %v3161 = vmul.f32 %v3143, 0.70710677
    %v3162 = vand.u32 2147483647, %v3154
    %v3163 = vand.u32 2147483647, %v3155
    %v3164 = vand.u32 2147483647, %v3156
    %v3165 = vand.u32 2147483647, %v3157
    %v3166 = vand.u32 2147483647, %v3158
    %v3167 = vand.u32 2147483647, %v3159
    %v3168 = vand.u32 2147483647, %v3160
    %v3169 = vand.u32 2147483647, %v3161
    %v3170 = vmul.f32 %v3162, 0.3275911
    %v3171 = vmul.f32 %v3163, 0.3275911
    %v3172 = vmul.f32 %v3164, 0.3275911
    %v3173 = vmul.f32 %v3165, 0.3275911
    %v3174 = vmul.f32 %v3166, 0.3275911
    %v3175 = vmul.f32 %v3167, 0.3275911
    %v3176 = vmul.f32 %v3168, 0.3275911
    %v3177 = vmul.f32 %v3169, 0.3275911
    %v3178 = vadd.f32 %v3170, 1.0
    %v3179 = vadd.f32 %v3171, 1.0
    %v3180 = vadd.f32 %v3172, 1.0
    %v3181 = vadd.f32 %v3173, 1.0
    %v3182 = vadd.f32 %v3174, 1.0
    %v3183 = vadd.f32 %v3175, 1.0
    %v3184 = vadd.f32 %v3176, 1.0
    %v3185 = vadd.f32 %v3177, 1.0
    %v3186 = vrcp.pop %v3178
    %v3187 = vmul.f32 1.0, %v3186
    %v3188 = vrcp.pop %v3179
    %v3189 = vmul.f32 1.0, %v3188
    %v3190 = vrcp.pop %v3180
    %v3191 = vmul.f32 1.0, %v3190
    %v3192 = vrcp.pop %v3181
    %v3193 = vmul.f32 1.0, %v3192
    %v3194 = vrcp.pop %v3182
    %v3195 = vmul.f32 1.0, %v3194
    %v3196 = vrcp.pop %v3183
    %v3197 = vmul.f32 1.0, %v3196
    %v3198 = vrcp.pop %v3184
    %v3199 = vmul.f32 1.0, %v3198
    %v3200 = vrcp.pop %v3185
    %v3201 = vmul.f32 1.0, %v3200
    %v3202 = vmul.f32 %v3187, 1.0614054
    %v3203 = vmul.f32 %v3189, 1.0614054
    %v3204 = vmul.f32 %v3191, 1.0614054
    %v3205 = vmul.f32 %v3193, 1.0614054
    %v3206 = vmul.f32 %v3195, 1.0614054
    %v3207 = vmul.f32 %v3197, 1.0614054
    %v3208 = vmul.f32 %v3199, 1.0614054
    %v3209 = vmul.f32 %v3201, 1.0614054
    %v3210 = vadd.f32 %v3202, -1.4531521
    %v3211 = vadd.f32 %v3203, -1.4531521
    %v3212 = vadd.f32 %v3204, -1.4531521
    %v3213 = vadd.f32 %v3205, -1.4531521
    %v3214 = vadd.f32 %v3206, -1.4531521
    %v3215 = vadd.f32 %v3207, -1.4531521
    %v3216 = vadd.f32 %v3208, -1.4531521
    %v3217 = vadd.f32 %v3209, -1.4531521
    %v3218 = vmul.f32 %v3210, %v3187
    %v3219 = vmul.f32 %v3211, %v3189
    %v3220 = vmul.f32 %v3212, %v3191
    %v3221 = vmul.f32 %v3213, %v3193
    %v3222 = vmul.f32 %v3214, %v3195
    %v3223 = vmul.f32 %v3215, %v3197
    %v3224 = vmul.f32 %v3216, %v3199
    %v3225 = vmul.f32 %v3217, %v3201
    %v3226 = vadd.f32 %v3218, 1.4214138
    %v3227 = vadd.f32 %v3219, 1.4214138
    %v3228 = vadd.f32 %v3220, 1.4214138
    %v3229 = vadd.f32 %v3221, 1.4214138
    %v3230 = vadd.f32 %v3222, 1.4214138
    %v3231 = vadd.f32 %v3223, 1.4214138
    %v3232 = vadd.f32 %v3224, 1.4214138
    %v3233 = vadd.f32 %v3225, 1.4214138
    %v3234 = vmul.f32 %v3226, %v3187
    %v3235 = vmul.f32 %v3227, %v3189
    %v3236 = vmul.f32 %v3228, %v3191
    %v3237 = vmul.f32 %v3229, %v3193
    %v3238 = vmul.f32 %v3230, %v3195
    %v3239 = vmul.f32 %v3231, %v3197
    %v3240 = vmul.f32 %v3232, %v3199
    %v3241 = vmul.f32 %v3233, %v3201
    %v3242 = vadd.f32 %v3234, -0.28449672
    %v3243 = vadd.f32 %v3235, -0.28449672
    %v3244 = vadd.f32 %v3236, -0.28449672
    %v3245 = vadd.f32 %v3237, -0.28449672
    %v3246 = vadd.f32 %v3238, -0.28449672
    %v3247 = vadd.f32 %v3239, -0.28449672
    %v3248 = vadd.f32 %v3240, -0.28449672
    %v3249 = vadd.f32 %v3241, -0.28449672
    %v3250 = vmul.f32 %v3242, %v3187
    %v3251 = vmul.f32 %v3243, %v3189
    %v3252 = vmul.f32 %v3244, %v3191
    %v3253 = vmul.f32 %v3245, %v3193
    %v3254 = vmul.f32 %v3246, %v3195
    %v3255 = vmul.f32 %v3247, %v3197
    %v3256 = vmul.f32 %v3248, %v3199
    %v3257 = vmul.f32 %v3249, %v3201
    %v3258 = vadd.f32 %v3250, 0.2548296
    %v3259 = vadd.f32 %v3251, 0.2548296
    %v3260 = vadd.f32 %v3252, 0.2548296
    %v3261 = vadd.f32 %v3253, 0.2548296
    %v3262 = vadd.f32 %v3254, 0.2548296
    %v3263 = vadd.f32 %v3255, 0.2548296
    %v3264 = vadd.f32 %v3256, 0.2548296
    %v3265 = vadd.f32 %v3257, 0.2548296
    %v3266 = vmul.f32 %v3258, %v3187
    %v3267 = vmul.f32 %v3259, %v3189
    %v3268 = vmul.f32 %v3260, %v3191
    %v3269 = vmul.f32 %v3261, %v3193
    %v3270 = vmul.f32 %v3262, %v3195
    %v3271 = vmul.f32 %v3263, %v3197
    %v3272 = vmul.f32 %v3264, %v3199
    %v3273 = vmul.f32 %v3265, %v3201
    %v3274 = vsub.f32 0.0, %v3162
    %v3275 = vsub.f32 0.0, %v3163
    %v3276 = vsub.f32 0.0, %v3164
    %v3277 = vsub.f32 0.0, %v3165
    %v3278 = vsub.f32 0.0, %v3166
    %v3279 = vsub.f32 0.0, %v3167
    %v3280 = vsub.f32 0.0, %v3168
    %v3281 = vsub.f32 0.0, %v3169
    %v3282 = vmul.f32 %v3274, %v3162
    %v3283 = vmul.f32 %v3275, %v3163
    %v3284 = vmul.f32 %v3276, %v3164
    %v3285 = vmul.f32 %v3277, %v3165
    %v3286 = vmul.f32 %v3278, %v3166
    %v3287 = vmul.f32 %v3279, %v3167
    %v3288 = vmul.f32 %v3280, %v3168
    %v3289 = vmul.f32 %v3281, %v3169
    %v3290 = vmul.f32 %v3282, 1.442695
    %v3291 = vpow.pop %v3290
    %v3292 = vmul.f32 %v3283, 1.442695
    %v3293 = vpow.pop %v3292
    %v3294 = vmul.f32 %v3284, 1.442695
    %v3295 = vpow.pop %v3294
    %v3296 = vmul.f32 %v3285, 1.442695
    %v3297 = vpow.pop %v3296
    %v3298 = vmul.f32 %v3286, 1.442695
    %v3299 = vpow.pop %v3298
    %v3300 = vmul.f32 %v3287, 1.442695
    %v3301 = vpow.pop %v3300
    %v3302 = vmul.f32 %v3288, 1.442695
    %v3303 = vpow.pop %v3302
    %v3304 = vmul.f32 %v3289, 1.442695
    %v3305 = vpow.pop %v3304
    %v3306 = vmul.f32 %v3266, %v3291
    %v3307 = vmul.f32 %v3267, %v3293
    %v3308 = vmul.f32 %v3268, %v3295
    %v3309 = vmul.f32 %v3269, %v3297
    %v3310 = vmul.f32 %v3270, %v3299
    %v3311 = vmul.f32 %v3271, %v3301
    %v3312 = vmul.f32 %v3272, %v3303
    %v3313 = vmul.f32 %v3273, %v3305
    %v3314 = vsub.f32 1.0, %v3306
    %v3315 = vsub.f32 1.0, %v3307
    %v3316 = vsub.f32 1.0, %v3308
    %v3317 = vsub.f32 1.0, %v3309
    %v3318 = vsub.f32 1.0, %v3310
    %v3319 = vsub.f32 1.0, %v3311
    %v3320 = vsub.f32 1.0, %v3312
    %v3321 = vsub.f32 1.0, %v3313
    %vm3322 = vcmp.lt.f32.partialorder %v3154, 0.0
    %vm3323 = vcmp.lt.f32.partialorder %v3155, 0.0
    %vm3324 = vcmp.lt.f32.partialorder %v3156, 0.0
    %vm3325 = vcmp.lt.f32.partialorder %v3157, 0.0
    %vm3326 = vcmp.lt.f32.partialorder %v3158, 0.0
    %vm3327 = vcmp.lt.f32.partialorder %v3159, 0.0
    %vm3328 = vcmp.lt.f32.partialorder %v3160, 0.0
    %vm3329 = vcmp.lt.f32.partialorder %v3161, 0.0
    %v3330 = vsub.f32 0.0, %v3314
    %v3331 = vsub.f32 0.0, %v3315
    %v3332 = vsub.f32 0.0, %v3316
    %v3333 = vsub.f32 0.0, %v3317
    %v3334 = vsub.f32 0.0, %v3318
    %v3335 = vsub.f32 0.0, %v3319
    %v3336 = vsub.f32 0.0, %v3320
    %v3337 = vsub.f32 0.0, %v3321
    %v3338 = vsel %vm3322, %v3330, %v3314
    %v3339 = vsel %vm3323, %v3331, %v3315
    %v3340 = vsel %vm3324, %v3332, %v3316
    %v3341 = vsel %vm3325, %v3333, %v3317
    %v3342 = vsel %vm3326, %v3334, %v3318
    %v3343 = vsel %vm3327, %v3335, %v3319
    %v3344 = vsel %vm3328, %v3336, %v3320
    %v3345 = vsel %vm3329, %v3337, %v3321
    %v3346 = vadd.f32 %v3338, 1.0
    %v3347 = vadd.f32 %v3339, 1.0
    %v3348 = vadd.f32 %v3340, 1.0
    %v3349 = vadd.f32 %v3341, 1.0
    %v3350 = vadd.f32 %v3342, 1.0
    %v3351 = vadd.f32 %v3343, 1.0
    %v3352 = vadd.f32 %v3344, 1.0
    %v3353 = vadd.f32 %v3345, 1.0
    %v3354 = vmul.f32 %v3146, %v3346
    %v3355 = vmul.f32 %v3147, %v3347
    %v3356 = vmul.f32 %v3148, %v3348
    %v3357 = vmul.f32 %v3149, %v3349
    %v3358 = vmul.f32 %v3150, %v3350
    %v3359 = vmul.f32 %v3151, %v3351
    %v3360 = vmul.f32 %v3152, %v3352
    %v3361 = vmul.f32 %v3153, %v3353
    %v3362 = vld [vmem:[%s22] sm:$0xff]
    %v3363 = vld [vmem:[%s22 + $0x8] sm:$0xff]
    %v3364 = vld [vmem:[%s22 + $0x10] sm:$0xff]
    %v3365 = vld [vmem:[%s22 + $0x18] sm:$0xff]
    %v3366 = vld [vmem:[%s22 + $0x20] sm:$0xff]
    %v3367 = vld [vmem:[%s22 + $0x28] sm:$0xff]
    %v3368 = vld [vmem:[%s22 + $0x30] sm:$0xff]
    %v3369 = vld [vmem:[%s22 + $0x38] sm:$0xff]
    %s3370 = scalar_lea.vmem [#allocation25], 3
    %v3371 = vld [vmem:[%s3370] sm:$0x1]
    %v3373 = vlaneseq
    %v3374 = vshrl.u32 %v3373, 7
    %v3375 = vsub.s32 0, %v3374
    %v3376 = vrot.slane %v3371, %v3375
    %v3379 = vsel %vm2195, %v3354, 0
    %v3382 = vsel %vm2195, %v3355, 0
    %v3385 = vsel %vm2195, %v3356, 0
    %v3388 = vsel %vm2195, %v3357, 0
    %v3391 = vsel %vm2195, %v3358, 0
    %v3394 = vsel %vm2195, %v3359, 0
    %v3397 = vsel %vm2195, %v3360, 0
    %v3400 = vsel %vm2195, %v3361, 0
    %3402 = vmatprep.subr.mxu0 0.0
    %3403 = vmatpush1.msra.mxu0 0.0
    %3404 = vmatprep.subr.mxu0 0.0
    %3405 = vmatpush1.msra.mxu0 0.0
    %3406 = vmatprep.subr.mxu0 0.0
    %3407 = vmatpush1.msra.mxu0 0.0
    %3408 = vmatprep.subr.mxu0 0.0
    %3409 = vmatpush1.msra.mxu0 0.0
    %3410 = vmatprep.subr.mxu0 0.0
    %3411 = vmatpush1.msra.mxu0 0.0
    %3412 = vmatprep.subr.mxu0 0.0
    %3413 = vmatpush1.msra.mxu0 0.0
    %3414 = vmatprep.subr.mxu0 0.0
    %3415 = vmatpush1.msra.mxu0 0.0
    %3416 = vmatprep.subr.mxu0 0.0
    %3417 = vmatpush1.msra.mxu0 0.0
    %3418 = vmatprep.subr.mxu0 0.0
    %3419 = vmatpush1.msra.mxu0 %v3369
    %3420 = vmatprep.subr.mxu0 0.0
    %3421 = vmatpush1.msra.mxu0 %v3368
    %3422 = vmatprep.subr.mxu0 0.0
    %3423 = vmatpush1.msra.mxu0 %v3367
    %3424 = vmatprep.subr.mxu0 0.0
    %3425 = vmatpush1.msra.mxu0 %v3366
    %3426 = vmatprep.subr.mxu0 0.0
    %3427 = vmatpush1.msra.mxu0 %v3365
    %3428 = vmatprep.subr.mxu0 0.0
    %3429 = vmatpush1.msra.mxu0 %v3364
    %3430 = vmatprep.subr.mxu0 0.0
    %3431 = vmatpush1.msra.mxu0 %v3363
    %3432 = vmatprep.subr.mxu0 0.0
    %3433 = vmatpush1.msra.mxu0 %v3362
    %3434 = vmatprep.subr.mxu0 0.0
    %3435 = vmatpush2.msra.mxu0 0.0
    %3436 = vmatprep.subr.mxu0 0.0
    %3437 = vmatpush2.msra.mxu0 0.0
    %3438 = vmatprep.subr.mxu0 0.0
    %3439 = vmatpush2.msra.mxu0 0.0
    %3440 = vmatprep.subr.mxu0 0.0
    %3441 = vmatpush2.msra.mxu0 0.0
    %3442 = vmatprep.subr.mxu0 0.0
    %3443 = vmatpush2.msra.mxu0 0.0
    %3444 = vmatprep.subr.mxu0 0.0
    %3445 = vmatpush2.msra.mxu0 0.0
    %3446 = vmatprep.subr.mxu0 0.0
    %3447 = vmatpush2.msra.mxu0 0.0
    %3448 = vmatprep.subr.mxu0 0.0
    %3449 = vmatpush2.msra.mxu0 0.0
    %3450 = vmatprep.subr.mxu0 0.0
    %3451 = vmatpush2.msra.mxu0 0.0
    %3452 = vmatprep.subr.mxu0 0.0
    %3453 = vmatpush2.msra.mxu0 0.0
    %3454 = vmatprep.subr.mxu0 0.0
    %3455 = vmatpush2.msra.mxu0 0.0
    %3456 = vmatprep.subr.mxu0 0.0
    %3457 = vmatpush2.msra.mxu0 0.0
    %3458 = vmatprep.subr.mxu0 0.0
    %3459 = vmatpush2.msra.mxu0 0.0
    %3460 = vmatprep.subr.mxu0 0.0
    %3461 = vmatpush2.msra.mxu0 0.0
    %3462 = vmatprep.subr.mxu0 0.0
    %3463 = vmatpush2.msra.mxu0 0.0
    %3464 = vmatprep.subr.mxu0 0.0
    %3465 = vmatpush2.msra.mxu0 0.0
    %3466 = vmatprep.mubr.f32.mxu0 0.0
    %3467 = vmatmul.mubr.f32.gmra.mxu0 %v3379
    %v3468 = vpop.f32.mrf.mxu0
    %v3469 = vadd.f32 %v3376, %v3468
    %v3470 = vpop.f32.mrf.mxu0
    %3471 = vmatprep.mubr.f32.mxu0 0.0
    %3472 = vmatmul.mubr.f32.gmra.mxu0 %v3382
    %v3473 = vpop.f32.mrf.mxu0
    %v3474 = vadd.f32 %v3376, %v3473
    %v3475 = vpop.f32.mrf.mxu0
    %3476 = vmatprep.mubr.f32.mxu0 0.0
    %3477 = vmatmul.mubr.f32.gmra.mxu0 %v3385
    %v3478 = vpop.f32.mrf.mxu0
    %v3479 = vadd.f32 %v3376, %v3478
    %v3480 = vpop.f32.mrf.mxu0
    %3481 = vmatprep.mubr.f32.mxu0 0.0
    %3482 = vmatmul.mubr.f32.gmra.mxu0 %v3388
    %v3483 = vpop.f32.mrf.mxu0
    %v3484 = vadd.f32 %v3376, %v3483
    %v3485 = vpop.f32.mrf.mxu0
    %3486 = vmatprep.mubr.f32.mxu0 0.0
    %3487 = vmatmul.mubr.f32.gmra.mxu0 %v3391
    %v3488 = vpop.f32.mrf.mxu0
    %v3489 = vadd.f32 %v3376, %v3488
    %v3490 = vpop.f32.mrf.mxu0
    %3491 = vmatprep.mubr.f32.mxu0 0.0
    %3492 = vmatmul.mubr.f32.gmra.mxu0 %v3394
    %v3493 = vpop.f32.mrf.mxu0
    %v3494 = vadd.f32 %v3376, %v3493
    %v3495 = vpop.f32.mrf.mxu0
    %3496 = vmatprep.mubr.f32.mxu0 0.0
    %3497 = vmatmul.mubr.f32.gmra.mxu0 %v3397
    %v3498 = vpop.f32.mrf.mxu0
    %v3499 = vadd.f32 %v3376, %v3498
    %v3500 = vpop.f32.mrf.mxu0
    %3501 = vmatprep.mubr.f32.mxu0 0.0
    %3502 = vmatmul.mubr.f32.gmra.mxu0 %v3400
    %v3503 = vpop.f32.mrf.mxu0
    %v3504 = vadd.f32 %v3376, %v3503
    %v3505 = vpop.f32.mrf.mxu0
    %3506 = vdwg.mxu0
    %v3507 = vadd.f32 %v3469, %v2998
    %v3508 = vadd.f32 %v3474, %v2999
    %v3509 = vadd.f32 %v3479, %v3000
    %v3510 = vadd.f32 %v3484, %v3001
    %v3511 = vadd.f32 %v3489, %v3002
    %v3512 = vadd.f32 %v3494, %v3003
    %v3513 = vadd.f32 %v3499, %v3004
    %v3514 = vadd.f32 %v3504, %v3005
    %s3515 = scalar_lea.vmem [#allocation25], 4
    %v3516 = vld [vmem:[%s3515] sm:$0x1]
    %s3517 = scalar_lea.vmem [#allocation25], 5
    %v3518 = vld [vmem:[%s3517] sm:$0x1]
    %v3519 = vsel %vm397, %v3507, 0.0
    %3520 = vadd.xlane.f32.xlu0 %v3519
    %v3521 = vpop.xlane.xlu0 %3520
    %v3522 = vsel %vm397, %v3508, 0.0
    %3523 = vadd.xlane.f32.xlu0 %v3522
    %v3524 = vpop.xlane.xlu0 %3523
    %v3525 = vsel %vm397, %v3509, 0.0
    %3526 = vadd.xlane.f32.xlu0 %v3525
    %v3527 = vpop.xlane.xlu0 %3526
    %v3528 = vsel %vm397, %v3510, 0.0
    %3529 = vadd.xlane.f32.xlu0 %v3528
    %v3530 = vpop.xlane.xlu0 %3529
    %v3531 = vsel %vm397, %v3511, 0.0
    %3532 = vadd.xlane.f32.xlu0 %v3531
    %v3533 = vpop.xlane.xlu0 %3532
    %v3534 = vsel %vm397, %v3512, 0.0
    %3535 = vadd.xlane.f32.xlu0 %v3534
    %v3536 = vpop.xlane.xlu0 %3535
    %v3537 = vsel %vm397, %v3513, 0.0
    %3538 = vadd.xlane.f32.xlu0 %v3537
    %v3539 = vpop.xlane.xlu0 %3538
    %v3540 = vsel %vm397, %v3514, 0.0
    %3541 = vadd.xlane.f32.xlu0 %v3540
    %v3542 = vpop.xlane.xlu0 %3541
    %v3543 = vmul.f32 %v3521, %v1784
    %v3544 = vmul.f32 %v3524, %v1784
    %v3545 = vmul.f32 %v3527, %v1784
    %v3546 = vmul.f32 %v3530, %v1784
    %v3547 = vmul.f32 %v3533, %v1784
    %v3548 = vmul.f32 %v3536, %v1784
    %v3549 = vmul.f32 %v3539, %v1784
    %v3550 = vmul.f32 %v3542, %v1784
    %v3551 = vsub.f32 %v3507, %v3543
    %v3552 = vsub.f32 %v3508, %v3544
    %v3553 = vsub.f32 %v3509, %v3545
    %v3554 = vsub.f32 %v3510, %v3546
    %v3555 = vsub.f32 %v3511, %v3547
    %v3556 = vsub.f32 %v3512, %v3548
    %v3557 = vsub.f32 %v3513, %v3549
    %v3558 = vsub.f32 %v3514, %v3550
    %v3559 = vmul.f32 %v3551, %v3551
    %v3560 = vmul.f32 %v3552, %v3552
    %v3561 = vmul.f32 %v3553, %v3553
    %v3562 = vmul.f32 %v3554, %v3554
    %v3563 = vmul.f32 %v3555, %v3555
    %v3564 = vmul.f32 %v3556, %v3556
    %v3565 = vmul.f32 %v3557, %v3557
    %v3566 = vmul.f32 %v3558, %v3558
    %v3567 = vsel %vm397, %v3559, 0.0
    %3568 = vadd.xlane.f32.xlu0 %v3567
    %v3569 = vpop.xlane.xlu0 %3568
    %v3570 = vsel %vm397, %v3560, 0.0
    %3571 = vadd.xlane.f32.xlu0 %v3570
    %v3572 = vpop.xlane.xlu0 %3571
    %v3573 = vsel %vm397, %v3561, 0.0
    %3574 = vadd.xlane.f32.xlu0 %v3573
    %v3575 = vpop.xlane.xlu0 %3574
    %v3576 = vsel %vm397, %v3562, 0.0
    %3577 = vadd.xlane.f32.xlu0 %v3576
    %v3578 = vpop.xlane.xlu0 %3577
    %v3579 = vsel %vm397, %v3563, 0.0
    %3580 = vadd.xlane.f32.xlu0 %v3579
    %v3581 = vpop.xlane.xlu0 %3580
    %v3582 = vsel %vm397, %v3564, 0.0
    %3583 = vadd.xlane.f32.xlu0 %v3582
    %v3584 = vpop.xlane.xlu0 %3583
    %v3585 = vsel %vm397, %v3565, 0.0
    %3586 = vadd.xlane.f32.xlu0 %v3585
    %v3587 = vpop.xlane.xlu0 %3586
    %v3588 = vsel %vm397, %v3566, 0.0
    %3589 = vadd.xlane.f32.xlu0 %v3588
    %v3590 = vpop.xlane.xlu0 %3589
    %v3591 = vmul.f32 %v3569, %v1784
    %v3592 = vmul.f32 %v3572, %v1784
    %v3593 = vmul.f32 %v3575, %v1784
    %v3594 = vmul.f32 %v3578, %v1784
    %v3595 = vmul.f32 %v3581, %v1784
    %v3596 = vmul.f32 %v3584, %v1784
    %v3597 = vmul.f32 %v3587, %v1784
    %v3598 = vmul.f32 %v3590, %v1784
    %v3599 = vadd.f32 %v3591, 1e-06
    %v3600 = vadd.f32 %v3592, 1e-06
    %v3601 = vadd.f32 %v3593, 1e-06
    %v3602 = vadd.f32 %v3594, 1e-06
    %v3603 = vadd.f32 %v3595, 1e-06
    %v3604 = vadd.f32 %v3596, 1e-06
    %v3605 = vadd.f32 %v3597, 1e-06
    %v3606 = vadd.f32 %v3598, 1e-06
    %v3607 = vrsqrt.pop %v3599
    %v3608 = vrsqrt.pop %v3600
    %v3609 = vrsqrt.pop %v3601
    %v3610 = vrsqrt.pop %v3602
    %v3611 = vrsqrt.pop %v3603
    %v3612 = vrsqrt.pop %v3604
    %v3613 = vrsqrt.pop %v3605
    %v3614 = vrsqrt.pop %v3606
    %v3615 = vmul.f32 %v3551, %v3607
    %v3616 = vmul.f32 %v3552, %v3608
    %v3617 = vmul.f32 %v3553, %v3609
    %v3618 = vmul.f32 %v3554, %v3610
    %v3619 = vmul.f32 %v3555, %v3611
    %v3620 = vmul.f32 %v3556, %v3612
    %v3621 = vmul.f32 %v3557, %v3613
    %v3622 = vmul.f32 %v3558, %v3614
    %v3624 = vlaneseq
    %v3625 = vshrl.u32 %v3624, 7
    %v3626 = vsub.s32 0, %v3625
    %v3627 = vrot.slane %v3516, %v3626
    %v3629 = vmul.f32 %v3615, %v3627
    %v3630 = vmul.f32 %v3616, %v3627
    %v3631 = vmul.f32 %v3617, %v3627
    %v3632 = vmul.f32 %v3618, %v3627
    %v3633 = vmul.f32 %v3619, %v3627
    %v3634 = vmul.f32 %v3620, %v3627
    %v3635 = vmul.f32 %v3621, %v3627
    %v3636 = vmul.f32 %v3622, %v3627
    %v3638 = vlaneseq
    %v3639 = vshrl.u32 %v3638, 7
    %v3640 = vsub.s32 0, %v3639
    %v3641 = vrot.slane %v3518, %v3640
    %v3643 = vadd.f32 %v3629, %v3641
    %v3644 = vadd.f32 %v3630, %v3641
    %v3645 = vadd.f32 %v3631, %v3641
    %v3646 = vadd.f32 %v3632, %v3641
    %v3647 = vadd.f32 %v3633, %v3641
    %v3648 = vadd.f32 %v3634, %v3641
    %v3649 = vadd.f32 %v3635, %v3641
    %v3650 = vadd.f32 %v3636, %v3641
    %s3651 = scalar_lea.vmem [#allocation24], 32
    %v3652 = vld [vmem:[%s3651] sm:$0xff]
    %v3653 = vld [vmem:[%s3651 + $0x8] sm:$0xff]
    %v3654 = vld [vmem:[%s3651 + $0x10] sm:$0xff]
    %v3655 = vld [vmem:[%s3651 + $0x18] sm:$0xff]
    %v3657 = vsel %vm397, %v3643, 0
    %v3660 = vsel %vm397, %v3644, 0
    %v3663 = vsel %vm397, %v3645, 0
    %v3666 = vsel %vm397, %v3646, 0
    %v3669 = vsel %vm397, %v3647, 0
    %v3672 = vsel %vm397, %v3648, 0
    %v3675 = vsel %vm397, %v3649, 0
    %v3678 = vsel %vm397, %v3650, 0
    %3680 = vmatprep.subr.mxu0 0.0
    %3681 = vmatpush1.msra.mxu0 0.0
    %3682 = vmatprep.subr.mxu0 0.0
    %3683 = vmatpush1.msra.mxu0 0.0
    %3684 = vmatprep.subr.mxu0 0.0
    %3685 = vmatpush1.msra.mxu0 0.0
    %3686 = vmatprep.subr.mxu0 0.0
    %3687 = vmatpush1.msra.mxu0 0.0
    %3688 = vmatprep.subr.mxu0 0.0
    %3689 = vmatpush1.msra.mxu0 0.0
    %3690 = vmatprep.subr.mxu0 0.0
    %3691 = vmatpush1.msra.mxu0 0.0
    %3692 = vmatprep.subr.mxu0 0.0
    %3693 = vmatpush1.msra.mxu0 0.0
    %3694 = vmatprep.subr.mxu0 0.0
    %3695 = vmatpush1.msra.mxu0 0.0
    %3696 = vmatprep.subr.mxu0 0.0
    %3697 = vmatpush1.msra.mxu0 0.0
    %3698 = vmatprep.subr.mxu0 0.0
    %3699 = vmatpush1.msra.mxu0 0.0
    %3700 = vmatprep.subr.mxu0 0.0
    %3701 = vmatpush1.msra.mxu0 0.0
    %3702 = vmatprep.subr.mxu0 0.0
    %3703 = vmatpush1.msra.mxu0 0.0
    %3704 = vmatprep.subr.mxu0 0.0
    %3705 = vmatpush1.msra.mxu0 %v3655
    %3706 = vmatprep.subr.mxu0 0.0
    %3707 = vmatpush1.msra.mxu0 %v3654
    %3708 = vmatprep.subr.mxu0 0.0
    %3709 = vmatpush1.msra.mxu0 %v3653
    %3710 = vmatprep.subr.mxu0 0.0
    %3711 = vmatpush1.msra.mxu0 %v3652
    %3712 = vmatprep.subr.mxu0 0.0
    %3713 = vmatpush2.msra.mxu0 0.0
    %3714 = vmatprep.subr.mxu0 0.0
    %3715 = vmatpush2.msra.mxu0 0.0
    %3716 = vmatprep.subr.mxu0 0.0
    %3717 = vmatpush2.msra.mxu0 0.0
    %3718 = vmatprep.subr.mxu0 0.0
    %3719 = vmatpush2.msra.mxu0 0.0
    %3720 = vmatprep.subr.mxu0 0.0
    %3721 = vmatpush2.msra.mxu0 0.0
    %3722 = vmatprep.subr.mxu0 0.0
    %3723 = vmatpush2.msra.mxu0 0.0
    %3724 = vmatprep.subr.mxu0 0.0
    %3725 = vmatpush2.msra.mxu0 0.0
    %3726 = vmatprep.subr.mxu0 0.0
    %3727 = vmatpush2.msra.mxu0 0.0
    %3728 = vmatprep.subr.mxu0 0.0
    %3729 = vmatpush2.msra.mxu0 0.0
    %3730 = vmatprep.subr.mxu0 0.0
    %3731 = vmatpush2.msra.mxu0 0.0
    %3732 = vmatprep.subr.mxu0 0.0
    %3733 = vmatpush2.msra.mxu0 0.0
    %3734 = vmatprep.subr.mxu0 0.0
    %3735 = vmatpush2.msra.mxu0 0.0
    %3736 = vmatprep.subr.mxu0 0.0
    %3737 = vmatpush2.msra.mxu0 0.0
    %3738 = vmatprep.subr.mxu0 0.0
    %3739 = vmatpush2.msra.mxu0 0.0
    %3740 = vmatprep.subr.mxu0 0.0
    %3741 = vmatpush2.msra.mxu0 0.0
    %3742 = vmatprep.subr.mxu0 0.0
    %3743 = vmatpush2.msra.mxu0 0.0
    %3744 = vmatprep.mubr.f32.mxu0 0.0
    %3745 = vmatmul.mubr.f32.gmra.mxu0 %v3657
    %v3746 = vpop.f32.mrf.mxu0
    %v3747 = vadd.f32 0.0, %v3746
    %v3748 = vpop.f32.mrf.mxu0
    %3749 = vmatprep.mubr.f32.mxu0 0.0
    %3750 = vmatmul.mubr.f32.gmra.mxu0 %v3660
    %v3751 = vpop.f32.mrf.mxu0
    %v3752 = vadd.f32 0.0, %v3751
    %v3753 = vpop.f32.mrf.mxu0
    %3754 = vmatprep.mubr.f32.mxu0 0.0
    %3755 = vmatmul.mubr.f32.gmra.mxu0 %v3663
    %v3756 = vpop.f32.mrf.mxu0
    %v3757 = vadd.f32 0.0, %v3756
    %v3758 = vpop.f32.mrf.mxu0
    %3759 = vmatprep.mubr.f32.mxu0 0.0
    %3760 = vmatmul.mubr.f32.gmra.mxu0 %v3666
    %v3761 = vpop.f32.mrf.mxu0
    %v3762 = vadd.f32 0.0, %v3761
    %v3763 = vpop.f32.mrf.mxu0
    %3764 = vmatprep.mubr.f32.mxu0 0.0
    %3765 = vmatmul.mubr.f32.gmra.mxu0 %v3669
    %v3766 = vpop.f32.mrf.mxu0
    %v3767 = vadd.f32 0.0, %v3766
    %v3768 = vpop.f32.mrf.mxu0
    %3769 = vmatprep.mubr.f32.mxu0 0.0
    %3770 = vmatmul.mubr.f32.gmra.mxu0 %v3672
    %v3771 = vpop.f32.mrf.mxu0
    %v3772 = vadd.f32 0.0, %v3771
    %v3773 = vpop.f32.mrf.mxu0
    %3774 = vmatprep.mubr.f32.mxu0 0.0
    %3775 = vmatmul.mubr.f32.gmra.mxu0 %v3675
    %v3776 = vpop.f32.mrf.mxu0
    %v3777 = vadd.f32 0.0, %v3776
    %v3778 = vpop.f32.mrf.mxu0
    %3779 = vmatprep.mubr.f32.mxu0 0.0
    %3780 = vmatmul.mubr.f32.gmra.mxu0 %v3678
    %v3781 = vpop.f32.mrf.mxu0
    %v3782 = vadd.f32 0.0, %v3781
    %v3783 = vpop.f32.mrf.mxu0
    %3784 = vdwg.mxu0
    %3793 = vrot.lane.b32.xlu0 %v3747, 96
    %v3794 = vpop.permute.xlu0 %3793
    %3795 = vrot.lane.b32.xlu0 %v3752, 96
    %v3796 = vpop.permute.xlu0 %3795
    %3797 = vrot.lane.b32.xlu0 %v3757, 96
    %v3798 = vpop.permute.xlu0 %3797
    %3799 = vrot.lane.b32.xlu0 %v3762, 96
    %v3800 = vpop.permute.xlu0 %3799
    %3801 = vrot.lane.b32.xlu0 %v3767, 96
    %v3802 = vpop.permute.xlu0 %3801
    %3803 = vrot.lane.b32.xlu0 %v3772, 96
    %v3804 = vpop.permute.xlu0 %3803
    %3805 = vrot.lane.b32.xlu0 %v3777, 96
    %v3806 = vpop.permute.xlu0 %3805
    %3807 = vrot.lane.b32.xlu0 %v3782, 96
    %v3808 = vpop.permute.xlu0 %3807
    %v3809 = vsel %vm673, %v3747, 0
    %v3811 = vsel %vm673, %v3752, 0
    %v3813 = vsel %vm673, %v3757, 0
    %v3815 = vsel %vm673, %v3762, 0
    %v3817 = vsel %vm673, %v3767, 0
    %v3819 = vsel %vm673, %v3772, 0
    %v3821 = vsel %vm673, %v3777, 0
    %v3823 = vsel %vm673, %v3782, 0
    %v3825 = vsel %vm673, %v3794, 0
    %v3827 = vsel %vm673, %v3796, 0
    %v3829 = vsel %vm673, %v3798, 0
    %v3831 = vsel %vm673, %v3800, 0
    %v3833 = vsel %vm673, %v3802, 0
    %v3835 = vsel %vm673, %v3804, 0
    %v3837 = vsel %vm673, %v3806, 0
    %v3839 = vsel %vm673, %v3808, 0
    %3841 = vmatprep.subr.mxu0 0.0
    %3842 = vmatpush1.xpose.msra.mxu0 0.0
    %3843 = vmatprep.subr.mxu0 0.0
    %3844 = vmatpush1.xpose.msra.mxu0 0.0
    %3845 = vmatprep.subr.mxu0 0.0
    %3846 = vmatpush1.xpose.msra.mxu0 0.0
    %3847 = vmatprep.subr.mxu0 0.0
    %3848 = vmatpush1.xpose.msra.mxu0 0.0
    %3849 = vmatprep.subr.mxu0 0.0
    %3850 = vmatpush1.xpose.msra.mxu0 0.0
    %3851 = vmatprep.subr.mxu0 0.0
    %3852 = vmatpush1.xpose.msra.mxu0 0.0
    %3853 = vmatprep.subr.mxu0 0.0
    %3854 = vmatpush1.xpose.msra.mxu0 0.0
    %3855 = vmatprep.subr.mxu0 0.0
    %3856 = vmatpush1.xpose.msra.mxu0 0.0
    %3857 = vmatprep.subr.mxu0 0.0
    %3858 = vmatpush1.xpose.msra.mxu0 %v3839
    %3859 = vmatprep.subr.mxu0 0.0
    %3860 = vmatpush1.xpose.msra.mxu0 %v3837
    %3861 = vmatprep.subr.mxu0 0.0
    %3862 = vmatpush1.xpose.msra.mxu0 %v3835
    %3863 = vmatprep.subr.mxu0 0.0
    %3864 = vmatpush1.xpose.msra.mxu0 %v3833
    %3865 = vmatprep.subr.mxu0 0.0
    %3866 = vmatpush1.xpose.msra.mxu0 %v3831
    %3867 = vmatprep.subr.mxu0 0.0
    %3868 = vmatpush1.xpose.msra.mxu0 %v3829
    %3869 = vmatprep.subr.mxu0 0.0
    %3870 = vmatpush1.xpose.msra.mxu0 %v3827
    %3871 = vmatprep.subr.mxu0 0.0
    %3872 = vmatpush1.xpose.msra.mxu0 %v3825
    %3873 = vmatprep.subr.mxu0 0.0
    %3874 = vmatpush2.xpose.msra.mxu0 0.0
    %3875 = vmatprep.subr.mxu0 0.0
    %3876 = vmatpush2.xpose.msra.mxu0 0.0
    %3877 = vmatprep.subr.mxu0 0.0
    %3878 = vmatpush2.xpose.msra.mxu0 0.0
    %3879 = vmatprep.subr.mxu0 0.0
    %3880 = vmatpush2.xpose.msra.mxu0 0.0
    %3881 = vmatprep.subr.mxu0 0.0
    %3882 = vmatpush2.xpose.msra.mxu0 0.0
    %3883 = vmatprep.subr.mxu0 0.0
    %3884 = vmatpush2.xpose.msra.mxu0 0.0
    %3885 = vmatprep.subr.mxu0 0.0
    %3886 = vmatpush2.xpose.msra.mxu0 0.0
    %3887 = vmatprep.subr.mxu0 0.0
    %3888 = vmatpush2.xpose.msra.mxu0 0.0
    %3889 = vmatprep.subr.mxu0 0.0
    %3890 = vmatpush2.xpose.msra.mxu0 0.0
    %3891 = vmatprep.subr.mxu0 0.0
    %3892 = vmatpush2.xpose.msra.mxu0 0.0
    %3893 = vmatprep.subr.mxu0 0.0
    %3894 = vmatpush2.xpose.msra.mxu0 0.0
    %3895 = vmatprep.subr.mxu0 0.0
    %3896 = vmatpush2.xpose.msra.mxu0 0.0
    %3897 = vmatprep.subr.mxu0 0.0
    %3898 = vmatpush2.xpose.msra.mxu0 0.0
    %3899 = vmatprep.subr.mxu0 0.0
    %3900 = vmatpush2.xpose.msra.mxu0 0.0
    %3901 = vmatprep.subr.mxu0 0.0
    %3902 = vmatpush2.xpose.msra.mxu0 0.0
    %3903 = vmatprep.subr.mxu0 0.0
    %3904 = vmatpush2.xpose.msra.mxu0 0.0
    %3905 = vmatprep.mubr.f32.mxu0 0.0
    %3906 = vmatmul.mubr.f32.gmra.mxu0 %v3809
    %v3907 = vpop.f32.mrf.mxu0
    %v3908 = vadd.f32 %v1893, %v3907
    %v3909 = vpop.f32.mrf.mxu0
    %3910 = vmatprep.mubr.f32.mxu0 0.0
    %3911 = vmatmul.mubr.f32.gmra.mxu0 %v3811
    %v3912 = vpop.f32.mrf.mxu0
    %v3913 = vadd.f32 %v1894, %v3912
    %v3914 = vpop.f32.mrf.mxu0
    %3915 = vmatprep.mubr.f32.mxu0 0.0
    %3916 = vmatmul.mubr.f32.gmra.mxu0 %v3813
    %v3917 = vpop.f32.mrf.mxu0
    %v3918 = vadd.f32 %v1895, %v3917
    %v3919 = vpop.f32.mrf.mxu0
    %3920 = vmatprep.mubr.f32.mxu0 0.0
    %3921 = vmatmul.mubr.f32.gmra.mxu0 %v3815
    %v3922 = vpop.f32.mrf.mxu0
    %v3923 = vadd.f32 %v1896, %v3922
    %v3924 = vpop.f32.mrf.mxu0
    %3925 = vmatprep.mubr.f32.mxu0 0.0
    %3926 = vmatmul.mubr.f32.gmra.mxu0 %v3817
    %v3927 = vpop.f32.mrf.mxu0
    %v3928 = vadd.f32 %v1897, %v3927
    %v3929 = vpop.f32.mrf.mxu0
    %3930 = vmatprep.mubr.f32.mxu0 0.0
    %3931 = vmatmul.mubr.f32.gmra.mxu0 %v3819
    %v3932 = vpop.f32.mrf.mxu0
    %v3933 = vadd.f32 %v1898, %v3932
    %v3934 = vpop.f32.mrf.mxu0
    %3935 = vmatprep.mubr.f32.mxu0 0.0
    %3936 = vmatmul.mubr.f32.gmra.mxu0 %v3821
    %v3937 = vpop.f32.mrf.mxu0
    %v3938 = vadd.f32 %v1899, %v3937
    %v3939 = vpop.f32.mrf.mxu0
    %3940 = vmatprep.mubr.f32.mxu0 0.0
    %3941 = vmatmul.mubr.f32.gmra.mxu0 %v3823
    %v3942 = vpop.f32.mrf.mxu0
    %v3943 = vadd.f32 %v1900, %v3942
    %v3944 = vpop.f32.mrf.mxu0
    %3945 = vdwg.mxu0
    %v3946 = vsel %vm2195, %v3908, -inf
    %3947 = vmax.xlane.f32.xlu0 %v3946
    %v3948 = vpop.xlane.xlu0 %3947
    %v3949 = vsel %vm2195, %v3913, -inf
    %3950 = vmax.xlane.f32.xlu0 %v3949
    %v3951 = vpop.xlane.xlu0 %3950
    %v3952 = vsel %vm2195, %v3918, -inf
    %3953 = vmax.xlane.f32.xlu0 %v3952
    %v3954 = vpop.xlane.xlu0 %3953
    %v3955 = vsel %vm2195, %v3923, -inf
    %3956 = vmax.xlane.f32.xlu0 %v3955
    %v3957 = vpop.xlane.xlu0 %3956
    %v3958 = vsel %vm2195, %v3928, -inf
    %3959 = vmax.xlane.f32.xlu0 %v3958
    %v3960 = vpop.xlane.xlu0 %3959
    %v3961 = vsel %vm2195, %v3933, -inf
    %3962 = vmax.xlane.f32.xlu0 %v3961
    %v3963 = vpop.xlane.xlu0 %3962
    %v3964 = vsel %vm2195, %v3938, -inf
    %3965 = vmax.xlane.f32.xlu0 %v3964
    %v3966 = vpop.xlane.xlu0 %3965
    %v3967 = vsel %vm2195, %v3943, -inf
    %3968 = vmax.xlane.f32.xlu0 %v3967
    %v3969 = vpop.xlane.xlu0 %3968
    %v3970 = vsub.f32 %v3908, %v3948
    %v3971 = vsub.f32 %v3913, %v3951
    %v3972 = vsub.f32 %v3918, %v3954
    %v3973 = vsub.f32 %v3923, %v3957
    %v3974 = vsub.f32 %v3928, %v3960
    %v3975 = vsub.f32 %v3933, %v3963
    %v3976 = vsub.f32 %v3938, %v3966
    %v3977 = vsub.f32 %v3943, %v3969
    %v3978 = vmul.f32 %v3970, 1.442695
    %v3979 = vpow.pop %v3978
    %v3980 = vmul.f32 %v3971, 1.442695
    %v3981 = vpow.pop %v3980
    %v3982 = vmul.f32 %v3972, 1.442695
    %v3983 = vpow.pop %v3982
    %v3984 = vmul.f32 %v3973, 1.442695
    %v3985 = vpow.pop %v3984
    %v3986 = vmul.f32 %v3974, 1.442695
    %v3987 = vpow.pop %v3986
    %v3988 = vmul.f32 %v3975, 1.442695
    %v3989 = vpow.pop %v3988
    %v3990 = vmul.f32 %v3976, 1.442695
    %v3991 = vpow.pop %v3990
    %v3992 = vmul.f32 %v3977, 1.442695
    %v3993 = vpow.pop %v3992
    %v3994 = vsel %vm2195, %v3979, 0.0
    %3995 = vadd.xlane.f32.xlu0 %v3994
    %v3996 = vpop.xlane.xlu0 %3995
    %v3997 = vsel %vm2195, %v3981, 0.0
    %3998 = vadd.xlane.f32.xlu0 %v3997
    %v3999 = vpop.xlane.xlu0 %3998
    %v4000 = vsel %vm2195, %v3983, 0.0
    %4001 = vadd.xlane.f32.xlu0 %v4000
    %v4002 = vpop.xlane.xlu0 %4001
    %v4003 = vsel %vm2195, %v3985, 0.0
    %4004 = vadd.xlane.f32.xlu0 %v4003
    %v4005 = vpop.xlane.xlu0 %4004
    %v4006 = vsel %vm2195, %v3987, 0.0
    %4007 = vadd.xlane.f32.xlu0 %v4006
    %v4008 = vpop.xlane.xlu0 %4007
    %v4009 = vsel %vm2195, %v3989, 0.0
    %4010 = vadd.xlane.f32.xlu0 %v4009
    %v4011 = vpop.xlane.xlu0 %4010
    %v4012 = vsel %vm2195, %v3991, 0.0
    %4013 = vadd.xlane.f32.xlu0 %v4012
    %v4014 = vpop.xlane.xlu0 %4013
    %v4015 = vsel %vm2195, %v3993, 0.0
    %4016 = vadd.xlane.f32.xlu0 %v4015
    %v4017 = vpop.xlane.xlu0 %4016
    %v4018 = vrcp.pop %v3996
    %v4019 = vrcp.pop %v3999
    %v4020 = vrcp.pop %v4002
    %v4021 = vrcp.pop %v4005
    %v4022 = vrcp.pop %v4008
    %v4023 = vrcp.pop %v4011
    %v4024 = vrcp.pop %v4014
    %v4025 = vrcp.pop %v4017
    %v4026 = vmul.f32 %v3979, %v4018
    %v4027 = vmul.f32 %v3981, %v4019
    %v4028 = vmul.f32 %v3983, %v4020
    %v4029 = vmul.f32 %v3985, %v4021
    %v4030 = vmul.f32 %v3987, %v4022
    %v4031 = vmul.f32 %v3989, %v4023
    %v4032 = vmul.f32 %v3991, %v4024
    %v4033 = vmul.f32 %v3993, %v4025
    %4034 = vrot.lane.b32.xlu0 %v3747, 112
    %v4035 = vpop.permute.xlu0 %4034
    %4036 = vrot.lane.b32.xlu0 %v3752, 112
    %v4037 = vpop.permute.xlu0 %4036
    %4038 = vrot.lane.b32.xlu0 %v3757, 112
    %v4039 = vpop.permute.xlu0 %4038
    %4040 = vrot.lane.b32.xlu0 %v3762, 112
    %v4041 = vpop.permute.xlu0 %4040
    %4042 = vrot.lane.b32.xlu0 %v3767, 112
    %v4043 = vpop.permute.xlu0 %4042
    %4044 = vrot.lane.b32.xlu0 %v3772, 112
    %v4045 = vpop.permute.xlu0 %4044
    %4046 = vrot.lane.b32.xlu0 %v3777, 112
    %v4047 = vpop.permute.xlu0 %4046
    %4048 = vrot.lane.b32.xlu0 %v3782, 112
    %v4049 = vpop.permute.xlu0 %4048
    %4050 = vrot.lane.b32.xlu0 %v3747, 80
    %v4051 = vpop.permute.xlu0 %4050
    %4052 = vrot.lane.b32.xlu0 %v3752, 80
    %v4053 = vpop.permute.xlu0 %4052
    %4054 = vrot.lane.b32.xlu0 %v3757, 80
    %v4055 = vpop.permute.xlu0 %4054
    %4056 = vrot.lane.b32.xlu0 %v3762, 80
    %v4057 = vpop.permute.xlu0 %4056
    %4058 = vrot.lane.b32.xlu0 %v3767, 80
    %v4059 = vpop.permute.xlu0 %4058
    %4060 = vrot.lane.b32.xlu0 %v3772, 80
    %v4061 = vpop.permute.xlu0 %4060
    %4062 = vrot.lane.b32.xlu0 %v3777, 80
    %v4063 = vpop.permute.xlu0 %4062
    %4064 = vrot.lane.b32.xlu0 %v3782, 80
    %v4065 = vpop.permute.xlu0 %4064
    %v4066 = vsel %vm673, %v4035, 0
    %v4068 = vsel %vm673, %v4037, 0
    %v4070 = vsel %vm673, %v4039, 0
    %v4072 = vsel %vm673, %v4041, 0
    %v4074 = vsel %vm673, %v4043, 0
    %v4076 = vsel %vm673, %v4045, 0
    %v4078 = vsel %vm673, %v4047, 0
    %v4080 = vsel %vm673, %v4049, 0
    %v4082 = vsel %vm673, %v4051, 0
    %v4084 = vsel %vm673, %v4053, 0
    %v4086 = vsel %vm673, %v4055, 0
    %v4088 = vsel %vm673, %v4057, 0
    %v4090 = vsel %vm673, %v4059, 0
    %v4092 = vsel %vm673, %v4061, 0
    %v4094 = vsel %vm673, %v4063, 0
    %v4096 = vsel %vm673, %v4065, 0
    %4098 = vmatprep.subr.mxu0 0.0
    %4099 = vmatpush1.xpose.msra.mxu0 0.0
    %4100 = vmatprep.subr.mxu0 0.0
    %4101 = vmatpush1.xpose.msra.mxu0 0.0
    %4102 = vmatprep.subr.mxu0 0.0
    %4103 = vmatpush1.xpose.msra.mxu0 0.0
    %4104 = vmatprep.subr.mxu0 0.0
    %4105 = vmatpush1.xpose.msra.mxu0 0.0
    %4106 = vmatprep.subr.mxu0 0.0
    %4107 = vmatpush1.xpose.msra.mxu0 0.0
    %4108 = vmatprep.subr.mxu0 0.0
    %4109 = vmatpush1.xpose.msra.mxu0 0.0
    %4110 = vmatprep.subr.mxu0 0.0
    %4111 = vmatpush1.xpose.msra.mxu0 0.0
    %4112 = vmatprep.subr.mxu0 0.0
    %4113 = vmatpush1.xpose.msra.mxu0 0.0
    %4114 = vmatprep.subr.mxu0 0.0
    %4115 = vmatpush1.xpose.msra.mxu0 %v4096
    %4116 = vmatprep.subr.mxu0 0.0
    %4117 = vmatpush1.xpose.msra.mxu0 %v4094
    %4118 = vmatprep.subr.mxu0 0.0
    %4119 = vmatpush1.xpose.msra.mxu0 %v4092
    %4120 = vmatprep.subr.mxu0 0.0
    %4121 = vmatpush1.xpose.msra.mxu0 %v4090
    %4122 = vmatprep.subr.mxu0 0.0
    %4123 = vmatpush1.xpose.msra.mxu0 %v4088
    %4124 = vmatprep.subr.mxu0 0.0
    %4125 = vmatpush1.xpose.msra.mxu0 %v4086
    %4126 = vmatprep.subr.mxu0 0.0
    %4127 = vmatpush1.xpose.msra.mxu0 %v4084
    %4128 = vmatprep.subr.mxu0 0.0
    %4129 = vmatpush1.xpose.msra.mxu0 %v4082
    %4130 = vmatprep.subr.mxu0 0.0
    %4131 = vmatpush2.xpose.msra.mxu0 0.0
    %4132 = vmatprep.subr.mxu0 0.0
    %4133 = vmatpush2.xpose.msra.mxu0 0.0
    %4134 = vmatprep.subr.mxu0 0.0
    %4135 = vmatpush2.xpose.msra.mxu0 0.0
    %4136 = vmatprep.subr.mxu0 0.0
    %4137 = vmatpush2.xpose.msra.mxu0 0.0
    %4138 = vmatprep.subr.mxu0 0.0
    %4139 = vmatpush2.xpose.msra.mxu0 0.0
    %4140 = vmatprep.subr.mxu0 0.0
    %4141 = vmatpush2.xpose.msra.mxu0 0.0
    %4142 = vmatprep.subr.mxu0 0.0
    %4143 = vmatpush2.xpose.msra.mxu0 0.0
    %4144 = vmatprep.subr.mxu0 0.0
    %4145 = vmatpush2.xpose.msra.mxu0 0.0
    %4146 = vmatprep.subr.mxu0 0.0
    %4147 = vmatpush2.xpose.msra.mxu0 0.0
    %4148 = vmatprep.subr.mxu0 0.0
    %4149 = vmatpush2.xpose.msra.mxu0 0.0
    %4150 = vmatprep.subr.mxu0 0.0
    %4151 = vmatpush2.xpose.msra.mxu0 0.0
    %4152 = vmatprep.subr.mxu0 0.0
    %4153 = vmatpush2.xpose.msra.mxu0 0.0
    %4154 = vmatprep.subr.mxu0 0.0
    %4155 = vmatpush2.xpose.msra.mxu0 0.0
    %4156 = vmatprep.subr.mxu0 0.0
    %4157 = vmatpush2.xpose.msra.mxu0 0.0
    %4158 = vmatprep.subr.mxu0 0.0
    %4159 = vmatpush2.xpose.msra.mxu0 0.0
    %4160 = vmatprep.subr.mxu0 0.0
    %4161 = vmatpush2.xpose.msra.mxu0 0.0
    %4162 = vmatprep.mubr.f32.mxu0 0.0
    %4163 = vmatmul.mubr.f32.gmra.mxu0 %v4066
    %v4164 = vpop.f32.mrf.mxu0
    %v4165 = vadd.f32 %v1893, %v4164
    %v4166 = vpop.f32.mrf.mxu0
    %4167 = vmatprep.mubr.f32.mxu0 0.0
    %4168 = vmatmul.mubr.f32.gmra.mxu0 %v4068
    %v4169 = vpop.f32.mrf.mxu0
    %v4170 = vadd.f32 %v1894, %v4169
    %v4171 = vpop.f32.mrf.mxu0
    %4172 = vmatprep.mubr.f32.mxu0 0.0
    %4173 = vmatmul.mubr.f32.gmra.mxu0 %v4070
    %v4174 = vpop.f32.mrf.mxu0
    %v4175 = vadd.f32 %v1895, %v4174
    %v4176 = vpop.f32.mrf.mxu0
    %4177 = vmatprep.mubr.f32.mxu0 0.0
    %4178 = vmatmul.mubr.f32.gmra.mxu0 %v4072
    %v4179 = vpop.f32.mrf.mxu0
    %v4180 = vadd.f32 %v1896, %v4179
    %v4181 = vpop.f32.mrf.mxu0
    %4182 = vmatprep.mubr.f32.mxu0 0.0
    %4183 = vmatmul.mubr.f32.gmra.mxu0 %v4074
    %v4184 = vpop.f32.mrf.mxu0
    %v4185 = vadd.f32 %v1897, %v4184
    %v4186 = vpop.f32.mrf.mxu0
    %4187 = vmatprep.mubr.f32.mxu0 0.0
    %4188 = vmatmul.mubr.f32.gmra.mxu0 %v4076
    %v4189 = vpop.f32.mrf.mxu0
    %v4190 = vadd.f32 %v1898, %v4189
    %v4191 = vpop.f32.mrf.mxu0
    %4192 = vmatprep.mubr.f32.mxu0 0.0
    %4193 = vmatmul.mubr.f32.gmra.mxu0 %v4078
    %v4194 = vpop.f32.mrf.mxu0
    %v4195 = vadd.f32 %v1899, %v4194
    %v4196 = vpop.f32.mrf.mxu0
    %4197 = vmatprep.mubr.f32.mxu0 0.0
    %4198 = vmatmul.mubr.f32.gmra.mxu0 %v4080
    %v4199 = vpop.f32.mrf.mxu0
    %v4200 = vadd.f32 %v1900, %v4199
    %v4201 = vpop.f32.mrf.mxu0
    %4202 = vdwg.mxu0
    %v4203 = vsel %vm2195, %v4165, -inf
    %4204 = vmax.xlane.f32.xlu0 %v4203
    %v4205 = vpop.xlane.xlu0 %4204
    %v4206 = vsel %vm2195, %v4170, -inf
    %4207 = vmax.xlane.f32.xlu0 %v4206
    %v4208 = vpop.xlane.xlu0 %4207
    %v4209 = vsel %vm2195, %v4175, -inf
    %4210 = vmax.xlane.f32.xlu0 %v4209
    %v4211 = vpop.xlane.xlu0 %4210
    %v4212 = vsel %vm2195, %v4180, -inf
    %4213 = vmax.xlane.f32.xlu0 %v4212
    %v4214 = vpop.xlane.xlu0 %4213
    %v4215 = vsel %vm2195, %v4185, -inf
    %4216 = vmax.xlane.f32.xlu0 %v4215
    %v4217 = vpop.xlane.xlu0 %4216
    %v4218 = vsel %vm2195, %v4190, -inf
    %4219 = vmax.xlane.f32.xlu0 %v4218
    %v4220 = vpop.xlane.xlu0 %4219
    %v4221 = vsel %vm2195, %v4195, -inf
    %4222 = vmax.xlane.f32.xlu0 %v4221
    %v4223 = vpop.xlane.xlu0 %4222
    %v4224 = vsel %vm2195, %v4200, -inf
    %4225 = vmax.xlane.f32.xlu0 %v4224
    %v4226 = vpop.xlane.xlu0 %4225
    %v4227 = vsub.f32 %v4165, %v4205
    %v4228 = vsub.f32 %v4170, %v4208
    %v4229 = vsub.f32 %v4175, %v4211
    %v4230 = vsub.f32 %v4180, %v4214
    %v4231 = vsub.f32 %v4185, %v4217
    %v4232 = vsub.f32 %v4190, %v4220
    %v4233 = vsub.f32 %v4195, %v4223
    %v4234 = vsub.f32 %v4200, %v4226
    %v4235 = vmul.f32 %v4227, 1.442695
    %v4236 = vpow.pop %v4235
    %v4237 = vmul.f32 %v4228, 1.442695
    %v4238 = vpow.pop %v4237
    %v4239 = vmul.f32 %v4229, 1.442695
    %v4240 = vpow.pop %v4239
    %v4241 = vmul.f32 %v4230, 1.442695
    %v4242 = vpow.pop %v4241
    %v4243 = vmul.f32 %v4231, 1.442695
    %v4244 = vpow.pop %v4243
    %v4245 = vmul.f32 %v4232, 1.442695
    %v4246 = vpow.pop %v4245
    %v4247 = vmul.f32 %v4233, 1.442695
    %v4248 = vpow.pop %v4247
    %v4249 = vmul.f32 %v4234, 1.442695
    %v4250 = vpow.pop %v4249
    %v4251 = vsel %vm2195, %v4236, 0.0
    %4252 = vadd.xlane.f32.xlu0 %v4251
    %v4253 = vpop.xlane.xlu0 %4252
    %v4254 = vsel %vm2195, %v4238, 0.0
    %4255 = vadd.xlane.f32.xlu0 %v4254
    %v4256 = vpop.xlane.xlu0 %4255
    %v4257 = vsel %vm2195, %v4240, 0.0
    %4258 = vadd.xlane.f32.xlu0 %v4257
    %v4259 = vpop.xlane.xlu0 %4258
    %v4260 = vsel %vm2195, %v4242, 0.0
    %4261 = vadd.xlane.f32.xlu0 %v4260
    %v4262 = vpop.xlane.xlu0 %4261
    %v4263 = vsel %vm2195, %v4244, 0.0
    %4264 = vadd.xlane.f32.xlu0 %v4263
    %v4265 = vpop.xlane.xlu0 %4264
    %v4266 = vsel %vm2195, %v4246, 0.0
    %4267 = vadd.xlane.f32.xlu0 %v4266
    %v4268 = vpop.xlane.xlu0 %4267
    %v4269 = vsel %vm2195, %v4248, 0.0
    %4270 = vadd.xlane.f32.xlu0 %v4269
    %v4271 = vpop.xlane.xlu0 %4270
    %v4272 = vsel %vm2195, %v4250, 0.0
    %4273 = vadd.xlane.f32.xlu0 %v4272
    %v4274 = vpop.xlane.xlu0 %4273
    %v4275 = vrcp.pop %v4253
    %v4276 = vrcp.pop %v4256
    %v4277 = vrcp.pop %v4259
    %v4278 = vrcp.pop %v4262
    %v4279 = vrcp.pop %v4265
    %v4280 = vrcp.pop %v4268
    %v4281 = vrcp.pop %v4271
    %v4282 = vrcp.pop %v4274
    %v4283 = vmul.f32 %v4236, %v4275
    %v4284 = vmul.f32 %v4238, %v4276
    %v4285 = vmul.f32 %v4240, %v4277
    %v4286 = vmul.f32 %v4242, %v4278
    %v4287 = vmul.f32 %v4244, %v4279
    %v4288 = vmul.f32 %v4246, %v4280
    %v4289 = vmul.f32 %v4248, %v4281
    %v4290 = vmul.f32 %v4250, %v4282
    %4291 = vrot.lane.b32.xlu0 %v3747, 32
    %v4292 = vpop.permute.xlu0 %4291
    %4293 = vrot.lane.b32.xlu0 %v3752, 32
    %v4294 = vpop.permute.xlu0 %4293
    %4295 = vrot.lane.b32.xlu0 %v3757, 32
    %v4296 = vpop.permute.xlu0 %4295
    %4297 = vrot.lane.b32.xlu0 %v3762, 32
    %v4298 = vpop.permute.xlu0 %4297
    %4299 = vrot.lane.b32.xlu0 %v3767, 32
    %v4300 = vpop.permute.xlu0 %4299
    %4301 = vrot.lane.b32.xlu0 %v3772, 32
    %v4302 = vpop.permute.xlu0 %4301
    %4303 = vrot.lane.b32.xlu0 %v3777, 32
    %v4304 = vpop.permute.xlu0 %4303
    %4305 = vrot.lane.b32.xlu0 %v3782, 32
    %v4306 = vpop.permute.xlu0 %4305
    %v4316 = vsel %vm2195, %v4283, 0
    %v4319 = vsel %vm2195, %v4284, 0
    %v4322 = vsel %vm2195, %v4285, 0
    %v4325 = vsel %vm2195, %v4286, 0
    %v4328 = vsel %vm2195, %v4287, 0
    %v4331 = vsel %vm2195, %v4288, 0
    %v4334 = vsel %vm2195, %v4289, 0
    %v4337 = vsel %vm2195, %v4290, 0
    %4339 = vmatprep.subr.mxu0 0.0
    %4340 = vmatpush1.msra.mxu0 0.0
    %4341 = vmatprep.subr.mxu0 0.0
    %4342 = vmatpush1.msra.mxu0 0.0
    %4343 = vmatprep.subr.mxu0 0.0
    %4344 = vmatpush1.msra.mxu0 0.0
    %4345 = vmatprep.subr.mxu0 0.0
    %4346 = vmatpush1.msra.mxu0 0.0
    %4347 = vmatprep.subr.mxu0 0.0
    %4348 = vmatpush1.msra.mxu0 0.0
    %4349 = vmatprep.subr.mxu0 0.0
    %4350 = vmatpush1.msra.mxu0 0.0
    %4351 = vmatprep.subr.mxu0 0.0
    %4352 = vmatpush1.msra.mxu0 0.0
    %4353 = vmatprep.subr.mxu0 0.0
    %4354 = vmatpush1.msra.mxu0 0.0
    %4355 = vmatprep.subr.mxu0 0.0
    %4356 = vmatpush1.msra.mxu0 %v4306
    %4357 = vmatprep.subr.mxu0 0.0
    %4358 = vmatpush1.msra.mxu0 %v4304
    %4359 = vmatprep.subr.mxu0 0.0
    %4360 = vmatpush1.msra.mxu0 %v4302
    %4361 = vmatprep.subr.mxu0 0.0
    %4362 = vmatpush1.msra.mxu0 %v4300
    %4363 = vmatprep.subr.mxu0 0.0
    %4364 = vmatpush1.msra.mxu0 %v4298
    %4365 = vmatprep.subr.mxu0 0.0
    %4366 = vmatpush1.msra.mxu0 %v4296
    %4367 = vmatprep.subr.mxu0 0.0
    %4368 = vmatpush1.msra.mxu0 %v4294
    %4369 = vmatprep.subr.mxu0 0.0
    %4370 = vmatpush1.msra.mxu0 %v4292
    %4371 = vmatprep.subr.mxu0 0.0
    %4372 = vmatpush2.msra.mxu0 0.0
    %4373 = vmatprep.subr.mxu0 0.0
    %4374 = vmatpush2.msra.mxu0 0.0
    %4375 = vmatprep.subr.mxu0 0.0
    %4376 = vmatpush2.msra.mxu0 0.0
    %4377 = vmatprep.subr.mxu0 0.0
    %4378 = vmatpush2.msra.mxu0 0.0
    %4379 = vmatprep.subr.mxu0 0.0
    %4380 = vmatpush2.msra.mxu0 0.0
    %4381 = vmatprep.subr.mxu0 0.0
    %4382 = vmatpush2.msra.mxu0 0.0
    %4383 = vmatprep.subr.mxu0 0.0
    %4384 = vmatpush2.msra.mxu0 0.0
    %4385 = vmatprep.subr.mxu0 0.0
    %4386 = vmatpush2.msra.mxu0 0.0
    %4387 = vmatprep.subr.mxu0 0.0
    %4388 = vmatpush2.msra.mxu0 0.0
    %4389 = vmatprep.subr.mxu0 0.0
    %4390 = vmatpush2.msra.mxu0 0.0
    %4391 = vmatprep.subr.mxu0 0.0
    %4392 = vmatpush2.msra.mxu0 0.0
    %4393 = vmatprep.subr.mxu0 0.0
    %4394 = vmatpush2.msra.mxu0 0.0
    %4395 = vmatprep.subr.mxu0 0.0
    %4396 = vmatpush2.msra.mxu0 0.0
    %4397 = vmatprep.subr.mxu0 0.0
    %4398 = vmatpush2.msra.mxu0 0.0
    %4399 = vmatprep.subr.mxu0 0.0
    %4400 = vmatpush2.msra.mxu0 0.0
    %4401 = vmatprep.subr.mxu0 0.0
    %4402 = vmatpush2.msra.mxu0 0.0
    %4403 = vmatprep.mubr.f32.mxu0 0.0
    %4404 = vmatmul.mubr.f32.gmra.mxu0 %v4316
    %v4405 = vpop.f32.mrf.mxu0
    %v4406 = vadd.f32 0.0, %v4405
    %v4407 = vpop.f32.mrf.mxu0
    %4408 = vmatprep.mubr.f32.mxu0 0.0
    %4409 = vmatmul.mubr.f32.gmra.mxu0 %v4319
    %v4410 = vpop.f32.mrf.mxu0
    %v4411 = vadd.f32 0.0, %v4410
    %v4412 = vpop.f32.mrf.mxu0
    %4413 = vmatprep.mubr.f32.mxu0 0.0
    %4414 = vmatmul.mubr.f32.gmra.mxu0 %v4322
    %v4415 = vpop.f32.mrf.mxu0
    %v4416 = vadd.f32 0.0, %v4415
    %v4417 = vpop.f32.mrf.mxu0
    %4418 = vmatprep.mubr.f32.mxu0 0.0
    %4419 = vmatmul.mubr.f32.gmra.mxu0 %v4325
    %v4420 = vpop.f32.mrf.mxu0
    %v4421 = vadd.f32 0.0, %v4420
    %v4422 = vpop.f32.mrf.mxu0
    %4423 = vmatprep.mubr.f32.mxu0 0.0
    %4424 = vmatmul.mubr.f32.gmra.mxu0 %v4328
    %v4425 = vpop.f32.mrf.mxu0
    %v4426 = vadd.f32 0.0, %v4425
    %v4427 = vpop.f32.mrf.mxu0
    %4428 = vmatprep.mubr.f32.mxu0 0.0
    %4429 = vmatmul.mubr.f32.gmra.mxu0 %v4331
    %v4430 = vpop.f32.mrf.mxu0
    %v4431 = vadd.f32 0.0, %v4430
    %v4432 = vpop.f32.mrf.mxu0
    %4433 = vmatprep.mubr.f32.mxu0 0.0
    %4434 = vmatmul.mubr.f32.gmra.mxu0 %v4334
    %v4435 = vpop.f32.mrf.mxu0
    %v4436 = vadd.f32 0.0, %v4435
    %v4437 = vpop.f32.mrf.mxu0
    %4438 = vmatprep.mubr.f32.mxu0 0.0
    %4439 = vmatmul.mubr.f32.gmra.mxu0 %v4337
    %v4440 = vpop.f32.mrf.mxu0
    %v4441 = vadd.f32 0.0, %v4440
    %v4442 = vpop.f32.mrf.mxu0
    %4443 = vdwg.mxu0
    %4444 = vrot.lane.b32.xlu0 %v3747, 64
    %v4445 = vpop.permute.xlu0 %4444
    %4446 = vrot.lane.b32.xlu0 %v3752, 64
    %v4447 = vpop.permute.xlu0 %4446
    %4448 = vrot.lane.b32.xlu0 %v3757, 64
    %v4449 = vpop.permute.xlu0 %4448
    %4450 = vrot.lane.b32.xlu0 %v3762, 64
    %v4451 = vpop.permute.xlu0 %4450
    %4452 = vrot.lane.b32.xlu0 %v3767, 64
    %v4453 = vpop.permute.xlu0 %4452
    %4454 = vrot.lane.b32.xlu0 %v3772, 64
    %v4455 = vpop.permute.xlu0 %4454
    %4456 = vrot.lane.b32.xlu0 %v3777, 64
    %v4457 = vpop.permute.xlu0 %4456
    %4458 = vrot.lane.b32.xlu0 %v3782, 64
    %v4459 = vpop.permute.xlu0 %4458
    %v4469 = vsel %vm2195, %v4026, 0
    %v4472 = vsel %vm2195, %v4027, 0
    %v4475 = vsel %vm2195, %v4028, 0
    %v4478 = vsel %vm2195, %v4029, 0
    %v4481 = vsel %vm2195, %v4030, 0
    %v4484 = vsel %vm2195, %v4031, 0
    %v4487 = vsel %vm2195, %v4032, 0
    %v4490 = vsel %vm2195, %v4033, 0
    %4492 = vmatprep.subr.mxu0 0.0
    %4493 = vmatpush1.msra.mxu0 0.0
    %4494 = vmatprep.subr.mxu0 0.0
    %4495 = vmatpush1.msra.mxu0 0.0
    %4496 = vmatprep.subr.mxu0 0.0
    %4497 = vmatpush1.msra.mxu0 0.0
    %4498 = vmatprep.subr.mxu0 0.0
    %4499 = vmatpush1.msra.mxu0 0.0
    %4500 = vmatprep.subr.mxu0 0.0
    %4501 = vmatpush1.msra.mxu0 0.0
    %4502 = vmatprep.subr.mxu0 0.0
    %4503 = vmatpush1.msra.mxu0 0.0
    %4504 = vmatprep.subr.mxu0 0.0
    %4505 = vmatpush1.msra.mxu0 0.0
    %4506 = vmatprep.subr.mxu0 0.0
    %4507 = vmatpush1.msra.mxu0 0.0
    %4508 = vmatprep.subr.mxu0 0.0
    %4509 = vmatpush1.msra.mxu0 %v4459
    %4510 = vmatprep.subr.mxu0 0.0
    %4511 = vmatpush1.msra.mxu0 %v4457
    %4512 = vmatprep.subr.mxu0 0.0
    %4513 = vmatpush1.msra.mxu0 %v4455
    %4514 = vmatprep.subr.mxu0 0.0
    %4515 = vmatpush1.msra.mxu0 %v4453
    %4516 = vmatprep.subr.mxu0 0.0
    %4517 = vmatpush1.msra.mxu0 %v4451
    %4518 = vmatprep.subr.mxu0 0.0
    %4519 = vmatpush1.msra.mxu0 %v4449
    %4520 = vmatprep.subr.mxu0 0.0
    %4521 = vmatpush1.msra.mxu0 %v4447
    %4522 = vmatprep.subr.mxu0 0.0
    %4523 = vmatpush1.msra.mxu0 %v4445
    %4524 = vmatprep.subr.mxu0 0.0
    %4525 = vmatpush2.msra.mxu0 0.0
    %4526 = vmatprep.subr.mxu0 0.0
    %4527 = vmatpush2.msra.mxu0 0.0
    %4528 = vmatprep.subr.mxu0 0.0
    %4529 = vmatpush2.msra.mxu0 0.0
    %4530 = vmatprep.subr.mxu0 0.0
    %4531 = vmatpush2.msra.mxu0 0.0
    %4532 = vmatprep.subr.mxu0 0.0
    %4533 = vmatpush2.msra.mxu0 0.0
    %4534 = vmatprep.subr.mxu0 0.0
    %4535 = vmatpush2.msra.mxu0 0.0
    %4536 = vmatprep.subr.mxu0 0.0
    %4537 = vmatpush2.msra.mxu0 0.0
    %4538 = vmatprep.subr.mxu0 0.0
    %4539 = vmatpush2.msra.mxu0 0.0
    %4540 = vmatprep.subr.mxu0 0.0
    %4541 = vmatpush2.msra.mxu0 0.0
    %4542 = vmatprep.subr.mxu0 0.0
    %4543 = vmatpush2.msra.mxu0 0.0
    %4544 = vmatprep.subr.mxu0 0.0
    %4545 = vmatpush2.msra.mxu0 0.0
    %4546 = vmatprep.subr.mxu0 0.0
    %4547 = vmatpush2.msra.mxu0 0.0
    %4548 = vmatprep.subr.mxu0 0.0
    %4549 = vmatpush2.msra.mxu0 0.0
    %4550 = vmatprep.subr.mxu0 0.0
    %4551 = vmatpush2.msra.mxu0 0.0
    %4552 = vmatprep.subr.mxu0 0.0
    %4553 = vmatpush2.msra.mxu0 0.0
    %4554 = vmatprep.subr.mxu0 0.0
    %4555 = vmatpush2.msra.mxu0 0.0
    %4556 = vmatprep.mubr.f32.mxu0 0.0
    %4557 = vmatmul.mubr.f32.gmra.mxu0 %v4469
    %v4558 = vpop.f32.mrf.mxu0
    %v4559 = vadd.f32 %v4406, %v4558
    %v4560 = vpop.f32.mrf.mxu0
    %4561 = vmatprep.mubr.f32.mxu0 0.0
    %4562 = vmatmul.mubr.f32.gmra.mxu0 %v4472
    %v4563 = vpop.f32.mrf.mxu0
    %v4564 = vadd.f32 %v4411, %v4563
    %v4565 = vpop.f32.mrf.mxu0
    %4566 = vmatprep.mubr.f32.mxu0 0.0
    %4567 = vmatmul.mubr.f32.gmra.mxu0 %v4475
    %v4568 = vpop.f32.mrf.mxu0
    %v4569 = vadd.f32 %v4416, %v4568
    %v4570 = vpop.f32.mrf.mxu0
    %4571 = vmatprep.mubr.f32.mxu0 0.0
    %4572 = vmatmul.mubr.f32.gmra.mxu0 %v4478
    %v4573 = vpop.f32.mrf.mxu0
    %v4574 = vadd.f32 %v4421, %v4573
    %v4575 = vpop.f32.mrf.mxu0
    %4576 = vmatprep.mubr.f32.mxu0 0.0
    %4577 = vmatmul.mubr.f32.gmra.mxu0 %v4481
    %v4578 = vpop.f32.mrf.mxu0
    %v4579 = vadd.f32 %v4426, %v4578
    %v4580 = vpop.f32.mrf.mxu0
    %4581 = vmatprep.mubr.f32.mxu0 0.0
    %4582 = vmatmul.mubr.f32.gmra.mxu0 %v4484
    %v4583 = vpop.f32.mrf.mxu0
    %v4584 = vadd.f32 %v4431, %v4583
    %v4585 = vpop.f32.mrf.mxu0
    %4586 = vmatprep.mubr.f32.mxu0 0.0
    %4587 = vmatmul.mubr.f32.gmra.mxu0 %v4487
    %v4588 = vpop.f32.mrf.mxu0
    %v4589 = vadd.f32 %v4436, %v4588
    %v4590 = vpop.f32.mrf.mxu0
    %4591 = vmatprep.mubr.f32.mxu0 0.0
    %4592 = vmatmul.mubr.f32.gmra.mxu0 %v4490
    %v4593 = vpop.f32.mrf.mxu0
    %v4594 = vadd.f32 %v4441, %v4593
    %v4595 = vpop.f32.mrf.mxu0
    %4596 = vdwg.mxu0
    %s4597 = scalar_lea.vmem [#allocation25], 6
    %v4598 = vld [vmem:[%s4597] sm:$0x1]
    %v4600 = vlaneseq
    %v4601 = vshrl.u32 %v4600, 7
    %v4602 = vsub.s32 0, %v4601
    %v4603 = vrot.slane %v4598, %v4602
    %v4605 = vadd.f32 %v4559, %v4603
    %v4606 = vadd.f32 %v4564, %v4603
    %v4607 = vadd.f32 %v4569, %v4603
    %v4608 = vadd.f32 %v4574, %v4603
    %v4609 = vadd.f32 %v4579, %v4603
    %v4610 = vadd.f32 %v4584, %v4603
    %v4611 = vadd.f32 %v4589, %v4603
    %v4612 = vadd.f32 %v4594, %v4603
    %v4613 = vadd.f32 %v4605, %v3643
    %v4614 = vadd.f32 %v4606, %v3644
    %v4615 = vadd.f32 %v4607, %v3645
    %v4616 = vadd.f32 %v4608, %v3646
    %v4617 = vadd.f32 %v4609, %v3647
    %v4618 = vadd.f32 %v4610, %v3648
    %v4619 = vadd.f32 %v4611, %v3649
    %v4620 = vadd.f32 %v4612, %v3650
    %s4621 = scalar_lea.vmem [#allocation25], 7
    %v4622 = vld [vmem:[%s4621] sm:$0x1]
    %s4623 = scalar_lea.vmem [#allocation25], 8
    %v4624 = vld [vmem:[%s4623] sm:$0x1]
    %v4625 = vsel %vm397, %v4613, 0.0
    %4626 = vadd.xlane.f32.xlu0 %v4625
    %v4627 = vpop.xlane.xlu0 %4626
    %v4628 = vsel %vm397, %v4614, 0.0
    %4629 = vadd.xlane.f32.xlu0 %v4628
    %v4630 = vpop.xlane.xlu0 %4629
    %v4631 = vsel %vm397, %v4615, 0.0
    %4632 = vadd.xlane.f32.xlu0 %v4631
    %v4633 = vpop.xlane.xlu0 %4632
    %v4634 = vsel %vm397, %v4616, 0.0
    %4635 = vadd.xlane.f32.xlu0 %v4634
    %v4636 = vpop.xlane.xlu0 %4635
    %v4637 = vsel %vm397, %v4617, 0.0
    %4638 = vadd.xlane.f32.xlu0 %v4637
    %v4639 = vpop.xlane.xlu0 %4638
    %v4640 = vsel %vm397, %v4618, 0.0
    %4641 = vadd.xlane.f32.xlu0 %v4640
    %v4642 = vpop.xlane.xlu0 %4641
    %v4643 = vsel %vm397, %v4619, 0.0
    %4644 = vadd.xlane.f32.xlu0 %v4643
    %v4645 = vpop.xlane.xlu0 %4644
    %v4646 = vsel %vm397, %v4620, 0.0
    %4647 = vadd.xlane.f32.xlu0 %v4646
    %v4648 = vpop.xlane.xlu0 %4647
    %v4649 = vmul.f32 %v4627, %v1784
    %v4650 = vmul.f32 %v4630, %v1784
    %v4651 = vmul.f32 %v4633, %v1784
    %v4652 = vmul.f32 %v4636, %v1784
    %v4653 = vmul.f32 %v4639, %v1784
    %v4654 = vmul.f32 %v4642, %v1784
    %v4655 = vmul.f32 %v4645, %v1784
    %v4656 = vmul.f32 %v4648, %v1784
    %v4657 = vsub.f32 %v4613, %v4649
    %v4658 = vsub.f32 %v4614, %v4650
    %v4659 = vsub.f32 %v4615, %v4651
    %v4660 = vsub.f32 %v4616, %v4652
    %v4661 = vsub.f32 %v4617, %v4653
    %v4662 = vsub.f32 %v4618, %v4654
    %v4663 = vsub.f32 %v4619, %v4655
    %v4664 = vsub.f32 %v4620, %v4656
    %v4665 = vmul.f32 %v4657, %v4657
    %v4666 = vmul.f32 %v4658, %v4658
    %v4667 = vmul.f32 %v4659, %v4659
    %v4668 = vmul.f32 %v4660, %v4660
    %v4669 = vmul.f32 %v4661, %v4661
    %v4670 = vmul.f32 %v4662, %v4662
    %v4671 = vmul.f32 %v4663, %v4663
    %v4672 = vmul.f32 %v4664, %v4664
    %v4673 = vsel %vm397, %v4665, 0.0
    %4674 = vadd.xlane.f32.xlu0 %v4673
    %v4675 = vpop.xlane.xlu0 %4674
    %v4676 = vsel %vm397, %v4666, 0.0
    %4677 = vadd.xlane.f32.xlu0 %v4676
    %v4678 = vpop.xlane.xlu0 %4677
    %v4679 = vsel %vm397, %v4667, 0.0
    %4680 = vadd.xlane.f32.xlu0 %v4679
    %v4681 = vpop.xlane.xlu0 %4680
    %v4682 = vsel %vm397, %v4668, 0.0
    %4683 = vadd.xlane.f32.xlu0 %v4682
    %v4684 = vpop.xlane.xlu0 %4683
    %v4685 = vsel %vm397, %v4669, 0.0
    %4686 = vadd.xlane.f32.xlu0 %v4685
    %v4687 = vpop.xlane.xlu0 %4686
    %v4688 = vsel %vm397, %v4670, 0.0
    %4689 = vadd.xlane.f32.xlu0 %v4688
    %v4690 = vpop.xlane.xlu0 %4689
    %v4691 = vsel %vm397, %v4671, 0.0
    %4692 = vadd.xlane.f32.xlu0 %v4691
    %v4693 = vpop.xlane.xlu0 %4692
    %v4694 = vsel %vm397, %v4672, 0.0
    %4695 = vadd.xlane.f32.xlu0 %v4694
    %v4696 = vpop.xlane.xlu0 %4695
    %v4697 = vmul.f32 %v4675, %v1784
    %v4698 = vmul.f32 %v4678, %v1784
    %v4699 = vmul.f32 %v4681, %v1784
    %v4700 = vmul.f32 %v4684, %v1784
    %v4701 = vmul.f32 %v4687, %v1784
    %v4702 = vmul.f32 %v4690, %v1784
    %v4703 = vmul.f32 %v4693, %v1784
    %v4704 = vmul.f32 %v4696, %v1784
    %v4705 = vadd.f32 %v4697, 1e-06
    %v4706 = vadd.f32 %v4698, 1e-06
    %v4707 = vadd.f32 %v4699, 1e-06
    %v4708 = vadd.f32 %v4700, 1e-06
    %v4709 = vadd.f32 %v4701, 1e-06
    %v4710 = vadd.f32 %v4702, 1e-06
    %v4711 = vadd.f32 %v4703, 1e-06
    %v4712 = vadd.f32 %v4704, 1e-06
    %v4713 = vrsqrt.pop %v4705
    %v4714 = vrsqrt.pop %v4706
    %v4715 = vrsqrt.pop %v4707
    %v4716 = vrsqrt.pop %v4708
    %v4717 = vrsqrt.pop %v4709
    %v4718 = vrsqrt.pop %v4710
    %v4719 = vrsqrt.pop %v4711
    %v4720 = vrsqrt.pop %v4712
    %v4721 = vmul.f32 %v4657, %v4713
    %v4722 = vmul.f32 %v4658, %v4714
    %v4723 = vmul.f32 %v4659, %v4715
    %v4724 = vmul.f32 %v4660, %v4716
    %v4725 = vmul.f32 %v4661, %v4717
    %v4726 = vmul.f32 %v4662, %v4718
    %v4727 = vmul.f32 %v4663, %v4719
    %v4728 = vmul.f32 %v4664, %v4720
    %v4730 = vlaneseq
    %v4731 = vshrl.u32 %v4730, 7
    %v4732 = vsub.s32 0, %v4731
    %v4733 = vrot.slane %v4622, %v4732
    %v4735 = vmul.f32 %v4721, %v4733
    %v4736 = vmul.f32 %v4722, %v4733
    %v4737 = vmul.f32 %v4723, %v4733
    %v4738 = vmul.f32 %v4724, %v4733
    %v4739 = vmul.f32 %v4725, %v4733
    %v4740 = vmul.f32 %v4726, %v4733
    %v4741 = vmul.f32 %v4727, %v4733
    %v4742 = vmul.f32 %v4728, %v4733
    %v4744 = vlaneseq
    %v4745 = vshrl.u32 %v4744, 7
    %v4746 = vsub.s32 0, %v4745
    %v4747 = vrot.slane %v4624, %v4746
    %v4749 = vadd.f32 %v4735, %v4747
    %v4750 = vadd.f32 %v4736, %v4747
    %v4751 = vadd.f32 %v4737, %v4747
    %v4752 = vadd.f32 %v4738, %v4747
    %v4753 = vadd.f32 %v4739, %v4747
    %v4754 = vadd.f32 %v4740, %v4747
    %v4755 = vadd.f32 %v4741, %v4747
    %v4756 = vadd.f32 %v4742, %v4747
    %s4757 = scalar_lea.vmem [#allocation27], 32
    %v4758 = vld [vmem:[%s4757] sm:$0xff]
    %v4759 = vld [vmem:[%s4757 + $0x8] sm:$0xff]
    %v4760 = vld [vmem:[%s4757 + $0x10] sm:$0xff]
    %v4761 = vld [vmem:[%s4757 + $0x18] sm:$0xff]
    %s4762 = scalar_lea.vmem [#allocation28], 1
    %v4763 = vld [vmem:[%s4762] sm:$0x1]
    %v4765 = vlaneseq
    %v4766 = vshrl.u32 %v4765, 7
    %v4767 = vsub.s32 0, %v4766
    %v4768 = vrot.slane %v4763, %v4767
    %v4771 = vsel %vm397, %v4749, 0
    %v4774 = vsel %vm397, %v4750, 0
    %v4777 = vsel %vm397, %v4751, 0
    %v4780 = vsel %vm397, %v4752, 0
    %v4783 = vsel %vm397, %v4753, 0
    %v4786 = vsel %vm397, %v4754, 0
    %v4789 = vsel %vm397, %v4755, 0
    %v4792 = vsel %vm397, %v4756, 0
    %4794 = vmatprep.subr.mxu0 0.0
    %4795 = vmatpush1.msra.mxu0 0.0
    %4796 = vmatprep.subr.mxu0 0.0
    %4797 = vmatpush1.msra.mxu0 0.0
    %4798 = vmatprep.subr.mxu0 0.0
    %4799 = vmatpush1.msra.mxu0 0.0
    %4800 = vmatprep.subr.mxu0 0.0
    %4801 = vmatpush1.msra.mxu0 0.0
    %4802 = vmatprep.subr.mxu0 0.0
    %4803 = vmatpush1.msra.mxu0 0.0
    %4804 = vmatprep.subr.mxu0 0.0
    %4805 = vmatpush1.msra.mxu0 0.0
    %4806 = vmatprep.subr.mxu0 0.0
    %4807 = vmatpush1.msra.mxu0 0.0
    %4808 = vmatprep.subr.mxu0 0.0
    %4809 = vmatpush1.msra.mxu0 0.0
    %4810 = vmatprep.subr.mxu0 0.0
    %4811 = vmatpush1.msra.mxu0 0.0
    %4812 = vmatprep.subr.mxu0 0.0
    %4813 = vmatpush1.msra.mxu0 0.0
    %4814 = vmatprep.subr.mxu0 0.0
    %4815 = vmatpush1.msra.mxu0 0.0
    %4816 = vmatprep.subr.mxu0 0.0
    %4817 = vmatpush1.msra.mxu0 0.0
    %4818 = vmatprep.subr.mxu0 0.0
    %4819 = vmatpush1.msra.mxu0 %v4761
    %4820 = vmatprep.subr.mxu0 0.0
    %4821 = vmatpush1.msra.mxu0 %v4760
    %4822 = vmatprep.subr.mxu0 0.0
    %4823 = vmatpush1.msra.mxu0 %v4759
    %4824 = vmatprep.subr.mxu0 0.0
    %4825 = vmatpush1.msra.mxu0 %v4758
    %4826 = vmatprep.subr.mxu0 0.0
    %4827 = vmatpush2.msra.mxu0 0.0
    %4828 = vmatprep.subr.mxu0 0.0
    %4829 = vmatpush2.msra.mxu0 0.0
    %4830 = vmatprep.subr.mxu0 0.0
    %4831 = vmatpush2.msra.mxu0 0.0
    %4832 = vmatprep.subr.mxu0 0.0
    %4833 = vmatpush2.msra.mxu0 0.0
    %4834 = vmatprep.subr.mxu0 0.0
    %4835 = vmatpush2.msra.mxu0 0.0
    %4836 = vmatprep.subr.mxu0 0.0
    %4837 = vmatpush2.msra.mxu0 0.0
    %4838 = vmatprep.subr.mxu0 0.0
    %4839 = vmatpush2.msra.mxu0 0.0
    %4840 = vmatprep.subr.mxu0 0.0
    %4841 = vmatpush2.msra.mxu0 0.0
    %4842 = vmatprep.subr.mxu0 0.0
    %4843 = vmatpush2.msra.mxu0 0.0
    %4844 = vmatprep.subr.mxu0 0.0
    %4845 = vmatpush2.msra.mxu0 0.0
    %4846 = vmatprep.subr.mxu0 0.0
    %4847 = vmatpush2.msra.mxu0 0.0
    %4848 = vmatprep.subr.mxu0 0.0
    %4849 = vmatpush2.msra.mxu0 0.0
    %4850 = vmatprep.subr.mxu0 0.0
    %4851 = vmatpush2.msra.mxu0 0.0
    %4852 = vmatprep.subr.mxu0 0.0
    %4853 = vmatpush2.msra.mxu0 0.0
    %4854 = vmatprep.subr.mxu0 0.0
    %4855 = vmatpush2.msra.mxu0 0.0
    %4856 = vmatprep.subr.mxu0 0.0
    %4857 = vmatpush2.msra.mxu0 0.0
    %4858 = vmatprep.mubr.f32.mxu0 0.0
    %4859 = vmatmul.mubr.f32.gmra.mxu0 %v4771
    %v4860 = vpop.f32.mrf.mxu0
    %v4861 = vadd.f32 %v4768, %v4860
    %v4862 = vpop.f32.mrf.mxu0
    %4863 = vmatprep.mubr.f32.mxu0 0.0
    %4864 = vmatmul.mubr.f32.gmra.mxu0 %v4774
    %v4865 = vpop.f32.mrf.mxu0
    %v4866 = vadd.f32 %v4768, %v4865
    %v4867 = vpop.f32.mrf.mxu0
    %4868 = vmatprep.mubr.f32.mxu0 0.0
    %4869 = vmatmul.mubr.f32.gmra.mxu0 %v4777
    %v4870 = vpop.f32.mrf.mxu0
    %v4871 = vadd.f32 %v4768, %v4870
    %v4872 = vpop.f32.mrf.mxu0
    %4873 = vmatprep.mubr.f32.mxu0 0.0
    %4874 = vmatmul.mubr.f32.gmra.mxu0 %v4780
    %v4875 = vpop.f32.mrf.mxu0
    %v4876 = vadd.f32 %v4768, %v4875
    %v4877 = vpop.f32.mrf.mxu0
    %4878 = vmatprep.mubr.f32.mxu0 0.0
    %4879 = vmatmul.mubr.f32.gmra.mxu0 %v4783
    %v4880 = vpop.f32.mrf.mxu0
    %v4881 = vadd.f32 %v4768, %v4880
    %v4882 = vpop.f32.mrf.mxu0
    %4883 = vmatprep.mubr.f32.mxu0 0.0
    %4884 = vmatmul.mubr.f32.gmra.mxu0 %v4786
    %v4885 = vpop.f32.mrf.mxu0
    %v4886 = vadd.f32 %v4768, %v4885
    %v4887 = vpop.f32.mrf.mxu0
    %4888 = vmatprep.mubr.f32.mxu0 0.0
    %4889 = vmatmul.mubr.f32.gmra.mxu0 %v4789
    %v4890 = vpop.f32.mrf.mxu0
    %v4891 = vadd.f32 %v4768, %v4890
    %v4892 = vpop.f32.mrf.mxu0
    %4893 = vmatprep.mubr.f32.mxu0 0.0
    %4894 = vmatmul.mubr.f32.gmra.mxu0 %v4792
    %v4895 = vpop.f32.mrf.mxu0
    %v4896 = vadd.f32 %v4768, %v4895
    %v4897 = vpop.f32.mrf.mxu0
    %4898 = vdwg.mxu0
    %v4899 = vmul.f32 %v4861, 0.5
    %v4900 = vmul.f32 %v4866, 0.5
    %v4901 = vmul.f32 %v4871, 0.5
    %v4902 = vmul.f32 %v4876, 0.5
    %v4903 = vmul.f32 %v4881, 0.5
    %v4904 = vmul.f32 %v4886, 0.5
    %v4905 = vmul.f32 %v4891, 0.5
    %v4906 = vmul.f32 %v4896, 0.5
    %v4907 = vmul.f32 %v4861, 0.70710677
    %v4908 = vmul.f32 %v4866, 0.70710677
    %v4909 = vmul.f32 %v4871, 0.70710677
    %v4910 = vmul.f32 %v4876, 0.70710677
    %v4911 = vmul.f32 %v4881, 0.70710677
    %v4912 = vmul.f32 %v4886, 0.70710677
    %v4913 = vmul.f32 %v4891, 0.70710677
    %v4914 = vmul.f32 %v4896, 0.70710677
    %v4915 = vand.u32 2147483647, %v4907
    %v4916 = vand.u32 2147483647, %v4908
    %v4917 = vand.u32 2147483647, %v4909
    %v4918 = vand.u32 2147483647, %v4910
    %v4919 = vand.u32 2147483647, %v4911
    %v4920 = vand.u32 2147483647, %v4912
    %v4921 = vand.u32 2147483647, %v4913
    %v4922 = vand.u32 2147483647, %v4914
    %v4923 = vmul.f32 %v4915, 0.3275911
    %v4924 = vmul.f32 %v4916, 0.3275911
    %v4925 = vmul.f32 %v4917, 0.3275911
    %v4926 = vmul.f32 %v4918, 0.3275911
    %v4927 = vmul.f32 %v4919, 0.3275911
    %v4928 = vmul.f32 %v4920, 0.3275911
    %v4929 = vmul.f32 %v4921, 0.3275911
    %v4930 = vmul.f32 %v4922, 0.3275911
    %v4931 = vadd.f32 %v4923, 1.0
    %v4932 = vadd.f32 %v4924, 1.0
    %v4933 = vadd.f32 %v4925, 1.0
    %v4934 = vadd.f32 %v4926, 1.0
    %v4935 = vadd.f32 %v4927, 1.0
    %v4936 = vadd.f32 %v4928, 1.0
    %v4937 = vadd.f32 %v4929, 1.0
    %v4938 = vadd.f32 %v4930, 1.0
    %v4939 = vrcp.pop %v4931
    %v4940 = vmul.f32 1.0, %v4939
    %v4941 = vrcp.pop %v4932
    %v4942 = vmul.f32 1.0, %v4941
    %v4943 = vrcp.pop %v4933
    %v4944 = vmul.f32 1.0, %v4943
    %v4945 = vrcp.pop %v4934
    %v4946 = vmul.f32 1.0, %v4945
    %v4947 = vrcp.pop %v4935
    %v4948 = vmul.f32 1.0, %v4947
    %v4949 = vrcp.pop %v4936
    %v4950 = vmul.f32 1.0, %v4949
    %v4951 = vrcp.pop %v4937
    %v4952 = vmul.f32 1.0, %v4951
    %v4953 = vrcp.pop %v4938
    %v4954 = vmul.f32 1.0, %v4953
    %v4955 = vmul.f32 %v4940, 1.0614054
    %v4956 = vmul.f32 %v4942, 1.0614054
    %v4957 = vmul.f32 %v4944, 1.0614054
    %v4958 = vmul.f32 %v4946, 1.0614054
    %v4959 = vmul.f32 %v4948, 1.0614054
    %v4960 = vmul.f32 %v4950, 1.0614054
    %v4961 = vmul.f32 %v4952, 1.0614054
    %v4962 = vmul.f32 %v4954, 1.0614054
    %v4963 = vadd.f32 %v4955, -1.4531521
    %v4964 = vadd.f32 %v4956, -1.4531521
    %v4965 = vadd.f32 %v4957, -1.4531521
    %v4966 = vadd.f32 %v4958, -1.4531521
    %v4967 = vadd.f32 %v4959, -1.4531521
    %v4968 = vadd.f32 %v4960, -1.4531521
    %v4969 = vadd.f32 %v4961, -1.4531521
    %v4970 = vadd.f32 %v4962, -1.4531521
    %v4971 = vmul.f32 %v4963, %v4940
    %v4972 = vmul.f32 %v4964, %v4942
    %v4973 = vmul.f32 %v4965, %v4944
    %v4974 = vmul.f32 %v4966, %v4946
    %v4975 = vmul.f32 %v4967, %v4948
    %v4976 = vmul.f32 %v4968, %v4950
    %v4977 = vmul.f32 %v4969, %v4952
    %v4978 = vmul.f32 %v4970, %v4954
    %v4979 = vadd.f32 %v4971, 1.4214138
    %v4980 = vadd.f32 %v4972, 1.4214138
    %v4981 = vadd.f32 %v4973, 1.4214138
    %v4982 = vadd.f32 %v4974, 1.4214138
    %v4983 = vadd.f32 %v4975, 1.4214138
    %v4984 = vadd.f32 %v4976, 1.4214138
    %v4985 = vadd.f32 %v4977, 1.4214138
    %v4986 = vadd.f32 %v4978, 1.4214138
    %v4987 = vmul.f32 %v4979, %v4940
    %v4988 = vmul.f32 %v4980, %v4942
    %v4989 = vmul.f32 %v4981, %v4944
    %v4990 = vmul.f32 %v4982, %v4946
    %v4991 = vmul.f32 %v4983, %v4948
    %v4992 = vmul.f32 %v4984, %v4950
    %v4993 = vmul.f32 %v4985, %v4952
    %v4994 = vmul.f32 %v4986, %v4954
    %v4995 = vadd.f32 %v4987, -0.28449672
    %v4996 = vadd.f32 %v4988, -0.28449672
    %v4997 = vadd.f32 %v4989, -0.28449672
    %v4998 = vadd.f32 %v4990, -0.28449672
    %v4999 = vadd.f32 %v4991, -0.28449672
    %v5000 = vadd.f32 %v4992, -0.28449672
    %v5001 = vadd.f32 %v4993, -0.28449672
    %v5002 = vadd.f32 %v4994, -0.28449672
    %v5003 = vmul.f32 %v4995, %v4940
    %v5004 = vmul.f32 %v4996, %v4942
    %v5005 = vmul.f32 %v4997, %v4944
    %v5006 = vmul.f32 %v4998, %v4946
    %v5007 = vmul.f32 %v4999, %v4948
    %v5008 = vmul.f32 %v5000, %v4950
    %v5009 = vmul.f32 %v5001, %v4952
    %v5010 = vmul.f32 %v5002, %v4954
    %v5011 = vadd.f32 %v5003, 0.2548296
    %v5012 = vadd.f32 %v5004, 0.2548296
    %v5013 = vadd.f32 %v5005, 0.2548296
    %v5014 = vadd.f32 %v5006, 0.2548296
    %v5015 = vadd.f32 %v5007, 0.2548296
    %v5016 = vadd.f32 %v5008, 0.2548296
    %v5017 = vadd.f32 %v5009, 0.2548296
    %v5018 = vadd.f32 %v5010, 0.2548296
    %v5019 = vmul.f32 %v5011, %v4940
    %v5020 = vmul.f32 %v5012, %v4942
    %v5021 = vmul.f32 %v5013, %v4944
    %v5022 = vmul.f32 %v5014, %v4946
    %v5023 = vmul.f32 %v5015, %v4948
    %v5024 = vmul.f32 %v5016, %v4950
    %v5025 = vmul.f32 %v5017, %v4952
    %v5026 = vmul.f32 %v5018, %v4954
    %v5027 = vsub.f32 0.0, %v4915
    %v5028 = vsub.f32 0.0, %v4916
    %v5029 = vsub.f32 0.0, %v4917
    %v5030 = vsub.f32 0.0, %v4918
    %v5031 = vsub.f32 0.0, %v4919
    %v5032 = vsub.f32 0.0, %v4920
    %v5033 = vsub.f32 0.0, %v4921
    %v5034 = vsub.f32 0.0, %v4922
    %v5035 = vmul.f32 %v5027, %v4915
    %v5036 = vmul.f32 %v5028, %v4916
    %v5037 = vmul.f32 %v5029, %v4917
    %v5038 = vmul.f32 %v5030, %v4918
    %v5039 = vmul.f32 %v5031, %v4919
    %v5040 = vmul.f32 %v5032, %v4920
    %v5041 = vmul.f32 %v5033, %v4921
    %v5042 = vmul.f32 %v5034, %v4922
    %v5043 = vmul.f32 %v5035, 1.442695
    %v5044 = vpow.pop %v5043
    %v5045 = vmul.f32 %v5036, 1.442695
    %v5046 = vpow.pop %v5045
    %v5047 = vmul.f32 %v5037, 1.442695
    %v5048 = vpow.pop %v5047
    %v5049 = vmul.f32 %v5038, 1.442695
    %v5050 = vpow.pop %v5049
    %v5051 = vmul.f32 %v5039, 1.442695
    %v5052 = vpow.pop %v5051
    %v5053 = vmul.f32 %v5040, 1.442695
    %v5054 = vpow.pop %v5053
    %v5055 = vmul.f32 %v5041, 1.442695
    %v5056 = vpow.pop %v5055
    %v5057 = vmul.f32 %v5042, 1.442695
    %v5058 = vpow.pop %v5057
    %v5059 = vmul.f32 %v5019, %v5044
    %v5060 = vmul.f32 %v5020, %v5046
    %v5061 = vmul.f32 %v5021, %v5048
    %v5062 = vmul.f32 %v5022, %v5050
    %v5063 = vmul.f32 %v5023, %v5052
    %v5064 = vmul.f32 %v5024, %v5054
    %v5065 = vmul.f32 %v5025, %v5056
    %v5066 = vmul.f32 %v5026, %v5058
    %v5067 = vsub.f32 1.0, %v5059
    %v5068 = vsub.f32 1.0, %v5060
    %v5069 = vsub.f32 1.0, %v5061
    %v5070 = vsub.f32 1.0, %v5062
    %v5071 = vsub.f32 1.0, %v5063
    %v5072 = vsub.f32 1.0, %v5064
    %v5073 = vsub.f32 1.0, %v5065
    %v5074 = vsub.f32 1.0, %v5066
    %vm5075 = vcmp.lt.f32.partialorder %v4907, 0.0
    %vm5076 = vcmp.lt.f32.partialorder %v4908, 0.0
    %vm5077 = vcmp.lt.f32.partialorder %v4909, 0.0
    %vm5078 = vcmp.lt.f32.partialorder %v4910, 0.0
    %vm5079 = vcmp.lt.f32.partialorder %v4911, 0.0
    %vm5080 = vcmp.lt.f32.partialorder %v4912, 0.0
    %vm5081 = vcmp.lt.f32.partialorder %v4913, 0.0
    %vm5082 = vcmp.lt.f32.partialorder %v4914, 0.0
    %v5083 = vsub.f32 0.0, %v5067
    %v5084 = vsub.f32 0.0, %v5068
    %v5085 = vsub.f32 0.0, %v5069
    %v5086 = vsub.f32 0.0, %v5070
    %v5087 = vsub.f32 0.0, %v5071
    %v5088 = vsub.f32 0.0, %v5072
    %v5089 = vsub.f32 0.0, %v5073
    %v5090 = vsub.f32 0.0, %v5074
    %v5091 = vsel %vm5075, %v5083, %v5067
    %v5092 = vsel %vm5076, %v5084, %v5068
    %v5093 = vsel %vm5077, %v5085, %v5069
    %v5094 = vsel %vm5078, %v5086, %v5070
    %v5095 = vsel %vm5079, %v5087, %v5071
    %v5096 = vsel %vm5080, %v5088, %v5072
    %v5097 = vsel %vm5081, %v5089, %v5073
    %v5098 = vsel %vm5082, %v5090, %v5074
    %v5099 = vadd.f32 %v5091, 1.0
    %v5100 = vadd.f32 %v5092, 1.0
    %v5101 = vadd.f32 %v5093, 1.0
    %v5102 = vadd.f32 %v5094, 1.0
    %v5103 = vadd.f32 %v5095, 1.0
    %v5104 = vadd.f32 %v5096, 1.0
    %v5105 = vadd.f32 %v5097, 1.0
    %v5106 = vadd.f32 %v5098, 1.0
    %v5107 = vmul.f32 %v4899, %v5099
    %v5108 = vmul.f32 %v4900, %v5100
    %v5109 = vmul.f32 %v4901, %v5101
    %v5110 = vmul.f32 %v4902, %v5102
    %v5111 = vmul.f32 %v4903, %v5103
    %v5112 = vmul.f32 %v4904, %v5104
    %v5113 = vmul.f32 %v4905, %v5105
    %v5114 = vmul.f32 %v4906, %v5106
    %s5115 = scalar_lea.vmem %s22, 64
    %v5116 = vld [vmem:[%s5115] sm:$0xff]
    %v5117 = vld [vmem:[%s5115 + $0x8] sm:$0xff]
    %v5118 = vld [vmem:[%s5115 + $0x10] sm:$0xff]
    %v5119 = vld [vmem:[%s5115 + $0x18] sm:$0xff]
    %v5120 = vld [vmem:[%s5115 + $0x20] sm:$0xff]
    %v5121 = vld [vmem:[%s5115 + $0x28] sm:$0xff]
    %v5122 = vld [vmem:[%s5115 + $0x30] sm:$0xff]
    %v5123 = vld [vmem:[%s5115 + $0x38] sm:$0xff]
    %s5124 = scalar_lea.vmem [#allocation25], 9
    %v5125 = vld [vmem:[%s5124] sm:$0x1]
    %v5127 = vlaneseq
    %v5128 = vshrl.u32 %v5127, 7
    %v5129 = vsub.s32 0, %v5128
    %v5130 = vrot.slane %v5125, %v5129
    %v5133 = vsel %vm2195, %v5107, 0
    %v5136 = vsel %vm2195, %v5108, 0
    %v5139 = vsel %vm2195, %v5109, 0
    %v5142 = vsel %vm2195, %v5110, 0
    %v5145 = vsel %vm2195, %v5111, 0
    %v5148 = vsel %vm2195, %v5112, 0
    %v5151 = vsel %vm2195, %v5113, 0
    %v5154 = vsel %vm2195, %v5114, 0
    %5156 = vmatprep.subr.mxu0 0.0
    %5157 = vmatpush1.msra.mxu0 0.0
    %5158 = vmatprep.subr.mxu0 0.0
    %5159 = vmatpush1.msra.mxu0 0.0
    %5160 = vmatprep.subr.mxu0 0.0
    %5161 = vmatpush1.msra.mxu0 0.0
    %5162 = vmatprep.subr.mxu0 0.0
    %5163 = vmatpush1.msra.mxu0 0.0
    %5164 = vmatprep.subr.mxu0 0.0
    %5165 = vmatpush1.msra.mxu0 0.0
    %5166 = vmatprep.subr.mxu0 0.0
    %5167 = vmatpush1.msra.mxu0 0.0
    %5168 = vmatprep.subr.mxu0 0.0
    %5169 = vmatpush1.msra.mxu0 0.0
    %5170 = vmatprep.subr.mxu0 0.0
    %5171 = vmatpush1.msra.mxu0 0.0
    %5172 = vmatprep.subr.mxu0 0.0
    %5173 = vmatpush1.msra.mxu0 %v5123
    %5174 = vmatprep.subr.mxu0 0.0
    %5175 = vmatpush1.msra.mxu0 %v5122
    %5176 = vmatprep.subr.mxu0 0.0
    %5177 = vmatpush1.msra.mxu0 %v5121
    %5178 = vmatprep.subr.mxu0 0.0
    %5179 = vmatpush1.msra.mxu0 %v5120
    %5180 = vmatprep.subr.mxu0 0.0
    %5181 = vmatpush1.msra.mxu0 %v5119
    %5182 = vmatprep.subr.mxu0 0.0
    %5183 = vmatpush1.msra.mxu0 %v5118
    %5184 = vmatprep.subr.mxu0 0.0
    %5185 = vmatpush1.msra.mxu0 %v5117
    %5186 = vmatprep.subr.mxu0 0.0
    %5187 = vmatpush1.msra.mxu0 %v5116
    %5188 = vmatprep.subr.mxu0 0.0
    %5189 = vmatpush2.msra.mxu0 0.0
    %5190 = vmatprep.subr.mxu0 0.0
    %5191 = vmatpush2.msra.mxu0 0.0
    %5192 = vmatprep.subr.mxu0 0.0
    %5193 = vmatpush2.msra.mxu0 0.0
    %5194 = vmatprep.subr.mxu0 0.0
    %5195 = vmatpush2.msra.mxu0 0.0
    %5196 = vmatprep.subr.mxu0 0.0
    %5197 = vmatpush2.msra.mxu0 0.0
    %5198 = vmatprep.subr.mxu0 0.0
    %5199 = vmatpush2.msra.mxu0 0.0
    %5200 = vmatprep.subr.mxu0 0.0
    %5201 = vmatpush2.msra.mxu0 0.0
    %5202 = vmatprep.subr.mxu0 0.0
    %5203 = vmatpush2.msra.mxu0 0.0
    %5204 = vmatprep.subr.mxu0 0.0
    %5205 = vmatpush2.msra.mxu0 0.0
    %5206 = vmatprep.subr.mxu0 0.0
    %5207 = vmatpush2.msra.mxu0 0.0
    %5208 = vmatprep.subr.mxu0 0.0
    %5209 = vmatpush2.msra.mxu0 0.0
    %5210 = vmatprep.subr.mxu0 0.0
    %5211 = vmatpush2.msra.mxu0 0.0
    %5212 = vmatprep.subr.mxu0 0.0
    %5213 = vmatpush2.msra.mxu0 0.0
    %5214 = vmatprep.subr.mxu0 0.0
    %5215 = vmatpush2.msra.mxu0 0.0
    %5216 = vmatprep.subr.mxu0 0.0
    %5217 = vmatpush2.msra.mxu0 0.0
    %5218 = vmatprep.subr.mxu0 0.0
    %5219 = vmatpush2.msra.mxu0 0.0
    %5220 = vmatprep.mubr.f32.mxu0 0.0
    %5221 = vmatmul.mubr.f32.gmra.mxu0 %v5133
    %v5222 = vpop.f32.mrf.mxu0
    %v5223 = vadd.f32 %v5130, %v5222
    %v5224 = vpop.f32.mrf.mxu0
    %5225 = vmatprep.mubr.f32.mxu0 0.0
    %5226 = vmatmul.mubr.f32.gmra.mxu0 %v5136
    %v5227 = vpop.f32.mrf.mxu0
    %v5228 = vadd.f32 %v5130, %v5227
    %v5229 = vpop.f32.mrf.mxu0
    %5230 = vmatprep.mubr.f32.mxu0 0.0
    %5231 = vmatmul.mubr.f32.gmra.mxu0 %v5139
    %v5232 = vpop.f32.mrf.mxu0
    %v5233 = vadd.f32 %v5130, %v5232
    %v5234 = vpop.f32.mrf.mxu0
    %5235 = vmatprep.mubr.f32.mxu0 0.0
    %5236 = vmatmul.mubr.f32.gmra.mxu0 %v5142
    %v5237 = vpop.f32.mrf.mxu0
    %v5238 = vadd.f32 %v5130, %v5237
    %v5239 = vpop.f32.mrf.mxu0
    %5240 = vmatprep.mubr.f32.mxu0 0.0
    %5241 = vmatmul.mubr.f32.gmra.mxu0 %v5145
    %v5242 = vpop.f32.mrf.mxu0
    %v5243 = vadd.f32 %v5130, %v5242
    %v5244 = vpop.f32.mrf.mxu0
    %5245 = vmatprep.mubr.f32.mxu0 0.0
    %5246 = vmatmul.mubr.f32.gmra.mxu0 %v5148
    %v5247 = vpop.f32.mrf.mxu0
    %v5248 = vadd.f32 %v5130, %v5247
    %v5249 = vpop.f32.mrf.mxu0
    %5250 = vmatprep.mubr.f32.mxu0 0.0
    %5251 = vmatmul.mubr.f32.gmra.mxu0 %v5151
    %v5252 = vpop.f32.mrf.mxu0
    %v5253 = vadd.f32 %v5130, %v5252
    %v5254 = vpop.f32.mrf.mxu0
    %5255 = vmatprep.mubr.f32.mxu0 0.0
    %5256 = vmatmul.mubr.f32.gmra.mxu0 %v5154
    %v5257 = vpop.f32.mrf.mxu0
    %v5258 = vadd.f32 %v5130, %v5257
    %v5259 = vpop.f32.mrf.mxu0
    %5260 = vdwg.mxu0
    %v5261 = vadd.f32 %v5223, %v4749
    %v5262 = vadd.f32 %v5228, %v4750
    %v5263 = vadd.f32 %v5233, %v4751
    %v5264 = vadd.f32 %v5238, %v4752
    %v5265 = vadd.f32 %v5243, %v4753
    %v5266 = vadd.f32 %v5248, %v4754
    %v5267 = vadd.f32 %v5253, %v4755
    %v5268 = vadd.f32 %v5258, %v4756
    %s5269 = scalar_lea.vmem [#allocation25], 10
    %v5270 = vld [vmem:[%s5269] sm:$0x1]
    %s5271 = scalar_lea.vmem [#allocation25], 11
    %v5272 = vld [vmem:[%s5271] sm:$0x1]
    %v5273 = vsel %vm397, %v5261, 0.0
    %5274 = vadd.xlane.f32.xlu0 %v5273
    %v5275 = vpop.xlane.xlu0 %5274
    %v5276 = vsel %vm397, %v5262, 0.0
    %5277 = vadd.xlane.f32.xlu0 %v5276
    %v5278 = vpop.xlane.xlu0 %5277
    %v5279 = vsel %vm397, %v5263, 0.0
    %5280 = vadd.xlane.f32.xlu0 %v5279
    %v5281 = vpop.xlane.xlu0 %5280
    %v5282 = vsel %vm397, %v5264, 0.0
    %5283 = vadd.xlane.f32.xlu0 %v5282
    %v5284 = vpop.xlane.xlu0 %5283
    %v5285 = vsel %vm397, %v5265, 0.0
    %5286 = vadd.xlane.f32.xlu0 %v5285
    %v5287 = vpop.xlane.xlu0 %5286
    %v5288 = vsel %vm397, %v5266, 0.0
    %5289 = vadd.xlane.f32.xlu0 %v5288
    %v5290 = vpop.xlane.xlu0 %5289
    %v5291 = vsel %vm397, %v5267, 0.0
    %5292 = vadd.xlane.f32.xlu0 %v5291
    %v5293 = vpop.xlane.xlu0 %5292
    %v5294 = vsel %vm397, %v5268, 0.0
    %5295 = vadd.xlane.f32.xlu0 %v5294
    %v5296 = vpop.xlane.xlu0 %5295
    %v5297 = vmul.f32 %v5275, %v1784
    %v5298 = vmul.f32 %v5278, %v1784
    %v5299 = vmul.f32 %v5281, %v1784
    %v5300 = vmul.f32 %v5284, %v1784
    %v5301 = vmul.f32 %v5287, %v1784
    %v5302 = vmul.f32 %v5290, %v1784
    %v5303 = vmul.f32 %v5293, %v1784
    %v5304 = vmul.f32 %v5296, %v1784
    %v5305 = vsub.f32 %v5261, %v5297
    %v5306 = vsub.f32 %v5262, %v5298
    %v5307 = vsub.f32 %v5263, %v5299
    %v5308 = vsub.f32 %v5264, %v5300
    %v5309 = vsub.f32 %v5265, %v5301
    %v5310 = vsub.f32 %v5266, %v5302
    %v5311 = vsub.f32 %v5267, %v5303
    %v5312 = vsub.f32 %v5268, %v5304
    %v5313 = vmul.f32 %v5305, %v5305
    %v5314 = vmul.f32 %v5306, %v5306
    %v5315 = vmul.f32 %v5307, %v5307
    %v5316 = vmul.f32 %v5308, %v5308
    %v5317 = vmul.f32 %v5309, %v5309
    %v5318 = vmul.f32 %v5310, %v5310
    %v5319 = vmul.f32 %v5311, %v5311
    %v5320 = vmul.f32 %v5312, %v5312
    %v5321 = vsel %vm397, %v5313, 0.0
    %5322 = vadd.xlane.f32.xlu0 %v5321
    %v5323 = vpop.xlane.xlu0 %5322
    %v5324 = vsel %vm397, %v5314, 0.0
    %5325 = vadd.xlane.f32.xlu0 %v5324
    %v5326 = vpop.xlane.xlu0 %5325
    %v5327 = vsel %vm397, %v5315, 0.0
    %5328 = vadd.xlane.f32.xlu0 %v5327
    %v5329 = vpop.xlane.xlu0 %5328
    %v5330 = vsel %vm397, %v5316, 0.0
    %5331 = vadd.xlane.f32.xlu0 %v5330
    %v5332 = vpop.xlane.xlu0 %5331
    %v5333 = vsel %vm397, %v5317, 0.0
    %5334 = vadd.xlane.f32.xlu0 %v5333
    %v5335 = vpop.xlane.xlu0 %5334
    %v5336 = vsel %vm397, %v5318, 0.0
    %5337 = vadd.xlane.f32.xlu0 %v5336
    %v5338 = vpop.xlane.xlu0 %5337
    %v5339 = vsel %vm397, %v5319, 0.0
    %5340 = vadd.xlane.f32.xlu0 %v5339
    %v5341 = vpop.xlane.xlu0 %5340
    %v5342 = vsel %vm397, %v5320, 0.0
    %5343 = vadd.xlane.f32.xlu0 %v5342
    %v5344 = vpop.xlane.xlu0 %5343
    %v5345 = vmul.f32 %v5323, %v1784
    %v5346 = vmul.f32 %v5326, %v1784
    %v5347 = vmul.f32 %v5329, %v1784
    %v5348 = vmul.f32 %v5332, %v1784
    %v5349 = vmul.f32 %v5335, %v1784
    %v5350 = vmul.f32 %v5338, %v1784
    %v5351 = vmul.f32 %v5341, %v1784
    %v5352 = vmul.f32 %v5344, %v1784
    %v5353 = vadd.f32 %v5345, 1e-06
    %v5354 = vadd.f32 %v5346, 1e-06
    %v5355 = vadd.f32 %v5347, 1e-06
    %v5356 = vadd.f32 %v5348, 1e-06
    %v5357 = vadd.f32 %v5349, 1e-06
    %v5358 = vadd.f32 %v5350, 1e-06
    %v5359 = vadd.f32 %v5351, 1e-06
    %v5360 = vadd.f32 %v5352, 1e-06
    %v5361 = vrsqrt.pop %v5353
    %v5362 = vrsqrt.pop %v5354
    %v5363 = vrsqrt.pop %v5355
    %v5364 = vrsqrt.pop %v5356
    %v5365 = vrsqrt.pop %v5357
    %v5366 = vrsqrt.pop %v5358
    %v5367 = vrsqrt.pop %v5359
    %v5368 = vrsqrt.pop %v5360
    %v5369 = vmul.f32 %v5305, %v5361
    %v5370 = vmul.f32 %v5306, %v5362
    %v5371 = vmul.f32 %v5307, %v5363
    %v5372 = vmul.f32 %v5308, %v5364
    %v5373 = vmul.f32 %v5309, %v5365
    %v5374 = vmul.f32 %v5310, %v5366
    %v5375 = vmul.f32 %v5311, %v5367
    %v5376 = vmul.f32 %v5312, %v5368
    %v5378 = vlaneseq
    %v5379 = vshrl.u32 %v5378, 7
    %v5380 = vsub.s32 0, %v5379
    %v5381 = vrot.slane %v5270, %v5380
    %v5383 = vmul.f32 %v5369, %v5381
    %v5384 = vmul.f32 %v5370, %v5381
    %v5385 = vmul.f32 %v5371, %v5381
    %v5386 = vmul.f32 %v5372, %v5381
    %v5387 = vmul.f32 %v5373, %v5381
    %v5388 = vmul.f32 %v5374, %v5381
    %v5389 = vmul.f32 %v5375, %v5381
    %v5390 = vmul.f32 %v5376, %v5381
    %v5392 = vlaneseq
    %v5393 = vshrl.u32 %v5392, 7
    %v5394 = vsub.s32 0, %v5393
    %v5395 = vrot.slane %v5272, %v5394
    %v5397 = vadd.f32 %v5383, %v5395
    %v5398 = vadd.f32 %v5384, %v5395
    %v5399 = vadd.f32 %v5385, %v5395
    %v5400 = vadd.f32 %v5386, %v5395
    %v5401 = vadd.f32 %v5387, %v5395
    %v5402 = vadd.f32 %v5388, %v5395
    %v5403 = vadd.f32 %v5389, %v5395
    %v5404 = vadd.f32 %v5390, %v5395
    %5405 = vst.msk [vmem:[#allocation2] sm:$0xff] %vm397, %v5397
    %5406 = vst.msk [vmem:[#allocation2 + $0x8] sm:$0xff] %vm397, %v5398
    %5407 = vst.msk [vmem:[#allocation2 + $0x10] sm:$0xff] %vm397, %v5399
    %5408 = vst.msk [vmem:[#allocation2 + $0x18] sm:$0xff] %vm397, %v5400
    %5409 = vst.msk [vmem:[#allocation2 + $0x20] sm:$0xff] %vm397, %v5401
    %5410 = vst.msk [vmem:[#allocation2 + $0x28] sm:$0xff] %vm397, %v5402
    %5411 = vst.msk [vmem:[#allocation2 + $0x30] sm:$0xff] %vm397, %v5403
    %5412 = vst.msk [vmem:[#allocation2 + $0x38] sm:$0xff] %vm397, %v5404
    %v5413 = vld [vmem:[#allocation2 + $0xf] sm:$0x1]
    %vm5414 = vcmask 253952
    %5415 = vst.msk [vmem:[#allocation3] sm:$0x1] %vm5414, %v5413
    %v5416 = vld [vmem:[#allocation2 + $0x17] sm:$0x1]
    %5418 = vrot.lane.b32.xlu0 %v5416, 32
    %v5419 = vpop.permute.xlu0 %5418
    %vm5421 = vcmask 516352
    %5422 = vst.msk [vmem:[#allocation3] sm:$0x1] %vm5421, %v5419
    %v5423 = vld [vmem:[#allocation2 + $0x1b] sm:$0x1]
    %5425 = vrot.lane.b32.xlu0 %v5423, 64
    %v5426 = vpop.permute.xlu0 %5425
    %vm5428 = vcmask 778752
    %5429 = vst.msk [vmem:[#allocation3] sm:$0x1] %vm5428, %v5426
    %v5430 = vld [vmem:[#allocation2 + $0x1d] sm:$0x1]
    %5432 = vrot.lane.b32.xlu0 %v5430, 96
    %v5433 = vpop.permute.xlu0 %5432
    %vm5435 = vcmask 1041152
    %5436 = vst.msk [vmem:[#allocation3] sm:$0x1] %vm5435, %v5433
    %v5437 = vld [vmem:[#allocation2 + $0x2f] sm:$0x1]
    %5438 = vst.msk [vmem:[#allocation3 + $0x1] sm:$0x1] %vm5414, %v5437
    %v5439 = vld [vmem:[#allocation2 + $0x37] sm:$0x1]
    %5441 = vrot.lane.b32.xlu0 %v5439, 32
    %v5442 = vpop.permute.xlu0 %5441
    %5444 = vst.msk [vmem:[#allocation3 + $0x1] sm:$0x1] %vm5421, %v5442
    %v5445 = vld [vmem:[#allocation2 + $0x3b] sm:$0x1]
    %5447 = vrot.lane.b32.xlu0 %v5445, 64
    %v5448 = vpop.permute.xlu0 %5447
    %5450 = vst.msk [vmem:[#allocation3 + $0x1] sm:$0x1] %vm5428, %v5448
    %v5451 = vld [vmem:[#allocation2 + $0x3d] sm:$0x1]
    %5453 = vrot.lane.b32.xlu0 %v5451, 96
    %v5454 = vpop.permute.xlu0 %5453
    %5456 = vst.msk [vmem:[#allocation3 + $0x1] sm:$0x1] %vm5435, %v5454
    %v5457 = vld [vmem:[#allocation3] sm:$0x3]
    %v5458 = vld [vmem:[%s23] sm:$0xff]
    %v5459 = vld [vmem:[%s23 + $0x8] sm:$0xff]
    %v5460 = vld [vmem:[%s23 + $0x10] sm:$0xff]
    %v5461 = vld [vmem:[%s23 + $0x18] sm:$0xff]
    %v5462 = vld [vmem:[%s23 + $0x20] sm:$0xff]
    %v5463 = vld [vmem:[%s23 + $0x28] sm:$0xff]
    %v5464 = vld [vmem:[%s23 + $0x30] sm:$0xff]
    %v5465 = vld [vmem:[%s23 + $0x38] sm:$0xff]
    %v5466 = vld [vmem:[%s23 + $0x40] sm:$0xff]
    %v5467 = vld [vmem:[%s23 + $0x48] sm:$0xff]
    %v5468 = vld [vmem:[%s23 + $0x50] sm:$0xff]
    %v5469 = vld [vmem:[%s23 + $0x58] sm:$0xff]
    %v5470 = vld [vmem:[%s23 + $0x60] sm:$0xff]
    %v5471 = vld [vmem:[%s23 + $0x68] sm:$0xff]
    %v5472 = vld [vmem:[%s23 + $0x70] sm:$0xff]
    %v5473 = vld [vmem:[%s23 + $0x78] sm:$0xff]
    %5474 = vmatprep.subr.mxu0 0.0
    %5475 = vmatpush1.msra.mxu0 %v5473
    %5476 = vmatprep.subr.mxu0 0.0
    %5477 = vmatpush1.msra.mxu0 %v5472
    %5478 = vmatprep.subr.mxu0 0.0
    %5479 = vmatpush1.msra.mxu0 %v5471
    %5480 = vmatprep.subr.mxu0 0.0
    %5481 = vmatpush1.msra.mxu0 %v5470
    %5482 = vmatprep.subr.mxu0 0.0
    %5483 = vmatpush1.msra.mxu0 %v5469
    %5484 = vmatprep.subr.mxu0 0.0
    %5485 = vmatpush1.msra.mxu0 %v5468
    %5486 = vmatprep.subr.mxu0 0.0
    %5487 = vmatpush1.msra.mxu0 %v5467
    %5488 = vmatprep.subr.mxu0 0.0
    %5489 = vmatpush1.msra.mxu0 %v5466
    %5490 = vmatprep.subr.mxu0 0.0
    %5491 = vmatpush1.msra.mxu0 %v5465
    %5492 = vmatprep.subr.mxu0 0.0
    %5493 = vmatpush1.msra.mxu0 %v5464
    %5494 = vmatprep.subr.mxu0 0.0
    %5495 = vmatpush1.msra.mxu0 %v5463
    %5496 = vmatprep.subr.mxu0 0.0
    %5497 = vmatpush1.msra.mxu0 %v5462
    %5498 = vmatprep.subr.mxu0 0.0
    %5499 = vmatpush1.msra.mxu0 %v5461
    %5500 = vmatprep.subr.mxu0 0.0
    %5501 = vmatpush1.msra.mxu0 %v5460
    %5502 = vmatprep.subr.mxu0 0.0
    %5503 = vmatpush1.msra.mxu0 %v5459
    %5504 = vmatprep.subr.mxu0 0.0
    %5505 = vmatpush1.msra.mxu0 %v5458
    %5506 = vmatprep.subr.mxu0 0.0
    %5507 = vmatpush2.msra.mxu0 0.0
    %5508 = vmatprep.subr.mxu0 0.0
    %5509 = vmatpush2.msra.mxu0 0.0
    %5510 = vmatprep.subr.mxu0 0.0
    %5511 = vmatpush2.msra.mxu0 0.0
    %5512 = vmatprep.subr.mxu0 0.0
    %5513 = vmatpush2.msra.mxu0 0.0
    %5514 = vmatprep.subr.mxu0 0.0
    %5515 = vmatpush2.msra.mxu0 0.0
    %5516 = vmatprep.subr.mxu0 0.0
    %5517 = vmatpush2.msra.mxu0 0.0
    %5518 = vmatprep.subr.mxu0 0.0
    %5519 = vmatpush2.msra.mxu0 0.0
    %5520 = vmatprep.subr.mxu0 0.0
    %5521 = vmatpush2.msra.mxu0 0.0
    %5522 = vmatprep.subr.mxu0 0.0
    %5523 = vmatpush2.msra.mxu0 0.0
    %5524 = vmatprep.subr.mxu0 0.0
    %5525 = vmatpush2.msra.mxu0 0.0
    %5526 = vmatprep.subr.mxu0 0.0
    %5527 = vmatpush2.msra.mxu0 0.0
    %5528 = vmatprep.subr.mxu0 0.0
    %5529 = vmatpush2.msra.mxu0 0.0
    %5530 = vmatprep.subr.mxu0 0.0
    %5531 = vmatpush2.msra.mxu0 0.0
    %5532 = vmatprep.subr.mxu0 0.0
    %5533 = vmatpush2.msra.mxu0 0.0
    %5534 = vmatprep.subr.mxu0 0.0
    %5535 = vmatpush2.msra.mxu0 0.0
    %5536 = vmatprep.subr.mxu0 0.0
    %5537 = vmatpush2.msra.mxu0 0.0
    %5538 = vmatprep.mubr.f32.mxu0 0.0
    %5539 = vmatmul.mubr.f32.gmra.mxu0 %v5457
    %v5540 = vpop.f32.mrf.mxu0
    %v5541 = vadd.f32 0.0, %v5540
    %v5542 = vpop.f32.mrf.mxu0
    %5543 = vdwg.mxu0
    %5544 = vst [vmem:[#allocation30] sm:$0x3] %v5541
    // Predicated region
    $region162: #{model_forward.1} parent=1 // pred_check
      _
    $region163: #{model_forward.1} parent=1 // pred_check_branch
      %5546 = sbr.rel (0) target = $region165
    $region164: #{model_forward.1} parent=1 // pred_region
      %s5548 = ssub.s32 32, 32
      %5549 = vsyncadd [#allocation6], %s5548
      %s5551 = sshll.u32 [#allocation30], 4
      %s5552 = int_to_ptr.vmem [resolvable:$true] %s5551
      %5554 = dma.vmem_to_hbm [thread:$0]  %s5552, 32, %s24, [#allocation6]
    $region165: #{model_forward.1} parent=1 // pred_fallthru
      _
    // Predicated region
    $region166: #{model_forward.1} parent=1 // pred_check
      _
    $region167: #{model_forward.1} parent=1 // pred_check_branch
      %5556 = sbr.rel (0) target = $region169
    $region168: #{model_forward.1} parent=1 // pred_region
      %5557 = dma.done [#allocation6], 32
    $region169: #{model_forward.1} parent=1 // pred_fallthru
      _
    %5558 = vsyncpa [#allocation5], 1
    %5559 = vsyncpa [#allocation8], 1
    %5560 = vsyncpa [#allocation11], 1
    %5561 = vsyncpa [#allocation14], 1
    %5562 = vsyncpa [#allocation17], 1
    %5563 = vsyncpa [#allocation20], 1
    %5564 = vsyncpa [#allocation23], 1
    %5565 = vsyncpa [#allocation26], 1
    %5566 = vsyncpa [#allocation29], 1
    %5567 = vsyncpa [#allocation6], 1

</llo_original>
